<compile_context>
chip_gen: v5e
topology: v5e:2x2
jax: 0.10.0
libtpu: 0.0.40
codegen_flags: <defaults>
</compile_context>

<pallas_src>
import functools

import jax
import jax.numpy as jnp
from jax.experimental import pallas as pl
from jax.experimental.pallas import tpu as pltpu


# ---------------------------------------------------------------------------
# tiling helpers
# ---------------------------------------------------------------------------

def _pick_row_tile(n, target=1024):
    """Largest multiple-of-16 divisor of n <= target; keep >=2 steps if possible."""
    t = min(n, target)
    t -= t % 16
    while t >= 16 and n % t:
        t -= 16
    if t < 16:
        return n
    if n // t == 1 and t % 32 == 0:
        t //= 2
    return t


def _pick_halo_rows(p):
    if p % 16 == 0:
        return 16
    if p % 8 == 0:
        return 8
    return p                       # degenerate fallback: full-extent blocks


def _pick_band_rows(p, hb, target=128):
    r = min(p, target)
    r -= r % hb
    while r >= hb and p % r:
        r -= hb
    if r < hb:
        return p
    if p // r == 1 and r % (2 * hb) == 0:
        r //= 2                    # prefer >= 2 bands for pipelining / megacore
    return r


def _pick_window_batch(n_windows, s, c, target=8, vmem_budget=8 << 20):
    per_win = s * c * (2 * 4 + 4) * 2       # 4 bf16 inputs + 1 f32 output, x2 buffers
    wb = max(1, min(n_windows, target, vmem_budget // max(per_win, 1)))
    while wb > 1 and n_windows % wb:
        wb -= 1
    if wb > 1 and n_windows // wb == 1 and wb % 2 == 0:
        wb //= 2                   # keep >= 2 grid steps when possible
    return max(wb, 1)


# ---------------------------------------------------------------------------
# Kernel 1: fused QKV 1x1 projection (token matmul, Cout = 3C)
# ---------------------------------------------------------------------------

def qkv_projection(x_tok, w_qkv, b_qkv, *, row_tile):
    """x_tok: (N, C) bf16, w_qkv: (C, 3C) bf16, b_qkv: (1, 3C) f32 -> 3 x (N, C) bf16."""
    N, C = x_tok.shape

    def kernel(x_ref, w_ref, b_ref, q_ref, k_ref, v_ref):
        y = jnp.dot(x_ref[...], w_ref[...],
                    preferred_element_type=jnp.float32) + b_ref[...]
        # TODO(synk): when C % 128 != 0 these three stores are masked partial
        # vsts; a single lane-dense (row_tile, 3C) output would be wider but
        # would force extra HBM slicing passes downstream, so keep 3 outputs.
        q_ref[...] = y[:, :C].astype(q_ref.dtype)
        k_ref[...] = y[:, C:2 * C].astype(k_ref.dtype)
        v_ref[...] = y[:, 2 * C:].astype(v_ref.dtype)

    out = jax.ShapeDtypeStruct((N, C), jnp.bfloat16)
    row_spec = pl.BlockSpec((row_tile, C), lambda i: (i, 0))
    return pl.pallas_call(
        kernel,
        out_shape=(out, out, out),
        grid=(N // row_tile,),
        in_specs=[
            row_spec,
            pl.BlockSpec((C, 3 * C), lambda i: (0, 0)),
            pl.BlockSpec((1, 3 * C), lambda i: (0, 0)),
        ],
        out_specs=(row_spec, row_spec, row_spec),
        compiler_params=pltpu.CompilerParams(dimension_semantics=("parallel",)),
    )(x_tok, w_qkv, b_qkv)


# ---------------------------------------------------------------------------
# Kernel 2: fused depthwise 5x5 convs (cape, q, k), band-tiled over P with a
#           2-row halo supplied through clamped-index BlockSpecs.
# ---------------------------------------------------------------------------

def fused_dwconv5x5(q2, k2, v2, wq, wk, wc, bq, bk, bc, *, P, Q, C,
                    band_rows, halo_rows):
    """Inputs lane-flattened (B, P, Q*C) bf16; weights (5,5,Q*C) f32; biases (1,Q*C) f32.

    Returns (q_attn, k_attn, cape), each (B, P, Q*C) bf16:
      cape   = dwconv5x5(v, wc) + bc
      q_attn = dwconv5x5(q, wq) + bq + cape
      k_attn = dwconv5x5(k, wk) + bk + cape
    """
    B = q2.shape[0]
    QC = Q * C
    Rb, HB = band_rows, halo_rows
    nb = P // Rb
    rbb = Rb // HB
    nhb = P // HB

    def kernel(qc_ref, qt_ref, qb_ref, kc_ref, kt_ref, kb_ref,
               vc_ref, vt_ref, vb_ref,
               wq_ref, wk_ref, wc_ref, bq_ref, bk_ref, bc_ref,
               qo_ref, ko_ref, co_ref, pad_sc):
        band = pl.program_id(1)
        # lane (column) halo: only the two thin 2*C-wide strips are zeroed, not
        # the whole padded scratch (interior + row halos get overwritten below).
        zcol = jnp.zeros((Rb + 4, 2 * C), jnp.float32)
        pad_sc[:, 0:2 * C] = zcol
        pad_sc[:, 2 * C + QC:] = zcol

        def dw(cur_ref, top_ref, bot_ref, w_ref, b_ref):
            pad_sc[2:2 + Rb, 2 * C:2 * C + QC] = cur_ref[0].astype(jnp.float32)
            top = jnp.where(band > 0,
                            top_ref[0, HB - 2:HB, :].astype(jnp.float32), 0.0)
            pad_sc[0:2, 2 * C:2 * C + QC] = top
            bot = jnp.where(band < nb - 1,
                            bot_ref[0, 0:2, :].astype(jnp.float32), 0.0)
            pad_sc[Rb + 2:Rb + 4, 2 * C:2 * C + QC] = bot
            acc = jnp.zeros((Rb, QC), jnp.float32) + b_ref[...]
            # TODO(synk): on v6e/v7x the 25-tap MAC could run in bf16 (bf16 VPU)
            # with periodic f32 accumulation; kept f32 for v5e safety.
            for dp in range(5):
                for dq in range(5):
                    w_tap = w_ref[dp, dq:dq + 1, :]                 # (1, QC)
                    acc = acc + pad_sc[dp:dp + Rb, dq * C:dq * C + QC] * w_tap
            return acc

        cape = dw(vc_ref, vt_ref, vb_ref, wc_ref, bc_ref)
        co_ref[0] = cape.astype(co_ref.dtype)
        q_out = dw(qc_ref, qt_ref, qb_ref, wq_ref, bq_ref)
        qo_ref[0] = (q_out + co_ref[0].astype(jnp.float32)).astype(qo_ref.dtype)
        k_out = dw(kc_ref, kt_ref, kb_ref, wk_ref, bk_ref)
        ko_ref[0] = (k_out + co_ref[0].astype(jnp.float32)).astype(ko_ref.dtype)

    cur_spec = pl.BlockSpec((1, Rb, QC), lambda b, h: (b, h, 0))
    top_spec = pl.BlockSpec((1, HB, QC),
                            lambda b, h: (b, jnp.maximum(h * rbb - 1, 0), 0))
    bot_spec = pl.BlockSpec((1, HB, QC),
                            lambda b, h: (b, jnp.minimum((h + 1) * rbb, nhb - 1), 0))
    # TODO(synk): for very large Q the pre-tiled (5,5,Q*C) weights should be
    # expanded in-kernel (or Q band-tiled too); at CaSA window resolutions the
    # footprint is a few hundred KiB.
    w_spec = pl.BlockSpec((5, 5, QC), lambda b, h: (0, 0, 0))
    b_spec = pl.BlockSpec((1, QC), lambda b, h: (0, 0))
    img = jax.ShapeDtypeStruct((B, P, QC), jnp.bfloat16)
    return pl.pallas_call(
        kernel,
        out_shape=(img, img, img),
        grid=(B, nb),
        in_specs=[cur_spec, top_spec, bot_spec,
                  cur_spec, top_spec, bot_spec,
                  cur_spec, top_spec, bot_spec,
                  w_spec, w_spec, w_spec, b_spec, b_spec, b_spec],
        out_specs=(cur_spec, cur_spec, cur_spec),
        scratch_shapes=[pltpu.VMEM((Rb + 4, (Q + 4) * C), jnp.float32)],
        compiler_params=pltpu.CompilerParams(
            dimension_semantics=("parallel", "parallel"),
            vmem_limit_bytes=32 * 1024 * 1024),
    )(q2, q2, q2, k2, k2, k2, v2, v2, v2, wq, wk, wc, bq, bk, bc)


# ---------------------------------------------------------------------------
# Kernel 3: windowed multi-head attention (Wb windows per grid step, heads
#           packed block-diagonally into one wide MXU contraction), + cape.
# ---------------------------------------------------------------------------

def window_attention(q_win, k_win, v_win, cape_win, *, num_heads, scale,
                     window_batch):
    """q/k/v/cape: (nW, S, C) bf16 -> (nW, S, C) f32 = softmax(scale*q k^T) v + cape."""
    nW, S, C = q_win.shape
    hd = C // num_heads
    nHS = num_heads * S
    Wb = window_batch

    def kernel(q_ref, k_ref, v_ref, cape_ref, o_ref, kp_sc, vp_sc, p_sc):
        # Zero the packed K'/V' scratches once per grid step: off-diagonal head
        # blocks stay zero, diagonal blocks are fully overwritten per window.
        kp_sc[...] = jnp.zeros_like(kp_sc)
        vp_sc[...] = jnp.zeros_like(vp_sc)
        for w in range(Wb):                     # small, unrolled
            k = k_ref[w]                        # (S, C) bf16
            v = v_ref[w]
            # Pack only each head's own hd-wide column slice (no full-width
            # jnp.where selects).
            for h in range(num_heads):
                kp_sc[h * S:(h + 1) * S, h * hd:(h + 1) * hd] = k[:, h * hd:(h + 1) * hd]
                vp_sc[h * S:(h + 1) * S, h * hd:(h + 1) * hd] = v[:, h * hd:(h + 1) * hd]
            # scores for all heads at once: (S, C) x (nH*S, C)^T -> (S, nH*S)
            # TODO(synk): for large S/C (>= native MXU tile) switch to a
            # per-head batched dot_general to avoid the nH x MAC inflation.
            a = jax.lax.dot_general(
                q_ref[w], kp_sc[...], (((1,), (1,)), ((), ())),
                preferred_element_type=jnp.float32) * scale
            # per-head softmax over the contiguous S-wide column blocks
            for h in range(num_heads):
                blk = a[:, h * S:(h + 1) * S]
                mx = jnp.max(blk, axis=-1, keepdims=True)
                e = jnp.exp(blk - mx)
                inv = pl.reciprocal(jnp.sum(e, axis=-1, keepdims=True), approx=True)
                p_sc[:, h * S:(h + 1) * S] = (e * inv).astype(p_sc.dtype)
            # (S, nH*S) x (nH*S, C) -> (S, C); packing keeps heads separated.
            o = jnp.dot(p_sc[...], vp_sc[...], preferred_element_type=jnp.float32)
            o_ref[w] = (o + cape_ref[w].astype(jnp.float32)).astype(o_ref.dtype)

    spec = pl.BlockSpec((Wb, S, C), lambda i: (i, 0, 0))
    return pl.pallas_call(
        kernel,
        out_shape=jax.ShapeDtypeStruct((nW, S, C), jnp.float32),
        grid=(nW // Wb,),
        in_specs=[spec, spec, spec, spec],
        out_specs=spec,
        scratch_shapes=[
            pltpu.VMEM((nHS, C), jnp.bfloat16),
            pltpu.VMEM((nHS, C), jnp.bfloat16),
            pltpu.VMEM((S, nHS), jnp.bfloat16),
        ],
        compiler_params=pltpu.CompilerParams(
            dimension_semantics=("parallel",),
            vmem_limit_bytes=32 * 1024 * 1024),
    )(q_win, k_win, v_win, cape_win)


# ---------------------------------------------------------------------------
# Parameter initialization (deterministic, synthetic, PyTorch-shaped)
# ---------------------------------------------------------------------------

def init_casa_params(key, dim):
    ks = jax.random.split(key, 10)
    s = 0.1
    n = lambda k, shp: jax.random.normal(k, shp, jnp.float32) * s
    return {
        "qk_w": n(ks[0], (2 * dim, dim)),   # Conv2d(dim, 2*dim, 1)
        "qk_b": n(ks[1], (2 * dim,)),
        "v_w": n(ks[2], (dim, dim)),        # Conv2d(dim, dim, 1)
        "v_b": n(ks[3], (dim,)),
        "q5_w": n(ks[4], (dim, 5, 5)),      # depthwise 5x5
        "q5_b": n(ks[5], (dim,)),
        "k5_w": n(ks[6], (dim, 5, 5)),
        "k5_b": n(ks[7], (dim,)),
        "cape_w": n(ks[8], (dim, 5, 5)),
        "cape_b": n(ks[9], (dim,)),
    }


# ---------------------------------------------------------------------------
# CaSA forward
# ---------------------------------------------------------------------------

def casa_forward(params, x, *, resolution, idx, split_size, num_heads):
    """x: (B, C, H, W) float32 NCHW.  Returns (B, C, H, W) float32."""
    B, C, H, W = x.shape
    assert C % num_heads == 0
    head_dim = C // num_heads
    scale = head_dim ** -0.5

    if idx == 0:
        H_sp, W_sp = resolution, split_size
    elif idx == 1:
        H_sp, W_sp = split_size, resolution
    elif idx == 2:
        H_sp, W_sp = resolution // 2, resolution // 2
    else:
        H_sp, W_sp = resolution, resolution

    # Internal channels-last layout (B, P, Q, C) chosen so attention windows
    # are contiguous (P_sp x full-Q) row bands whenever possible: windowing is
    # then a free reshape (idx in {0, 1, 3}).
    if W_sp == W:                                   # windows span full width
        perm_in, perm_out = (0, 2, 3, 1), (0, 3, 1, 2)      # NHWC
        P, Q, P_sp, Q_sp = H, W, H_sp, W_sp
        w_perm = (1, 2, 0)
    elif H_sp == H:                                 # windows span full height
        perm_in, perm_out = (0, 3, 2, 1), (0, 3, 2, 1)      # NWHC (self-inverse)
        P, Q, P_sp, Q_sp = W, H, W_sp, H_sp
        w_perm = (2, 1, 0)
    else:
        # TODO(synk): idx==2 square windows still pay one XLA transpose pair for
        # windowing; replace with BlockSpec-driven (B,nP,P_sp,nQ,Q_sp,C) blocks.
        perm_in, perm_out = (0, 2, 3, 1), (0, 3, 1, 2)
        P, Q, P_sp, Q_sp = H, W, H_sp, W_sp
        w_perm = (1, 2, 0)

    nP, nQ = P // P_sp, Q // Q_sp
    S = P_sp * Q_sp
    nW_total = B * nP * nQ
    N = B * P * Q
    QC = Q * C

    # NCHW -> channels-last, fused with the f32 -> bf16 cast (halves kernel-1 input).
    x_pq = jnp.transpose(x, perm_in).astype(jnp.bfloat16)
    x_tok = x_pq.reshape(N, C)

    # fused qkv 1x1 projection (bf16 operands, f32 accumulate + bias in kernel)
    w_qkv = jnp.concatenate([params["qk_w"], params["v_w"]],
                            axis=0).T.astype(jnp.bfloat16)          # (C, 3C)
    b_qkv = jnp.concatenate([params["qk_b"], params["v_b"]]).reshape(1, 3 * C)
    q_tok, k_tok, v_tok = qkv_projection(
        x_tok, w_qkv, b_qkv, row_tile=_pick_row_tile(N))

    # lane-flattened views for the depthwise convs (free reshapes)
    q2 = q_tok.reshape(B, P, QC)
    k2 = k_tok.reshape(B, P, QC)
    v2 = v_tok.reshape(B, P, QC)

    def dw_weight(w):   # (C,5,5) -> (5,5,Q*C): layout-permuted then lane-tiled
        return jnp.tile(jnp.transpose(w, w_perm), (1, 1, Q))

    def dw_bias(b):     # (C,) -> (1, Q*C)
        return jnp.tile(b, Q).reshape(1, QC)

    HB = _pick_halo_rows(P)
    Rb = _pick_band_rows(P, HB)
    q_a2, k_a2, cape2 = fused_dwconv5x5(
        q2, k2, v2,
        dw_weight(params["q5_w"]), dw_weight(params["k5_w"]),
        dw_weight(params["cape_w"]),
        dw_bias(params["q5_b"]), dw_bias(params["k5_b"]),
        dw_bias(params["cape_b"]),
        P=P, Q=Q, C=C, band_rows=Rb, halo_rows=HB)

    def to_windows(t2):         # (B, P, Q*C) -> (nW, S, C)
        if nQ == 1:
            return t2.reshape(nW_total, S, C)       # free
        t = t2.reshape(B, nP, P_sp, nQ, Q_sp, C)
        t = jnp.transpose(t, (0, 1, 3, 2, 4, 5))
        return t.reshape(nW_total, S, C)

    def from_windows(tw):       # (nW, S, C) -> (B, P, Q, C)
        if nQ == 1:
            return tw.reshape(B, P, Q, C)           # free
        t = tw.reshape(B, nP, nQ, P_sp, Q_sp, C)
        t = jnp.transpose(t, (0, 1, 3, 2, 4, 5))
        return t.reshape(B, P, Q, C)

    Wb = _pick_window_batch(nW_total, S, C)
    out_win = window_attention(
        to_windows(q_a2), to_windows(k_a2), to_windows(v2), to_windows(cape2),
        num_heads=num_heads, scale=scale, window_batch=Wb)   # attn(q,k,v) + cape

    out_pq = from_windows(out_win)                  # (B, P, Q, C) f32
    return jnp.transpose(out_pq, perm_out)          # back to NCHW


# ---------------------------------------------------------------------------
# Demo
# ---------------------------------------------------------------------------

if __name__ == "__main__":
    B, dim, resolution = 2, 8, 16
    idx, split_size, num_heads = 0, 4, 2

    key = jax.random.PRNGKey(0)
    kx, kp = jax.random.split(key)
    x = jax.random.normal(kx, (B, dim, resolution, resolution), jnp.float32)
    params = init_casa_params(kp, dim)

    fwd = jax.jit(functools.partial(
        casa_forward, resolution=resolution, idx=idx,
        split_size=split_size, num_heads=num_heads))

    out = fwd(params, x)
    jax.block_until_ready(out)
    assert out.shape == (B, dim, resolution, resolution), out.shape
    assert out.dtype == jnp.float32
    print("KERNEL_OK")
</pallas_src>

<mosaic_0001>
module attributes {stable_mosaic.version = 11 : i64} {
  func.func @kernel(%arg0: i32, %arg1: memref<256x8xbf16, #tpu.memory_space<vmem>>, %arg2: memref<8x24xbf16, #tpu.memory_space<vmem>>, %arg3: memref<1x24xf32, #tpu.memory_space<vmem>>, %arg4: memref<256x8xbf16, #tpu.memory_space<vmem>>, %arg5: memref<256x8xbf16, #tpu.memory_space<vmem>>, %arg6: memref<256x8xbf16, #tpu.memory_space<vmem>>) attributes {dimension_semantics = [#tpu.dimension_semantics<parallel>], iteration_bounds = array<i64: 2>, scalar_prefetch = 0 : i64, scratch_operands = 0 : i64, tpu.core_type = #tpu.core_type<tc>, window_params = [{transform_indices = @transform_0, window_bounds = array<i64: 256, 8>}, {pipeline_mode = #tpu.pipeline_mode<synchronous>, transform_indices = @transform_1, window_bounds = array<i64: 8, 24>}, {pipeline_mode = #tpu.pipeline_mode<synchronous>, transform_indices = @transform_2, window_bounds = array<i64: 1, 24>}, {transform_indices = @transform_3, window_bounds = array<i64: 256, 8>}, {transform_indices = @transform_4, window_bounds = array<i64: 256, 8>}, {transform_indices = @transform_5, window_bounds = array<i64: 256, 8>}]} {
    %c0 = arith.constant 0 : index
    %c0_0 = arith.constant 0 : index
    %0 = vector.load %arg1[%c0, %c0_0] : memref<256x8xbf16, #tpu.memory_space<vmem>>, vector<256x8xbf16>
    %c0_1 = arith.constant 0 : index
    %c0_2 = arith.constant 0 : index
    %1 = vector.load %arg2[%c0_1, %c0_2] : memref<8x24xbf16, #tpu.memory_space<vmem>>, vector<8x24xbf16>
    %cst = arith.constant dense<0.000000e+00> : vector<256x24xf32>
    %2 = tpu.matmul %0, %1, %cst {dimension_numbers = #tpu.dot_dimension_numbers<[1], [0], [0], [1], [0, 0, 1, 1], [], []>} : vector<256x8xbf16>, vector<8x24xbf16>, vector<256x24xf32> -> vector<256x24xf32>
    %c0_3 = arith.constant 0 : index
    %c0_4 = arith.constant 0 : index
    %3 = vector.load %arg3[%c0_3, %c0_4] : memref<1x24xf32, #tpu.memory_space<vmem>>, vector<1x24xf32>
    %4 = vector.broadcast %3 : vector<1x24xf32> to vector<256x24xf32>
    %5 = arith.addf %2, %4 : vector<256x24xf32>
    %6 = vector.extract_strided_slice %5 {offsets = [0, 0], sizes = [256, 8], strides = [1, 1]} : vector<256x24xf32> to vector<256x8xf32>
    %7 = arith.truncf %6 : vector<256x8xf32> to vector<256x8xbf16>
    %c0_5 = arith.constant 0 : index
    %c0_6 = arith.constant 0 : index
    %8 = vector.load %arg4[%c0_5, %c0_6] : memref<256x8xbf16, #tpu.memory_space<vmem>>, vector<256x8xbf16>
    tpu.vector_store %arg4[%c0_5, %c0_6], %7 {strides = array<i32>} : memref<256x8xbf16, #tpu.memory_space<vmem>>, vector<256x8xbf16>,
    %9 = vector.extract_strided_slice %5 {offsets = [0, 8], sizes = [256, 8], strides = [1, 1]} : vector<256x24xf32> to vector<256x8xf32>
    %10 = arith.truncf %9 : vector<256x8xf32> to vector<256x8xbf16>
    %c0_7 = arith.constant 0 : index
    %c0_8 = arith.constant 0 : index
    %11 = vector.load %arg5[%c0_7, %c0_8] : memref<256x8xbf16, #tpu.memory_space<vmem>>, vector<256x8xbf16>
    tpu.vector_store %arg5[%c0_7, %c0_8], %10 {strides = array<i32>} : memref<256x8xbf16, #tpu.memory_space<vmem>>, vector<256x8xbf16>,
    %12 = vector.extract_strided_slice %5 {offsets = [0, 16], sizes = [256, 8], strides = [1, 1]} : vector<256x24xf32> to vector<256x8xf32>
    %13 = arith.truncf %12 : vector<256x8xf32> to vector<256x8xbf16>
    %c0_9 = arith.constant 0 : index
    %c0_10 = arith.constant 0 : index
    %14 = vector.load %arg6[%c0_9, %c0_10] : memref<256x8xbf16, #tpu.memory_space<vmem>>, vector<256x8xbf16>
    tpu.vector_store %arg6[%c0_9, %c0_10], %13 {strides = array<i32>} : memref<256x8xbf16, #tpu.memory_space<vmem>>, vector<256x8xbf16>,
    return
  }
  func.func @transform_0(%arg0: i32) -> (i32, i32) {
    %c0_i32 = arith.constant 0 : i32
    %c0_i32_0 = arith.constant 0 : i32
    return %arg0, %c0_i32 : i32, i32
  }
  func.func @transform_1(%arg0: i32) -> (i32, i32) {
    %c0_i32 = arith.constant 0 : i32
    %c0_i32_0 = arith.constant 0 : i32
    %c0_i32_1 = arith.constant 0 : i32
    return %c0_i32, %c0_i32_0 : i32, i32
  }
  func.func @transform_2(%arg0: i32) -> (i32, i32) {
    %c0_i32 = arith.constant 0 : i32
    %c0_i32_0 = arith.constant 0 : i32
    %c0_i32_1 = arith.constant 0 : i32
    return %c0_i32, %c0_i32_0 : i32, i32
  }
  func.func @transform_3(%arg0: i32) -> (i32, i32) {
    %c0_i32 = arith.constant 0 : i32
    %c0_i32_0 = arith.constant 0 : i32
    return %arg0, %c0_i32 : i32, i32
  }
  func.func @transform_4(%arg0: i32) -> (i32, i32) {
    %c0_i32 = arith.constant 0 : i32
    %c0_i32_0 = arith.constant 0 : i32
    return %arg0, %c0_i32 : i32, i32
  }
  func.func @transform_5(%arg0: i32) -> (i32, i32) {
    %c0_i32 = arith.constant 0 : i32
    %c0_i32_0 = arith.constant 0 : i32
    return %arg0, %c0_i32 : i32, i32
  }
}

module attributes {stable_mosaic.version = 11 : i64} {
  func.func @kernel(%arg0: i32, %arg1: i32, %arg2: memref<1x16x128xbf16, #tpu.memory_space<vmem>>, %arg3: memref<1x16x128xbf16, #tpu.memory_space<vmem>>, %arg4: memref<1x16x128xbf16, #tpu.memory_space<vmem>>, %arg5: memref<1x16x128xbf16, #tpu.memory_space<vmem>>, %arg6: memref<1x16x128xbf16, #tpu.memory_space<vmem>>, %arg7: memref<1x16x128xbf16, #tpu.memory_space<vmem>>, %arg8: memref<1x16x128xbf16, #tpu.memory_space<vmem>>, %arg9: memref<1x16x128xbf16, #tpu.memory_space<vmem>>, %arg10: memref<1x16x128xbf16, #tpu.memory_space<vmem>>, %arg11: memref<5x5x128xf32, #tpu.memory_space<vmem>>, %arg12: memref<5x5x128xf32, #tpu.memory_space<vmem>>, %arg13: memref<5x5x128xf32, #tpu.memory_space<vmem>>, %arg14: memref<1x128xf32, #tpu.memory_space<vmem>>, %arg15: memref<1x128xf32, #tpu.memory_space<vmem>>, %arg16: memref<1x128xf32, #tpu.memory_space<vmem>>, %arg17: memref<1x16x128xbf16, #tpu.memory_space<vmem>>, %arg18: memref<1x16x128xbf16, #tpu.memory_space<vmem>>, %arg19: memref<1x16x128xbf16, #tpu.memory_space<vmem>>, %arg20: memref<20x160xf32, #tpu.memory_space<vmem>>) attributes {dimension_semantics = [#tpu.dimension_semantics<parallel>, #tpu.dimension_semantics<parallel>], iteration_bounds = array<i64: 2, 1>, scalar_prefetch = 0 : i64, scratch_operands = 1 : i64, tpu.core_type = #tpu.core_type<tc>, window_params = [{transform_indices = @transform_0, window_bounds = array<i64: 1, 16, 128>}, {transform_indices = @transform_1, window_bounds = array<i64: 1, 16, 128>}, {transform_indices = @transform_2, window_bounds = array<i64: 1, 16, 128>}, {transform_indices = @transform_3, window_bounds = array<i64: 1, 16, 128>}, {transform_indices = @transform_4, window_bounds = array<i64: 1, 16, 128>}, {transform_indices = @transform_5, window_bounds = array<i64: 1, 16, 128>}, {transform_indices = @transform_6, window_bounds = array<i64: 1, 16, 128>}, {transform_indices = @transform_7, window_bounds = array<i64: 1, 16, 128>}, {transform_indices = @transform_8, window_bounds = array<i64: 1, 16, 128>}, {pipeline_mode = #tpu.pipeline_mode<synchronous>, transform_indices = @transform_9, window_bounds = array<i64: 5, 5, 128>}, {pipeline_mode = #tpu.pipeline_mode<synchronous>, transform_indices = @transform_10, window_bounds = array<i64: 5, 5, 128>}, {pipeline_mode = #tpu.pipeline_mode<synchronous>, transform_indices = @transform_11, window_bounds = array<i64: 5, 5, 128>}, {pipeline_mode = #tpu.pipeline_mode<synchronous>, transform_indices = @transform_12, window_bounds = array<i64: 1, 128>}, {pipeline_mode = #tpu.pipeline_mode<synchronous>, transform_indices = @transform_13, window_bounds = array<i64: 1, 128>}, {pipeline_mode = #tpu.pipeline_mode<synchronous>, transform_indices = @transform_14, window_bounds = array<i64: 1, 128>}, {transform_indices = @transform_15, window_bounds = array<i64: 1, 16, 128>}, {transform_indices = @transform_16, window_bounds = array<i64: 1, 16, 128>}, {transform_indices = @transform_17, window_bounds = array<i64: 1, 16, 128>}]} {
    %cst = arith.constant 0.000000e+00 : f32
    %0 = vector.broadcast %cst : f32 to vector<20x16xf32>
    %c0 = arith.constant 0 : index
    %c0_0 = arith.constant 0 : index
    %1 = vector.load %arg20[%c0, %c0_0] : memref<20x160xf32, #tpu.memory_space<vmem>>, vector<20x16xf32>
    tpu.vector_store %arg20[%c0, %c0_0], %0 {strides = array<i32>} : memref<20x160xf32, #tpu.memory_space<vmem>>, vector<20x16xf32>,
    %c0_1 = arith.constant 0 : index
    %c144 = arith.constant 144 : index
    %2 = vector.load %arg20[%c0_1, %c144] : memref<20x160xf32, #tpu.memory_space<vmem>>, vector<20x16xf32>
    tpu.vector_store %arg20[%c0_1, %c144], %0 {strides = array<i32>} : memref<20x160xf32, #tpu.memory_space<vmem>>, vector<20x16xf32>,
    %c0_2 = arith.constant 0 : index
    %c0_3 = arith.constant 0 : index
    %c0_4 = arith.constant 0 : index
    %3 = vector.load %arg8[%c0_2, %c0_3, %c0_4] : memref<1x16x128xbf16, #tpu.memory_space<vmem>>, vector<1x16x128xbf16>
    %4 = vector.shape_cast %3 : vector<1x16x128xbf16> to vector<16x128xbf16>
    %5 = arith.extf %4 : vector<16x128xbf16> to vector<16x128xf32>
    %c2 = arith.constant 2 : index
    %c16 = arith.constant 16 : index
    %6 = vector.load %arg20[%c2, %c16] : memref<20x160xf32, #tpu.memory_space<vmem>>, vector<16x128xf32>
    tpu.vector_store %arg20[%c2, %c16], %5 {strides = array<i32>} : memref<20x160xf32, #tpu.memory_space<vmem>>, vector<16x128xf32>,
    %c0_i32 = arith.constant 0 : i32
    %7 = arith.cmpi sgt, %arg1, %c0_i32 : i32
    %c0_5 = arith.constant 0 : index
    %c14 = arith.constant 14 : index
    %c0_6 = arith.constant 0 : index
    %8 = vector.load %arg9[%c0_5, %c14, %c0_6] : memref<1x16x128xbf16, #tpu.memory_space<vmem>>, vector<1x2x128xbf16>
    %9 = vector.shape_cast %8 : vector<1x2x128xbf16> to vector<2x128xbf16>
    %10 = arith.extf %9 : vector<2x128xbf16> to vector<2x128xf32>
    %cst_7 = arith.constant 0.000000e+00 : f32
    %11 = vector.broadcast %cst_7 : f32 to vector<2x128xf32>
    %12 = arith.select %7, %10, %11 : vector<2x128xf32>
    %c0_8 = arith.constant 0 : index
    %c16_9 = arith.constant 16 : index
    %13 = vector.load %arg20[%c0_8, %c16_9] : memref<20x160xf32, #tpu.memory_space<vmem>>, vector<2x128xf32>
    tpu.vector_store %arg20[%c0_8, %c16_9], %12 {strides = array<i32>} : memref<20x160xf32, #tpu.memory_space<vmem>>, vector<2x128xf32>,
    %c0_i32_10 = arith.constant 0 : i32
    %14 = arith.cmpi slt, %arg1, %c0_i32_10 : i32
    %c0_11 = arith.constant 0 : index
    %c0_12 = arith.constant 0 : index
    %c0_13 = arith.constant 0 : index
    %15 = vector.load %arg10[%c0_11, %c0_12, %c0_13] : memref<1x16x128xbf16, #tpu.memory_space<vmem>>, vector<1x2x128xbf16>
    %16 = vector.shape_cast %15 : vector<1x2x128xbf16> to vector<2x128xbf16>
    %17 = arith.extf %16 : vector<2x128xbf16> to vector<2x128xf32>
    %cst_14 = arith.constant 0.000000e+00 : f32
    %18 = vector.broadcast %cst_14 : f32 to vector<2x128xf32>
    %19 = arith.select %14, %17, %18 : vector<2x128xf32>
    %c18 = arith.constant 18 : index
    %c16_15 = arith.constant 16 : index
    %20 = vector.load %arg20[%c18, %c16_15] : memref<20x160xf32, #tpu.memory_space<vmem>>, vector<2x128xf32>
    tpu.vector_store %arg20[%c18, %c16_15], %19 {strides = array<i32>} : memref<20x160xf32, #tpu.memory_space<vmem>>, vector<2x128xf32>,
    %cst_16 = arith.constant 0.000000e+00 : f32
    %21 = vector.broadcast %cst_16 : f32 to vector<16x128xf32>
    %c0_17 = arith.constant 0 : index
    %c0_18 = arith.constant 0 : index
    %22 = vector.load %arg16[%c0_17, %c0_18] : memref<1x128xf32, #tpu.memory_space<vmem>>, vector<1x128xf32>
    %23 = vector.broadcast %22 : vector<1x128xf32> to vector<16x128xf32>
    %24 = arith.addf %21, %23 : vector<16x128xf32>
    %c0_19 = arith.constant 0 : index
    %c0_20 = arith.constant 0 : index
    %c0_21 = arith.constant 0 : index
    %25 = vector.load %arg13[%c0_19, %c0_20, %c0_21] : memref<5x5x128xf32, #tpu.memory_space<vmem>>, vector<1x1x128xf32>
    %26 = vector.shape_cast %25 : vector<1x1x128xf32> to vector<1x128xf32>
    %c0_22 = arith.constant 0 : index
    %c0_23 = arith.constant 0 : index
    %27 = vector.load %arg20[%c0_22, %c0_23] : memref<20x160xf32, #tpu.memory_space<vmem>>, vector<16x128xf32>
    %28 = vector.broadcast %26 : vector<1x128xf32> to vector<16x128xf32>
    %29 = arith.mulf %27, %28 : vector<16x128xf32>
    %30 = arith.addf %24, %29 : vector<16x128xf32>
    %c0_24 = arith.constant 0 : index
    %c1 = arith.constant 1 : index
    %c0_25 = arith.constant 0 : index
    %31 = vector.load %arg13[%c0_24, %c1, %c0_25] : memref<5x5x128xf32, #tpu.memory_space<vmem>>, vector<1x1x128xf32>
    %32 = vector.shape_cast %31 : vector<1x1x128xf32> to vector<1x128xf32>
    %c0_26 = arith.constant 0 : index
    %c8 = arith.constant 8 : index
    %33 = vector.load %arg20[%c0_26, %c8] : memref<20x160xf32, #tpu.memory_space<vmem>>, vector<16x128xf32>
    %34 = vector.broadcast %32 : vector<1x128xf32> to vector<16x128xf32>
    %35 = arith.mulf %33, %34 : vector<16x128xf32>
    %36 = arith.addf %30, %35 : vector<16x128xf32>
    %c0_27 = arith.constant 0 : index
    %c2_28 = arith.constant 2 : index
    %c0_29 = arith.constant 0 : index
    %37 = vector.load %arg13[%c0_27, %c2_28, %c0_29] : memref<5x5x128xf32, #tpu.memory_space<vmem>>, vector<1x1x128xf32>
    %38 = vector.shape_cast %37 : vector<1x1x128xf32> to vector<1x128xf32>
    %c0_30 = arith.constant 0 : index
    %c16_31 = arith.constant 16 : index
    %39 = vector.load %arg20[%c0_30, %c16_31] : memref<20x160xf32, #tpu.memory_space<vmem>>, vector<16x128xf32>
    %40 = vector.broadcast %38 : vector<1x128xf32> to vector<16x128xf32>
    %41 = arith.mulf %39, %40 : vector<16x128xf32>
    %42 = arith.addf %36, %41 : vector<16x128xf32>
    %c0_32 = arith.constant 0 : index
    %c3 = arith.constant 3 : index
    %c0_33 = arith.constant 0 : index
    %43 = vector.load %arg13[%c0_32, %c3, %c0_33] : memref<5x5x128xf32, #tpu.memory_space<vmem>>, vector<1x1x128xf32>
    %44 = vector.shape_cast %43 : vector<1x1x128xf32> to vector<1x128xf32>
    %c0_34 = arith.constant 0 : index
    %c24 = arith.constant 24 : index
    %45 = vector.load %arg20[%c0_34, %c24] : memref<20x160xf32, #tpu.memory_space<vmem>>, vector<16x128xf32>
    %46 = vector.broadcast %44 : vector<1x128xf32> to vector<16x128xf32>
    %47 = arith.mulf %45, %46 : vector<16x128xf32>
    %48 = arith.addf %42, %47 : vector<16x128xf32>
    %c0_35 = arith.constant 0 : index
    %c4 = arith.constant 4 : index
    %c0_36 = arith.constant 0 : index
    %49 = vector.load %arg13[%c0_35, %c4, %c0_36] : memref<5x5x128xf32, #tpu.memory_space<vmem>>, vector<1x1x128xf32>
    %50 = vector.shape_cast %49 : vector<1x1x128xf32> to vector<1x128xf32>
    %c0_37 = arith.constant 0 : index
    %c32 = arith.constant 32 : index
    %51 = vector.load %arg20[%c0_37, %c32] : memref<20x160xf32, #tpu.memory_space<vmem>>, vector<16x128xf32>
    %52 = vector.broadcast %50 : vector<1x128xf32> to vector<16x128xf32>
    %53 = arith.mulf %51, %52 : vector<16x128xf32>
    %54 = arith.addf %48, %53 : vector<16x128xf32>
    %c1_38 = arith.constant 1 : index
    %c0_39 = arith.constant 0 : index
    %c0_40 = arith.constant 0 : index
    %55 = vector.load %arg13[%c1_38, %c0_39, %c0_40] : memref<5x5x128xf32, #tpu.memory_space<vmem>>, vector<1x1x128xf32>
    %56 = vector.shape_cast %55 : vector<1x1x128xf32> to vector<1x128xf32>
    %c1_41 = arith.constant 1 : index
    %c0_42 = arith.constant 0 : index
    %57 = vector.load %arg20[%c1_41, %c0_42] : memref<20x160xf32, #tpu.memory_space<vmem>>, vector<16x128xf32>
    %58 = vector.broadcast %56 : vector<1x128xf32> to vector<16x128xf32>
    %59 = arith.mulf %57, %58 : vector<16x128xf32>
    %60 = arith.addf %54, %59 : vector<16x128xf32>
    %c1_43 = arith.constant 1 : index
    %c1_44 = arith.constant 1 : index
    %c0_45 = arith.constant 0 : index
    %61 = vector.load %arg13[%c1_43, %c1_44, %c0_45] : memref<5x5x128xf32, #tpu.memory_space<vmem>>, vector<1x1x128xf32>
    %62 = vector.shape_cast %61 : vector<1x1x128xf32> to vector<1x128xf32>
    %c1_46 = arith.constant 1 : index
    %c8_47 = arith.constant 8 : index
    %63 = vector.load %arg20[%c1_46, %c8_47] : memref<20x160xf32, #tpu.memory_space<vmem>>, vector<16x128xf32>
    %64 = vector.broadcast %62 : vector<1x128xf32> to vector<16x128xf32>
    %65 = arith.mulf %63, %64 : vector<16x128xf32>
    %66 = arith.addf %60, %65 : vector<16x128xf32>
    %c1_48 = arith.constant 1 : index
    %c2_49 = arith.constant 2 : index
    %c0_50 = arith.constant 0 : index
    %67 = vector.load %arg13[%c1_48, %c2_49, %c0_50] : memref<5x5x128xf32, #tpu.memory_space<vmem>>, vector<1x1x128xf32>
    %68 = vector.shape_cast %67 : vector<1x1x128xf32> to vector<1x128xf32>
    %c1_51 = arith.constant 1 : index
    %c16_52 = arith.constant 16 : index
    %69 = vector.load %arg20[%c1_51, %c16_52] : memref<20x160xf32, #tpu.memory_space<vmem>>, vector<16x128xf32>
    %70 = vector.broadcast %68 : vector<1x128xf32> to vector<16x128xf32>
    %71 = arith.mulf %69, %70 : vector<16x128xf32>
    %72 = arith.addf %66, %71 : vector<16x128xf32>
    %c1_53 = arith.constant 1 : index
    %c3_54 = arith.constant 3 : index
    %c0_55 = arith.constant 0 : index
    %73 = vector.load %arg13[%c1_53, %c3_54, %c0_55] : memref<5x5x128xf32, #tpu.memory_space<vmem>>, vector<1x1x128xf32>
    %74 = vector.shape_cast %73 : vector<1x1x128xf32> to vector<1x128xf32>
    %c1_56 = arith.constant 1 : index
    %c24_57 = arith.constant 24 : index
    %75 = vector.load %arg20[%c1_56, %c24_57] : memref<20x160xf32, #tpu.memory_space<vmem>>, vector<16x128xf32>
    %76 = vector.broadcast %74 : vector<1x128xf32> to vector<16x128xf32>
    %77 = arith.mulf %75, %76 : vector<16x128xf32>
    %78 = arith.addf %72, %77 : vector<16x128xf32>
    %c1_58 = arith.constant 1 : index
    %c4_59 = arith.constant 4 : index
    %c0_60 = arith.constant 0 : index
    %79 = vector.load %arg13[%c1_58, %c4_59, %c0_60] : memref<5x5x128xf32, #tpu.memory_space<vmem>>, vector<1x1x128xf32>
    %80 = vector.shape_cast %79 : vector<1x1x128xf32> to vector<1x128xf32>
    %c1_61 = arith.constant 1 : index
    %c32_62 = arith.constant 32 : index
    %81 = vector.load %arg20[%c1_61, %c32_62] : memref<20x160xf32, #tpu.memory_space<vmem>>, vector<16x128xf32>
    %82 = vector.broadcast %80 : vector<1x128xf32> to vector<16x128xf32>
    %83 = arith.mulf %81, %82 : vector<16x128xf32>
    %84 = arith.addf %78, %83 : vector<16x128xf32>
    %c2_63 = arith.constant 2 : index
    %c0_64 = arith.constant 0 : index
    %c0_65 = arith.constant 0 : index
    %85 = vector.load %arg13[%c2_63, %c0_64, %c0_65] : memref<5x5x128xf32, #tpu.memory_space<vmem>>, vector<1x1x128xf32>
    %86 = vector.shape_cast %85 : vector<1x1x128xf32> to vector<1x128xf32>
    %c2_66 = arith.constant 2 : index
    %c0_67 = arith.constant 0 : index
    %87 = vector.load %arg20[%c2_66, %c0_67] : memref<20x160xf32, #tpu.memory_space<vmem>>, vector<16x128xf32>
    %88 = vector.broadcast %86 : vector<1x128xf32> to vector<16x128xf32>
    %89 = arith.mulf %87, %88 : vector<16x128xf32>
    %90 = arith.addf %84, %89 : vector<16x128xf32>
    %c2_68 = arith.constant 2 : index
    %c1_69 = arith.constant 1 : index
    %c0_70 = arith.constant 0 : index
    %91 = vector.load %arg13[%c2_68, %c1_69, %c0_70] : memref<5x5x128xf32, #tpu.memory_space<vmem>>, vector<1x1x128xf32>
    %92 = vector.shape_cast %91 : vector<1x1x128xf32> to vector<1x128xf32>
    %c2_71 = arith.constant 2 : index
    %c8_72 = arith.constant 8 : index
    %93 = vector.load %arg20[%c2_71, %c8_72] : memref<20x160xf32, #tpu.memory_space<vmem>>, vector<16x128xf32>
    %94 = vector.broadcast %92 : vector<1x128xf32> to vector<16x128xf32>
    %95 = arith.mulf %93, %94 : vector<16x128xf32>
    %96 = arith.addf %90, %95 : vector<16x128xf32>
    %c2_73 = arith.constant 2 : index
    %c2_74 = arith.constant 2 : index
    %c0_75 = arith.constant 0 : index
    %97 = vector.load %arg13[%c2_73, %c2_74, %c0_75] : memref<5x5x128xf32, #tpu.memory_space<vmem>>, vector<1x1x128xf32>
    %98 = vector.shape_cast %97 : vector<1x1x128xf32> to vector<1x128xf32>
    %c2_76 = arith.constant 2 : index
    %c16_77 = arith.constant 16 : index
    %99 = vector.load %arg20[%c2_76, %c16_77] : memref<20x160xf32, #tpu.memory_space<vmem>>, vector<16x128xf32>
    %100 = vector.broadcast %98 : vector<1x128xf32> to vector<16x128xf32>
    %101 = arith.mulf %99, %100 : vector<16x128xf32>
    %102 = arith.addf %96, %101 : vector<16x128xf32>
    %c2_78 = arith.constant 2 : index
    %c3_79 = arith.constant 3 : index
    %c0_80 = arith.constant 0 : index
    %103 = vector.load %arg13[%c2_78, %c3_79, %c0_80] : memref<5x5x128xf32, #tpu.memory_space<vmem>>, vector<1x1x128xf32>
    %104 = vector.shape_cast %103 : vector<1x1x128xf32> to vector<1x128xf32>
    %c2_81 = arith.constant 2 : index
    %c24_82 = arith.constant 24 : index
    %105 = vector.load %arg20[%c2_81, %c24_82] : memref<20x160xf32, #tpu.memory_space<vmem>>, vector<16x128xf32>
    %106 = vector.broadcast %104 : vector<1x128xf32> to vector<16x128xf32>
    %107 = arith.mulf %105, %106 : vector<16x128xf32>
    %108 = arith.addf %102, %107 : vector<16x128xf32>
    %c2_83 = arith.constant 2 : index
    %c4_84 = arith.constant 4 : index
    %c0_85 = arith.constant 0 : index
    %109 = vector.load %arg13[%c2_83, %c4_84, %c0_85] : memref<5x5x128xf32, #tpu.memory_space<vmem>>, vector<1x1x128xf32>
    %110 = vector.shape_cast %109 : vector<1x1x128xf32> to vector<1x128xf32>
    %c2_86 = arith.constant 2 : index
    %c32_87 = arith.constant 32 : index
    %111 = vector.load %arg20[%c2_86, %c32_87] : memref<20x160xf32, #tpu.memory_space<vmem>>, vector<16x128xf32>
    %112 = vector.broadcast %110 : vector<1x128xf32> to vector<16x128xf32>
    %113 = arith.mulf %111, %112 : vector<16x128xf32>
    %114 = arith.addf %108, %113 : vector<16x128xf32>
    %c3_88 = arith.constant 3 : index
    %c0_89 = arith.constant 0 : index
    %c0_90 = arith.constant 0 : index
    %115 = vector.load %arg13[%c3_88, %c0_89, %c0_90] : memref<5x5x128xf32, #tpu.memory_space<vmem>>, vector<1x1x128xf32>
    %116 = vector.shape_cast %115 : vector<1x1x128xf32> to vector<1x128xf32>
    %c3_91 = arith.constant 3 : index
    %c0_92 = arith.constant 0 : index
    %117 = vector.load %arg20[%c3_91, %c0_92] : memref<20x160xf32, #tpu.memory_space<vmem>>, vector<16x128xf32>
    %118 = vector.broadcast %116 : vector<1x128xf32> to vector<16x128xf32>
    %119 = arith.mulf %117, %118 : vector<16x128xf32>
    %120 = arith.addf %114, %119 : vector<16x128xf32>
    %c3_93 = arith.constant 3 : index
    %c1_94 = arith.constant 1 : index
    %c0_95 = arith.constant 0 : index
    %121 = vector.load %arg13[%c3_93, %c1_94, %c0_95] : memref<5x5x128xf32, #tpu.memory_space<vmem>>, vector<1x1x128xf32>
    %122 = vector.shape_cast %121 : vector<1x1x128xf32> to vector<1x128xf32>
    %c3_96 = arith.constant 3 : index
    %c8_97 = arith.constant 8 : index
    %123 = vector.load %arg20[%c3_96, %c8_97] : memref<20x160xf32, #tpu.memory_space<vmem>>, vector<16x128xf32>
    %124 = vector.broadcast %122 : vector<1x128xf32> to vector<16x128xf32>
    %125 = arith.mulf %123, %124 : vector<16x128xf32>
    %126 = arith.addf %120, %125 : vector<16x128xf32>
    %c3_98 = arith.constant 3 : index
    %c2_99 = arith.constant 2 : index
    %c0_100 = arith.constant 0 : index
    %127 = vector.load %arg13[%c3_98, %c2_99, %c0_100] : memref<5x5x128xf32, #tpu.memory_space<vmem>>, vector<1x1x128xf32>
    %128 = vector.shape_cast %127 : vector<1x1x128xf32> to vector<1x128xf32>
    %c3_101 = arith.constant 3 : index
    %c16_102 = arith.constant 16 : index
    %129 = vector.load %arg20[%c3_101, %c16_102] : memref<20x160xf32, #tpu.memory_space<vmem>>, vector<16x128xf32>
    %130 = vector.broadcast %128 : vector<1x128xf32> to vector<16x128xf32>
    %131 = arith.mulf %129, %130 : vector<16x128xf32>
    %132 = arith.addf %126, %131 : vector<16x128xf32>
    %c3_103 = arith.constant 3 : index
    %c3_104 = arith.constant 3 : index
    %c0_105 = arith.constant 0 : index
    %133 = vector.load %arg13[%c3_103, %c3_104, %c0_105] : memref<5x5x128xf32, #tpu.memory_space<vmem>>, vector<1x1x128xf32>
    %134 = vector.shape_cast %133 : vector<1x1x128xf32> to vector<1x128xf32>
    %c3_106 = arith.constant 3 : index
    %c24_107 = arith.constant 24 : index
    %135 = vector.load %arg20[%c3_106, %c24_107] : memref<20x160xf32, #tpu.memory_space<vmem>>, vector<16x128xf32>
    %136 = vector.broadcast %134 : vector<1x128xf32> to vector<16x128xf32>
    %137 = arith.mulf %135, %136 : vector<16x128xf32>
    %138 = arith.addf %132, %137 : vector<16x128xf32>
    %c3_108 = arith.constant 3 : index
    %c4_109 = arith.constant 4 : index
    %c0_110 = arith.constant 0 : index
    %139 = vector.load %arg13[%c3_108, %c4_109, %c0_110] : memref<5x5x128xf32, #tpu.memory_space<vmem>>, vector<1x1x128xf32>
    %140 = vector.shape_cast %139 : vector<1x1x128xf32> to vector<1x128xf32>
    %c3_111 = arith.constant 3 : index
    %c32_112 = arith.constant 32 : index
    %141 = vector.load %arg20[%c3_111, %c32_112] : memref<20x160xf32, #tpu.memory_space<vmem>>, vector<16x128xf32>
    %142 = vector.broadcast %140 : vector<1x128xf32> to vector<16x128xf32>
    %143 = arith.mulf %141, %142 : vector<16x128xf32>
    %144 = arith.addf %138, %143 : vector<16x128xf32>
    %c4_113 = arith.constant 4 : index
    %c0_114 = arith.constant 0 : index
    %c0_115 = arith.constant 0 : index
    %145 = vector.load %arg13[%c4_113, %c0_114, %c0_115] : memref<5x5x128xf32, #tpu.memory_space<vmem>>, vector<1x1x128xf32>
    %146 = vector.shape_cast %145 : vector<1x1x128xf32> to vector<1x128xf32>
    %c4_116 = arith.constant 4 : index
    %c0_117 = arith.constant 0 : index
    %147 = vector.load %arg20[%c4_116, %c0_117] : memref<20x160xf32, #tpu.memory_space<vmem>>, vector<16x128xf32>
    %148 = vector.broadcast %146 : vector<1x128xf32> to vector<16x128xf32>
    %149 = arith.mulf %147, %148 : vector<16x128xf32>
    %150 = arith.addf %144, %149 : vector<16x128xf32>
    %c4_118 = arith.constant 4 : index
    %c1_119 = arith.constant 1 : index
    %c0_120 = arith.constant 0 : index
    %151 = vector.load %arg13[%c4_118, %c1_119, %c0_120] : memref<5x5x128xf32, #tpu.memory_space<vmem>>, vector<1x1x128xf32>
    %152 = vector.shape_cast %151 : vector<1x1x128xf32> to vector<1x128xf32>
    %c4_121 = arith.constant 4 : index
    %c8_122 = arith.constant 8 : index
    %153 = vector.load %arg20[%c4_121, %c8_122] : memref<20x160xf32, #tpu.memory_space<vmem>>, vector<16x128xf32>
    %154 = vector.broadcast %152 : vector<1x128xf32> to vector<16x128xf32>
    %155 = arith.mulf %153, %154 : vector<16x128xf32>
    %156 = arith.addf %150, %155 : vector<16x128xf32>
    %c4_123 = arith.constant 4 : index
    %c2_124 = arith.constant 2 : index
    %c0_125 = arith.constant 0 : index
    %157 = vector.load %arg13[%c4_123, %c2_124, %c0_125] : memref<5x5x128xf32, #tpu.memory_space<vmem>>, vector<1x1x128xf32>
    %158 = vector.shape_cast %157 : vector<1x1x128xf32> to vector<1x128xf32>
    %c4_126 = arith.constant 4 : index
    %c16_127 = arith.constant 16 : index
    %159 = vector.load %arg20[%c4_126, %c16_127] : memref<20x160xf32, #tpu.memory_space<vmem>>, vector<16x128xf32>
    %160 = vector.broadcast %158 : vector<1x128xf32> to vector<16x128xf32>
    %161 = arith.mulf %159, %160 : vector<16x128xf32>
    %162 = arith.addf %156, %161 : vector<16x128xf32>
    %c4_128 = arith.constant 4 : index
    %c3_129 = arith.constant 3 : index
    %c0_130 = arith.constant 0 : index
    %163 = vector.load %arg13[%c4_128, %c3_129, %c0_130] : memref<5x5x128xf32, #tpu.memory_space<vmem>>, vector<1x1x128xf32>
    %164 = vector.shape_cast %163 : vector<1x1x128xf32> to vector<1x128xf32>
    %c4_131 = arith.constant 4 : index
    %c24_132 = arith.constant 24 : index
    %165 = vector.load %arg20[%c4_131, %c24_132] : memref<20x160xf32, #tpu.memory_space<vmem>>, vector<16x128xf32>
    %166 = vector.broadcast %164 : vector<1x128xf32> to vector<16x128xf32>
    %167 = arith.mulf %165, %166 : vector<16x128xf32>
    %168 = arith.addf %162, %167 : vector<16x128xf32>
    %c4_133 = arith.constant 4 : index
    %c4_134 = arith.constant 4 : index
    %c0_135 = arith.constant 0 : index
    %169 = vector.load %arg13[%c4_133, %c4_134, %c0_135] : memref<5x5x128xf32, #tpu.memory_space<vmem>>, vector<1x1x128xf32>
    %170 = vector.shape_cast %169 : vector<1x1x128xf32> to vector<1x128xf32>
    %c4_136 = arith.constant 4 : index
    %c32_137 = arith.constant 32 : index
    %171 = vector.load %arg20[%c4_136, %c32_137] : memref<20x160xf32, #tpu.memory_space<vmem>>, vector<16x128xf32>
    %172 = vector.broadcast %170 : vector<1x128xf32> to vector<16x128xf32>
    %173 = arith.mulf %171, %172 : vector<16x128xf32>
    %174 = arith.addf %168, %173 : vector<16x128xf32>
    %175 = arith.truncf %174 : vector<16x128xf32> to vector<16x128xbf16>
    %c0_138 = arith.constant 0 : index
    %c0_139 = arith.constant 0 : index
    %c0_140 = arith.constant 0 : index
    %176 = vector.load %arg19[%c0_138, %c0_139, %c0_140] : memref<1x16x128xbf16, #tpu.memory_space<vmem>>, vector<1x16x128xbf16>
    %177 = vector.shape_cast %176 : vector<1x16x128xbf16> to vector<16x128xbf16>
    %178 = vector.shape_cast %175 : vector<16x128xbf16> to vector<1x16x128xbf16>
    tpu.vector_store %arg19[%c0_138, %c0_139, %c0_140], %178 {strides = array<i32>} : memref<1x16x128xbf16, #tpu.memory_space<vmem>>, vector<1x16x128xbf16>,
    %c0_141 = arith.constant 0 : index
    %c0_142 = arith.constant 0 : index
    %c0_143 = arith.constant 0 : index
    %179 = vector.load %arg2[%c0_141, %c0_142, %c0_143] : memref<1x16x128xbf16, #tpu.memory_space<vmem>>, vector<1x16x128xbf16>
    %180 = vector.shape_cast %179 : vector<1x16x128xbf16> to vector<16x128xbf16>
    %181 = arith.extf %180 : vector<16x128xbf16> to vector<16x128xf32>
    %c2_144 = arith.constant 2 : index
    %c16_145 = arith.constant 16 : index
    %182 = vector.load %arg20[%c2_144, %c16_145] : memref<20x160xf32, #tpu.memory_space<vmem>>, vector<16x128xf32>
    tpu.vector_store %arg20[%c2_144, %c16_145], %181 {strides = array<i32>} : memref<20x160xf32, #tpu.memory_space<vmem>>, vector<16x128xf32>,
    %c0_i32_146 = arith.constant 0 : i32
    %183 = arith.cmpi sgt, %arg1, %c0_i32_146 : i32
    %c0_147 = arith.constant 0 : index
    %c14_148 = arith.constant 14 : index
    %c0_149 = arith.constant 0 : index
    %184 = vector.load %arg3[%c0_147, %c14_148, %c0_149] : memref<1x16x128xbf16, #tpu.memory_space<vmem>>, vector<1x2x128xbf16>
    %185 = vector.shape_cast %184 : vector<1x2x128xbf16> to vector<2x128xbf16>
    %186 = arith.extf %185 : vector<2x128xbf16> to vector<2x128xf32>
    %cst_150 = arith.constant 0.000000e+00 : f32
    %187 = vector.broadcast %cst_150 : f32 to vector<2x128xf32>
    %188 = arith.select %183, %186, %187 : vector<2x128xf32>
    %c0_151 = arith.constant 0 : index
    %c16_152 = arith.constant 16 : index
    %189 = vector.load %arg20[%c0_151, %c16_152] : memref<20x160xf32, #tpu.memory_space<vmem>>, vector<2x128xf32>
    tpu.vector_store %arg20[%c0_151, %c16_152], %188 {strides = array<i32>} : memref<20x160xf32, #tpu.memory_space<vmem>>, vector<2x128xf32>,
    %c0_i32_153 = arith.constant 0 : i32
    %190 = arith.cmpi slt, %arg1, %c0_i32_153 : i32
    %c0_154 = arith.constant 0 : index
    %c0_155 = arith.constant 0 : index
    %c0_156 = arith.constant 0 : index
    %191 = vector.load %arg4[%c0_154, %c0_155, %c0_156] : memref<1x16x128xbf16, #tpu.memory_space<vmem>>, vector<1x2x128xbf16>
    %192 = vector.shape_cast %191 : vector<1x2x128xbf16> to vector<2x128xbf16>
    %193 = arith.extf %192 : vector<2x128xbf16> to vector<2x128xf32>
    %cst_157 = arith.constant 0.000000e+00 : f32
    %194 = vector.broadcast %cst_157 : f32 to vector<2x128xf32>
    %195 = arith.select %190, %193, %194 : vector<2x128xf32>
    %c18_158 = arith.constant 18 : index
    %c16_159 = arith.constant 16 : index
    %196 = vector.load %arg20[%c18_158, %c16_159] : memref<20x160xf32, #tpu.memory_space<vmem>>, vector<2x128xf32>
    tpu.vector_store %arg20[%c18_158, %c16_159], %195 {strides = array<i32>} : memref<20x160xf32, #tpu.memory_space<vmem>>, vector<2x128xf32>,
    %cst_160 = arith.constant 0.000000e+00 : f32
    %197 = vector.broadcast %cst_160 : f32 to vector<16x128xf32>
    %c0_161 = arith.constant 0 : index
    %c0_162 = arith.constant 0 : index
    %198 = vector.load %arg14[%c0_161, %c0_162] : memref<1x128xf32, #tpu.memory_space<vmem>>, vector<1x128xf32>
    %199 = vector.broadcast %198 : vector<1x128xf32> to vector<16x128xf32>
    %200 = arith.addf %197, %199 : vector<16x128xf32>
    %c0_163 = arith.constant 0 : index
    %c0_164 = arith.constant 0 : index
    %c0_165 = arith.constant 0 : index
    %201 = vector.load %arg11[%c0_163, %c0_164, %c0_165] : memref<5x5x128xf32, #tpu.memory_space<vmem>>, vector<1x1x128xf32>
    %202 = vector.shape_cast %201 : vector<1x1x128xf32> to vector<1x128xf32>
    %c0_166 = arith.constant 0 : index
    %c0_167 = arith.constant 0 : index
    %203 = vector.load %arg20[%c0_166, %c0_167] : memref<20x160xf32, #tpu.memory_space<vmem>>, vector<16x128xf32>
    %204 = vector.broadcast %202 : vector<1x128xf32> to vector<16x128xf32>
    %205 = arith.mulf %203, %204 : vector<16x128xf32>
    %206 = arith.addf %200, %205 : vector<16x128xf32>
    %c0_168 = arith.constant 0 : index
    %c1_169 = arith.constant 1 : index
    %c0_170 = arith.constant 0 : index
    %207 = vector.load %arg11[%c0_168, %c1_169, %c0_170] : memref<5x5x128xf32, #tpu.memory_space<vmem>>, vector<1x1x128xf32>
    %208 = vector.shape_cast %207 : vector<1x1x128xf32> to vector<1x128xf32>
    %c0_171 = arith.constant 0 : index
    %c8_172 = arith.constant 8 : index
    %209 = vector.load %arg20[%c0_171, %c8_172] : memref<20x160xf32, #tpu.memory_space<vmem>>, vector<16x128xf32>
    %210 = vector.broadcast %208 : vector<1x128xf32> to vector<16x128xf32>
    %211 = arith.mulf %209, %210 : vector<16x128xf32>
    %212 = arith.addf %206, %211 : vector<16x128xf32>
    %c0_173 = arith.constant 0 : index
    %c2_174 = arith.constant 2 : index
    %c0_175 = arith.constant 0 : index
    %213 = vector.load %arg11[%c0_173, %c2_174, %c0_175] : memref<5x5x128xf32, #tpu.memory_space<vmem>>, vector<1x1x128xf32>
    %214 = vector.shape_cast %213 : vector<1x1x128xf32> to vector<1x128xf32>
    %c0_176 = arith.constant 0 : index
    %c16_177 = arith.constant 16 : index
    %215 = vector.load %arg20[%c0_176, %c16_177] : memref<20x160xf32, #tpu.memory_space<vmem>>, vector<16x128xf32>
    %216 = vector.broadcast %214 : vector<1x128xf32> to vector<16x128xf32>
    %217 = arith.mulf %215, %216 : vector<16x128xf32>
    %218 = arith.addf %212, %217 : vector<16x128xf32>
    %c0_178 = arith.constant 0 : index
    %c3_179 = arith.constant 3 : index
    %c0_180 = arith.constant 0 : index
    %219 = vector.load %arg11[%c0_178, %c3_179, %c0_180] : memref<5x5x128xf32, #tpu.memory_space<vmem>>, vector<1x1x128xf32>
    %220 = vector.shape_cast %219 : vector<1x1x128xf32> to vector<1x128xf32>
    %c0_181 = arith.constant 0 : index
    %c24_182 = arith.constant 24 : index
    %221 = vector.load %arg20[%c0_181, %c24_182] : memref<20x160xf32, #tpu.memory_space<vmem>>, vector<16x128xf32>
    %222 = vector.broadcast %220 : vector<1x128xf32> to vector<16x128xf32>
    %223 = arith.mulf %221, %222 : vector<16x128xf32>
    %224 = arith.addf %218, %223 : vector<16x128xf32>
    %c0_183 = arith.constant 0 : index
    %c4_184 = arith.constant 4 : index
    %c0_185 = arith.constant 0 : index
    %225 = vector.load %arg11[%c0_183, %c4_184, %c0_185] : memref<5x5x128xf32, #tpu.memory_space<vmem>>, vector<1x1x128xf32>
    %226 = vector.shape_cast %225 : vector<1x1x128xf32> to vector<1x128xf32>
    %c0_186 = arith.constant 0 : index
    %c32_187 = arith.constant 32 : index
    %227 = vector.load %arg20[%c0_186, %c32_187] : memref<20x160xf32, #tpu.memory_space<vmem>>, vector<16x128xf32>
    %228 = vector.broadcast %226 : vector<1x128xf32> to vector<16x128xf32>
    %229 = arith.mulf %227, %228 : vector<16x128xf32>
    %230 = arith.addf %224, %229 : vector<16x128xf32>
    %c1_188 = arith.constant 1 : index
    %c0_189 = arith.constant 0 : index
    %c0_190 = arith.constant 0 : index
    %231 = vector.load %arg11[%c1_188, %c0_189, %c0_190] : memref<5x5x128xf32, #tpu.memory_space<vmem>>, vector<1x1x128xf32>
    %232 = vector.shape_cast %231 : vector<1x1x128xf32> to vector<1x128xf32>
    %c1_191 = arith.constant 1 : index
    %c0_192 = arith.constant 0 : index
    %233 = vector.load %arg20[%c1_191, %c0_192] : memref<20x160xf32, #tpu.memory_space<vmem>>, vector<16x128xf32>
    %234 = vector.broadcast %232 : vector<1x128xf32> to vector<16x128xf32>
    %235 = arith.mulf %233, %234 : vector<16x128xf32>
    %236 = arith.addf %230, %235 : vector<16x128xf32>
    %c1_193 = arith.constant 1 : index
    %c1_194 = arith.constant 1 : index
    %c0_195 = arith.constant 0 : index
    %237 = vector.load %arg11[%c1_193, %c1_194, %c0_195] : memref<5x5x128xf32, #tpu.memory_space<vmem>>, vector<1x1x128xf32>
    %238 = vector.shape_cast %237 : vector<1x1x128xf32> to vector<1x128xf32>
    %c1_196 = arith.constant 1 : index
    %c8_197 = arith.constant 8 : index
    %239 = vector.load %arg20[%c1_196, %c8_197] : memref<20x160xf32, #tpu.memory_space<vmem>>, vector<16x128xf32>
    %240 = vector.broadcast %238 : vector<1x128xf32> to vector<16x128xf32>
    %241 = arith.mulf %239, %240 : vector<16x128xf32>
    %242 = arith.addf %236, %241 : vector<16x128xf32>
    %c1_198 = arith.constant 1 : index
    %c2_199 = arith.constant 2 : index
    %c0_200 = arith.constant 0 : index
    %243 = vector.load %arg11[%c1_198, %c2_199, %c0_200] : memref<5x5x128xf32, #tpu.memory_space<vmem>>, vector<1x1x128xf32>
    %244 = vector.shape_cast %243 : vector<1x1x128xf32> to vector<1x128xf32>
    %c1_201 = arith.constant 1 : index
    %c16_202 = arith.constant 16 : index
    %245 = vector.load %arg20[%c1_201, %c16_202] : memref<20x160xf32, #tpu.memory_space<vmem>>, vector<16x128xf32>
    %246 = vector.broadcast %244 : vector<1x128xf32> to vector<16x128xf32>
    %247 = arith.mulf %245, %246 : vector<16x128xf32>
    %248 = arith.addf %242, %247 : vector<16x128xf32>
    %c1_203 = arith.constant 1 : index
    %c3_204 = arith.constant 3 : index
    %c0_205 = arith.constant 0 : index
    %249 = vector.load %arg11[%c1_203, %c3_204, %c0_205] : memref<5x5x128xf32, #tpu.memory_space<vmem>>, vector<1x1x128xf32>
    %250 = vector.shape_cast %249 : vector<1x1x128xf32> to vector<1x128xf32>
    %c1_206 = arith.constant 1 : index
    %c24_207 = arith.constant 24 : index
    %251 = vector.load %arg20[%c1_206, %c24_207] : memref<20x160xf32, #tpu.memory_space<vmem>>, vector<16x128xf32>
    %252 = vector.broadcast %250 : vector<1x128xf32> to vector<16x128xf32>
    %253 = arith.mulf %251, %252 : vector<16x128xf32>
    %254 = arith.addf %248, %253 : vector<16x128xf32>
    %c1_208 = arith.constant 1 : index
    %c4_209 = arith.constant 4 : index
    %c0_210 = arith.constant 0 : index
    %255 = vector.load %arg11[%c1_208, %c4_209, %c0_210] : memref<5x5x128xf32, #tpu.memory_space<vmem>>, vector<1x1x128xf32>
    %256 = vector.shape_cast %255 : vector<1x1x128xf32> to vector<1x128xf32>
    %c1_211 = arith.constant 1 : index
    %c32_212 = arith.constant 32 : index
    %257 = vector.load %arg20[%c1_211, %c32_212] : memref<20x160xf32, #tpu.memory_space<vmem>>, vector<16x128xf32>
    %258 = vector.broadcast %256 : vector<1x128xf32> to vector<16x128xf32>
    %259 = arith.mulf %257, %258 : vector<16x128xf32>
    %260 = arith.addf %254, %259 : vector<16x128xf32>
    %c2_213 = arith.constant 2 : index
    %c0_214 = arith.constant 0 : index
    %c0_215 = arith.constant 0 : index
    %261 = vector.load %arg11[%c2_213, %c0_214, %c0_215] : memref<5x5x128xf32, #tpu.memory_space<vmem>>, vector<1x1x128xf32>
    %262 = vector.shape_cast %261 : vector<1x1x128xf32> to vector<1x128xf32>
    %c2_216 = arith.constant 2 : index
    %c0_217 = arith.constant 0 : index
    %263 = vector.load %arg20[%c2_216, %c0_217] : memref<20x160xf32, #tpu.memory_space<vmem>>, vector<16x128xf32>
    %264 = vector.broadcast %262 : vector<1x128xf32> to vector<16x128xf32>
    %265 = arith.mulf %263, %264 : vector<16x128xf32>
    %266 = arith.addf %260, %265 : vector<16x128xf32>
    %c2_218 = arith.constant 2 : index
    %c1_219 = arith.constant 1 : index
    %c0_220 = arith.constant 0 : index
    %267 = vector.load %arg11[%c2_218, %c1_219, %c0_220] : memref<5x5x128xf32, #tpu.memory_space<vmem>>, vector<1x1x128xf32>
    %268 = vector.shape_cast %267 : vector<1x1x128xf32> to vector<1x128xf32>
    %c2_221 = arith.constant 2 : index
    %c8_222 = arith.constant 8 : index
    %269 = vector.load %arg20[%c2_221, %c8_222] : memref<20x160xf32, #tpu.memory_space<vmem>>, vector<16x128xf32>
    %270 = vector.broadcast %268 : vector<1x128xf32> to vector<16x128xf32>
    %271 = arith.mulf %269, %270 : vector<16x128xf32>
    %272 = arith.addf %266, %271 : vector<16x128xf32>
    %c2_223 = arith.constant 2 : index
    %c2_224 = arith.constant 2 : index
    %c0_225 = arith.constant 0 : index
    %273 = vector.load %arg11[%c2_223, %c2_224, %c0_225] : memref<5x5x128xf32, #tpu.memory_space<vmem>>, vector<1x1x128xf32>
    %274 = vector.shape_cast %273 : vector<1x1x128xf32> to vector<1x128xf32>
    %c2_226 = arith.constant 2 : index
    %c16_227 = arith.constant 16 : index
    %275 = vector.load %arg20[%c2_226, %c16_227] : memref<20x160xf32, #tpu.memory_space<vmem>>, vector<16x128xf32>
    %276 = vector.broadcast %274 : vector<1x128xf32> to vector<16x128xf32>
    %277 = arith.mulf %275, %276 : vector<16x128xf32>
    %278 = arith.addf %272, %277 : vector<16x128xf32>
    %c2_228 = arith.constant 2 : index
    %c3_229 = arith.constant 3 : index
    %c0_230 = arith.constant 0 : index
    %279 = vector.load %arg11[%c2_228, %c3_229, %c0_230] : memref<5x5x128xf32, #tpu.memory_space<vmem>>, vector<1x1x128xf32>
    %280 = vector.shape_cast %279 : vector<1x1x128xf32> to vector<1x128xf32>
    %c2_231 = arith.constant 2 : index
    %c24_232 = arith.constant 24 : index
    %281 = vector.load %arg20[%c2_231, %c24_232] : memref<20x160xf32, #tpu.memory_space<vmem>>, vector<16x128xf32>
    %282 = vector.broadcast %280 : vector<1x128xf32> to vector<16x128xf32>
    %283 = arith.mulf %281, %282 : vector<16x128xf32>
    %284 = arith.addf %278, %283 : vector<16x128xf32>
    %c2_233 = arith.constant 2 : index
    %c4_234 = arith.constant 4 : index
    %c0_235 = arith.constant 0 : index
    %285 = vector.load %arg11[%c2_233, %c4_234, %c0_235] : memref<5x5x128xf32, #tpu.memory_space<vmem>>, vector<1x1x128xf32>
    %286 = vector.shape_cast %285 : vector<1x1x128xf32> to vector<1x128xf32>
    %c2_236 = arith.constant 2 : index
    %c32_237 = arith.constant 32 : index
    %287 = vector.load %arg20[%c2_236, %c32_237] : memref<20x160xf32, #tpu.memory_space<vmem>>, vector<16x128xf32>
    %288 = vector.broadcast %286 : vector<1x128xf32> to vector<16x128xf32>
    %289 = arith.mulf %287, %288 : vector<16x128xf32>
    %290 = arith.addf %284, %289 : vector<16x128xf32>
    %c3_238 = arith.constant 3 : index
    %c0_239 = arith.constant 0 : index
    %c0_240 = arith.constant 0 : index
    %291 = vector.load %arg11[%c3_238, %c0_239, %c0_240] : memref<5x5x128xf32, #tpu.memory_space<vmem>>, vector<1x1x128xf32>
    %292 = vector.shape_cast %291 : vector<1x1x128xf32> to vector<1x128xf32>
    %c3_241 = arith.constant 3 : index
    %c0_242 = arith.constant 0 : index
    %293 = vector.load %arg20[%c3_241, %c0_242] : memref<20x160xf32, #tpu.memory_space<vmem>>, vector<16x128xf32>
    %294 = vector.broadcast %292 : vector<1x128xf32> to vector<16x128xf32>
    %295 = arith.mulf %293, %294 : vector<16x128xf32>
    %296 = arith.addf %290, %295 : vector<16x128xf32>
    %c3_243 = arith.constant 3 : index
    %c1_244 = arith.constant 1 : index
    %c0_245 = arith.constant 0 : index
    %297 = vector.load %arg11[%c3_243, %c1_244, %c0_245] : memref<5x5x128xf32, #tpu.memory_space<vmem>>, vector<1x1x128xf32>
    %298 = vector.shape_cast %297 : vector<1x1x128xf32> to vector<1x128xf32>
    %c3_246 = arith.constant 3 : index
    %c8_247 = arith.constant 8 : index
    %299 = vector.load %arg20[%c3_246, %c8_247] : memref<20x160xf32, #tpu.memory_space<vmem>>, vector<16x128xf32>
    %300 = vector.broadcast %298 : vector<1x128xf32> to vector<16x128xf32>
    %301 = arith.mulf %299, %300 : vector<16x128xf32>
    %302 = arith.addf %296, %301 : vector<16x128xf32>
    %c3_248 = arith.constant 3 : index
    %c2_249 = arith.constant 2 : index
    %c0_250 = arith.constant 0 : index
    %303 = vector.load %arg11[%c3_248, %c2_249, %c0_250] : memref<5x5x128xf32, #tpu.memory_space<vmem>>, vector<1x1x128xf32>
    %304 = vector.shape_cast %303 : vector<1x1x128xf32> to vector<1x128xf32>
    %c3_251 = arith.constant 3 : index
    %c16_252 = arith.constant 16 : index
    %305 = vector.load %arg20[%c3_251, %c16_252] : memref<20x160xf32, #tpu.memory_space<vmem>>, vector<16x128xf32>
    %306 = vector.broadcast %304 : vector<1x128xf32> to vector<16x128xf32>
    %307 = arith.mulf %305, %306 : vector<16x128xf32>
    %308 = arith.addf %302, %307 : vector<16x128xf32>
    %c3_253 = arith.constant 3 : index
    %c3_254 = arith.constant 3 : index
    %c0_255 = arith.constant 0 : index
    %309 = vector.load %arg11[%c3_253, %c3_254, %c0_255] : memref<5x5x128xf32, #tpu.memory_space<vmem>>, vector<1x1x128xf32>
    %310 = vector.shape_cast %309 : vector<1x1x128xf32> to vector<1x128xf32>
    %c3_256 = arith.constant 3 : index
    %c24_257 = arith.constant 24 : index
    %311 = vector.load %arg20[%c3_256, %c24_257] : memref<20x160xf32, #tpu.memory_space<vmem>>, vector<16x128xf32>
    %312 = vector.broadcast %310 : vector<1x128xf32> to vector<16x128xf32>
    %313 = arith.mulf %311, %312 : vector<16x128xf32>
    %314 = arith.addf %308, %313 : vector<16x128xf32>
    %c3_258 = arith.constant 3 : index
    %c4_259 = arith.constant 4 : index
    %c0_260 = arith.constant 0 : index
    %315 = vector.load %arg11[%c3_258, %c4_259, %c0_260] : memref<5x5x128xf32, #tpu.memory_space<vmem>>, vector<1x1x128xf32>
    %316 = vector.shape_cast %315 : vector<1x1x128xf32> to vector<1x128xf32>
    %c3_261 = arith.constant 3 : index
    %c32_262 = arith.constant 32 : index
    %317 = vector.load %arg20[%c3_261, %c32_262] : memref<20x160xf32, #tpu.memory_space<vmem>>, vector<16x128xf32>
    %318 = vector.broadcast %316 : vector<1x128xf32> to vector<16x128xf32>
    %319 = arith.mulf %317, %318 : vector<16x128xf32>
    %320 = arith.addf %314, %319 : vector<16x128xf32>
    %c4_263 = arith.constant 4 : index
    %c0_264 = arith.constant 0 : index
    %c0_265 = arith.constant 0 : index
    %321 = vector.load %arg11[%c4_263, %c0_264, %c0_265] : memref<5x5x128xf32, #tpu.memory_space<vmem>>, vector<1x1x128xf32>
    %322 = vector.shape_cast %321 : vector<1x1x128xf32> to vector<1x128xf32>
    %c4_266 = arith.constant 4 : index
    %c0_267 = arith.constant 0 : index
    %323 = vector.load %arg20[%c4_266, %c0_267] : memref<20x160xf32, #tpu.memory_space<vmem>>, vector<16x128xf32>
    %324 = vector.broadcast %322 : vector<1x128xf32> to vector<16x128xf32>
    %325 = arith.mulf %323, %324 : vector<16x128xf32>
    %326 = arith.addf %320, %325 : vector<16x128xf32>
    %c4_268 = arith.constant 4 : index
    %c1_269 = arith.constant 1 : index
    %c0_270 = arith.constant 0 : index
    %327 = vector.load %arg11[%c4_268, %c1_269, %c0_270] : memref<5x5x128xf32, #tpu.memory_space<vmem>>, vector<1x1x128xf32>
    %328 = vector.shape_cast %327 : vector<1x1x128xf32> to vector<1x128xf32>
    %c4_271 = arith.constant 4 : index
    %c8_272 = arith.constant 8 : index
    %329 = vector.load %arg20[%c4_271, %c8_272] : memref<20x160xf32, #tpu.memory_space<vmem>>, vector<16x128xf32>
    %330 = vector.broadcast %328 : vector<1x128xf32> to vector<16x128xf32>
    %331 = arith.mulf %329, %330 : vector<16x128xf32>
    %332 = arith.addf %326, %331 : vector<16x128xf32>
    %c4_273 = arith.constant 4 : index
    %c2_274 = arith.constant 2 : index
    %c0_275 = arith.constant 0 : index
    %333 = vector.load %arg11[%c4_273, %c2_274, %c0_275] : memref<5x5x128xf32, #tpu.memory_space<vmem>>, vector<1x1x128xf32>
    %334 = vector.shape_cast %333 : vector<1x1x128xf32> to vector<1x128xf32>
    %c4_276 = arith.constant 4 : index
    %c16_277 = arith.constant 16 : index
    %335 = vector.load %arg20[%c4_276, %c16_277] : memref<20x160xf32, #tpu.memory_space<vmem>>, vector<16x128xf32>
    %336 = vector.broadcast %334 : vector<1x128xf32> to vector<16x128xf32>
    %337 = arith.mulf %335, %336 : vector<16x128xf32>
    %338 = arith.addf %332, %337 : vector<16x128xf32>
    %c4_278 = arith.constant 4 : index
    %c3_279 = arith.constant 3 : index
    %c0_280 = arith.constant 0 : index
    %339 = vector.load %arg11[%c4_278, %c3_279, %c0_280] : memref<5x5x128xf32, #tpu.memory_space<vmem>>, vector<1x1x128xf32>
    %340 = vector.shape_cast %339 : vector<1x1x128xf32> to vector<1x128xf32>
    %c4_281 = arith.constant 4 : index
    %c24_282 = arith.constant 24 : index
    %341 = vector.load %arg20[%c4_281, %c24_282] : memref<20x160xf32, #tpu.memory_space<vmem>>, vector<16x128xf32>
    %342 = vector.broadcast %340 : vector<1x128xf32> to vector<16x128xf32>
    %343 = arith.mulf %341, %342 : vector<16x128xf32>
    %344 = arith.addf %338, %343 : vector<16x128xf32>
    %c4_283 = arith.constant 4 : index
    %c4_284 = arith.constant 4 : index
    %c0_285 = arith.constant 0 : index
    %345 = vector.load %arg11[%c4_283, %c4_284, %c0_285] : memref<5x5x128xf32, #tpu.memory_space<vmem>>, vector<1x1x128xf32>
    %346 = vector.shape_cast %345 : vector<1x1x128xf32> to vector<1x128xf32>
    %c4_286 = arith.constant 4 : index
    %c32_287 = arith.constant 32 : index
    %347 = vector.load %arg20[%c4_286, %c32_287] : memref<20x160xf32, #tpu.memory_space<vmem>>, vector<16x128xf32>
    %348 = vector.broadcast %346 : vector<1x128xf32> to vector<16x128xf32>
    %349 = arith.mulf %347, %348 : vector<16x128xf32>
    %350 = arith.addf %344, %349 : vector<16x128xf32>
    %c0_288 = arith.constant 0 : index
    %c0_289 = arith.constant 0 : index
    %c0_290 = arith.constant 0 : index
    %351 = vector.load %arg19[%c0_288, %c0_289, %c0_290] : memref<1x16x128xbf16, #tpu.memory_space<vmem>>, vector<1x16x128xbf16>
    %352 = vector.shape_cast %351 : vector<1x16x128xbf16> to vector<16x128xbf16>
    %353 = arith.extf %352 : vector<16x128xbf16> to vector<16x128xf32>
    %354 = arith.addf %350, %353 : vector<16x128xf32>
    %355 = arith.truncf %354 : vector<16x128xf32> to vector<16x128xbf16>
    %c0_291 = arith.constant 0 : index
    %c0_292 = arith.constant 0 : index
    %c0_293 = arith.constant 0 : index
    %356 = vector.load %arg17[%c0_291, %c0_292, %c0_293] : memref<1x16x128xbf16, #tpu.memory_space<vmem>>, vector<1x16x128xbf16>
    %357 = vector.shape_cast %356 : vector<1x16x128xbf16> to vector<16x128xbf16>
    %358 = vector.shape_cast %355 : vector<16x128xbf16> to vector<1x16x128xbf16>
    tpu.vector_store %arg17[%c0_291, %c0_292, %c0_293], %358 {strides = array<i32>} : memref<1x16x128xbf16, #tpu.memory_space<vmem>>, vector<1x16x128xbf16>,
    %c0_294 = arith.constant 0 : index
    %c0_295 = arith.constant 0 : index
    %c0_296 = arith.constant 0 : index
    %359 = vector.load %arg5[%c0_294, %c0_295, %c0_296] : memref<1x16x128xbf16, #tpu.memory_space<vmem>>, vector<1x16x128xbf16>
    %360 = vector.shape_cast %359 : vector<1x16x128xbf16> to vector<16x128xbf16>
    %361 = arith.extf %360 : vector<16x128xbf16> to vector<16x128xf32>
    %c2_297 = arith.constant 2 : index
    %c16_298 = arith.constant 16 : index
    %362 = vector.load %arg20[%c2_297, %c16_298] : memref<20x160xf32, #tpu.memory_space<vmem>>, vector<16x128xf32>
    tpu.vector_store %arg20[%c2_297, %c16_298], %361 {strides = array<i32>} : memref<20x160xf32, #tpu.memory_space<vmem>>, vector<16x128xf32>,
    %c0_i32_299 = arith.constant 0 : i32
    %363 = arith.cmpi sgt, %arg1, %c0_i32_299 : i32
    %c0_300 = arith.constant 0 : index
    %c14_301 = arith.constant 14 : index
    %c0_302 = arith.constant 0 : index
    %364 = vector.load %arg6[%c0_300, %c14_301, %c0_302] : memref<1x16x128xbf16, #tpu.memory_space<vmem>>, vector<1x2x128xbf16>
    %365 = vector.shape_cast %364 : vector<1x2x128xbf16> to vector<2x128xbf16>
    %366 = arith.extf %365 : vector<2x128xbf16> to vector<2x128xf32>
    %cst_303 = arith.constant 0.000000e+00 : f32
    %367 = vector.broadcast %cst_303 : f32 to vector<2x128xf32>
    %368 = arith.select %363, %366, %367 : vector<2x128xf32>
    %c0_304 = arith.constant 0 : index
    %c16_305 = arith.constant 16 : index
    %369 = vector.load %arg20[%c0_304, %c16_305] : memref<20x160xf32, #tpu.memory_space<vmem>>, vector<2x128xf32>
    tpu.vector_store %arg20[%c0_304, %c16_305], %368 {strides = array<i32>} : memref<20x160xf32, #tpu.memory_space<vmem>>, vector<2x128xf32>,
    %c0_i32_306 = arith.constant 0 : i32
    %370 = arith.cmpi slt, %arg1, %c0_i32_306 : i32
    %c0_307 = arith.constant 0 : index
    %c0_308 = arith.constant 0 : index
    %c0_309 = arith.constant 0 : index
    %371 = vector.load %arg7[%c0_307, %c0_308, %c0_309] : memref<1x16x128xbf16, #tpu.memory_space<vmem>>, vector<1x2x128xbf16>
    %372 = vector.shape_cast %371 : vector<1x2x128xbf16> to vector<2x128xbf16>
    %373 = arith.extf %372 : vector<2x128xbf16> to vector<2x128xf32>
    %cst_310 = arith.constant 0.000000e+00 : f32
    %374 = vector.broadcast %cst_310 : f32 to vector<2x128xf32>
    %375 = arith.select %370, %373, %374 : vector<2x128xf32>
    %c18_311 = arith.constant 18 : index
    %c16_312 = arith.constant 16 : index
    %376 = vector.load %arg20[%c18_311, %c16_312] : memref<20x160xf32, #tpu.memory_space<vmem>>, vector<2x128xf32>
    tpu.vector_store %arg20[%c18_311, %c16_312], %375 {strides = array<i32>} : memref<20x160xf32, #tpu.memory_space<vmem>>, vector<2x128xf32>,
    %cst_313 = arith.constant 0.000000e+00 : f32
    %377 = vector.broadcast %cst_313 : f32 to vector<16x128xf32>
    %c0_314 = arith.constant 0 : index
    %c0_315 = arith.constant 0 : index
    %378 = vector.load %arg15[%c0_314, %c0_315] : memref<1x128xf32, #tpu.memory_space<vmem>>, vector<1x128xf32>
    %379 = vector.broadcast %378 : vector<1x128xf32> to vector<16x128xf32>
    %380 = arith.addf %377, %379 : vector<16x128xf32>
    %c0_316 = arith.constant 0 : index
    %c0_317 = arith.constant 0 : index
    %c0_318 = arith.constant 0 : index
    %381 = vector.load %arg12[%c0_316, %c0_317, %c0_318] : memref<5x5x128xf32, #tpu.memory_space<vmem>>, vector<1x1x128xf32>
    %382 = vector.shape_cast %381 : vector<1x1x128xf32> to vector<1x128xf32>
    %c0_319 = arith.constant 0 : index
    %c0_320 = arith.constant 0 : index
    %383 = vector.load %arg20[%c0_319, %c0_320] : memref<20x160xf32, #tpu.memory_space<vmem>>, vector<16x128xf32>
    %384 = vector.broadcast %382 : vector<1x128xf32> to vector<16x128xf32>
    %385 = arith.mulf %383, %384 : vector<16x128xf32>
    %386 = arith.addf %380, %385 : vector<16x128xf32>
    %c0_321 = arith.constant 0 : index
    %c1_322 = arith.constant 1 : index
    %c0_323 = arith.constant 0 : index
    %387 = vector.load %arg12[%c0_321, %c1_322, %c0_323] : memref<5x5x128xf32, #tpu.memory_space<vmem>>, vector<1x1x128xf32>
    %388 = vector.shape_cast %387 : vector<1x1x128xf32> to vector<1x128xf32>
    %c0_324 = arith.constant 0 : index
    %c8_325 = arith.constant 8 : index
    %389 = vector.load %arg20[%c0_324, %c8_325] : memref<20x160xf32, #tpu.memory_space<vmem>>, vector<16x128xf32>
    %390 = vector.broadcast %388 : vector<1x128xf32> to vector<16x128xf32>
    %391 = arith.mulf %389, %390 : vector<16x128xf32>
    %392 = arith.addf %386, %391 : vector<16x128xf32>
    %c0_326 = arith.constant 0 : index
    %c2_327 = arith.constant 2 : index
    %c0_328 = arith.constant 0 : index
    %393 = vector.load %arg12[%c0_326, %c2_327, %c0_328] : memref<5x5x128xf32, #tpu.memory_space<vmem>>, vector<1x1x128xf32>
    %394 = vector.shape_cast %393 : vector<1x1x128xf32> to vector<1x128xf32>
    %c0_329 = arith.constant 0 : index
    %c16_330 = arith.constant 16 : index
    %395 = vector.load %arg20[%c0_329, %c16_330] : memref<20x160xf32, #tpu.memory_space<vmem>>, vector<16x128xf32>
    %396 = vector.broadcast %394 : vector<1x128xf32> to vector<16x128xf32>
    %397 = arith.mulf %395, %396 : vector<16x128xf32>
    %398 = arith.addf %392, %397 : vector<16x128xf32>
    %c0_331 = arith.constant 0 : index
    %c3_332 = arith.constant 3 : index
    %c0_333 = arith.constant 0 : index
    %399 = vector.load %arg12[%c0_331, %c3_332, %c0_333] : memref<5x5x128xf32, #tpu.memory_space<vmem>>, vector<1x1x128xf32>
    %400 = vector.shape_cast %399 : vector<1x1x128xf32> to vector<1x128xf32>
    %c0_334 = arith.constant 0 : index
    %c24_335 = arith.constant 24 : index
    %401 = vector.load %arg20[%c0_334, %c24_335] : memref<20x160xf32, #tpu.memory_space<vmem>>, vector<16x128xf32>
    %402 = vector.broadcast %400 : vector<1x128xf32> to vector<16x128xf32>
    %403 = arith.mulf %401, %402 : vector<16x128xf32>
    %404 = arith.addf %398, %403 : vector<16x128xf32>
    %c0_336 = arith.constant 0 : index
    %c4_337 = arith.constant 4 : index
    %c0_338 = arith.constant 0 : index
    %405 = vector.load %arg12[%c0_336, %c4_337, %c0_338] : memref<5x5x128xf32, #tpu.memory_space<vmem>>, vector<1x1x128xf32>
    %406 = vector.shape_cast %405 : vector<1x1x128xf32> to vector<1x128xf32>
    %c0_339 = arith.constant 0 : index
    %c32_340 = arith.constant 32 : index
    %407 = vector.load %arg20[%c0_339, %c32_340] : memref<20x160xf32, #tpu.memory_space<vmem>>, vector<16x128xf32>
    %408 = vector.broadcast %406 : vector<1x128xf32> to vector<16x128xf32>
    %409 = arith.mulf %407, %408 : vector<16x128xf32>
    %410 = arith.addf %404, %409 : vector<16x128xf32>
    %c1_341 = arith.constant 1 : index
    %c0_342 = arith.constant 0 : index
    %c0_343 = arith.constant 0 : index
    %411 = vector.load %arg12[%c1_341, %c0_342, %c0_343] : memref<5x5x128xf32, #tpu.memory_space<vmem>>, vector<1x1x128xf32>
    %412 = vector.shape_cast %411 : vector<1x1x128xf32> to vector<1x128xf32>
    %c1_344 = arith.constant 1 : index
    %c0_345 = arith.constant 0 : index
    %413 = vector.load %arg20[%c1_344, %c0_345] : memref<20x160xf32, #tpu.memory_space<vmem>>, vector<16x128xf32>
    %414 = vector.broadcast %412 : vector<1x128xf32> to vector<16x128xf32>
    %415 = arith.mulf %413, %414 : vector<16x128xf32>
    %416 = arith.addf %410, %415 : vector<16x128xf32>
    %c1_346 = arith.constant 1 : index
    %c1_347 = arith.constant 1 : index
    %c0_348 = arith.constant 0 : index
    %417 = vector.load %arg12[%c1_346, %c1_347, %c0_348] : memref<5x5x128xf32, #tpu.memory_space<vmem>>, vector<1x1x128xf32>
    %418 = vector.shape_cast %417 : vector<1x1x128xf32> to vector<1x128xf32>
    %c1_349 = arith.constant 1 : index
    %c8_350 = arith.constant 8 : index
    %419 = vector.load %arg20[%c1_349, %c8_350] : memref<20x160xf32, #tpu.memory_space<vmem>>, vector<16x128xf32>
    %420 = vector.broadcast %418 : vector<1x128xf32> to vector<16x128xf32>
    %421 = arith.mulf %419, %420 : vector<16x128xf32>
    %422 = arith.addf %416, %421 : vector<16x128xf32>
    %c1_351 = arith.constant 1 : index
    %c2_352 = arith.constant 2 : index
    %c0_353 = arith.constant 0 : index
    %423 = vector.load %arg12[%c1_351, %c2_352, %c0_353] : memref<5x5x128xf32, #tpu.memory_space<vmem>>, vector<1x1x128xf32>
    %424 = vector.shape_cast %423 : vector<1x1x128xf32> to vector<1x128xf32>
    %c1_354 = arith.constant 1 : index
    %c16_355 = arith.constant 16 : index
    %425 = vector.load %arg20[%c1_354, %c16_355] : memref<20x160xf32, #tpu.memory_space<vmem>>, vector<16x128xf32>
    %426 = vector.broadcast %424 : vector<1x128xf32> to vector<16x128xf32>
    %427 = arith.mulf %425, %426 : vector<16x128xf32>
    %428 = arith.addf %422, %427 : vector<16x128xf32>
    %c1_356 = arith.constant 1 : index
    %c3_357 = arith.constant 3 : index
    %c0_358 = arith.constant 0 : index
    %429 = vector.load %arg12[%c1_356, %c3_357, %c0_358] : memref<5x5x128xf32, #tpu.memory_space<vmem>>, vector<1x1x128xf32>
    %430 = vector.shape_cast %429 : vector<1x1x128xf32> to vector<1x128xf32>
    %c1_359 = arith.constant 1 : index
    %c24_360 = arith.constant 24 : index
    %431 = vector.load %arg20[%c1_359, %c24_360] : memref<20x160xf32, #tpu.memory_space<vmem>>, vector<16x128xf32>
    %432 = vector.broadcast %430 : vector<1x128xf32> to vector<16x128xf32>
    %433 = arith.mulf %431, %432 : vector<16x128xf32>
    %434 = arith.addf %428, %433 : vector<16x128xf32>
    %c1_361 = arith.constant 1 : index
    %c4_362 = arith.constant 4 : index
    %c0_363 = arith.constant 0 : index
    %435 = vector.load %arg12[%c1_361, %c4_362, %c0_363] : memref<5x5x128xf32, #tpu.memory_space<vmem>>, vector<1x1x128xf32>
    %436 = vector.shape_cast %435 : vector<1x1x128xf32> to vector<1x128xf32>
    %c1_364 = arith.constant 1 : index
    %c32_365 = arith.constant 32 : index
    %437 = vector.load %arg20[%c1_364, %c32_365] : memref<20x160xf32, #tpu.memory_space<vmem>>, vector<16x128xf32>
    %438 = vector.broadcast %436 : vector<1x128xf32> to vector<16x128xf32>
    %439 = arith.mulf %437, %438 : vector<16x128xf32>
    %440 = arith.addf %434, %439 : vector<16x128xf32>
    %c2_366 = arith.constant 2 : index
    %c0_367 = arith.constant 0 : index
    %c0_368 = arith.constant 0 : index
    %441 = vector.load %arg12[%c2_366, %c0_367, %c0_368] : memref<5x5x128xf32, #tpu.memory_space<vmem>>, vector<1x1x128xf32>
    %442 = vector.shape_cast %441 : vector<1x1x128xf32> to vector<1x128xf32>
    %c2_369 = arith.constant 2 : index
    %c0_370 = arith.constant 0 : index
    %443 = vector.load %arg20[%c2_369, %c0_370] : memref<20x160xf32, #tpu.memory_space<vmem>>, vector<16x128xf32>
    %444 = vector.broadcast %442 : vector<1x128xf32> to vector<16x128xf32>
    %445 = arith.mulf %443, %444 : vector<16x128xf32>
    %446 = arith.addf %440, %445 : vector<16x128xf32>
    %c2_371 = arith.constant 2 : index
    %c1_372 = arith.constant 1 : index
    %c0_373 = arith.constant 0 : index
    %447 = vector.load %arg12[%c2_371, %c1_372, %c0_373] : memref<5x5x128xf32, #tpu.memory_space<vmem>>, vector<1x1x128xf32>
    %448 = vector.shape_cast %447 : vector<1x1x128xf32> to vector<1x128xf32>
    %c2_374 = arith.constant 2 : index
    %c8_375 = arith.constant 8 : index
    %449 = vector.load %arg20[%c2_374, %c8_375] : memref<20x160xf32, #tpu.memory_space<vmem>>, vector<16x128xf32>
    %450 = vector.broadcast %448 : vector<1x128xf32> to vector<16x128xf32>
    %451 = arith.mulf %449, %450 : vector<16x128xf32>
    %452 = arith.addf %446, %451 : vector<16x128xf32>
    %c2_376 = arith.constant 2 : index
    %c2_377 = arith.constant 2 : index
    %c0_378 = arith.constant 0 : index
    %453 = vector.load %arg12[%c2_376, %c2_377, %c0_378] : memref<5x5x128xf32, #tpu.memory_space<vmem>>, vector<1x1x128xf32>
    %454 = vector.shape_cast %453 : vector<1x1x128xf32> to vector<1x128xf32>
    %c2_379 = arith.constant 2 : index
    %c16_380 = arith.constant 16 : index
    %455 = vector.load %arg20[%c2_379, %c16_380] : memref<20x160xf32, #tpu.memory_space<vmem>>, vector<16x128xf32>
    %456 = vector.broadcast %454 : vector<1x128xf32> to vector<16x128xf32>
    %457 = arith.mulf %455, %456 : vector<16x128xf32>
    %458 = arith.addf %452, %457 : vector<16x128xf32>
    %c2_381 = arith.constant 2 : index
    %c3_382 = arith.constant 3 : index
    %c0_383 = arith.constant 0 : index
    %459 = vector.load %arg12[%c2_381, %c3_382, %c0_383] : memref<5x5x128xf32, #tpu.memory_space<vmem>>, vector<1x1x128xf32>
    %460 = vector.shape_cast %459 : vector<1x1x128xf32> to vector<1x128xf32>
    %c2_384 = arith.constant 2 : index
    %c24_385 = arith.constant 24 : index
    %461 = vector.load %arg20[%c2_384, %c24_385] : memref<20x160xf32, #tpu.memory_space<vmem>>, vector<16x128xf32>
    %462 = vector.broadcast %460 : vector<1x128xf32> to vector<16x128xf32>
    %463 = arith.mulf %461, %462 : vector<16x128xf32>
    %464 = arith.addf %458, %463 : vector<16x128xf32>
    %c2_386 = arith.constant 2 : index
    %c4_387 = arith.constant 4 : index
    %c0_388 = arith.constant 0 : index
    %465 = vector.load %arg12[%c2_386, %c4_387, %c0_388] : memref<5x5x128xf32, #tpu.memory_space<vmem>>, vector<1x1x128xf32>
    %466 = vector.shape_cast %465 : vector<1x1x128xf32> to vector<1x128xf32>
    %c2_389 = arith.constant 2 : index
    %c32_390 = arith.constant 32 : index
    %467 = vector.load %arg20[%c2_389, %c32_390] : memref<20x160xf32, #tpu.memory_space<vmem>>, vector<16x128xf32>
    %468 = vector.broadcast %466 : vector<1x128xf32> to vector<16x128xf32>
    %469 = arith.mulf %467, %468 : vector<16x128xf32>
    %470 = arith.addf %464, %469 : vector<16x128xf32>
    %c3_391 = arith.constant 3 : index
    %c0_392 = arith.constant 0 : index
    %c0_393 = arith.constant 0 : index
    %471 = vector.load %arg12[%c3_391, %c0_392, %c0_393] : memref<5x5x128xf32, #tpu.memory_space<vmem>>, vector<1x1x128xf32>
    %472 = vector.shape_cast %471 : vector<1x1x128xf32> to vector<1x128xf32>
    %c3_394 = arith.constant 3 : index
    %c0_395 = arith.constant 0 : index
    %473 = vector.load %arg20[%c3_394, %c0_395] : memref<20x160xf32, #tpu.memory_space<vmem>>, vector<16x128xf32>
    %474 = vector.broadcast %472 : vector<1x128xf32> to vector<16x128xf32>
    %475 = arith.mulf %473, %474 : vector<16x128xf32>
    %476 = arith.addf %470, %475 : vector<16x128xf32>
    %c3_396 = arith.constant 3 : index
    %c1_397 = arith.constant 1 : index
    %c0_398 = arith.constant 0 : index
    %477 = vector.load %arg12[%c3_396, %c1_397, %c0_398] : memref<5x5x128xf32, #tpu.memory_space<vmem>>, vector<1x1x128xf32>
    %478 = vector.shape_cast %477 : vector<1x1x128xf32> to vector<1x128xf32>
    %c3_399 = arith.constant 3 : index
    %c8_400 = arith.constant 8 : index
    %479 = vector.load %arg20[%c3_399, %c8_400] : memref<20x160xf32, #tpu.memory_space<vmem>>, vector<16x128xf32>
    %480 = vector.broadcast %478 : vector<1x128xf32> to vector<16x128xf32>
    %481 = arith.mulf %479, %480 : vector<16x128xf32>
    %482 = arith.addf %476, %481 : vector<16x128xf32>
    %c3_401 = arith.constant 3 : index
    %c2_402 = arith.constant 2 : index
    %c0_403 = arith.constant 0 : index
    %483 = vector.load %arg12[%c3_401, %c2_402, %c0_403] : memref<5x5x128xf32, #tpu.memory_space<vmem>>, vector<1x1x128xf32>
    %484 = vector.shape_cast %483 : vector<1x1x128xf32> to vector<1x128xf32>
    %c3_404 = arith.constant 3 : index
    %c16_405 = arith.constant 16 : index
    %485 = vector.load %arg20[%c3_404, %c16_405] : memref<20x160xf32, #tpu.memory_space<vmem>>, vector<16x128xf32>
    %486 = vector.broadcast %484 : vector<1x128xf32> to vector<16x128xf32>
    %487 = arith.mulf %485, %486 : vector<16x128xf32>
    %488 = arith.addf %482, %487 : vector<16x128xf32>
    %c3_406 = arith.constant 3 : index
    %c3_407 = arith.constant 3 : index
    %c0_408 = arith.constant 0 : index
    %489 = vector.load %arg12[%c3_406, %c3_407, %c0_408] : memref<5x5x128xf32, #tpu.memory_space<vmem>>, vector<1x1x128xf32>
    %490 = vector.shape_cast %489 : vector<1x1x128xf32> to vector<1x128xf32>
    %c3_409 = arith.constant 3 : index
    %c24_410 = arith.constant 24 : index
    %491 = vector.load %arg20[%c3_409, %c24_410] : memref<20x160xf32, #tpu.memory_space<vmem>>, vector<16x128xf32>
    %492 = vector.broadcast %490 : vector<1x128xf32> to vector<16x128xf32>
    %493 = arith.mulf %491, %492 : vector<16x128xf32>
    %494 = arith.addf %488, %493 : vector<16x128xf32>
    %c3_411 = arith.constant 3 : index
    %c4_412 = arith.constant 4 : index
    %c0_413 = arith.constant 0 : index
    %495 = vector.load %arg12[%c3_411, %c4_412, %c0_413] : memref<5x5x128xf32, #tpu.memory_space<vmem>>, vector<1x1x128xf32>
    %496 = vector.shape_cast %495 : vector<1x1x128xf32> to vector<1x128xf32>
    %c3_414 = arith.constant 3 : index
    %c32_415 = arith.constant 32 : index
    %497 = vector.load %arg20[%c3_414, %c32_415] : memref<20x160xf32, #tpu.memory_space<vmem>>, vector<16x128xf32>
    %498 = vector.broadcast %496 : vector<1x128xf32> to vector<16x128xf32>
    %499 = arith.mulf %497, %498 : vector<16x128xf32>
    %500 = arith.addf %494, %499 : vector<16x128xf32>
    %c4_416 = arith.constant 4 : index
    %c0_417 = arith.constant 0 : index
    %c0_418 = arith.constant 0 : index
    %501 = vector.load %arg12[%c4_416, %c0_417, %c0_418] : memref<5x5x128xf32, #tpu.memory_space<vmem>>, vector<1x1x128xf32>
    %502 = vector.shape_cast %501 : vector<1x1x128xf32> to vector<1x128xf32>
    %c4_419 = arith.constant 4 : index
    %c0_420 = arith.constant 0 : index
    %503 = vector.load %arg20[%c4_419, %c0_420] : memref<20x160xf32, #tpu.memory_space<vmem>>, vector<16x128xf32>
    %504 = vector.broadcast %502 : vector<1x128xf32> to vector<16x128xf32>
    %505 = arith.mulf %503, %504 : vector<16x128xf32>
    %506 = arith.addf %500, %505 : vector<16x128xf32>
    %c4_421 = arith.constant 4 : index
    %c1_422 = arith.constant 1 : index
    %c0_423 = arith.constant 0 : index
    %507 = vector.load %arg12[%c4_421, %c1_422, %c0_423] : memref<5x5x128xf32, #tpu.memory_space<vmem>>, vector<1x1x128xf32>
    %508 = vector.shape_cast %507 : vector<1x1x128xf32> to vector<1x128xf32>
    %c4_424 = arith.constant 4 : index
    %c8_425 = arith.constant 8 : index
    %509 = vector.load %arg20[%c4_424, %c8_425] : memref<20x160xf32, #tpu.memory_space<vmem>>, vector<16x128xf32>
    %510 = vector.broadcast %508 : vector<1x128xf32> to vector<16x128xf32>
    %511 = arith.mulf %509, %510 : vector<16x128xf32>
    %512 = arith.addf %506, %511 : vector<16x128xf32>
    %c4_426 = arith.constant 4 : index
    %c2_427 = arith.constant 2 : index
    %c0_428 = arith.constant 0 : index
    %513 = vector.load %arg12[%c4_426, %c2_427, %c0_428] : memref<5x5x128xf32, #tpu.memory_space<vmem>>, vector<1x1x128xf32>
    %514 = vector.shape_cast %513 : vector<1x1x128xf32> to vector<1x128xf32>
    %c4_429 = arith.constant 4 : index
    %c16_430 = arith.constant 16 : index
    %515 = vector.load %arg20[%c4_429, %c16_430] : memref<20x160xf32, #tpu.memory_space<vmem>>, vector<16x128xf32>
    %516 = vector.broadcast %514 : vector<1x128xf32> to vector<16x128xf32>
    %517 = arith.mulf %515, %516 : vector<16x128xf32>
    %518 = arith.addf %512, %517 : vector<16x128xf32>
    %c4_431 = arith.constant 4 : index
    %c3_432 = arith.constant 3 : index
    %c0_433 = arith.constant 0 : index
    %519 = vector.load %arg12[%c4_431, %c3_432, %c0_433] : memref<5x5x128xf32, #tpu.memory_space<vmem>>, vector<1x1x128xf32>
    %520 = vector.shape_cast %519 : vector<1x1x128xf32> to vector<1x128xf32>
    %c4_434 = arith.constant 4 : index
    %c24_435 = arith.constant 24 : index
    %521 = vector.load %arg20[%c4_434, %c24_435] : memref<20x160xf32, #tpu.memory_space<vmem>>, vector<16x128xf32>
    %522 = vector.broadcast %520 : vector<1x128xf32> to vector<16x128xf32>
    %523 = arith.mulf %521, %522 : vector<16x128xf32>
    %524 = arith.addf %518, %523 : vector<16x128xf32>
    %c4_436 = arith.constant 4 : index
    %c4_437 = arith.constant 4 : index
    %c0_438 = arith.constant 0 : index
    %525 = vector.load %arg12[%c4_436, %c4_437, %c0_438] : memref<5x5x128xf32, #tpu.memory_space<vmem>>, vector<1x1x128xf32>
    %526 = vector.shape_cast %525 : vector<1x1x128xf32> to vector<1x128xf32>
    %c4_439 = arith.constant 4 : index
    %c32_440 = arith.constant 32 : index
    %527 = vector.load %arg20[%c4_439, %c32_440] : memref<20x160xf32, #tpu.memory_space<vmem>>, vector<16x128xf32>
    %528 = vector.broadcast %526 : vector<1x128xf32> to vector<16x128xf32>
    %529 = arith.mulf %527, %528 : vector<16x128xf32>
    %530 = arith.addf %524, %529 : vector<16x128xf32>
    %c0_441 = arith.constant 0 : index
    %c0_442 = arith.constant 0 : index
    %c0_443 = arith.constant 0 : index
    %531 = vector.load %arg19[%c0_441, %c0_442, %c0_443] : memref<1x16x128xbf16, #tpu.memory_space<vmem>>, vector<1x16x128xbf16>
    %532 = vector.shape_cast %531 : vector<1x16x128xbf16> to vector<16x128xbf16>
    %533 = arith.extf %532 : vector<16x128xbf16> to vector<16x128xf32>
    %534 = arith.addf %530, %533 : vector<16x128xf32>
    %535 = arith.truncf %534 : vector<16x128xf32> to vector<16x128xbf16>
    %c0_444 = arith.constant 0 : index
    %c0_445 = arith.constant 0 : index
    %c0_446 = arith.constant 0 : index
    %536 = vector.load %arg18[%c0_444, %c0_445, %c0_446] : memref<1x16x128xbf16, #tpu.memory_space<vmem>>, vector<1x16x128xbf16>
    %537 = vector.shape_cast %536 : vector<1x16x128xbf16> to vector<16x128xbf16>
    %538 = vector.shape_cast %535 : vector<16x128xbf16> to vector<1x16x128xbf16>
    tpu.vector_store %arg18[%c0_444, %c0_445, %c0_446], %538 {strides = array<i32>} : memref<1x16x128xbf16, #tpu.memory_space<vmem>>, vector<1x16x128xbf16>,
    return
  }
  func.func @transform_0(%arg0: i32, %arg1: i32) -> (i32, i32, i32) {
    %c0_i32 = arith.constant 0 : i32
    %c0_i32_0 = arith.constant 0 : i32
    return %arg0, %arg1, %c0_i32 : i32, i32, i32
  }
  func.func @transform_1(%arg0: i32, %arg1: i32) -> (i32, i32, i32) {
    %c1_i32 = arith.constant 1 : i32
    %0 = arith.muli %arg1, %c1_i32 : i32
    %c1_i32_0 = arith.constant 1 : i32
    %1 = arith.subi %0, %c1_i32_0 : i32
    %c0_i32 = arith.constant 0 : i32
    %2 = arith.maxsi %1, %c0_i32 : i32
    %c0_i32_1 = arith.constant 0 : i32
    %c0_i32_2 = arith.constant 0 : i32
    return %arg0, %2, %c0_i32_1 : i32, i32, i32
  }
  func.func @transform_2(%arg0: i32, %arg1: i32) -> (i32, i32, i32) {
    %c1_i32 = arith.constant 1 : i32
    %0 = arith.addi %arg1, %c1_i32 : i32
    %c1_i32_0 = arith.constant 1 : i32
    %1 = arith.muli %0, %c1_i32_0 : i32
    %c0_i32 = arith.constant 0 : i32
    %2 = arith.minsi %1, %c0_i32 : i32
    %c0_i32_1 = arith.constant 0 : i32
    %c0_i32_2 = arith.constant 0 : i32
    return %arg0, %2, %c0_i32_1 : i32, i32, i32
  }
  func.func @transform_3(%arg0: i32, %arg1: i32) -> (i32, i32, i32) {
    %c0_i32 = arith.constant 0 : i32
    %c0_i32_0 = arith.constant 0 : i32
    return %arg0, %arg1, %c0_i32 : i32, i32, i32
  }
  func.func @transform_4(%arg0: i32, %arg1: i32) -> (i32, i32, i32) {
    %c1_i32 = arith.constant 1 : i32
    %0 = arith.muli %arg1, %c1_i32 : i32
    %c1_i32_0 = arith.constant 1 : i32
    %1 = arith.subi %0, %c1_i32_0 : i32
    %c0_i32 = arith.constant 0 : i32
    %2 = arith.maxsi %1, %c0_i32 : i32
    %c0_i32_1 = arith.constant 0 : i32
    %c0_i32_2 = arith.constant 0 : i32
    return %arg0, %2, %c0_i32_1 : i32, i32, i32
  }
  func.func @transform_5(%arg0: i32, %arg1: i32) -> (i32, i32, i32) {
    %c1_i32 = arith.constant 1 : i32
    %0 = arith.addi %arg1, %c1_i32 : i32
    %c1_i32_0 = arith.constant 1 : i32
    %1 = arith.muli %0, %c1_i32_0 : i32
    %c0_i32 = arith.constant 0 : i32
    %2 = arith.minsi %1, %c0_i32 : i32
    %c0_i32_1 = arith.constant 0 : i32
    %c0_i32_2 = arith.constant 0 : i32
    return %arg0, %2, %c0_i32_1 : i32, i32, i32
  }
  func.func @transform_6(%arg0: i32, %arg1: i32) -> (i32, i32, i32) {
    %c0_i32 = arith.constant 0 : i32
    %c0_i32_0 = arith.constant 0 : i32
    return %arg0, %arg1, %c0_i32 : i32, i32, i32
  }
  func.func @transform_7(%arg0: i32, %arg1: i32) -> (i32, i32, i32) {
    %c1_i32 = arith.constant 1 : i32
    %0 = arith.muli %arg1, %c1_i32 : i32
    %c1_i32_0 = arith.constant 1 : i32
    %1 = arith.subi %0, %c1_i32_0 : i32
    %c0_i32 = arith.constant 0 : i32
    %2 = arith.maxsi %1, %c0_i32 : i32
    %c0_i32_1 = arith.constant 0 : i32
    %c0_i32_2 = arith.constant 0 : i32
    return %arg0, %2, %c0_i32_1 : i32, i32, i32
  }
  func.func @transform_8(%arg0: i32, %arg1: i32) -> (i32, i32, i32) {
    %c1_i32 = arith.constant 1 : i32
    %0 = arith.addi %arg1, %c1_i32 : i32
    %c1_i32_0 = arith.constant 1 : i32
    %1 = arith.muli %0, %c1_i32_0 : i32
    %c0_i32 = arith.constant 0 : i32
    %2 = arith.minsi %1, %c0_i32 : i32
    %c0_i32_1 = arith.constant 0 : i32
    %c0_i32_2 = arith.constant 0 : i32
    return %arg0, %2, %c0_i32_1 : i32, i32, i32
  }
  func.func @transform_9(%arg0: i32, %arg1: i32) -> (i32, i32, i32) {
    %c0_i32 = arith.constant 0 : i32
    %c0_i32_0 = arith.constant 0 : i32
    %c0_i32_1 = arith.constant 0 : i32
    %c0_i32_2 = arith.constant 0 : i32
    return %c0_i32, %c0_i32_0, %c0_i32_1 : i32, i32, i32
  }
  func.func @transform_10(%arg0: i32, %arg1: i32) -> (i32, i32, i32) {
    %c0_i32 = arith.constant 0 : i32
    %c0_i32_0 = arith.constant 0 : i32
    %c0_i32_1 = arith.constant 0 : i32
    %c0_i32_2 = arith.constant 0 : i32
    return %c0_i32, %c0_i32_0, %c0_i32_1 : i32, i32, i32
  }
  func.func @transform_11(%arg0: i32, %arg1: i32) -> (i32, i32, i32) {
    %c0_i32 = arith.constant 0 : i32
    %c0_i32_0 = arith.constant 0 : i32
    %c0_i32_1 = arith.constant 0 : i32
    %c0_i32_2 = arith.constant 0 : i32
    return %c0_i32, %c0_i32_0, %c0_i32_1 : i32, i32, i32
  }
  func.func @transform_12(%arg0: i32, %arg1: i32) -> (i32, i32) {
    %c0_i32 = arith.constant 0 : i32
    %c0_i32_0 = arith.constant 0 : i32
    %c0_i32_1 = arith.constant 0 : i32
    return %c0_i32, %c0_i32_0 : i32, i32
  }
  func.func @transform_13(%arg0: i32, %arg1: i32) -> (i32, i32) {
    %c0_i32 = arith.constant 0 : i32
    %c0_i32_0 = arith.constant 0 : i32
    %c0_i32_1 = arith.constant 0 : i32
    return %c0_i32, %c0_i32_0 : i32, i32
  }
  func.func @transform_14(%arg0: i32, %arg1: i32) -> (i32, i32) {
    %c0_i32 = arith.constant 0 : i32
    %c0_i32_0 = arith.constant 0 : i32
    %c0_i32_1 = arith.constant 0 : i32
    return %c0_i32, %c0_i32_0 : i32, i32
  }
  func.func @transform_15(%arg0: i32, %arg1: i32) -> (i32, i32, i32) {
    %c0_i32 = arith.constant 0 : i32
    %c0_i32_0 = arith.constant 0 : i32
    return %arg0, %arg1, %c0_i32 : i32, i32, i32
  }
  func.func @transform_16(%arg0: i32, %arg1: i32) -> (i32, i32, i32) {
    %c0_i32 = arith.constant 0 : i32
    %c0_i32_0 = arith.constant 0 : i32
    return %arg0, %arg1, %c0_i32 : i32, i32, i32
  }
  func.func @transform_17(%arg0: i32, %arg1: i32) -> (i32, i32, i32) {
    %c0_i32 = arith.constant 0 : i32
    %c0_i32_0 = arith.constant 0 : i32
    return %arg0, %arg1, %c0_i32 : i32, i32, i32
  }
}

module attributes {stable_mosaic.version = 11 : i64} {
  func.func @kernel(%arg0: i32, %arg1: memref<4x64x8xbf16, #tpu.memory_space<vmem>>, %arg2: memref<4x64x8xbf16, #tpu.memory_space<vmem>>, %arg3: memref<4x64x8xbf16, #tpu.memory_space<vmem>>, %arg4: memref<4x64x8xbf16, #tpu.memory_space<vmem>>, %arg5: memref<4x64x8xf32, #tpu.memory_space<vmem>>, %arg6: memref<128x8xbf16, #tpu.memory_space<vmem>>, %arg7: memref<128x8xbf16, #tpu.memory_space<vmem>>, %arg8: memref<64x128xbf16, #tpu.memory_space<vmem>>) attributes {dimension_semantics = [#tpu.dimension_semantics<parallel>], iteration_bounds = array<i64: 2>, scalar_prefetch = 0 : i64, scratch_operands = 3 : i64, tpu.core_type = #tpu.core_type<tc>, window_params = [{transform_indices = @transform_0, window_bounds = array<i64: 4, 64, 8>}, {transform_indices = @transform_1, window_bounds = array<i64: 4, 64, 8>}, {transform_indices = @transform_2, window_bounds = array<i64: 4, 64, 8>}, {transform_indices = @transform_3, window_bounds = array<i64: 4, 64, 8>}, {transform_indices = @transform_4, window_bounds = array<i64: 4, 64, 8>}]} {
    %cst = arith.constant 0.000000e+00 : bf16
    %0 = vector.broadcast %cst : bf16 to vector<128x8xbf16>
    %c0 = arith.constant 0 : index
    %c0_0 = arith.constant 0 : index
    %1 = vector.load %arg6[%c0, %c0_0] : memref<128x8xbf16, #tpu.memory_space<vmem>>, vector<128x8xbf16>
    tpu.vector_store %arg6[%c0, %c0_0], %0 {strides = array<i32>} : memref<128x8xbf16, #tpu.memory_space<vmem>>, vector<128x8xbf16>,
    %cst_1 = arith.constant 0.000000e+00 : bf16
    %2 = vector.broadcast %cst_1 : bf16 to vector<128x8xbf16>
    %c0_2 = arith.constant 0 : index
    %c0_3 = arith.constant 0 : index
    %3 = vector.load %arg7[%c0_2, %c0_3] : memref<128x8xbf16, #tpu.memory_space<vmem>>, vector<128x8xbf16>
    tpu.vector_store %arg7[%c0_2, %c0_3], %2 {strides = array<i32>} : memref<128x8xbf16, #tpu.memory_space<vmem>>, vector<128x8xbf16>,
    %c0_4 = arith.constant 0 : index
    %c0_5 = arith.constant 0 : index
    %c0_6 = arith.constant 0 : index
    %4 = vector.load %arg2[%c0_4, %c0_5, %c0_6] : memref<4x64x8xbf16, #tpu.memory_space<vmem>>, vector<1x64x8xbf16>
    %5 = vector.shape_cast %4 : vector<1x64x8xbf16> to vector<64x8xbf16>
    %c0_7 = arith.constant 0 : index
    %c0_8 = arith.constant 0 : index
    %c0_9 = arith.constant 0 : index
    %6 = vector.load %arg3[%c0_7, %c0_8, %c0_9] : memref<4x64x8xbf16, #tpu.memory_space<vmem>>, vector<1x64x8xbf16>
    %7 = vector.shape_cast %6 : vector<1x64x8xbf16> to vector<64x8xbf16>
    %8 = vector.extract_strided_slice %5 {offsets = [0, 0], sizes = [64, 4], strides = [1, 1]} : vector<64x8xbf16> to vector<64x4xbf16>
    %c0_10 = arith.constant 0 : index
    %c0_11 = arith.constant 0 : index
    %9 = vector.load %arg6[%c0_10, %c0_11] : memref<128x8xbf16, #tpu.memory_space<vmem>>, vector<64x4xbf16>
    tpu.vector_store %arg6[%c0_10, %c0_11], %8 {strides = array<i32>} : memref<128x8xbf16, #tpu.memory_space<vmem>>, vector<64x4xbf16>,
    %10 = vector.extract_strided_slice %7 {offsets = [0, 0], sizes = [64, 4], strides = [1, 1]} : vector<64x8xbf16> to vector<64x4xbf16>
    %c0_12 = arith.constant 0 : index
    %c0_13 = arith.constant 0 : index
    %11 = vector.load %arg7[%c0_12, %c0_13] : memref<128x8xbf16, #tpu.memory_space<vmem>>, vector<64x4xbf16>
    tpu.vector_store %arg7[%c0_12, %c0_13], %10 {strides = array<i32>} : memref<128x8xbf16, #tpu.memory_space<vmem>>, vector<64x4xbf16>,
    %12 = vector.extract_strided_slice %5 {offsets = [0, 4], sizes = [64, 4], strides = [1, 1]} : vector<64x8xbf16> to vector<64x4xbf16>
    %c64 = arith.constant 64 : index
    %c4 = arith.constant 4 : index
    %13 = vector.load %arg6[%c64, %c4] : memref<128x8xbf16, #tpu.memory_space<vmem>>, vector<64x4xbf16>
    tpu.vector_store %arg6[%c64, %c4], %12 {strides = array<i32>} : memref<128x8xbf16, #tpu.memory_space<vmem>>, vector<64x4xbf16>,
    %14 = vector.extract_strided_slice %7 {offsets = [0, 4], sizes = [64, 4], strides = [1, 1]} : vector<64x8xbf16> to vector<64x4xbf16>
    %c64_14 = arith.constant 64 : index
    %c4_15 = arith.constant 4 : index
    %15 = vector.load %arg7[%c64_14, %c4_15] : memref<128x8xbf16, #tpu.memory_space<vmem>>, vector<64x4xbf16>
    tpu.vector_store %arg7[%c64_14, %c4_15], %14 {strides = array<i32>} : memref<128x8xbf16, #tpu.memory_space<vmem>>, vector<64x4xbf16>,
    %c0_16 = arith.constant 0 : index
    %c0_17 = arith.constant 0 : index
    %c0_18 = arith.constant 0 : index
    %16 = vector.load %arg1[%c0_16, %c0_17, %c0_18] : memref<4x64x8xbf16, #tpu.memory_space<vmem>>, vector<1x64x8xbf16>
    %17 = vector.shape_cast %16 : vector<1x64x8xbf16> to vector<64x8xbf16>
    %c0_19 = arith.constant 0 : index
    %c0_20 = arith.constant 0 : index
    %18 = vector.load %arg6[%c0_19, %c0_20] : memref<128x8xbf16, #tpu.memory_space<vmem>>, vector<128x8xbf16>
    %cst_21 = arith.constant dense<0.000000e+00> : vector<64x128xf32>
    %19 = tpu.matmul %17, %18, %cst_21 {dimension_numbers = #tpu.dot_dimension_numbers<[1], [1], [0], [0], [0, 0, 1, 0], [], []>} : vector<64x8xbf16>, vector<128x8xbf16>, vector<64x128xf32> -> vector<64x128xf32>
    %cst_22 = arith.constant 5.000000e-01 : f32
    %20 = vector.broadcast %cst_22 : f32 to vector<64x128xf32>
    %21 = arith.mulf %19, %20 : vector<64x128xf32>
    %22 = vector.extract_strided_slice %21 {offsets = [0, 0], sizes = [64, 64], strides = [1, 1]} : vector<64x128xf32> to vector<64x64xf32>
    %cst_23 = arith.constant dense<0xFF800000> : vector<64xf32>
    %23 = vector.multi_reduction <maximumf>, %22, %cst_23 [1] : vector<64x64xf32> to vector<64xf32>
    %24 = vector.shape_cast %23 : vector<64xf32> to vector<64x1xf32>
    %25 = vector.broadcast %24 : vector<64x1xf32> to vector<64x64xf32>
    %26 = arith.subf %22, %25 : vector<64x64xf32>
    %27 = math.exp %26 : vector<64x64xf32>
    %cst_24 = arith.constant dense<0.000000e+00> : vector<64xf32>
    %28 = vector.multi_reduction <add>, %27, %cst_24 [1] : vector<64x64xf32> to vector<64xf32>
    %29 = vector.shape_cast %28 : vector<64xf32> to vector<64x1xf32>
    %30 = tpu.reciprocal %29 {approx = true} : vector<64x1xf32> -> vector<64x1xf32>
    %31 = vector.broadcast %30 : vector<64x1xf32> to vector<64x64xf32>
    %32 = arith.mulf %27, %31 : vector<64x64xf32>
    %33 = arith.truncf %32 : vector<64x64xf32> to vector<64x64xbf16>
    %c0_25 = arith.constant 0 : index
    %c0_26 = arith.constant 0 : index
    %34 = vector.load %arg8[%c0_25, %c0_26] : memref<64x128xbf16, #tpu.memory_space<vmem>>, vector<64x64xbf16>
    tpu.vector_store %arg8[%c0_25, %c0_26], %33 {strides = array<i32>} : memref<64x128xbf16, #tpu.memory_space<vmem>>, vector<64x64xbf16>,
    %35 = vector.extract_strided_slice %21 {offsets = [0, 64], sizes = [64, 64], strides = [1, 1]} : vector<64x128xf32> to vector<64x64xf32>
    %cst_27 = arith.constant dense<0xFF800000> : vector<64xf32>
    %36 = vector.multi_reduction <maximumf>, %35, %cst_27 [1] : vector<64x64xf32> to vector<64xf32>
    %37 = vector.shape_cast %36 : vector<64xf32> to vector<64x1xf32>
    %38 = vector.broadcast %37 : vector<64x1xf32> to vector<64x64xf32>
    %39 = arith.subf %35, %38 : vector<64x64xf32>
    %40 = math.exp %39 : vector<64x64xf32>
    %cst_28 = arith.constant dense<0.000000e+00> : vector<64xf32>
    %41 = vector.multi_reduction <add>, %40, %cst_28 [1] : vector<64x64xf32> to vector<64xf32>
    %42 = vector.shape_cast %41 : vector<64xf32> to vector<64x1xf32>
    %43 = tpu.reciprocal %42 {approx = true} : vector<64x1xf32> -> vector<64x1xf32>
    %44 = vector.broadcast %43 : vector<64x1xf32> to vector<64x64xf32>
    %45 = arith.mulf %40, %44 : vector<64x64xf32>
    %46 = arith.truncf %45 : vector<64x64xf32> to vector<64x64xbf16>
    %c0_29 = arith.constant 0 : index
    %c64_30 = arith.constant 64 : index
    %47 = vector.load %arg8[%c0_29, %c64_30] : memref<64x128xbf16, #tpu.memory_space<vmem>>, vector<64x64xbf16>
    tpu.vector_store %arg8[%c0_29, %c64_30], %46 {strides = array<i32>} : memref<64x128xbf16, #tpu.memory_space<vmem>>, vector<64x64xbf16>,
    %c0_31 = arith.constant 0 : index
    %c0_32 = arith.constant 0 : index
    %48 = vector.load %arg8[%c0_31, %c0_32] : memref<64x128xbf16, #tpu.memory_space<vmem>>, vector<64x128xbf16>
    %c0_33 = arith.constant 0 : index
    %c0_34 = arith.constant 0 : index
    %49 = vector.load %arg7[%c0_33, %c0_34] : memref<128x8xbf16, #tpu.memory_space<vmem>>, vector<128x8xbf16>
    %cst_35 = arith.constant dense<0.000000e+00> : vector<64x8xf32>
    %50 = tpu.matmul %48, %49, %cst_35 {dimension_numbers = #tpu.dot_dimension_numbers<[1], [0], [0], [1], [0, 0, 1, 1], [], []>} : vector<64x128xbf16>, vector<128x8xbf16>, vector<64x8xf32> -> vector<64x8xf32>
    %c0_36 = arith.constant 0 : index
    %c0_37 = arith.constant 0 : index
    %c0_38 = arith.constant 0 : index
    %51 = vector.load %arg4[%c0_36, %c0_37, %c0_38] : memref<4x64x8xbf16, #tpu.memory_space<vmem>>, vector<1x64x8xbf16>
    %52 = vector.shape_cast %51 : vector<1x64x8xbf16> to vector<64x8xbf16>
    %53 = arith.extf %52 : vector<64x8xbf16> to vector<64x8xf32>
    %54 = arith.addf %50, %53 : vector<64x8xf32>
    %c0_39 = arith.constant 0 : index
    %c0_40 = arith.constant 0 : index
    %c0_41 = arith.constant 0 : index
    %55 = vector.load %arg5[%c0_39, %c0_40, %c0_41] : memref<4x64x8xf32, #tpu.memory_space<vmem>>, vector<1x64x8xf32>
    %56 = vector.shape_cast %55 : vector<1x64x8xf32> to vector<64x8xf32>
    %57 = vector.shape_cast %54 : vector<64x8xf32> to vector<1x64x8xf32>
    tpu.vector_store %arg5[%c0_39, %c0_40, %c0_41], %57 {strides = array<i32>} : memref<4x64x8xf32, #tpu.memory_space<vmem>>, vector<1x64x8xf32>,
    %c1 = arith.constant 1 : index
    %c0_42 = arith.constant 0 : index
    %c0_43 = arith.constant 0 : index
    %58 = vector.load %arg2[%c1, %c0_42, %c0_43] : memref<4x64x8xbf16, #tpu.memory_space<vmem>>, vector<1x64x8xbf16>
    %59 = vector.shape_cast %58 : vector<1x64x8xbf16> to vector<64x8xbf16>
    %c1_44 = arith.constant 1 : index
    %c0_45 = arith.constant 0 : index
    %c0_46 = arith.constant 0 : index
    %60 = vector.load %arg3[%c1_44, %c0_45, %c0_46] : memref<4x64x8xbf16, #tpu.memory_space<vmem>>, vector<1x64x8xbf16>
    %61 = vector.shape_cast %60 : vector<1x64x8xbf16> to vector<64x8xbf16>
    %62 = vector.extract_strided_slice %59 {offsets = [0, 0], sizes = [64, 4], strides = [1, 1]} : vector<64x8xbf16> to vector<64x4xbf16>
    %c0_47 = arith.constant 0 : index
    %c0_48 = arith.constant 0 : index
    %63 = vector.load %arg6[%c0_47, %c0_48] : memref<128x8xbf16, #tpu.memory_space<vmem>>, vector<64x4xbf16>
    tpu.vector_store %arg6[%c0_47, %c0_48], %62 {strides = array<i32>} : memref<128x8xbf16, #tpu.memory_space<vmem>>, vector<64x4xbf16>,
    %64 = vector.extract_strided_slice %61 {offsets = [0, 0], sizes = [64, 4], strides = [1, 1]} : vector<64x8xbf16> to vector<64x4xbf16>
    %c0_49 = arith.constant 0 : index
    %c0_50 = arith.constant 0 : index
    %65 = vector.load %arg7[%c0_49, %c0_50] : memref<128x8xbf16, #tpu.memory_space<vmem>>, vector<64x4xbf16>
    tpu.vector_store %arg7[%c0_49, %c0_50], %64 {strides = array<i32>} : memref<128x8xbf16, #tpu.memory_space<vmem>>, vector<64x4xbf16>,
    %66 = vector.extract_strided_slice %59 {offsets = [0, 4], sizes = [64, 4], strides = [1, 1]} : vector<64x8xbf16> to vector<64x4xbf16>
    %c64_51 = arith.constant 64 : index
    %c4_52 = arith.constant 4 : index
    %67 = vector.load %arg6[%c64_51, %c4_52] : memref<128x8xbf16, #tpu.memory_space<vmem>>, vector<64x4xbf16>
    tpu.vector_store %arg6[%c64_51, %c4_52], %66 {strides = array<i32>} : memref<128x8xbf16, #tpu.memory_space<vmem>>, vector<64x4xbf16>,
    %68 = vector.extract_strided_slice %61 {offsets = [0, 4], sizes = [64, 4], strides = [1, 1]} : vector<64x8xbf16> to vector<64x4xbf16>
    %c64_53 = arith.constant 64 : index
    %c4_54 = arith.constant 4 : index
    %69 = vector.load %arg7[%c64_53, %c4_54] : memref<128x8xbf16, #tpu.memory_space<vmem>>, vector<64x4xbf16>
    tpu.vector_store %arg7[%c64_53, %c4_54], %68 {strides = array<i32>} : memref<128x8xbf16, #tpu.memory_space<vmem>>, vector<64x4xbf16>,
    %c1_55 = arith.constant 1 : index
    %c0_56 = arith.constant 0 : index
    %c0_57 = arith.constant 0 : index
    %70 = vector.load %arg1[%c1_55, %c0_56, %c0_57] : memref<4x64x8xbf16, #tpu.memory_space<vmem>>, vector<1x64x8xbf16>
    %71 = vector.shape_cast %70 : vector<1x64x8xbf16> to vector<64x8xbf16>
    %c0_58 = arith.constant 0 : index
    %c0_59 = arith.constant 0 : index
    %72 = vector.load %arg6[%c0_58, %c0_59] : memref<128x8xbf16, #tpu.memory_space<vmem>>, vector<128x8xbf16>
    %cst_60 = arith.constant dense<0.000000e+00> : vector<64x128xf32>
    %73 = tpu.matmul %71, %72, %cst_60 {dimension_numbers = #tpu.dot_dimension_numbers<[1], [1], [0], [0], [0, 0, 1, 0], [], []>} : vector<64x8xbf16>, vector<128x8xbf16>, vector<64x128xf32> -> vector<64x128xf32>
    %cst_61 = arith.constant 5.000000e-01 : f32
    %74 = vector.broadcast %cst_61 : f32 to vector<64x128xf32>
    %75 = arith.mulf %73, %74 : vector<64x128xf32>
    %76 = vector.extract_strided_slice %75 {offsets = [0, 0], sizes = [64, 64], strides = [1, 1]} : vector<64x128xf32> to vector<64x64xf32>
    %cst_62 = arith.constant dense<0xFF800000> : vector<64xf32>
    %77 = vector.multi_reduction <maximumf>, %76, %cst_62 [1] : vector<64x64xf32> to vector<64xf32>
    %78 = vector.shape_cast %77 : vector<64xf32> to vector<64x1xf32>
    %79 = vector.broadcast %78 : vector<64x1xf32> to vector<64x64xf32>
    %80 = arith.subf %76, %79 : vector<64x64xf32>
    %81 = math.exp %80 : vector<64x64xf32>
    %cst_63 = arith.constant dense<0.000000e+00> : vector<64xf32>
    %82 = vector.multi_reduction <add>, %81, %cst_63 [1] : vector<64x64xf32> to vector<64xf32>
    %83 = vector.shape_cast %82 : vector<64xf32> to vector<64x1xf32>
    %84 = tpu.reciprocal %83 {approx = true} : vector<64x1xf32> -> vector<64x1xf32>
    %85 = vector.broadcast %84 : vector<64x1xf32> to vector<64x64xf32>
    %86 = arith.mulf %81, %85 : vector<64x64xf32>
    %87 = arith.truncf %86 : vector<64x64xf32> to vector<64x64xbf16>
    %c0_64 = arith.constant 0 : index
    %c0_65 = arith.constant 0 : index
    %88 = vector.load %arg8[%c0_64, %c0_65] : memref<64x128xbf16, #tpu.memory_space<vmem>>, vector<64x64xbf16>
    tpu.vector_store %arg8[%c0_64, %c0_65], %87 {strides = array<i32>} : memref<64x128xbf16, #tpu.memory_space<vmem>>, vector<64x64xbf16>,
    %89 = vector.extract_strided_slice %75 {offsets = [0, 64], sizes = [64, 64], strides = [1, 1]} : vector<64x128xf32> to vector<64x64xf32>
    %cst_66 = arith.constant dense<0xFF800000> : vector<64xf32>
    %90 = vector.multi_reduction <maximumf>, %89, %cst_66 [1] : vector<64x64xf32> to vector<64xf32>
    %91 = vector.shape_cast %90 : vector<64xf32> to vector<64x1xf32>
    %92 = vector.broadcast %91 : vector<64x1xf32> to vector<64x64xf32>
    %93 = arith.subf %89, %92 : vector<64x64xf32>
    %94 = math.exp %93 : vector<64x64xf32>
    %cst_67 = arith.constant dense<0.000000e+00> : vector<64xf32>
    %95 = vector.multi_reduction <add>, %94, %cst_67 [1] : vector<64x64xf32> to vector<64xf32>
    %96 = vector.shape_cast %95 : vector<64xf32> to vector<64x1xf32>
    %97 = tpu.reciprocal %96 {approx = true} : vector<64x1xf32> -> vector<64x1xf32>
    %98 = vector.broadcast %97 : vector<64x1xf32> to vector<64x64xf32>
    %99 = arith.mulf %94, %98 : vector<64x64xf32>
    %100 = arith.truncf %99 : vector<64x64xf32> to vector<64x64xbf16>
    %c0_68 = arith.constant 0 : index
    %c64_69 = arith.constant 64 : index
    %101 = vector.load %arg8[%c0_68, %c64_69] : memref<64x128xbf16, #tpu.memory_space<vmem>>, vector<64x64xbf16>
    tpu.vector_store %arg8[%c0_68, %c64_69], %100 {strides = array<i32>} : memref<64x128xbf16, #tpu.memory_space<vmem>>, vector<64x64xbf16>,
    %c0_70 = arith.constant 0 : index
    %c0_71 = arith.constant 0 : index
    %102 = vector.load %arg8[%c0_70, %c0_71] : memref<64x128xbf16, #tpu.memory_space<vmem>>, vector<64x128xbf16>
    %c0_72 = arith.constant 0 : index
    %c0_73 = arith.constant 0 : index
    %103 = vector.load %arg7[%c0_72, %c0_73] : memref<128x8xbf16, #tpu.memory_space<vmem>>, vector<128x8xbf16>
    %cst_74 = arith.constant dense<0.000000e+00> : vector<64x8xf32>
    %104 = tpu.matmul %102, %103, %cst_74 {dimension_numbers = #tpu.dot_dimension_numbers<[1], [0], [0], [1], [0, 0, 1, 1], [], []>} : vector<64x128xbf16>, vector<128x8xbf16>, vector<64x8xf32> -> vector<64x8xf32>
    %c1_75 = arith.constant 1 : index
    %c0_76 = arith.constant 0 : index
    %c0_77 = arith.constant 0 : index
    %105 = vector.load %arg4[%c1_75, %c0_76, %c0_77] : memref<4x64x8xbf16, #tpu.memory_space<vmem>>, vector<1x64x8xbf16>
    %106 = vector.shape_cast %105 : vector<1x64x8xbf16> to vector<64x8xbf16>
    %107 = arith.extf %106 : vector<64x8xbf16> to vector<64x8xf32>
    %108 = arith.addf %104, %107 : vector<64x8xf32>
    %c1_78 = arith.constant 1 : index
    %c0_79 = arith.constant 0 : index
    %c0_80 = arith.constant 0 : index
    %109 = vector.load %arg5[%c1_78, %c0_79, %c0_80] : memref<4x64x8xf32, #tpu.memory_space<vmem>>, vector<1x64x8xf32>
    %110 = vector.shape_cast %109 : vector<1x64x8xf32> to vector<64x8xf32>
    %111 = vector.shape_cast %108 : vector<64x8xf32> to vector<1x64x8xf32>
    tpu.vector_store %arg5[%c1_78, %c0_79, %c0_80], %111 {strides = array<i32>} : memref<4x64x8xf32, #tpu.memory_space<vmem>>, vector<1x64x8xf32>,
    %c2 = arith.constant 2 : index
    %c0_81 = arith.constant 0 : index
    %c0_82 = arith.constant 0 : index
    %112 = vector.load %arg2[%c2, %c0_81, %c0_82] : memref<4x64x8xbf16, #tpu.memory_space<vmem>>, vector<1x64x8xbf16>
    %113 = vector.shape_cast %112 : vector<1x64x8xbf16> to vector<64x8xbf16>
    %c2_83 = arith.constant 2 : index
    %c0_84 = arith.constant 0 : index
    %c0_85 = arith.constant 0 : index
    %114 = vector.load %arg3[%c2_83, %c0_84, %c0_85] : memref<4x64x8xbf16, #tpu.memory_space<vmem>>, vector<1x64x8xbf16>
    %115 = vector.shape_cast %114 : vector<1x64x8xbf16> to vector<64x8xbf16>
    %116 = vector.extract_strided_slice %113 {offsets = [0, 0], sizes = [64, 4], strides = [1, 1]} : vector<64x8xbf16> to vector<64x4xbf16>
    %c0_86 = arith.constant 0 : index
    %c0_87 = arith.constant 0 : index
    %117 = vector.load %arg6[%c0_86, %c0_87] : memref<128x8xbf16, #tpu.memory_space<vmem>>, vector<64x4xbf16>
    tpu.vector_store %arg6[%c0_86, %c0_87], %116 {strides = array<i32>} : memref<128x8xbf16, #tpu.memory_space<vmem>>, vector<64x4xbf16>,
    %118 = vector.extract_strided_slice %115 {offsets = [0, 0], sizes = [64, 4], strides = [1, 1]} : vector<64x8xbf16> to vector<64x4xbf16>
    %c0_88 = arith.constant 0 : index
    %c0_89 = arith.constant 0 : index
    %119 = vector.load %arg7[%c0_88, %c0_89] : memref<128x8xbf16, #tpu.memory_space<vmem>>, vector<64x4xbf16>
    tpu.vector_store %arg7[%c0_88, %c0_89], %118 {strides = array<i32>} : memref<128x8xbf16, #tpu.memory_space<vmem>>, vector<64x4xbf16>,
    %120 = vector.extract_strided_slice %113 {offsets = [0, 4], sizes = [64, 4], strides = [1, 1]} : vector<64x8xbf16> to vector<64x4xbf16>
    %c64_90 = arith.constant 64 : index
    %c4_91 = arith.constant 4 : index
    %121 = vector.load %arg6[%c64_90, %c4_91] : memref<128x8xbf16, #tpu.memory_space<vmem>>, vector<64x4xbf16>
    tpu.vector_store %arg6[%c64_90, %c4_91], %120 {strides = array<i32>} : memref<128x8xbf16, #tpu.memory_space<vmem>>, vector<64x4xbf16>,
    %122 = vector.extract_strided_slice %115 {offsets = [0, 4], sizes = [64, 4], strides = [1, 1]} : vector<64x8xbf16> to vector<64x4xbf16>
    %c64_92 = arith.constant 64 : index
    %c4_93 = arith.constant 4 : index
    %123 = vector.load %arg7[%c64_92, %c4_93] : memref<128x8xbf16, #tpu.memory_space<vmem>>, vector<64x4xbf16>
    tpu.vector_store %arg7[%c64_92, %c4_93], %122 {strides = array<i32>} : memref<128x8xbf16, #tpu.memory_space<vmem>>, vector<64x4xbf16>,
    %c2_94 = arith.constant 2 : index
    %c0_95 = arith.constant 0 : index
    %c0_96 = arith.constant 0 : index
    %124 = vector.load %arg1[%c2_94, %c0_95, %c0_96] : memref<4x64x8xbf16, #tpu.memory_space<vmem>>, vector<1x64x8xbf16>
    %125 = vector.shape_cast %124 : vector<1x64x8xbf16> to vector<64x8xbf16>
    %c0_97 = arith.constant 0 : index
    %c0_98 = arith.constant 0 : index
    %126 = vector.load %arg6[%c0_97, %c0_98] : memref<128x8xbf16, #tpu.memory_space<vmem>>, vector<128x8xbf16>
    %cst_99 = arith.constant dense<0.000000e+00> : vector<64x128xf32>
    %127 = tpu.matmul %125, %126, %cst_99 {dimension_numbers = #tpu.dot_dimension_numbers<[1], [1], [0], [0], [0, 0, 1, 0], [], []>} : vector<64x8xbf16>, vector<128x8xbf16>, vector<64x128xf32> -> vector<64x128xf32>
    %cst_100 = arith.constant 5.000000e-01 : f32
    %128 = vector.broadcast %cst_100 : f32 to vector<64x128xf32>
    %129 = arith.mulf %127, %128 : vector<64x128xf32>
    %130 = vector.extract_strided_slice %129 {offsets = [0, 0], sizes = [64, 64], strides = [1, 1]} : vector<64x128xf32> to vector<64x64xf32>
    %cst_101 = arith.constant dense<0xFF800000> : vector<64xf32>
    %131 = vector.multi_reduction <maximumf>, %130, %cst_101 [1] : vector<64x64xf32> to vector<64xf32>
    %132 = vector.shape_cast %131 : vector<64xf32> to vector<64x1xf32>
    %133 = vector.broadcast %132 : vector<64x1xf32> to vector<64x64xf32>
    %134 = arith.subf %130, %133 : vector<64x64xf32>
    %135 = math.exp %134 : vector<64x64xf32>
    %cst_102 = arith.constant dense<0.000000e+00> : vector<64xf32>
    %136 = vector.multi_reduction <add>, %135, %cst_102 [1] : vector<64x64xf32> to vector<64xf32>
    %137 = vector.shape_cast %136 : vector<64xf32> to vector<64x1xf32>
    %138 = tpu.reciprocal %137 {approx = true} : vector<64x1xf32> -> vector<64x1xf32>
    %139 = vector.broadcast %138 : vector<64x1xf32> to vector<64x64xf32>
    %140 = arith.mulf %135, %139 : vector<64x64xf32>
    %141 = arith.truncf %140 : vector<64x64xf32> to vector<64x64xbf16>
    %c0_103 = arith.constant 0 : index
    %c0_104 = arith.constant 0 : index
    %142 = vector.load %arg8[%c0_103, %c0_104] : memref<64x128xbf16, #tpu.memory_space<vmem>>, vector<64x64xbf16>
    tpu.vector_store %arg8[%c0_103, %c0_104], %141 {strides = array<i32>} : memref<64x128xbf16, #tpu.memory_space<vmem>>, vector<64x64xbf16>,
    %143 = vector.extract_strided_slice %129 {offsets = [0, 64], sizes = [64, 64], strides = [1, 1]} : vector<64x128xf32> to vector<64x64xf32>
    %cst_105 = arith.constant dense<0xFF800000> : vector<64xf32>
    %144 = vector.multi_reduction <maximumf>, %143, %cst_105 [1] : vector<64x64xf32> to vector<64xf32>
    %145 = vector.shape_cast %144 : vector<64xf32> to vector<64x1xf32>
    %146 = vector.broadcast %145 : vector<64x1xf32> to vector<64x64xf32>
    %147 = arith.subf %143, %146 : vector<64x64xf32>
    %148 = math.exp %147 : vector<64x64xf32>
    %cst_106 = arith.constant dense<0.000000e+00> : vector<64xf32>
    %149 = vector.multi_reduction <add>, %148, %cst_106 [1] : vector<64x64xf32> to vector<64xf32>
    %150 = vector.shape_cast %149 : vector<64xf32> to vector<64x1xf32>
    %151 = tpu.reciprocal %150 {approx = true} : vector<64x1xf32> -> vector<64x1xf32>
    %152 = vector.broadcast %151 : vector<64x1xf32> to vector<64x64xf32>
    %153 = arith.mulf %148, %152 : vector<64x64xf32>
    %154 = arith.truncf %153 : vector<64x64xf32> to vector<64x64xbf16>
    %c0_107 = arith.constant 0 : index
    %c64_108 = arith.constant 64 : index
    %155 = vector.load %arg8[%c0_107, %c64_108] : memref<64x128xbf16, #tpu.memory_space<vmem>>, vector<64x64xbf16>
    tpu.vector_store %arg8[%c0_107, %c64_108], %154 {strides = array<i32>} : memref<64x128xbf16, #tpu.memory_space<vmem>>, vector<64x64xbf16>,
    %c0_109 = arith.constant 0 : index
    %c0_110 = arith.constant 0 : index
    %156 = vector.load %arg8[%c0_109, %c0_110] : memref<64x128xbf16, #tpu.memory_space<vmem>>, vector<64x128xbf16>
    %c0_111 = arith.constant 0 : index
    %c0_112 = arith.constant 0 : index
    %157 = vector.load %arg7[%c0_111, %c0_112] : memref<128x8xbf16, #tpu.memory_space<vmem>>, vector<128x8xbf16>
    %cst_113 = arith.constant dense<0.000000e+00> : vector<64x8xf32>
    %158 = tpu.matmul %156, %157, %cst_113 {dimension_numbers = #tpu.dot_dimension_numbers<[1], [0], [0], [1], [0, 0, 1, 1], [], []>} : vector<64x128xbf16>, vector<128x8xbf16>, vector<64x8xf32> -> vector<64x8xf32>
    %c2_114 = arith.constant 2 : index
    %c0_115 = arith.constant 0 : index
    %c0_116 = arith.constant 0 : index
    %159 = vector.load %arg4[%c2_114, %c0_115, %c0_116] : memref<4x64x8xbf16, #tpu.memory_space<vmem>>, vector<1x64x8xbf16>
    %160 = vector.shape_cast %159 : vector<1x64x8xbf16> to vector<64x8xbf16>
    %161 = arith.extf %160 : vector<64x8xbf16> to vector<64x8xf32>
    %162 = arith.addf %158, %161 : vector<64x8xf32>
    %c2_117 = arith.constant 2 : index
    %c0_118 = arith.constant 0 : index
    %c0_119 = arith.constant 0 : index
    %163 = vector.load %arg5[%c2_117, %c0_118, %c0_119] : memref<4x64x8xf32, #tpu.memory_space<vmem>>, vector<1x64x8xf32>
    %164 = vector.shape_cast %163 : vector<1x64x8xf32> to vector<64x8xf32>
    %165 = vector.shape_cast %162 : vector<64x8xf32> to vector<1x64x8xf32>
    tpu.vector_store %arg5[%c2_117, %c0_118, %c0_119], %165 {strides = array<i32>} : memref<4x64x8xf32, #tpu.memory_space<vmem>>, vector<1x64x8xf32>,
    %c3 = arith.constant 3 : index
    %c0_120 = arith.constant 0 : index
    %c0_121 = arith.constant 0 : index
    %166 = vector.load %arg2[%c3, %c0_120, %c0_121] : memref<4x64x8xbf16, #tpu.memory_space<vmem>>, vector<1x64x8xbf16>
    %167 = vector.shape_cast %166 : vector<1x64x8xbf16> to vector<64x8xbf16>
    %c3_122 = arith.constant 3 : index
    %c0_123 = arith.constant 0 : index
    %c0_124 = arith.constant 0 : index
    %168 = vector.load %arg3[%c3_122, %c0_123, %c0_124] : memref<4x64x8xbf16, #tpu.memory_space<vmem>>, vector<1x64x8xbf16>
    %169 = vector.shape_cast %168 : vector<1x64x8xbf16> to vector<64x8xbf16>
    %170 = vector.extract_strided_slice %167 {offsets = [0, 0], sizes = [64, 4], strides = [1, 1]} : vector<64x8xbf16> to vector<64x4xbf16>
    %c0_125 = arith.constant 0 : index
    %c0_126 = arith.constant 0 : index
    %171 = vector.load %arg6[%c0_125, %c0_126] : memref<128x8xbf16, #tpu.memory_space<vmem>>, vector<64x4xbf16>
    tpu.vector_store %arg6[%c0_125, %c0_126], %170 {strides = array<i32>} : memref<128x8xbf16, #tpu.memory_space<vmem>>, vector<64x4xbf16>,
    %172 = vector.extract_strided_slice %169 {offsets = [0, 0], sizes = [64, 4], strides = [1, 1]} : vector<64x8xbf16> to vector<64x4xbf16>
    %c0_127 = arith.constant 0 : index
    %c0_128 = arith.constant 0 : index
    %173 = vector.load %arg7[%c0_127, %c0_128] : memref<128x8xbf16, #tpu.memory_space<vmem>>, vector<64x4xbf16>
    tpu.vector_store %arg7[%c0_127, %c0_128], %172 {strides = array<i32>} : memref<128x8xbf16, #tpu.memory_space<vmem>>, vector<64x4xbf16>,
    %174 = vector.extract_strided_slice %167 {offsets = [0, 4], sizes = [64, 4], strides = [1, 1]} : vector<64x8xbf16> to vector<64x4xbf16>
    %c64_129 = arith.constant 64 : index
    %c4_130 = arith.constant 4 : index
    %175 = vector.load %arg6[%c64_129, %c4_130] : memref<128x8xbf16, #tpu.memory_space<vmem>>, vector<64x4xbf16>
    tpu.vector_store %arg6[%c64_129, %c4_130], %174 {strides = array<i32>} : memref<128x8xbf16, #tpu.memory_space<vmem>>, vector<64x4xbf16>,
    %176 = vector.extract_strided_slice %169 {offsets = [0, 4], sizes = [64, 4], strides = [1, 1]} : vector<64x8xbf16> to vector<64x4xbf16>
    %c64_131 = arith.constant 64 : index
    %c4_132 = arith.constant 4 : index
    %177 = vector.load %arg7[%c64_131, %c4_132] : memref<128x8xbf16, #tpu.memory_space<vmem>>, vector<64x4xbf16>
    tpu.vector_store %arg7[%c64_131, %c4_132], %176 {strides = array<i32>} : memref<128x8xbf16, #tpu.memory_space<vmem>>, vector<64x4xbf16>,
    %c3_133 = arith.constant 3 : index
    %c0_134 = arith.constant 0 : index
    %c0_135 = arith.constant 0 : index
    %178 = vector.load %arg1[%c3_133, %c0_134, %c0_135] : memref<4x64x8xbf16, #tpu.memory_space<vmem>>, vector<1x64x8xbf16>
    %179 = vector.shape_cast %178 : vector<1x64x8xbf16> to vector<64x8xbf16>
    %c0_136 = arith.constant 0 : index
    %c0_137 = arith.constant 0 : index
    %180 = vector.load %arg6[%c0_136, %c0_137] : memref<128x8xbf16, #tpu.memory_space<vmem>>, vector<128x8xbf16>
    %cst_138 = arith.constant dense<0.000000e+00> : vector<64x128xf32>
    %181 = tpu.matmul %179, %180, %cst_138 {dimension_numbers = #tpu.dot_dimension_numbers<[1], [1], [0], [0], [0, 0, 1, 0], [], []>} : vector<64x8xbf16>, vector<128x8xbf16>, vector<64x128xf32> -> vector<64x128xf32>
    %cst_139 = arith.constant 5.000000e-01 : f32
    %182 = vector.broadcast %cst_139 : f32 to vector<64x128xf32>
    %183 = arith.mulf %181, %182 : vector<64x128xf32>
    %184 = vector.extract_strided_slice %183 {offsets = [0, 0], sizes = [64, 64], strides = [1, 1]} : vector<64x128xf32> to vector<64x64xf32>
    %cst_140 = arith.constant dense<0xFF800000> : vector<64xf32>
    %185 = vector.multi_reduction <maximumf>, %184, %cst_140 [1] : vector<64x64xf32> to vector<64xf32>
    %186 = vector.shape_cast %185 : vector<64xf32> to vector<64x1xf32>
    %187 = vector.broadcast %186 : vector<64x1xf32> to vector<64x64xf32>
    %188 = arith.subf %184, %187 : vector<64x64xf32>
    %189 = math.exp %188 : vector<64x64xf32>
    %cst_141 = arith.constant dense<0.000000e+00> : vector<64xf32>
    %190 = vector.multi_reduction <add>, %189, %cst_141 [1] : vector<64x64xf32> to vector<64xf32>
    %191 = vector.shape_cast %190 : vector<64xf32> to vector<64x1xf32>
    %192 = tpu.reciprocal %191 {approx = true} : vector<64x1xf32> -> vector<64x1xf32>
    %193 = vector.broadcast %192 : vector<64x1xf32> to vector<64x64xf32>
    %194 = arith.mulf %189, %193 : vector<64x64xf32>
    %195 = arith.truncf %194 : vector<64x64xf32> to vector<64x64xbf16>
    %c0_142 = arith.constant 0 : index
    %c0_143 = arith.constant 0 : index
    %196 = vector.load %arg8[%c0_142, %c0_143] : memref<64x128xbf16, #tpu.memory_space<vmem>>, vector<64x64xbf16>
    tpu.vector_store %arg8[%c0_142, %c0_143], %195 {strides = array<i32>} : memref<64x128xbf16, #tpu.memory_space<vmem>>, vector<64x64xbf16>,
    %197 = vector.extract_strided_slice %183 {offsets = [0, 64], sizes = [64, 64], strides = [1, 1]} : vector<64x128xf32> to vector<64x64xf32>
    %cst_144 = arith.constant dense<0xFF800000> : vector<64xf32>
    %198 = vector.multi_reduction <maximumf>, %197, %cst_144 [1] : vector<64x64xf32> to vector<64xf32>
    %199 = vector.shape_cast %198 : vector<64xf32> to vector<64x1xf32>
    %200 = vector.broadcast %199 : vector<64x1xf32> to vector<64x64xf32>
    %201 = arith.subf %197, %200 : vector<64x64xf32>
    %202 = math.exp %201 : vector<64x64xf32>
    %cst_145 = arith.constant dense<0.000000e+00> : vector<64xf32>
    %203 = vector.multi_reduction <add>, %202, %cst_145 [1] : vector<64x64xf32> to vector<64xf32>
    %204 = vector.shape_cast %203 : vector<64xf32> to vector<64x1xf32>
    %205 = tpu.reciprocal %204 {approx = true} : vector<64x1xf32> -> vector<64x1xf32>
    %206 = vector.broadcast %205 : vector<64x1xf32> to vector<64x64xf32>
    %207 = arith.mulf %202, %206 : vector<64x64xf32>
    %208 = arith.truncf %207 : vector<64x64xf32> to vector<64x64xbf16>
    %c0_146 = arith.constant 0 : index
    %c64_147 = arith.constant 64 : index
    %209 = vector.load %arg8[%c0_146, %c64_147] : memref<64x128xbf16, #tpu.memory_space<vmem>>, vector<64x64xbf16>
    tpu.vector_store %arg8[%c0_146, %c64_147], %208 {strides = array<i32>} : memref<64x128xbf16, #tpu.memory_space<vmem>>, vector<64x64xbf16>,
    %c0_148 = arith.constant 0 : index
    %c0_149 = arith.constant 0 : index
    %210 = vector.load %arg8[%c0_148, %c0_149] : memref<64x128xbf16, #tpu.memory_space<vmem>>, vector<64x128xbf16>
    %c0_150 = arith.constant 0 : index
    %c0_151 = arith.constant 0 : index
    %211 = vector.load %arg7[%c0_150, %c0_151] : memref<128x8xbf16, #tpu.memory_space<vmem>>, vector<128x8xbf16>
    %cst_152 = arith.constant dense<0.000000e+00> : vector<64x8xf32>
    %212 = tpu.matmul %210, %211, %cst_152 {dimension_numbers = #tpu.dot_dimension_numbers<[1], [0], [0], [1], [0, 0, 1, 1], [], []>} : vector<64x128xbf16>, vector<128x8xbf16>, vector<64x8xf32> -> vector<64x8xf32>
    %c3_153 = arith.constant 3 : index
    %c0_154 = arith.constant 0 : index
    %c0_155 = arith.constant 0 : index
    %213 = vector.load %arg4[%c3_153, %c0_154, %c0_155] : memref<4x64x8xbf16, #tpu.memory_space<vmem>>, vector<1x64x8xbf16>
    %214 = vector.shape_cast %213 : vector<1x64x8xbf16> to vector<64x8xbf16>
    %215 = arith.extf %214 : vector<64x8xbf16> to vector<64x8xf32>
    %216 = arith.addf %212, %215 : vector<64x8xf32>
    %c3_156 = arith.constant 3 : index
    %c0_157 = arith.constant 0 : index
    %c0_158 = arith.constant 0 : index
    %217 = vector.load %arg5[%c3_156, %c0_157, %c0_158] : memref<4x64x8xf32, #tpu.memory_space<vmem>>, vector<1x64x8xf32>
    %218 = vector.shape_cast %217 : vector<1x64x8xf32> to vector<64x8xf32>
    %219 = vector.shape_cast %216 : vector<64x8xf32> to vector<1x64x8xf32>
    tpu.vector_store %arg5[%c3_156, %c0_157, %c0_158], %219 {strides = array<i32>} : memref<4x64x8xf32, #tpu.memory_space<vmem>>, vector<1x64x8xf32>,
    return
  }
  func.func @transform_0(%arg0: i32) -> (i32, i32, i32) {
    %c0_i32 = arith.constant 0 : i32
    %c0_i32_0 = arith.constant 0 : i32
    %c0_i32_1 = arith.constant 0 : i32
    return %arg0, %c0_i32, %c0_i32_0 : i32, i32, i32
  }
  func.func @transform_1(%arg0: i32) -> (i32, i32, i32) {
    %c0_i32 = arith.constant 0 : i32
    %c0_i32_0 = arith.constant 0 : i32
    %c0_i32_1 = arith.constant 0 : i32
    return %arg0, %c0_i32, %c0_i32_0 : i32, i32, i32
  }
  func.func @transform_2(%arg0: i32) -> (i32, i32, i32) {
    %c0_i32 = arith.constant 0 : i32
    %c0_i32_0 = arith.constant 0 : i32
    %c0_i32_1 = arith.constant 0 : i32
    return %arg0, %c0_i32, %c0_i32_0 : i32, i32, i32
  }
  func.func @transform_3(%arg0: i32) -> (i32, i32, i32) {
    %c0_i32 = arith.constant 0 : i32
    %c0_i32_0 = arith.constant 0 : i32
    %c0_i32_1 = arith.constant 0 : i32
    return %arg0, %c0_i32, %c0_i32_0 : i32, i32, i32
  }
  func.func @transform_4(%arg0: i32) -> (i32, i32, i32) {
    %c0_i32 = arith.constant 0 : i32
    %c0_i32_0 = arith.constant 0 : i32
    %c0_i32_1 = arith.constant 0 : i32
    return %arg0, %c0_i32, %c0_i32_0 : i32, i32, i32
  }
}

</mosaic_0001>

<llo_original>
// kernel: tile.58
$region0: #{tile.58}
  #allocation2 [shape = 's32[1]{0}', space=sflag, size = 0x4, scoped, tag = 'scoped memory for tile.58']
  %s0 = inlined_call_operand.hbm [shape: f32[8], index: 0, kind: input, shape index: {}]
  %s1 = inlined_call_operand.vmem [shape: f32[16,8], index: 1, kind: output, shape index: {}]
  $region1: #{tile.58} parent=0
    #allocation0 [shape = 'u8[512]{0}', space=vmem, size = 0x400, scoped, tag = 'operand span for operand 0']
    #allocation1 [shape = 's32[1]{0}', space=sflag, size = 0x4, scoped, tag = 'scoped memory for tile.58']
    %2 = vsyncpa [#allocation1], 0
    // Predicated region
    $region2: #{tile.58} parent=1 // pred_check
      _
    $region3: #{tile.58} parent=1 // pred_check_branch
      %4 = sbr.rel (0) target = $region5
    $region4: #{tile.58} parent=1 // pred_region
      %6 = vsyncadd [#allocation1], 0
      %s8 = sshll.u32 %s0, 4
      %s9 = int_to_ptr.hbm [resolvable:$true] %s8
      %s10 = sshll.u32 [#allocation0], 4
      %s11 = int_to_ptr.vmem [resolvable:$true] %s10
      %13 = dma.hbm_to_vmem [thread:$0]  %s9, 16, %s11, [#allocation1]
    $region5: #{tile.58} parent=1 // pred_fallthru
      _
    // Predicated region
    $region6: #{tile.58} parent=1 // pred_check
      _
    $region7: #{tile.58} parent=1 // pred_check_branch
      %15 = sbr.rel (0) target = $region9
    $region8: #{tile.58} parent=1 // pred_region
      %17 = dma.done [#allocation1], 16
    $region9: #{tile.58} parent=1 // pred_fallthru
      _
    %v18 = vld [vmem:[#allocation0] ss:$0 sm:$0xff]
    %19 = vst [vmem:[%s1] sm:$0xff] %v18
    %s20 = scalar_lea.vmem %s1, 8
    %21 = vst [vmem:[%s20] sm:$0xff] %v18
    %22 = vsyncpa [#allocation1], 1

// kernel: tile.59
$region0: #{tile.59}
  %s0 = inlined_call_operand.vmem [shape: f32[16,8], index: 0, kind: input, shape index: {}]
  %s1 = inlined_call_operand.vmem [shape: f32[1,128], index: 1, kind: output, shape index: {}]
  $region1: #{tile.59} parent=0
    #allocation0 [shape = 'u8[4096]{0}', space=vmem, size = 0x1000, scoped, tag = 'scoped mem for output reshape']
    %v2 = vld [vmem:[%s0] sm:$0x1]
    %vm3 = vcmask 64512
    %4 = vst.msk [vmem:[#allocation0] sm:$0x1] %vm3, %v2
    %s5 = scalar_lea.vmem %s0, 15
    %v6 = vld [vmem:[%s5] sm:$0x1]
    %7 = vrot.lane.b32.xlu0 %v6, 120
    %v8 = vpop.permute.xlu0 %7
    %vm9 = vcmask 1048512
    %10 = vst.msk [vmem:[#allocation0] sm:$0x1] %vm9, %v8
    %s11 = scalar_lea.vmem %s0, 14
    %v12 = vld [vmem:[%s11] sm:$0x1]
    %13 = vrot.lane.b32.xlu0 %v12, 112
    %v14 = vpop.permute.xlu0 %13
    %vm15 = vcmask 982912
    %16 = vst.msk [vmem:[#allocation0] sm:$0x1] %vm15, %v14
    %s17 = scalar_lea.vmem %s0, 13
    %v18 = vld [vmem:[%s17] sm:$0x1]
    %19 = vrot.lane.b32.xlu0 %v18, 104
    %v20 = vpop.permute.xlu0 %19
    %vm21 = vcmask 917312
    %22 = vst.msk [vmem:[#allocation0] sm:$0x1] %vm21, %v20
    %s23 = scalar_lea.vmem %s0, 12
    %v24 = vld [vmem:[%s23] sm:$0x1]
    %25 = vrot.lane.b32.xlu0 %v24, 96
    %v26 = vpop.permute.xlu0 %25
    %vm27 = vcmask 851712
    %28 = vst.msk [vmem:[#allocation0] sm:$0x1] %vm27, %v26
    %s29 = scalar_lea.vmem %s0, 11
    %v30 = vld [vmem:[%s29] sm:$0x1]
    %31 = vrot.lane.b32.xlu0 %v30, 88
    %v32 = vpop.permute.xlu0 %31
    %vm33 = vcmask 786112
    %34 = vst.msk [vmem:[#allocation0] sm:$0x1] %vm33, %v32
    %s35 = scalar_lea.vmem %s0, 10
    %v36 = vld [vmem:[%s35] sm:$0x1]
    %37 = vrot.lane.b32.xlu0 %v36, 80
    %v38 = vpop.permute.xlu0 %37
    %vm39 = vcmask 720512
    %40 = vst.msk [vmem:[#allocation0] sm:$0x1] %vm39, %v38
    %s41 = scalar_lea.vmem %s0, 9
    %v42 = vld [vmem:[%s41] sm:$0x1]
    %43 = vrot.lane.b32.xlu0 %v42, 72
    %v44 = vpop.permute.xlu0 %43
    %vm45 = vcmask 654912
    %46 = vst.msk [vmem:[#allocation0] sm:$0x1] %vm45, %v44
    %s47 = scalar_lea.vmem %s0, 8
    %v48 = vld [vmem:[%s47] sm:$0x1]
    %49 = vrot.lane.b32.xlu0 %v48, 64
    %v50 = vpop.permute.xlu0 %49
    %vm51 = vcmask 589312
    %52 = vst.msk [vmem:[#allocation0] sm:$0x1] %vm51, %v50
    %s53 = scalar_lea.vmem %s0, 7
    %v54 = vld [vmem:[%s53] sm:$0x1]
    %55 = vrot.lane.b32.xlu0 %v54, 56
    %v56 = vpop.permute.xlu0 %55
    %vm57 = vcmask 523712
    %58 = vst.msk [vmem:[#allocation0] sm:$0x1] %vm57, %v56
    %s59 = scalar_lea.vmem %s0, 6
    %v60 = vld [vmem:[%s59] sm:$0x1]
    %61 = vrot.lane.b32.xlu0 %v60, 48
    %v62 = vpop.permute.xlu0 %61
    %vm63 = vcmask 458112
    %64 = vst.msk [vmem:[#allocation0] sm:$0x1] %vm63, %v62
    %s65 = scalar_lea.vmem %s0, 5
    %v66 = vld [vmem:[%s65] sm:$0x1]
    %67 = vrot.lane.b32.xlu0 %v66, 40
    %v68 = vpop.permute.xlu0 %67
    %vm69 = vcmask 392512
    %70 = vst.msk [vmem:[#allocation0] sm:$0x1] %vm69, %v68
    %s71 = scalar_lea.vmem %s0, 4
    %v72 = vld [vmem:[%s71] sm:$0x1]
    %73 = vrot.lane.b32.xlu0 %v72, 32
    %v74 = vpop.permute.xlu0 %73
    %vm75 = vcmask 326912
    %76 = vst.msk [vmem:[#allocation0] sm:$0x1] %vm75, %v74
    %s77 = scalar_lea.vmem %s0, 3
    %v78 = vld [vmem:[%s77] sm:$0x1]
    %79 = vrot.lane.b32.xlu0 %v78, 24
    %v80 = vpop.permute.xlu0 %79
    %vm81 = vcmask 261312
    %82 = vst.msk [vmem:[#allocation0] sm:$0x1] %vm81, %v80
    %s83 = scalar_lea.vmem %s0, 2
    %v84 = vld [vmem:[%s83] sm:$0x1]
    %85 = vrot.lane.b32.xlu0 %v84, 16
    %v86 = vpop.permute.xlu0 %85
    %vm87 = vcmask 195712
    %88 = vst.msk [vmem:[#allocation0] sm:$0x1] %vm87, %v86
    %s89 = scalar_lea.vmem %s0, 1
    %v90 = vld [vmem:[%s89] sm:$0x1]
    %91 = vrot.lane.b32.xlu0 %v90, 8
    %v92 = vpop.permute.xlu0 %91
    %vm93 = vcmask 130112
    %94 = vst.msk [vmem:[#allocation0] sm:$0x1] %vm93, %v92
    %s96 = ssub.s32 2, 1
    %v97 = vld [vmem:[#allocation0] sm:%s96]
    %s99 = ssub.s32 2, 1
    %100 = vst [vmem:[%s1] sm:%s99] %v97

// kernel: tile.34
$region0: #{tile.34}
  %s0 = inlined_call_operand.vmem [shape: f32[5,5,16,8], index: 0, kind: input, shape index: {}]
  %s1 = inlined_call_operand.vmem [shape: f32[5,5,128], index: 1, kind: output, shape index: {}]
  %s2 = smov 3
  %v3 = vld [vmem:[%s0] ss:$16 sm:%s2]
  %s4 = smov 12
  %v5 = vld [vmem:[%s0] ss:$16 sm:%s4]
  %vm6 = vcmask 1043458
  %v7 = vsel %vm6, %v5, %v3
  %s8 = smov 48
  %v9 = vld [vmem:[%s0] ss:$16 sm:%s8]
  %vm10 = vcmask 1045508
  %v11 = vsel %vm10, %v9, %v7
  %s12 = smov 192
  %v13 = vld [vmem:[%s0] ss:$16 sm:%s12]
  %vm14 = vcmask 1047558
  %v15 = vsel %vm14, %v13, %v11
  %vm16 = vcmask 64512
  %17 = vst.msk [vmem:[%s1] sm:$0x1f] %vm16, %v15
  %s18 = scalar_lea.vmem %s1, 3
  %19 = vst.msk [vmem:[%s18] sm:$0xe0] %vm16, %v15
  %s20 = scalar_lea.vmem %s0, 128
  %s21 = smov 3
  %v22 = vld [vmem:[%s20] ss:$16 sm:%s21]
  %s23 = scalar_lea.vmem %s0, 128
  %s24 = smov 12
  %v25 = vld [vmem:[%s23] ss:$16 sm:%s24]
  %vm26 = vcmask 1043458
  %v27 = vsel %vm26, %v25, %v22
  %s28 = scalar_lea.vmem %s0, 128
  %s29 = smov 48
  %v30 = vld [vmem:[%s28] ss:$16 sm:%s29]
  %vm31 = vcmask 1045508
  %v32 = vsel %vm31, %v30, %v27
  %s33 = scalar_lea.vmem %s0, 128
  %s34 = smov 192
  %v35 = vld [vmem:[%s33] ss:$16 sm:%s34]
  %vm36 = vcmask 1047558
  %v37 = vsel %vm36, %v35, %v32
  %vm38 = vcmask 64512
  %s39 = scalar_lea.vmem %s1, 11
  %40 = vst.msk [vmem:[%s39] sm:$0x3] %vm38, %v37
  %s41 = scalar_lea.vmem %s1, 14
  %42 = vst.msk [vmem:[%s41] sm:$0x7c] %vm38, %v37
  %s43 = scalar_lea.vmem %s1, 17
  %44 = vst.msk [vmem:[%s43] sm:$0x80] %vm38, %v37
  %s45 = scalar_lea.vmem %s0, 256
  %s46 = smov 3
  %v47 = vld [vmem:[%s45] ss:$16 sm:%s46]
  %s48 = scalar_lea.vmem %s0, 256
  %s49 = smov 12
  %v50 = vld [vmem:[%s48] ss:$16 sm:%s49]
  %vm51 = vcmask 1043458
  %v52 = vsel %vm51, %v50, %v47
  %s53 = scalar_lea.vmem %s0, 256
  %s54 = smov 48
  %v55 = vld [vmem:[%s53] ss:$16 sm:%s54]
  %vm56 = vcmask 1045508
  %v57 = vsel %vm56, %v55, %v52
  %s58 = scalar_lea.vmem %s0, 256
  %s59 = smov 192
  %v60 = vld [vmem:[%s58] ss:$16 sm:%s59]
  %vm61 = vcmask 1047558
  %v62 = vsel %vm61, %v60, %v57
  %vm63 = vcmask 64512
  %s64 = scalar_lea.vmem %s1, 25
  %65 = vst.msk [vmem:[%s64] sm:$0xf] %vm63, %v62
  %s66 = scalar_lea.vmem %s1, 28
  %67 = vst.msk [vmem:[%s66] sm:$0xf0] %vm63, %v62
  %s68 = scalar_lea.vmem %s0, 384
  %v69 = vld [vmem:[%s68] sm:$0x1]
  %vm70 = vcmask 64512
  %s71 = scalar_lea.vmem %s1, 36
  %72 = vst.msk [vmem:[%s71] sm:$0x1] %vm70, %v69
  %s73 = scalar_lea.vmem %s0, 15
  %s74 = smov 3
  %v75 = vld [vmem:[%s73] ss:$16 sm:%s74]
  %s76 = scalar_lea.vmem %s0, 15
  %s77 = smov 12
  %v78 = vld [vmem:[%s76] ss:$16 sm:%s77]
  %vm79 = vcmask 1043458
  %v80 = vsel %vm79, %v78, %v75
  %s81 = scalar_lea.vmem %s0, 15
  %s82 = smov 48
  %v83 = vld [vmem:[%s81] ss:$16 sm:%s82]
  %vm84 = vcmask 1045508
  %v85 = vsel %vm84, %v83, %v80
  %s86 = scalar_lea.vmem %s0, 15
  %s87 = smov 192
  %v88 = vld [vmem:[%s86] ss:$16 sm:%s87]
  %vm89 = vcmask 1047558
  %v90 = vsel %vm89, %v88, %v85
  %91 = vrot.lane.b32.xlu0 %v90, 120
  %v92 = vpop.permute.xlu0 %91
  %vm93 = vcmask 1048512
  %94 = vst.msk [vmem:[%s1] sm:$0x1f] %vm93, %v92
  %s95 = scalar_lea.vmem %s1, 3
  %96 = vst.msk [vmem:[%s95] sm:$0xe0] %vm93, %v92
  %s97 = scalar_lea.vmem %s0, 335
  %s98 = smov 3
  %v99 = vld [vmem:[%s97] ss:$16 sm:%s98]
  %s100 = scalar_lea.vmem %s0, 335
  %s101 = smov 12
  %v102 = vld [vmem:[%s100] ss:$16 sm:%s101]
  %vm103 = vcmask 1043458
  %v104 = vsel %vm103, %v102, %v99
  %s105 = scalar_lea.vmem %s0, 395
  %v106 = vld [vmem:[%s105] sm:$0x10]
  %vm107 = vcmask 1044484
  %v108 = vsel %vm107, %v106, %v104
  %s109 = scalar_lea.vmem %s0, 63
  %s110 = smov 96
  %v111 = vld [vmem:[%s109] ss:$16 sm:%s110]
  %vm112 = vcmask 1046533
  %v113 = vsel %vm112, %v111, %v108
  %s114 = scalar_lea.vmem %s0, 168
  %v115 = vld [vmem:[%s114] sm:$0x80]
  %vm116 = vcmask 1047559
  %v117 = vsel %vm116, %v115, %v113
  %118 = vrot.lane.b32.xlu0 %v117, 120
  %v119 = vpop.permute.xlu0 %118
  %vm120 = vcmask 1048512
  %s121 = scalar_lea.vmem %s1, 32
  %122 = vst.msk [vmem:[%s121] sm:$0x1f] %vm120, %v119
  %s123 = scalar_lea.vmem %s1, 6
  %124 = vst.msk [vmem:[%s123] sm:$0x60] %vm120, %v119
  %s125 = scalar_lea.vmem %s1, 9
  %126 = vst.msk [vmem:[%s125] sm:$0x80] %vm120, %v119
  %s127 = scalar_lea.vmem %s0, 191
  %s128 = smov 3
  %v129 = vld [vmem:[%s127] ss:$16 sm:%s128]
  %s130 = scalar_lea.vmem %s0, 191
  %s131 = smov 12
  %v132 = vld [vmem:[%s130] ss:$16 sm:%s131]
  %vm133 = vcmask 1043458
  %v134 = vsel %vm133, %v132, %v129
  %s135 = scalar_lea.vmem %s0, 191
  %s136 = smov 48
  %v137 = vld [vmem:[%s135] ss:$16 sm:%s136]
  %vm138 = vcmask 1045508
  %v139 = vsel %vm138, %v137, %v134
  %s140 = scalar_lea.vmem %s0, 191
  %s141 = smov 192
  %v142 = vld [vmem:[%s140] ss:$16 sm:%s141]
  %vm143 = vcmask 1047558
  %v144 = vsel %vm143, %v142, %v139
  %145 = vrot.lane.b32.xlu0 %v144, 120
  %v146 = vpop.permute.xlu0 %145
  %vm147 = vcmask 1048512
  %s148 = scalar_lea.vmem %s1, 17
  %149 = vst.msk [vmem:[%s148] sm:$0xf] %vm147, %v146
  %s150 = scalar_lea.vmem %s1, 20
  %151 = vst.msk [vmem:[%s150] sm:$0xf0] %vm147, %v146
  %s152 = scalar_lea.vmem %s0, 319
  %v153 = vld [vmem:[%s152] sm:$0x1]
  %154 = vrot.lane.b32.xlu0 %v153, 120
  %v155 = vpop.permute.xlu0 %154
  %vm156 = vcmask 1048512
  %s157 = scalar_lea.vmem %s1, 28
  %158 = vst.msk [vmem:[%s157] sm:$0x1] %vm156, %v155
  %s159 = scalar_lea.vmem %s0, 14
  %s160 = smov 3
  %v161 = vld [vmem:[%s159] ss:$16 sm:%s160]
  %s162 = scalar_lea.vmem %s0, 14
  %s163 = smov 12
  %v164 = vld [vmem:[%s162] ss:$16 sm:%s163]
  %vm165 = vcmask 1043458
  %v166 = vsel %vm165, %v164, %v161
  %s167 = scalar_lea.vmem %s0, 14
  %s168 = smov 48
  %v169 = vld [vmem:[%s167] ss:$16 sm:%s168]
  %vm170 = vcmask 1045508
  %v171 = vsel %vm170, %v169, %v166
  %s172 = scalar_lea.vmem %s0, 14
  %s173 = smov 192
  %v174 = vld [vmem:[%s172] ss:$16 sm:%s173]
  %vm175 = vcmask 1047558
  %v176 = vsel %vm175, %v174, %v171
  %177 = vrot.lane.b32.xlu0 %v176, 112
  %v178 = vpop.permute.xlu0 %177
  %vm179 = vcmask 982912
  %180 = vst.msk [vmem:[%s1] sm:$0x1f] %vm179, %v178
  %s181 = scalar_lea.vmem %s1, 3
  %182 = vst.msk [vmem:[%s181] sm:$0xe0] %vm179, %v178
  %s183 = scalar_lea.vmem %s0, 334
  %s184 = smov 3
  %v185 = vld [vmem:[%s183] ss:$16 sm:%s184]
  %s186 = scalar_lea.vmem %s0, 334
  %s187 = smov 12
  %v188 = vld [vmem:[%s186] ss:$16 sm:%s187]
  %vm189 = vcmask 1043458
  %v190 = vsel %vm189, %v188, %v185
  %s191 = scalar_lea.vmem %s0, 394
  %v192 = vld [vmem:[%s191] sm:$0x10]
  %vm193 = vcmask 1044484
  %v194 = vsel %vm193, %v192, %v190
  %s195 = scalar_lea.vmem %s0, 62
  %s196 = smov 96
  %v197 = vld [vmem:[%s195] ss:$16 sm:%s196]
  %vm198 = vcmask 1046533
  %v199 = vsel %vm198, %v197, %v194
  %s200 = scalar_lea.vmem %s0, 167
  %v201 = vld [vmem:[%s200] sm:$0x80]
  %vm202 = vcmask 1047559
  %v203 = vsel %vm202, %v201, %v199
  %204 = vrot.lane.b32.xlu0 %v203, 112
  %v205 = vpop.permute.xlu0 %204
  %vm206 = vcmask 982912
  %s207 = scalar_lea.vmem %s1, 32
  %208 = vst.msk [vmem:[%s207] sm:$0x1f] %vm206, %v205
  %s209 = scalar_lea.vmem %s1, 6
  %210 = vst.msk [vmem:[%s209] sm:$0x60] %vm206, %v205
  %s211 = scalar_lea.vmem %s1, 9
  %212 = vst.msk [vmem:[%s211] sm:$0x80] %vm206, %v205
  %s213 = scalar_lea.vmem %s0, 190
  %s214 = smov 3
  %v215 = vld [vmem:[%s213] ss:$16 sm:%s214]
  %s216 = scalar_lea.vmem %s0, 190
  %s217 = smov 12
  %v218 = vld [vmem:[%s216] ss:$16 sm:%s217]
  %vm219 = vcmask 1043458
  %v220 = vsel %vm219, %v218, %v215
  %s221 = scalar_lea.vmem %s0, 190
  %s222 = smov 48
  %v223 = vld [vmem:[%s221] ss:$16 sm:%s222]
  %vm224 = vcmask 1045508
  %v225 = vsel %vm224, %v223, %v220
  %s226 = scalar_lea.vmem %s0, 190
  %s227 = smov 192
  %v228 = vld [vmem:[%s226] ss:$16 sm:%s227]
  %vm229 = vcmask 1047558
  %v230 = vsel %vm229, %v228, %v225
  %231 = vrot.lane.b32.xlu0 %v230, 112
  %v232 = vpop.permute.xlu0 %231
  %vm233 = vcmask 982912
  %s234 = scalar_lea.vmem %s1, 17
  %235 = vst.msk [vmem:[%s234] sm:$0xf] %vm233, %v232
  %s236 = scalar_lea.vmem %s1, 20
  %237 = vst.msk [vmem:[%s236] sm:$0xf0] %vm233, %v232
  %s238 = scalar_lea.vmem %s0, 318
  %v239 = vld [vmem:[%s238] sm:$0x1]
  %240 = vrot.lane.b32.xlu0 %v239, 112
  %v241 = vpop.permute.xlu0 %240
  %vm242 = vcmask 982912
  %s243 = scalar_lea.vmem %s1, 28
  %244 = vst.msk [vmem:[%s243] sm:$0x1] %vm242, %v241
  %s245 = scalar_lea.vmem %s0, 13
  %s246 = smov 3
  %v247 = vld [vmem:[%s245] ss:$16 sm:%s246]
  %s248 = scalar_lea.vmem %s0, 13
  %s249 = smov 12
  %v250 = vld [vmem:[%s248] ss:$16 sm:%s249]
  %vm251 = vcmask 1043458
  %v252 = vsel %vm251, %v250, %v247
  %s253 = scalar_lea.vmem %s0, 13
  %s254 = smov 48
  %v255 = vld [vmem:[%s253] ss:$16 sm:%s254]
  %vm256 = vcmask 1045508
  %v257 = vsel %vm256, %v255, %v252
  %s258 = scalar_lea.vmem %s0, 13
  %s259 = smov 192
  %v260 = vld [vmem:[%s258] ss:$16 sm:%s259]
  %vm261 = vcmask 1047558
  %v262 = vsel %vm261, %v260, %v257
  %263 = vrot.lane.b32.xlu0 %v262, 104
  %v264 = vpop.permute.xlu0 %263
  %vm265 = vcmask 917312
  %266 = vst.msk [vmem:[%s1] sm:$0x1f] %vm265, %v264
  %s267 = scalar_lea.vmem %s1, 3
  %268 = vst.msk [vmem:[%s267] sm:$0xe0] %vm265, %v264
  %s269 = scalar_lea.vmem %s0, 333
  %s270 = smov 3
  %v271 = vld [vmem:[%s269] ss:$16 sm:%s270]
  %s272 = scalar_lea.vmem %s0, 333
  %s273 = smov 12
  %v274 = vld [vmem:[%s272] ss:$16 sm:%s273]
  %vm275 = vcmask 1043458
  %v276 = vsel %vm275, %v274, %v271
  %s277 = scalar_lea.vmem %s0, 393
  %v278 = vld [vmem:[%s277] sm:$0x10]
  %vm279 = vcmask 1044484
  %v280 = vsel %vm279, %v278, %v276
  %s281 = scalar_lea.vmem %s0, 61
  %s282 = smov 96
  %v283 = vld [vmem:[%s281] ss:$16 sm:%s282]
  %vm284 = vcmask 1046533
  %v285 = vsel %vm284, %v283, %v280
  %s286 = scalar_lea.vmem %s0, 166
  %v287 = vld [vmem:[%s286] sm:$0x80]
  %vm288 = vcmask 1047559
  %v289 = vsel %vm288, %v287, %v285
  %290 = vrot.lane.b32.xlu0 %v289, 104
  %v291 = vpop.permute.xlu0 %290
  %vm292 = vcmask 917312
  %s293 = scalar_lea.vmem %s1, 32
  %294 = vst.msk [vmem:[%s293] sm:$0x1f] %vm292, %v291
  %s295 = scalar_lea.vmem %s1, 6
  %296 = vst.msk [vmem:[%s295] sm:$0x60] %vm292, %v291
  %s297 = scalar_lea.vmem %s1, 9
  %298 = vst.msk [vmem:[%s297] sm:$0x80] %vm292, %v291
  %s299 = scalar_lea.vmem %s0, 189
  %s300 = smov 3
  %v301 = vld [vmem:[%s299] ss:$16 sm:%s300]
  %s302 = scalar_lea.vmem %s0, 189
  %s303 = smov 12
  %v304 = vld [vmem:[%s302] ss:$16 sm:%s303]
  %vm305 = vcmask 1043458
  %v306 = vsel %vm305, %v304, %v301
  %s307 = scalar_lea.vmem %s0, 189
  %s308 = smov 48
  %v309 = vld [vmem:[%s307] ss:$16 sm:%s308]
  %vm310 = vcmask 1045508
  %v311 = vsel %vm310, %v309, %v306
  %s312 = scalar_lea.vmem %s0, 189
  %s313 = smov 192
  %v314 = vld [vmem:[%s312] ss:$16 sm:%s313]
  %vm315 = vcmask 1047558
  %v316 = vsel %vm315, %v314, %v311
  %317 = vrot.lane.b32.xlu0 %v316, 104
  %v318 = vpop.permute.xlu0 %317
  %vm319 = vcmask 917312
  %s320 = scalar_lea.vmem %s1, 17
  %321 = vst.msk [vmem:[%s320] sm:$0xf] %vm319, %v318
  %s322 = scalar_lea.vmem %s1, 20
  %323 = vst.msk [vmem:[%s322] sm:$0xf0] %vm319, %v318
  %s324 = scalar_lea.vmem %s0, 317
  %v325 = vld [vmem:[%s324] sm:$0x1]
  %326 = vrot.lane.b32.xlu0 %v325, 104
  %v327 = vpop.permute.xlu0 %326
  %vm328 = vcmask 917312
  %s329 = scalar_lea.vmem %s1, 28
  %330 = vst.msk [vmem:[%s329] sm:$0x1] %vm328, %v327
  %s331 = scalar_lea.vmem %s0, 12
  %s332 = smov 3
  %v333 = vld [vmem:[%s331] ss:$16 sm:%s332]
  %s334 = scalar_lea.vmem %s0, 12
  %s335 = smov 12
  %v336 = vld [vmem:[%s334] ss:$16 sm:%s335]
  %vm337 = vcmask 1043458
  %v338 = vsel %vm337, %v336, %v333
  %s339 = scalar_lea.vmem %s0, 12
  %s340 = smov 48
  %v341 = vld [vmem:[%s339] ss:$16 sm:%s340]
  %vm342 = vcmask 1045508
  %v343 = vsel %vm342, %v341, %v338
  %s344 = scalar_lea.vmem %s0, 12
  %s345 = smov 192
  %v346 = vld [vmem:[%s344] ss:$16 sm:%s345]
  %vm347 = vcmask 1047558
  %v348 = vsel %vm347, %v346, %v343
  %349 = vrot.lane.b32.xlu0 %v348, 96
  %v350 = vpop.permute.xlu0 %349
  %vm351 = vcmask 851712
  %352 = vst.msk [vmem:[%s1] sm:$0x1f] %vm351, %v350
  %s353 = scalar_lea.vmem %s1, 3
  %354 = vst.msk [vmem:[%s353] sm:$0xe0] %vm351, %v350
  %s355 = scalar_lea.vmem %s0, 332
  %s356 = smov 3
  %v357 = vld [vmem:[%s355] ss:$16 sm:%s356]
  %s358 = scalar_lea.vmem %s0, 332
  %s359 = smov 12
  %v360 = vld [vmem:[%s358] ss:$16 sm:%s359]
  %vm361 = vcmask 1043458
  %v362 = vsel %vm361, %v360, %v357
  %s363 = scalar_lea.vmem %s0, 392
  %v364 = vld [vmem:[%s363] sm:$0x10]
  %vm365 = vcmask 1044484
  %v366 = vsel %vm365, %v364, %v362
  %s367 = scalar_lea.vmem %s0, 60
  %s368 = smov 96
  %v369 = vld [vmem:[%s367] ss:$16 sm:%s368]
  %vm370 = vcmask 1046533
  %v371 = vsel %vm370, %v369, %v366
  %s372 = scalar_lea.vmem %s0, 165
  %v373 = vld [vmem:[%s372] sm:$0x80]
  %vm374 = vcmask 1047559
  %v375 = vsel %vm374, %v373, %v371
  %376 = vrot.lane.b32.xlu0 %v375, 96
  %v377 = vpop.permute.xlu0 %376
  %vm378 = vcmask 851712
  %s379 = scalar_lea.vmem %s1, 32
  %380 = vst.msk [vmem:[%s379] sm:$0x1f] %vm378, %v377
  %s381 = scalar_lea.vmem %s1, 6
  %382 = vst.msk [vmem:[%s381] sm:$0x60] %vm378, %v377
  %s383 = scalar_lea.vmem %s1, 9
  %384 = vst.msk [vmem:[%s383] sm:$0x80] %vm378, %v377
  %s385 = scalar_lea.vmem %s0, 188
  %s386 = smov 3
  %v387 = vld [vmem:[%s385] ss:$16 sm:%s386]
  %s388 = scalar_lea.vmem %s0, 188
  %s389 = smov 12
  %v390 = vld [vmem:[%s388] ss:$16 sm:%s389]
  %vm391 = vcmask 1043458
  %v392 = vsel %vm391, %v390, %v387
  %s393 = scalar_lea.vmem %s0, 188
  %s394 = smov 48
  %v395 = vld [vmem:[%s393] ss:$16 sm:%s394]
  %vm396 = vcmask 1045508
  %v397 = vsel %vm396, %v395, %v392
  %s398 = scalar_lea.vmem %s0, 188
  %s399 = smov 192
  %v400 = vld [vmem:[%s398] ss:$16 sm:%s399]
  %vm401 = vcmask 1047558
  %v402 = vsel %vm401, %v400, %v397
  %403 = vrot.lane.b32.xlu0 %v402, 96
  %v404 = vpop.permute.xlu0 %403
  %vm405 = vcmask 851712
  %s406 = scalar_lea.vmem %s1, 17
  %407 = vst.msk [vmem:[%s406] sm:$0xf] %vm405, %v404
  %s408 = scalar_lea.vmem %s1, 20
  %409 = vst.msk [vmem:[%s408] sm:$0xf0] %vm405, %v404
  %s410 = scalar_lea.vmem %s0, 316
  %v411 = vld [vmem:[%s410] sm:$0x1]
  %412 = vrot.lane.b32.xlu0 %v411, 96
  %v413 = vpop.permute.xlu0 %412
  %vm414 = vcmask 851712
  %s415 = scalar_lea.vmem %s1, 28
  %416 = vst.msk [vmem:[%s415] sm:$0x1] %vm414, %v413
  %s417 = scalar_lea.vmem %s0, 11
  %s418 = smov 3
  %v419 = vld [vmem:[%s417] ss:$16 sm:%s418]
  %s420 = scalar_lea.vmem %s0, 11
  %s421 = smov 12
  %v422 = vld [vmem:[%s420] ss:$16 sm:%s421]
  %vm423 = vcmask 1043458
  %v424 = vsel %vm423, %v422, %v419
  %s425 = scalar_lea.vmem %s0, 11
  %s426 = smov 48
  %v427 = vld [vmem:[%s425] ss:$16 sm:%s426]
  %vm428 = vcmask 1045508
  %v429 = vsel %vm428, %v427, %v424
  %s430 = scalar_lea.vmem %s0, 11
  %s431 = smov 192
  %v432 = vld [vmem:[%s430] ss:$16 sm:%s431]
  %vm433 = vcmask 1047558
  %v434 = vsel %vm433, %v432, %v429
  %435 = vrot.lane.b32.xlu0 %v434, 88
  %v436 = vpop.permute.xlu0 %435
  %vm437 = vcmask 786112
  %438 = vst.msk [vmem:[%s1] sm:$0x1f] %vm437, %v436
  %s439 = scalar_lea.vmem %s1, 3
  %440 = vst.msk [vmem:[%s439] sm:$0xe0] %vm437, %v436
  %s441 = scalar_lea.vmem %s0, 331
  %s442 = smov 3
  %v443 = vld [vmem:[%s441] ss:$16 sm:%s442]
  %s444 = scalar_lea.vmem %s0, 331
  %s445 = smov 12
  %v446 = vld [vmem:[%s444] ss:$16 sm:%s445]
  %vm447 = vcmask 1043458
  %v448 = vsel %vm447, %v446, %v443
  %s449 = scalar_lea.vmem %s0, 391
  %v450 = vld [vmem:[%s449] sm:$0x10]
  %vm451 = vcmask 1044484
  %v452 = vsel %vm451, %v450, %v448
  %s453 = scalar_lea.vmem %s0, 59
  %s454 = smov 96
  %v455 = vld [vmem:[%s453] ss:$16 sm:%s454]
  %vm456 = vcmask 1046533
  %v457 = vsel %vm456, %v455, %v452
  %s458 = scalar_lea.vmem %s0, 164
  %v459 = vld [vmem:[%s458] sm:$0x80]
  %vm460 = vcmask 1047559
  %v461 = vsel %vm460, %v459, %v457
  %462 = vrot.lane.b32.xlu0 %v461, 88
  %v463 = vpop.permute.xlu0 %462
  %vm464 = vcmask 786112
  %s465 = scalar_lea.vmem %s1, 32
  %466 = vst.msk [vmem:[%s465] sm:$0x1f] %vm464, %v463
  %s467 = scalar_lea.vmem %s1, 6
  %468 = vst.msk [vmem:[%s467] sm:$0x60] %vm464, %v463
  %s469 = scalar_lea.vmem %s1, 9
  %470 = vst.msk [vmem:[%s469] sm:$0x80] %vm464, %v463
  %s471 = scalar_lea.vmem %s0, 187
  %s472 = smov 3
  %v473 = vld [vmem:[%s471] ss:$16 sm:%s472]
  %s474 = scalar_lea.vmem %s0, 187
  %s475 = smov 12
  %v476 = vld [vmem:[%s474] ss:$16 sm:%s475]
  %vm477 = vcmask 1043458
  %v478 = vsel %vm477, %v476, %v473
  %s479 = scalar_lea.vmem %s0, 187
  %s480 = smov 48
  %v481 = vld [vmem:[%s479] ss:$16 sm:%s480]
  %vm482 = vcmask 1045508
  %v483 = vsel %vm482, %v481, %v478
  %s484 = scalar_lea.vmem %s0, 187
  %s485 = smov 192
  %v486 = vld [vmem:[%s484] ss:$16 sm:%s485]
  %vm487 = vcmask 1047558
  %v488 = vsel %vm487, %v486, %v483
  %489 = vrot.lane.b32.xlu0 %v488, 88
  %v490 = vpop.permute.xlu0 %489
  %vm491 = vcmask 786112
  %s492 = scalar_lea.vmem %s1, 17
  %493 = vst.msk [vmem:[%s492] sm:$0xf] %vm491, %v490
  %s494 = scalar_lea.vmem %s1, 20
  %495 = vst.msk [vmem:[%s494] sm:$0xf0] %vm491, %v490
  %s496 = scalar_lea.vmem %s0, 315
  %v497 = vld [vmem:[%s496] sm:$0x1]
  %498 = vrot.lane.b32.xlu0 %v497, 88
  %v499 = vpop.permute.xlu0 %498
  %vm500 = vcmask 786112
  %s501 = scalar_lea.vmem %s1, 28
  %502 = vst.msk [vmem:[%s501] sm:$0x1] %vm500, %v499
  %s503 = scalar_lea.vmem %s0, 10
  %s504 = smov 3
  %v505 = vld [vmem:[%s503] ss:$16 sm:%s504]
  %s506 = scalar_lea.vmem %s0, 10
  %s507 = smov 12
  %v508 = vld [vmem:[%s506] ss:$16 sm:%s507]
  %vm509 = vcmask 1043458
  %v510 = vsel %vm509, %v508, %v505
  %s511 = scalar_lea.vmem %s0, 10
  %s512 = smov 48
  %v513 = vld [vmem:[%s511] ss:$16 sm:%s512]
  %vm514 = vcmask 1045508
  %v515 = vsel %vm514, %v513, %v510
  %s516 = scalar_lea.vmem %s0, 10
  %s517 = smov 192
  %v518 = vld [vmem:[%s516] ss:$16 sm:%s517]
  %vm519 = vcmask 1047558
  %v520 = vsel %vm519, %v518, %v515
  %521 = vrot.lane.b32.xlu0 %v520, 80
  %v522 = vpop.permute.xlu0 %521
  %vm523 = vcmask 720512
  %524 = vst.msk [vmem:[%s1] sm:$0x1f] %vm523, %v522
  %s525 = scalar_lea.vmem %s1, 3
  %526 = vst.msk [vmem:[%s525] sm:$0xe0] %vm523, %v522
  %s527 = scalar_lea.vmem %s0, 330
  %s528 = smov 3
  %v529 = vld [vmem:[%s527] ss:$16 sm:%s528]
  %s530 = scalar_lea.vmem %s0, 330
  %s531 = smov 12
  %v532 = vld [vmem:[%s530] ss:$16 sm:%s531]
  %vm533 = vcmask 1043458
  %v534 = vsel %vm533, %v532, %v529
  %s535 = scalar_lea.vmem %s0, 390
  %v536 = vld [vmem:[%s535] sm:$0x10]
  %vm537 = vcmask 1044484
  %v538 = vsel %vm537, %v536, %v534
  %s539 = scalar_lea.vmem %s0, 58
  %s540 = smov 96
  %v541 = vld [vmem:[%s539] ss:$16 sm:%s540]
  %vm542 = vcmask 1046533
  %v543 = vsel %vm542, %v541, %v538
  %s544 = scalar_lea.vmem %s0, 163
  %v545 = vld [vmem:[%s544] sm:$0x80]
  %vm546 = vcmask 1047559
  %v547 = vsel %vm546, %v545, %v543
  %548 = vrot.lane.b32.xlu0 %v547, 80
  %v549 = vpop.permute.xlu0 %548
  %vm550 = vcmask 720512
  %s551 = scalar_lea.vmem %s1, 32
  %552 = vst.msk [vmem:[%s551] sm:$0x1f] %vm550, %v549
  %s553 = scalar_lea.vmem %s1, 6
  %554 = vst.msk [vmem:[%s553] sm:$0x60] %vm550, %v549
  %s555 = scalar_lea.vmem %s1, 9
  %556 = vst.msk [vmem:[%s555] sm:$0x80] %vm550, %v549
  %s557 = scalar_lea.vmem %s0, 186
  %s558 = smov 3
  %v559 = vld [vmem:[%s557] ss:$16 sm:%s558]
  %s560 = scalar_lea.vmem %s0, 186
  %s561 = smov 12
  %v562 = vld [vmem:[%s560] ss:$16 sm:%s561]
  %vm563 = vcmask 1043458
  %v564 = vsel %vm563, %v562, %v559
  %s565 = scalar_lea.vmem %s0, 186
  %s566 = smov 48
  %v567 = vld [vmem:[%s565] ss:$16 sm:%s566]
  %vm568 = vcmask 1045508
  %v569 = vsel %vm568, %v567, %v564
  %s570 = scalar_lea.vmem %s0, 186
  %s571 = smov 192
  %v572 = vld [vmem:[%s570] ss:$16 sm:%s571]
  %vm573 = vcmask 1047558
  %v574 = vsel %vm573, %v572, %v569
  %575 = vrot.lane.b32.xlu0 %v574, 80
  %v576 = vpop.permute.xlu0 %575
  %vm577 = vcmask 720512
  %s578 = scalar_lea.vmem %s1, 17
  %579 = vst.msk [vmem:[%s578] sm:$0xf] %vm577, %v576
  %s580 = scalar_lea.vmem %s1, 20
  %581 = vst.msk [vmem:[%s580] sm:$0xf0] %vm577, %v576
  %s582 = scalar_lea.vmem %s0, 314
  %v583 = vld [vmem:[%s582] sm:$0x1]
  %584 = vrot.lane.b32.xlu0 %v583, 80
  %v585 = vpop.permute.xlu0 %584
  %vm586 = vcmask 720512
  %s587 = scalar_lea.vmem %s1, 28
  %588 = vst.msk [vmem:[%s587] sm:$0x1] %vm586, %v585
  %s589 = scalar_lea.vmem %s0, 9
  %s590 = smov 3
  %v591 = vld [vmem:[%s589] ss:$16 sm:%s590]
  %s592 = scalar_lea.vmem %s0, 9
  %s593 = smov 12
  %v594 = vld [vmem:[%s592] ss:$16 sm:%s593]
  %vm595 = vcmask 1043458
  %v596 = vsel %vm595, %v594, %v591
  %s597 = scalar_lea.vmem %s0, 9
  %s598 = smov 48
  %v599 = vld [vmem:[%s597] ss:$16 sm:%s598]
  %vm600 = vcmask 1045508
  %v601 = vsel %vm600, %v599, %v596
  %s602 = scalar_lea.vmem %s0, 9
  %s603 = smov 192
  %v604 = vld [vmem:[%s602] ss:$16 sm:%s603]
  %vm605 = vcmask 1047558
  %v606 = vsel %vm605, %v604, %v601
  %607 = vrot.lane.b32.xlu0 %v606, 72
  %v608 = vpop.permute.xlu0 %607
  %vm609 = vcmask 654912
  %610 = vst.msk [vmem:[%s1] sm:$0x1f] %vm609, %v608
  %s611 = scalar_lea.vmem %s1, 3
  %612 = vst.msk [vmem:[%s611] sm:$0xe0] %vm609, %v608
  %s613 = scalar_lea.vmem %s0, 329
  %s614 = smov 3
  %v615 = vld [vmem:[%s613] ss:$16 sm:%s614]
  %s616 = scalar_lea.vmem %s0, 329
  %s617 = smov 12
  %v618 = vld [vmem:[%s616] ss:$16 sm:%s617]
  %vm619 = vcmask 1043458
  %v620 = vsel %vm619, %v618, %v615
  %s621 = scalar_lea.vmem %s0, 389
  %v622 = vld [vmem:[%s621] sm:$0x10]
  %vm623 = vcmask 1044484
  %v624 = vsel %vm623, %v622, %v620
  %s625 = scalar_lea.vmem %s0, 57
  %s626 = smov 96
  %v627 = vld [vmem:[%s625] ss:$16 sm:%s626]
  %vm628 = vcmask 1046533
  %v629 = vsel %vm628, %v627, %v624
  %s630 = scalar_lea.vmem %s0, 162
  %v631 = vld [vmem:[%s630] sm:$0x80]
  %vm632 = vcmask 1047559
  %v633 = vsel %vm632, %v631, %v629
  %634 = vrot.lane.b32.xlu0 %v633, 72
  %v635 = vpop.permute.xlu0 %634
  %vm636 = vcmask 654912
  %s637 = scalar_lea.vmem %s1, 32
  %638 = vst.msk [vmem:[%s637] sm:$0x1f] %vm636, %v635
  %s639 = scalar_lea.vmem %s1, 6
  %640 = vst.msk [vmem:[%s639] sm:$0x60] %vm636, %v635
  %s641 = scalar_lea.vmem %s1, 9
  %642 = vst.msk [vmem:[%s641] sm:$0x80] %vm636, %v635
  %s643 = scalar_lea.vmem %s0, 185
  %s644 = smov 3
  %v645 = vld [vmem:[%s643] ss:$16 sm:%s644]
  %s646 = scalar_lea.vmem %s0, 185
  %s647 = smov 12
  %v648 = vld [vmem:[%s646] ss:$16 sm:%s647]
  %vm649 = vcmask 1043458
  %v650 = vsel %vm649, %v648, %v645
  %s651 = scalar_lea.vmem %s0, 185
  %s652 = smov 48
  %v653 = vld [vmem:[%s651] ss:$16 sm:%s652]
  %vm654 = vcmask 1045508
  %v655 = vsel %vm654, %v653, %v650
  %s656 = scalar_lea.vmem %s0, 185
  %s657 = smov 192
  %v658 = vld [vmem:[%s656] ss:$16 sm:%s657]
  %vm659 = vcmask 1047558
  %v660 = vsel %vm659, %v658, %v655
  %661 = vrot.lane.b32.xlu0 %v660, 72
  %v662 = vpop.permute.xlu0 %661
  %vm663 = vcmask 654912
  %s664 = scalar_lea.vmem %s1, 17
  %665 = vst.msk [vmem:[%s664] sm:$0xf] %vm663, %v662
  %s666 = scalar_lea.vmem %s1, 20
  %667 = vst.msk [vmem:[%s666] sm:$0xf0] %vm663, %v662
  %s668 = scalar_lea.vmem %s0, 313
  %v669 = vld [vmem:[%s668] sm:$0x1]
  %670 = vrot.lane.b32.xlu0 %v669, 72
  %v671 = vpop.permute.xlu0 %670
  %vm672 = vcmask 654912
  %s673 = scalar_lea.vmem %s1, 28
  %674 = vst.msk [vmem:[%s673] sm:$0x1] %vm672, %v671
  %s675 = scalar_lea.vmem %s0, 8
  %s676 = smov 3
  %v677 = vld [vmem:[%s675] ss:$16 sm:%s676]
  %s678 = scalar_lea.vmem %s0, 8
  %s679 = smov 12
  %v680 = vld [vmem:[%s678] ss:$16 sm:%s679]
  %vm681 = vcmask 1043458
  %v682 = vsel %vm681, %v680, %v677
  %s683 = scalar_lea.vmem %s0, 8
  %s684 = smov 48
  %v685 = vld [vmem:[%s683] ss:$16 sm:%s684]
  %vm686 = vcmask 1045508
  %v687 = vsel %vm686, %v685, %v682
  %s688 = scalar_lea.vmem %s0, 8
  %s689 = smov 192
  %v690 = vld [vmem:[%s688] ss:$16 sm:%s689]
  %vm691 = vcmask 1047558
  %v692 = vsel %vm691, %v690, %v687
  %693 = vrot.lane.b32.xlu0 %v692, 64
  %v694 = vpop.permute.xlu0 %693
  %vm695 = vcmask 589312
  %696 = vst.msk [vmem:[%s1] sm:$0x1f] %vm695, %v694
  %s697 = scalar_lea.vmem %s1, 3
  %698 = vst.msk [vmem:[%s697] sm:$0xe0] %vm695, %v694
  %s699 = scalar_lea.vmem %s0, 328
  %s700 = smov 3
  %v701 = vld [vmem:[%s699] ss:$16 sm:%s700]
  %s702 = scalar_lea.vmem %s0, 328
  %s703 = smov 12
  %v704 = vld [vmem:[%s702] ss:$16 sm:%s703]
  %vm705 = vcmask 1043458
  %v706 = vsel %vm705, %v704, %v701
  %s707 = scalar_lea.vmem %s0, 388
  %v708 = vld [vmem:[%s707] sm:$0x10]
  %vm709 = vcmask 1044484
  %v710 = vsel %vm709, %v708, %v706
  %s711 = scalar_lea.vmem %s0, 56
  %s712 = smov 96
  %v713 = vld [vmem:[%s711] ss:$16 sm:%s712]
  %vm714 = vcmask 1046533
  %v715 = vsel %vm714, %v713, %v710
  %s716 = scalar_lea.vmem %s0, 161
  %v717 = vld [vmem:[%s716] sm:$0x80]
  %vm718 = vcmask 1047559
  %v719 = vsel %vm718, %v717, %v715
  %720 = vrot.lane.b32.xlu0 %v719, 64
  %v721 = vpop.permute.xlu0 %720
  %vm722 = vcmask 589312
  %s723 = scalar_lea.vmem %s1, 32
  %724 = vst.msk [vmem:[%s723] sm:$0x1f] %vm722, %v721
  %s725 = scalar_lea.vmem %s1, 6
  %726 = vst.msk [vmem:[%s725] sm:$0x60] %vm722, %v721
  %s727 = scalar_lea.vmem %s1, 9
  %728 = vst.msk [vmem:[%s727] sm:$0x80] %vm722, %v721
  %s729 = scalar_lea.vmem %s0, 184
  %s730 = smov 3
  %v731 = vld [vmem:[%s729] ss:$16 sm:%s730]
  %s732 = scalar_lea.vmem %s0, 184
  %s733 = smov 12
  %v734 = vld [vmem:[%s732] ss:$16 sm:%s733]
  %vm735 = vcmask 1043458
  %v736 = vsel %vm735, %v734, %v731
  %s737 = scalar_lea.vmem %s0, 184
  %s738 = smov 48
  %v739 = vld [vmem:[%s737] ss:$16 sm:%s738]
  %vm740 = vcmask 1045508
  %v741 = vsel %vm740, %v739, %v736
  %s742 = scalar_lea.vmem %s0, 184
  %s743 = smov 192
  %v744 = vld [vmem:[%s742] ss:$16 sm:%s743]
  %vm745 = vcmask 1047558
  %v746 = vsel %vm745, %v744, %v741
  %747 = vrot.lane.b32.xlu0 %v746, 64
  %v748 = vpop.permute.xlu0 %747
  %vm749 = vcmask 589312
  %s750 = scalar_lea.vmem %s1, 17
  %751 = vst.msk [vmem:[%s750] sm:$0xf] %vm749, %v748
  %s752 = scalar_lea.vmem %s1, 20
  %753 = vst.msk [vmem:[%s752] sm:$0xf0] %vm749, %v748
  %s754 = scalar_lea.vmem %s0, 312
  %v755 = vld [vmem:[%s754] sm:$0x1]
  %756 = vrot.lane.b32.xlu0 %v755, 64
  %v757 = vpop.permute.xlu0 %756
  %vm758 = vcmask 589312
  %s759 = scalar_lea.vmem %s1, 28
  %760 = vst.msk [vmem:[%s759] sm:$0x1] %vm758, %v757
  %s761 = scalar_lea.vmem %s0, 7
  %s762 = smov 3
  %v763 = vld [vmem:[%s761] ss:$16 sm:%s762]
  %s764 = scalar_lea.vmem %s0, 7
  %s765 = smov 12
  %v766 = vld [vmem:[%s764] ss:$16 sm:%s765]
  %vm767 = vcmask 1043458
  %v768 = vsel %vm767, %v766, %v763
  %s769 = scalar_lea.vmem %s0, 7
  %s770 = smov 48
  %v771 = vld [vmem:[%s769] ss:$16 sm:%s770]
  %vm772 = vcmask 1045508
  %v773 = vsel %vm772, %v771, %v768
  %s774 = scalar_lea.vmem %s0, 7
  %s775 = smov 192
  %v776 = vld [vmem:[%s774] ss:$16 sm:%s775]
  %vm777 = vcmask 1047558
  %v778 = vsel %vm777, %v776, %v773
  %779 = vrot.lane.b32.xlu0 %v778, 56
  %v780 = vpop.permute.xlu0 %779
  %vm781 = vcmask 523712
  %782 = vst.msk [vmem:[%s1] sm:$0x1f] %vm781, %v780
  %s783 = scalar_lea.vmem %s1, 3
  %784 = vst.msk [vmem:[%s783] sm:$0xe0] %vm781, %v780
  %s785 = scalar_lea.vmem %s0, 327
  %s786 = smov 3
  %v787 = vld [vmem:[%s785] ss:$16 sm:%s786]
  %s788 = scalar_lea.vmem %s0, 327
  %s789 = smov 12
  %v790 = vld [vmem:[%s788] ss:$16 sm:%s789]
  %vm791 = vcmask 1043458
  %v792 = vsel %vm791, %v790, %v787
  %s793 = scalar_lea.vmem %s0, 387
  %v794 = vld [vmem:[%s793] sm:$0x10]
  %vm795 = vcmask 1044484
  %v796 = vsel %vm795, %v794, %v792
  %s797 = scalar_lea.vmem %s0, 55
  %s798 = smov 96
  %v799 = vld [vmem:[%s797] ss:$16 sm:%s798]
  %vm800 = vcmask 1046533
  %v801 = vsel %vm800, %v799, %v796
  %s802 = scalar_lea.vmem %s0, 160
  %v803 = vld [vmem:[%s802] sm:$0x80]
  %vm804 = vcmask 1047559
  %v805 = vsel %vm804, %v803, %v801
  %806 = vrot.lane.b32.xlu0 %v805, 56
  %v807 = vpop.permute.xlu0 %806
  %vm808 = vcmask 523712
  %s809 = scalar_lea.vmem %s1, 32
  %810 = vst.msk [vmem:[%s809] sm:$0x1f] %vm808, %v807
  %s811 = scalar_lea.vmem %s1, 6
  %812 = vst.msk [vmem:[%s811] sm:$0x60] %vm808, %v807
  %s813 = scalar_lea.vmem %s1, 9
  %814 = vst.msk [vmem:[%s813] sm:$0x80] %vm808, %v807
  %s815 = scalar_lea.vmem %s0, 183
  %s816 = smov 3
  %v817 = vld [vmem:[%s815] ss:$16 sm:%s816]
  %s818 = scalar_lea.vmem %s0, 183
  %s819 = smov 12
  %v820 = vld [vmem:[%s818] ss:$16 sm:%s819]
  %vm821 = vcmask 1043458
  %v822 = vsel %vm821, %v820, %v817
  %s823 = scalar_lea.vmem %s0, 183
  %s824 = smov 48
  %v825 = vld [vmem:[%s823] ss:$16 sm:%s824]
  %vm826 = vcmask 1045508
  %v827 = vsel %vm826, %v825, %v822
  %s828 = scalar_lea.vmem %s0, 183
  %s829 = smov 192
  %v830 = vld [vmem:[%s828] ss:$16 sm:%s829]
  %vm831 = vcmask 1047558
  %v832 = vsel %vm831, %v830, %v827
  %833 = vrot.lane.b32.xlu0 %v832, 56
  %v834 = vpop.permute.xlu0 %833
  %vm835 = vcmask 523712
  %s836 = scalar_lea.vmem %s1, 17
  %837 = vst.msk [vmem:[%s836] sm:$0xf] %vm835, %v834
  %s838 = scalar_lea.vmem %s1, 20
  %839 = vst.msk [vmem:[%s838] sm:$0xf0] %vm835, %v834
  %s840 = scalar_lea.vmem %s0, 311
  %v841 = vld [vmem:[%s840] sm:$0x1]
  %842 = vrot.lane.b32.xlu0 %v841, 56
  %v843 = vpop.permute.xlu0 %842
  %vm844 = vcmask 523712
  %s845 = scalar_lea.vmem %s1, 28
  %846 = vst.msk [vmem:[%s845] sm:$0x1] %vm844, %v843
  %s847 = scalar_lea.vmem %s0, 6
  %s848 = smov 3
  %v849 = vld [vmem:[%s847] ss:$16 sm:%s848]
  %s850 = scalar_lea.vmem %s0, 6
  %s851 = smov 12
  %v852 = vld [vmem:[%s850] ss:$16 sm:%s851]
  %vm853 = vcmask 1043458
  %v854 = vsel %vm853, %v852, %v849
  %s855 = scalar_lea.vmem %s0, 6
  %s856 = smov 48
  %v857 = vld [vmem:[%s855] ss:$16 sm:%s856]
  %vm858 = vcmask 1045508
  %v859 = vsel %vm858, %v857, %v854
  %s860 = scalar_lea.vmem %s0, 6
  %s861 = smov 192
  %v862 = vld [vmem:[%s860] ss:$16 sm:%s861]
  %vm863 = vcmask 1047558
  %v864 = vsel %vm863, %v862, %v859
  %865 = vrot.lane.b32.xlu0 %v864, 48
  %v866 = vpop.permute.xlu0 %865
  %vm867 = vcmask 458112
  %868 = vst.msk [vmem:[%s1] sm:$0x1f] %vm867, %v866
  %s869 = scalar_lea.vmem %s1, 3
  %870 = vst.msk [vmem:[%s869] sm:$0xe0] %vm867, %v866
  %s871 = scalar_lea.vmem %s0, 326
  %s872 = smov 3
  %v873 = vld [vmem:[%s871] ss:$16 sm:%s872]
  %s874 = scalar_lea.vmem %s0, 326
  %s875 = smov 12
  %v876 = vld [vmem:[%s874] ss:$16 sm:%s875]
  %vm877 = vcmask 1043458
  %v878 = vsel %vm877, %v876, %v873
  %s879 = scalar_lea.vmem %s0, 386
  %v880 = vld [vmem:[%s879] sm:$0x10]
  %vm881 = vcmask 1044484
  %v882 = vsel %vm881, %v880, %v878
  %s883 = scalar_lea.vmem %s0, 54
  %s884 = smov 96
  %v885 = vld [vmem:[%s883] ss:$16 sm:%s884]
  %vm886 = vcmask 1046533
  %v887 = vsel %vm886, %v885, %v882
  %s888 = scalar_lea.vmem %s0, 159
  %v889 = vld [vmem:[%s888] sm:$0x80]
  %vm890 = vcmask 1047559
  %v891 = vsel %vm890, %v889, %v887
  %892 = vrot.lane.b32.xlu0 %v891, 48
  %v893 = vpop.permute.xlu0 %892
  %vm894 = vcmask 458112
  %s895 = scalar_lea.vmem %s1, 32
  %896 = vst.msk [vmem:[%s895] sm:$0x1f] %vm894, %v893
  %s897 = scalar_lea.vmem %s1, 6
  %898 = vst.msk [vmem:[%s897] sm:$0x60] %vm894, %v893
  %s899 = scalar_lea.vmem %s1, 9
  %900 = vst.msk [vmem:[%s899] sm:$0x80] %vm894, %v893
  %s901 = scalar_lea.vmem %s0, 182
  %s902 = smov 3
  %v903 = vld [vmem:[%s901] ss:$16 sm:%s902]
  %s904 = scalar_lea.vmem %s0, 182
  %s905 = smov 12
  %v906 = vld [vmem:[%s904] ss:$16 sm:%s905]
  %vm907 = vcmask 1043458
  %v908 = vsel %vm907, %v906, %v903
  %s909 = scalar_lea.vmem %s0, 182
  %s910 = smov 48
  %v911 = vld [vmem:[%s909] ss:$16 sm:%s910]
  %vm912 = vcmask 1045508
  %v913 = vsel %vm912, %v911, %v908
  %s914 = scalar_lea.vmem %s0, 182
  %s915 = smov 192
  %v916 = vld [vmem:[%s914] ss:$16 sm:%s915]
  %vm917 = vcmask 1047558
  %v918 = vsel %vm917, %v916, %v913
  %919 = vrot.lane.b32.xlu0 %v918, 48
  %v920 = vpop.permute.xlu0 %919
  %vm921 = vcmask 458112
  %s922 = scalar_lea.vmem %s1, 17
  %923 = vst.msk [vmem:[%s922] sm:$0xf] %vm921, %v920
  %s924 = scalar_lea.vmem %s1, 20
  %925 = vst.msk [vmem:[%s924] sm:$0xf0] %vm921, %v920
  %s926 = scalar_lea.vmem %s0, 310
  %v927 = vld [vmem:[%s926] sm:$0x1]
  %928 = vrot.lane.b32.xlu0 %v927, 48
  %v929 = vpop.permute.xlu0 %928
  %vm930 = vcmask 458112
  %s931 = scalar_lea.vmem %s1, 28
  %932 = vst.msk [vmem:[%s931] sm:$0x1] %vm930, %v929
  %s933 = scalar_lea.vmem %s0, 5
  %s934 = smov 3
  %v935 = vld [vmem:[%s933] ss:$16 sm:%s934]
  %s936 = scalar_lea.vmem %s0, 5
  %s937 = smov 12
  %v938 = vld [vmem:[%s936] ss:$16 sm:%s937]
  %vm939 = vcmask 1043458
  %v940 = vsel %vm939, %v938, %v935
  %s941 = scalar_lea.vmem %s0, 5
  %s942 = smov 48
  %v943 = vld [vmem:[%s941] ss:$16 sm:%s942]
  %vm944 = vcmask 1045508
  %v945 = vsel %vm944, %v943, %v940
  %s946 = scalar_lea.vmem %s0, 5
  %s947 = smov 192
  %v948 = vld [vmem:[%s946] ss:$16 sm:%s947]
  %vm949 = vcmask 1047558
  %v950 = vsel %vm949, %v948, %v945
  %951 = vrot.lane.b32.xlu0 %v950, 40
  %v952 = vpop.permute.xlu0 %951
  %vm953 = vcmask 392512
  %954 = vst.msk [vmem:[%s1] sm:$0x1f] %vm953, %v952
  %s955 = scalar_lea.vmem %s1, 3
  %956 = vst.msk [vmem:[%s955] sm:$0xe0] %vm953, %v952
  %s957 = scalar_lea.vmem %s0, 325
  %s958 = smov 3
  %v959 = vld [vmem:[%s957] ss:$16 sm:%s958]
  %s960 = scalar_lea.vmem %s0, 325
  %s961 = smov 12
  %v962 = vld [vmem:[%s960] ss:$16 sm:%s961]
  %vm963 = vcmask 1043458
  %v964 = vsel %vm963, %v962, %v959
  %s965 = scalar_lea.vmem %s0, 385
  %v966 = vld [vmem:[%s965] sm:$0x10]
  %vm967 = vcmask 1044484
  %v968 = vsel %vm967, %v966, %v964
  %s969 = scalar_lea.vmem %s0, 53
  %s970 = smov 96
  %v971 = vld [vmem:[%s969] ss:$16 sm:%s970]
  %vm972 = vcmask 1046533
  %v973 = vsel %vm972, %v971, %v968
  %s974 = scalar_lea.vmem %s0, 158
  %v975 = vld [vmem:[%s974] sm:$0x80]
  %vm976 = vcmask 1047559
  %v977 = vsel %vm976, %v975, %v973
  %978 = vrot.lane.b32.xlu0 %v977, 40
  %v979 = vpop.permute.xlu0 %978
  %vm980 = vcmask 392512
  %s981 = scalar_lea.vmem %s1, 32
  %982 = vst.msk [vmem:[%s981] sm:$0x1f] %vm980, %v979
  %s983 = scalar_lea.vmem %s1, 6
  %984 = vst.msk [vmem:[%s983] sm:$0x60] %vm980, %v979
  %s985 = scalar_lea.vmem %s1, 9
  %986 = vst.msk [vmem:[%s985] sm:$0x80] %vm980, %v979
  %s987 = scalar_lea.vmem %s0, 181
  %s988 = smov 3
  %v989 = vld [vmem:[%s987] ss:$16 sm:%s988]
  %s990 = scalar_lea.vmem %s0, 181
  %s991 = smov 12
  %v992 = vld [vmem:[%s990] ss:$16 sm:%s991]
  %vm993 = vcmask 1043458
  %v994 = vsel %vm993, %v992, %v989
  %s995 = scalar_lea.vmem %s0, 181
  %s996 = smov 48
  %v997 = vld [vmem:[%s995] ss:$16 sm:%s996]
  %vm998 = vcmask 1045508
  %v999 = vsel %vm998, %v997, %v994
  %s1000 = scalar_lea.vmem %s0, 181
  %s1001 = smov 192
  %v1002 = vld [vmem:[%s1000] ss:$16 sm:%s1001]
  %vm1003 = vcmask 1047558
  %v1004 = vsel %vm1003, %v1002, %v999
  %1005 = vrot.lane.b32.xlu0 %v1004, 40
  %v1006 = vpop.permute.xlu0 %1005
  %vm1007 = vcmask 392512
  %s1008 = scalar_lea.vmem %s1, 17
  %1009 = vst.msk [vmem:[%s1008] sm:$0xf] %vm1007, %v1006
  %s1010 = scalar_lea.vmem %s1, 20
  %1011 = vst.msk [vmem:[%s1010] sm:$0xf0] %vm1007, %v1006
  %s1012 = scalar_lea.vmem %s0, 309
  %v1013 = vld [vmem:[%s1012] sm:$0x1]
  %1014 = vrot.lane.b32.xlu0 %v1013, 40
  %v1015 = vpop.permute.xlu0 %1014
  %vm1016 = vcmask 392512
  %s1017 = scalar_lea.vmem %s1, 28
  %1018 = vst.msk [vmem:[%s1017] sm:$0x1] %vm1016, %v1015
  %s1019 = scalar_lea.vmem %s0, 4
  %s1020 = smov 3
  %v1021 = vld [vmem:[%s1019] ss:$16 sm:%s1020]
  %s1022 = scalar_lea.vmem %s0, 4
  %s1023 = smov 12
  %v1024 = vld [vmem:[%s1022] ss:$16 sm:%s1023]
  %vm1025 = vcmask 1043458
  %v1026 = vsel %vm1025, %v1024, %v1021
  %s1027 = scalar_lea.vmem %s0, 4
  %s1028 = smov 48
  %v1029 = vld [vmem:[%s1027] ss:$16 sm:%s1028]
  %vm1030 = vcmask 1045508
  %v1031 = vsel %vm1030, %v1029, %v1026
  %s1032 = scalar_lea.vmem %s0, 4
  %s1033 = smov 192
  %v1034 = vld [vmem:[%s1032] ss:$16 sm:%s1033]
  %vm1035 = vcmask 1047558
  %v1036 = vsel %vm1035, %v1034, %v1031
  %1037 = vrot.lane.b32.xlu0 %v1036, 32
  %v1038 = vpop.permute.xlu0 %1037
  %vm1039 = vcmask 326912
  %1040 = vst.msk [vmem:[%s1] sm:$0x1f] %vm1039, %v1038
  %s1041 = scalar_lea.vmem %s1, 3
  %1042 = vst.msk [vmem:[%s1041] sm:$0xe0] %vm1039, %v1038
  %s1043 = scalar_lea.vmem %s0, 324
  %s1044 = smov 3
  %v1045 = vld [vmem:[%s1043] ss:$16 sm:%s1044]
  %s1046 = scalar_lea.vmem %s0, 324
  %s1047 = smov 12
  %v1048 = vld [vmem:[%s1046] ss:$16 sm:%s1047]
  %vm1049 = vcmask 1043458
  %v1050 = vsel %vm1049, %v1048, %v1045
  %s1051 = scalar_lea.vmem %s0, 384
  %v1052 = vld [vmem:[%s1051] sm:$0x10]
  %vm1053 = vcmask 1044484
  %v1054 = vsel %vm1053, %v1052, %v1050
  %s1055 = scalar_lea.vmem %s0, 52
  %s1056 = smov 96
  %v1057 = vld [vmem:[%s1055] ss:$16 sm:%s1056]
  %vm1058 = vcmask 1046533
  %v1059 = vsel %vm1058, %v1057, %v1054
  %s1060 = scalar_lea.vmem %s0, 157
  %v1061 = vld [vmem:[%s1060] sm:$0x80]
  %vm1062 = vcmask 1047559
  %v1063 = vsel %vm1062, %v1061, %v1059
  %1064 = vrot.lane.b32.xlu0 %v1063, 32
  %v1065 = vpop.permute.xlu0 %1064
  %vm1066 = vcmask 326912
  %s1067 = scalar_lea.vmem %s1, 32
  %1068 = vst.msk [vmem:[%s1067] sm:$0x1f] %vm1066, %v1065
  %s1069 = scalar_lea.vmem %s1, 6
  %1070 = vst.msk [vmem:[%s1069] sm:$0x60] %vm1066, %v1065
  %s1071 = scalar_lea.vmem %s1, 9
  %1072 = vst.msk [vmem:[%s1071] sm:$0x80] %vm1066, %v1065
  %s1073 = scalar_lea.vmem %s0, 180
  %s1074 = smov 3
  %v1075 = vld [vmem:[%s1073] ss:$16 sm:%s1074]
  %s1076 = scalar_lea.vmem %s0, 180
  %s1077 = smov 12
  %v1078 = vld [vmem:[%s1076] ss:$16 sm:%s1077]
  %vm1079 = vcmask 1043458
  %v1080 = vsel %vm1079, %v1078, %v1075
  %s1081 = scalar_lea.vmem %s0, 180
  %s1082 = smov 48
  %v1083 = vld [vmem:[%s1081] ss:$16 sm:%s1082]
  %vm1084 = vcmask 1045508
  %v1085 = vsel %vm1084, %v1083, %v1080
  %s1086 = scalar_lea.vmem %s0, 180
  %s1087 = smov 192
  %v1088 = vld [vmem:[%s1086] ss:$16 sm:%s1087]
  %vm1089 = vcmask 1047558
  %v1090 = vsel %vm1089, %v1088, %v1085
  %1091 = vrot.lane.b32.xlu0 %v1090, 32
  %v1092 = vpop.permute.xlu0 %1091
  %vm1093 = vcmask 326912
  %s1094 = scalar_lea.vmem %s1, 17
  %1095 = vst.msk [vmem:[%s1094] sm:$0xf] %vm1093, %v1092
  %s1096 = scalar_lea.vmem %s1, 20
  %1097 = vst.msk [vmem:[%s1096] sm:$0xf0] %vm1093, %v1092
  %s1098 = scalar_lea.vmem %s0, 308
  %v1099 = vld [vmem:[%s1098] sm:$0x1]
  %1100 = vrot.lane.b32.xlu0 %v1099, 32
  %v1101 = vpop.permute.xlu0 %1100
  %vm1102 = vcmask 326912
  %s1103 = scalar_lea.vmem %s1, 28
  %1104 = vst.msk [vmem:[%s1103] sm:$0x1] %vm1102, %v1101
  %s1105 = scalar_lea.vmem %s0, 3
  %s1106 = smov 3
  %v1107 = vld [vmem:[%s1105] ss:$16 sm:%s1106]
  %s1108 = scalar_lea.vmem %s0, 3
  %s1109 = smov 12
  %v1110 = vld [vmem:[%s1108] ss:$16 sm:%s1109]
  %vm1111 = vcmask 1043458
  %v1112 = vsel %vm1111, %v1110, %v1107
  %s1113 = scalar_lea.vmem %s0, 3
  %s1114 = smov 48
  %v1115 = vld [vmem:[%s1113] ss:$16 sm:%s1114]
  %vm1116 = vcmask 1045508
  %v1117 = vsel %vm1116, %v1115, %v1112
  %s1118 = scalar_lea.vmem %s0, 3
  %s1119 = smov 192
  %v1120 = vld [vmem:[%s1118] ss:$16 sm:%s1119]
  %vm1121 = vcmask 1047558
  %v1122 = vsel %vm1121, %v1120, %v1117
  %1123 = vrot.lane.b32.xlu0 %v1122, 24
  %v1124 = vpop.permute.xlu0 %1123
  %vm1125 = vcmask 261312
  %1126 = vst.msk [vmem:[%s1] sm:$0x1f] %vm1125, %v1124
  %s1127 = scalar_lea.vmem %s1, 3
  %1128 = vst.msk [vmem:[%s1127] sm:$0xe0] %vm1125, %v1124
  %s1129 = scalar_lea.vmem %s0, 323
  %s1130 = smov 3
  %v1131 = vld [vmem:[%s1129] ss:$16 sm:%s1130]
  %s1132 = scalar_lea.vmem %s0, 323
  %s1133 = smov 12
  %v1134 = vld [vmem:[%s1132] ss:$16 sm:%s1133]
  %vm1135 = vcmask 1043458
  %v1136 = vsel %vm1135, %v1134, %v1131
  %s1137 = scalar_lea.vmem %s0, 383
  %v1138 = vld [vmem:[%s1137] sm:$0x10]
  %vm1139 = vcmask 1044484
  %v1140 = vsel %vm1139, %v1138, %v1136
  %s1141 = scalar_lea.vmem %s0, 51
  %s1142 = smov 96
  %v1143 = vld [vmem:[%s1141] ss:$16 sm:%s1142]
  %vm1144 = vcmask 1046533
  %v1145 = vsel %vm1144, %v1143, %v1140
  %s1146 = scalar_lea.vmem %s0, 156
  %v1147 = vld [vmem:[%s1146] sm:$0x80]
  %vm1148 = vcmask 1047559
  %v1149 = vsel %vm1148, %v1147, %v1145
  %1150 = vrot.lane.b32.xlu0 %v1149, 24
  %v1151 = vpop.permute.xlu0 %1150
  %vm1152 = vcmask 261312
  %s1153 = scalar_lea.vmem %s1, 32
  %1154 = vst.msk [vmem:[%s1153] sm:$0x1f] %vm1152, %v1151
  %s1155 = scalar_lea.vmem %s1, 6
  %1156 = vst.msk [vmem:[%s1155] sm:$0x60] %vm1152, %v1151
  %s1157 = scalar_lea.vmem %s1, 9
  %1158 = vst.msk [vmem:[%s1157] sm:$0x80] %vm1152, %v1151
  %s1159 = scalar_lea.vmem %s0, 179
  %s1160 = smov 3
  %v1161 = vld [vmem:[%s1159] ss:$16 sm:%s1160]
  %s1162 = scalar_lea.vmem %s0, 179
  %s1163 = smov 12
  %v1164 = vld [vmem:[%s1162] ss:$16 sm:%s1163]
  %vm1165 = vcmask 1043458
  %v1166 = vsel %vm1165, %v1164, %v1161
  %s1167 = scalar_lea.vmem %s0, 179
  %s1168 = smov 48
  %v1169 = vld [vmem:[%s1167] ss:$16 sm:%s1168]
  %vm1170 = vcmask 1045508
  %v1171 = vsel %vm1170, %v1169, %v1166
  %s1172 = scalar_lea.vmem %s0, 179
  %s1173 = smov 192
  %v1174 = vld [vmem:[%s1172] ss:$16 sm:%s1173]
  %vm1175 = vcmask 1047558
  %v1176 = vsel %vm1175, %v1174, %v1171
  %1177 = vrot.lane.b32.xlu0 %v1176, 24
  %v1178 = vpop.permute.xlu0 %1177
  %vm1179 = vcmask 261312
  %s1180 = scalar_lea.vmem %s1, 17
  %1181 = vst.msk [vmem:[%s1180] sm:$0xf] %vm1179, %v1178
  %s1182 = scalar_lea.vmem %s1, 20
  %1183 = vst.msk [vmem:[%s1182] sm:$0xf0] %vm1179, %v1178
  %s1184 = scalar_lea.vmem %s0, 307
  %v1185 = vld [vmem:[%s1184] sm:$0x1]
  %1186 = vrot.lane.b32.xlu0 %v1185, 24
  %v1187 = vpop.permute.xlu0 %1186
  %vm1188 = vcmask 261312
  %s1189 = scalar_lea.vmem %s1, 28
  %1190 = vst.msk [vmem:[%s1189] sm:$0x1] %vm1188, %v1187
  %s1191 = scalar_lea.vmem %s0, 2
  %s1192 = smov 3
  %v1193 = vld [vmem:[%s1191] ss:$16 sm:%s1192]
  %s1194 = scalar_lea.vmem %s0, 2
  %s1195 = smov 12
  %v1196 = vld [vmem:[%s1194] ss:$16 sm:%s1195]
  %vm1197 = vcmask 1043458
  %v1198 = vsel %vm1197, %v1196, %v1193
  %s1199 = scalar_lea.vmem %s0, 2
  %s1200 = smov 48
  %v1201 = vld [vmem:[%s1199] ss:$16 sm:%s1200]
  %vm1202 = vcmask 1045508
  %v1203 = vsel %vm1202, %v1201, %v1198
  %s1204 = scalar_lea.vmem %s0, 2
  %s1205 = smov 192
  %v1206 = vld [vmem:[%s1204] ss:$16 sm:%s1205]
  %vm1207 = vcmask 1047558
  %v1208 = vsel %vm1207, %v1206, %v1203
  %1209 = vrot.lane.b32.xlu0 %v1208, 16
  %v1210 = vpop.permute.xlu0 %1209
  %vm1211 = vcmask 195712
  %1212 = vst.msk [vmem:[%s1] sm:$0x1f] %vm1211, %v1210
  %s1213 = scalar_lea.vmem %s1, 3
  %1214 = vst.msk [vmem:[%s1213] sm:$0xe0] %vm1211, %v1210
  %s1215 = scalar_lea.vmem %s0, 322
  %s1216 = smov 3
  %v1217 = vld [vmem:[%s1215] ss:$16 sm:%s1216]
  %s1218 = scalar_lea.vmem %s0, 322
  %s1219 = smov 12
  %v1220 = vld [vmem:[%s1218] ss:$16 sm:%s1219]
  %vm1221 = vcmask 1043458
  %v1222 = vsel %vm1221, %v1220, %v1217
  %s1223 = scalar_lea.vmem %s0, 382
  %v1224 = vld [vmem:[%s1223] sm:$0x10]
  %vm1225 = vcmask 1044484
  %v1226 = vsel %vm1225, %v1224, %v1222
  %s1227 = scalar_lea.vmem %s0, 50
  %s1228 = smov 96
  %v1229 = vld [vmem:[%s1227] ss:$16 sm:%s1228]
  %vm1230 = vcmask 1046533
  %v1231 = vsel %vm1230, %v1229, %v1226
  %s1232 = scalar_lea.vmem %s0, 155
  %v1233 = vld [vmem:[%s1232] sm:$0x80]
  %vm1234 = vcmask 1047559
  %v1235 = vsel %vm1234, %v1233, %v1231
  %1236 = vrot.lane.b32.xlu0 %v1235, 16
  %v1237 = vpop.permute.xlu0 %1236
  %vm1238 = vcmask 195712
  %s1239 = scalar_lea.vmem %s1, 32
  %1240 = vst.msk [vmem:[%s1239] sm:$0x1f] %vm1238, %v1237
  %s1241 = scalar_lea.vmem %s1, 6
  %1242 = vst.msk [vmem:[%s1241] sm:$0x60] %vm1238, %v1237
  %s1243 = scalar_lea.vmem %s1, 9
  %1244 = vst.msk [vmem:[%s1243] sm:$0x80] %vm1238, %v1237
  %s1245 = scalar_lea.vmem %s0, 178
  %s1246 = smov 3
  %v1247 = vld [vmem:[%s1245] ss:$16 sm:%s1246]
  %s1248 = scalar_lea.vmem %s0, 178
  %s1249 = smov 12
  %v1250 = vld [vmem:[%s1248] ss:$16 sm:%s1249]
  %vm1251 = vcmask 1043458
  %v1252 = vsel %vm1251, %v1250, %v1247
  %s1253 = scalar_lea.vmem %s0, 178
  %s1254 = smov 48
  %v1255 = vld [vmem:[%s1253] ss:$16 sm:%s1254]
  %vm1256 = vcmask 1045508
  %v1257 = vsel %vm1256, %v1255, %v1252
  %s1258 = scalar_lea.vmem %s0, 178
  %s1259 = smov 192
  %v1260 = vld [vmem:[%s1258] ss:$16 sm:%s1259]
  %vm1261 = vcmask 1047558
  %v1262 = vsel %vm1261, %v1260, %v1257
  %1263 = vrot.lane.b32.xlu0 %v1262, 16
  %v1264 = vpop.permute.xlu0 %1263
  %vm1265 = vcmask 195712
  %s1266 = scalar_lea.vmem %s1, 17
  %1267 = vst.msk [vmem:[%s1266] sm:$0xf] %vm1265, %v1264
  %s1268 = scalar_lea.vmem %s1, 20
  %1269 = vst.msk [vmem:[%s1268] sm:$0xf0] %vm1265, %v1264
  %s1270 = scalar_lea.vmem %s0, 306
  %v1271 = vld [vmem:[%s1270] sm:$0x1]
  %1272 = vrot.lane.b32.xlu0 %v1271, 16
  %v1273 = vpop.permute.xlu0 %1272
  %vm1274 = vcmask 195712
  %s1275 = scalar_lea.vmem %s1, 28
  %1276 = vst.msk [vmem:[%s1275] sm:$0x1] %vm1274, %v1273
  %s1277 = scalar_lea.vmem %s0, 1
  %s1278 = smov 3
  %v1279 = vld [vmem:[%s1277] ss:$16 sm:%s1278]
  %s1280 = scalar_lea.vmem %s0, 1
  %s1281 = smov 12
  %v1282 = vld [vmem:[%s1280] ss:$16 sm:%s1281]
  %vm1283 = vcmask 1043458
  %v1284 = vsel %vm1283, %v1282, %v1279
  %s1285 = scalar_lea.vmem %s0, 1
  %s1286 = smov 48
  %v1287 = vld [vmem:[%s1285] ss:$16 sm:%s1286]
  %vm1288 = vcmask 1045508
  %v1289 = vsel %vm1288, %v1287, %v1284
  %s1290 = scalar_lea.vmem %s0, 1
  %s1291 = smov 192
  %v1292 = vld [vmem:[%s1290] ss:$16 sm:%s1291]
  %vm1293 = vcmask 1047558
  %v1294 = vsel %vm1293, %v1292, %v1289
  %1295 = vrot.lane.b32.xlu0 %v1294, 8
  %v1296 = vpop.permute.xlu0 %1295
  %vm1297 = vcmask 130112
  %1298 = vst.msk [vmem:[%s1] sm:$0x1f] %vm1297, %v1296
  %s1299 = scalar_lea.vmem %s1, 3
  %1300 = vst.msk [vmem:[%s1299] sm:$0xe0] %vm1297, %v1296
  %s1301 = scalar_lea.vmem %s0, 321
  %s1302 = smov 3
  %v1303 = vld [vmem:[%s1301] ss:$16 sm:%s1302]
  %s1304 = scalar_lea.vmem %s0, 321
  %s1305 = smov 12
  %v1306 = vld [vmem:[%s1304] ss:$16 sm:%s1305]
  %vm1307 = vcmask 1043458
  %v1308 = vsel %vm1307, %v1306, %v1303
  %s1309 = scalar_lea.vmem %s0, 381
  %v1310 = vld [vmem:[%s1309] sm:$0x10]
  %vm1311 = vcmask 1044484
  %v1312 = vsel %vm1311, %v1310, %v1308
  %s1313 = scalar_lea.vmem %s0, 49
  %s1314 = smov 96
  %v1315 = vld [vmem:[%s1313] ss:$16 sm:%s1314]
  %vm1316 = vcmask 1046533
  %v1317 = vsel %vm1316, %v1315, %v1312
  %s1318 = scalar_lea.vmem %s0, 154
  %v1319 = vld [vmem:[%s1318] sm:$0x80]
  %vm1320 = vcmask 1047559
  %v1321 = vsel %vm1320, %v1319, %v1317
  %1322 = vrot.lane.b32.xlu0 %v1321, 8
  %v1323 = vpop.permute.xlu0 %1322
  %vm1324 = vcmask 130112
  %s1325 = scalar_lea.vmem %s1, 32
  %1326 = vst.msk [vmem:[%s1325] sm:$0x1f] %vm1324, %v1323
  %s1327 = scalar_lea.vmem %s1, 6
  %1328 = vst.msk [vmem:[%s1327] sm:$0x60] %vm1324, %v1323
  %s1329 = scalar_lea.vmem %s1, 9
  %1330 = vst.msk [vmem:[%s1329] sm:$0x80] %vm1324, %v1323
  %s1331 = scalar_lea.vmem %s0, 177
  %s1332 = smov 3
  %v1333 = vld [vmem:[%s1331] ss:$16 sm:%s1332]
  %s1334 = scalar_lea.vmem %s0, 177
  %s1335 = smov 12
  %v1336 = vld [vmem:[%s1334] ss:$16 sm:%s1335]
  %vm1337 = vcmask 1043458
  %v1338 = vsel %vm1337, %v1336, %v1333
  %s1339 = scalar_lea.vmem %s0, 177
  %s1340 = smov 48
  %v1341 = vld [vmem:[%s1339] ss:$16 sm:%s1340]
  %vm1342 = vcmask 1045508
  %v1343 = vsel %vm1342, %v1341, %v1338
  %s1344 = scalar_lea.vmem %s0, 177
  %s1345 = smov 192
  %v1346 = vld [vmem:[%s1344] ss:$16 sm:%s1345]
  %vm1347 = vcmask 1047558
  %v1348 = vsel %vm1347, %v1346, %v1343
  %1349 = vrot.lane.b32.xlu0 %v1348, 8
  %v1350 = vpop.permute.xlu0 %1349
  %vm1351 = vcmask 130112
  %s1352 = scalar_lea.vmem %s1, 17
  %1353 = vst.msk [vmem:[%s1352] sm:$0xf] %vm1351, %v1350
  %s1354 = scalar_lea.vmem %s1, 20
  %1355 = vst.msk [vmem:[%s1354] sm:$0xf0] %vm1351, %v1350
  %s1356 = scalar_lea.vmem %s0, 305
  %v1357 = vld [vmem:[%s1356] sm:$0x1]
  %1358 = vrot.lane.b32.xlu0 %v1357, 8
  %v1359 = vpop.permute.xlu0 %1358
  %vm1360 = vcmask 130112
  %s1361 = scalar_lea.vmem %s1, 28
  %1362 = vst.msk [vmem:[%s1361] sm:$0x1] %vm1360, %v1359

// kernel: casa_forward.3
$region0: #{casa_forward.3}
  #allocation0 [shape = 'u32[]', space=smem, size = 0x4, offset = 0x4, fixed_abs, tag = 'smem constant byte address 0x4 - core index']
  #allocation1 [shape = 'u32[72,128]{1,0:T(1,128)}', space=vmem, size = 0x9000, scoped, tag = 'internal scratch']
  %s0 = inlined_call_operand.vmem [shape: bf16[512,8], index: 0, kind: input, shape index: {}]
  %s1 = inlined_call_operand.vmem [shape: bf16[8,24], index: 1, kind: input, shape index: {}]
  %s2 = inlined_call_operand.vmem [shape: f32[1,24], index: 2, kind: input, shape index: {}]
  %s3 = inlined_call_operand.vmem [shape: bf16[512,8], index: 3, kind: output, shape index: {0}]
  %s4 = inlined_call_operand.vmem [shape: bf16[512,8], index: 4, kind: output, shape index: {1}]
  %s5 = inlined_call_operand.vmem [shape: bf16[512,8], index: 5, kind: output, shape index: {2}]
  %6 = xla_tuple %s3, %s4, %s5
  %s7 = sld [smem:[#allocation0]]
  $region61: #{casa_forward.3} parent=0
    _
  %s9 = ssub.s32 1, %s7
  %s10 = scalar_select 0, %s9, %s7
  loop: start=0, step=1, limit=4
  $region2: #{casa_forward.3} parent=0 // loop_pre_header
    _
  $region3: #{casa_forward.3} parent=0 // loop_header
    %s12 = sphi 0, %s16
    %p13 = scmp.ge.s32.totalorder %s12, 4
    %s22 = sphi 0, %s24
    %s25 = sphi 0, %s22
    %s26 = sphi 0, %s25
    %s42 = sphi 0, %s26
    %s46 = sphi 0, %s46
    %s48 = sphi 0, %s46
    %s49 = sphi 0, %s48
    %s63 = sphi 0, %s49
    %s67 = sphi 0, %s67
    %s69 = sphi 0, %s67
    %s70 = sphi 0, %s69
    %s84 = sphi 0, %s70
    %s90 = sphi 0, %s92
    %s93 = sphi 0, %s90
    %s94 = sphi 0, %s93
    %s110 = sphi 0, %s94
    %s116 = sphi 0, %s118
    %s119 = sphi 0, %s116
    %s120 = sphi 0, %s119
    %s136 = sphi 0, %s120
    %s142 = sphi 0, %s144
    %s145 = sphi 0, %s142
    %s146 = sphi 0, %s145
    %s162 = sphi 0, %s146
  $region4: #{casa_forward.3} parent=0 // loop_header_branch
    %15 = sbr.rel (%p13) target = $region8
  $region5: #{casa_forward.3} parent=0 // loop_body
    %s17 = ssub.s32 %s12, 1
    %s18 = ssub.s32 %s12, 2
    %s19 = sadd.s32 %s12, 1
    %s20 = ssub.s32 %s12, %s19
    %p21 = scmp.eq.s32.totalorder %s20, 0
    %s23 = sadd.s32 %s22, 1
    %s24 = scalar_select %p21, %s22, %s23
    %p27 = pneg %p21
    %p28 = scmp.eq.s32.totalorder %s12, 1
    %p29 = por %p27, %p28
    %p30 = scmp.ne.s32.totalorder %s22, %s25
    %p31 = scmp.eq.s32.totalorder %s12, 0
    %p32 = por %p30, %p31
    %p33 = scmp.ne.s32.totalorder %s22, %s25
    %p34 = scmp.eq.s32.totalorder %s17, 1
    %p35 = por %p33, %p34
    %p36 = scmp.ne.s32.totalorder %s25, %s26
    %p37 = scmp.eq.s32.totalorder %s17, 0
    %p38 = por %p36, %p37
    %p39 = scmp.ne.s32.totalorder %s25, %s26
    %p40 = scmp.eq.s32.totalorder %s18, 1
    %p41 = por %p39, %p40
    %p43 = scmp.ne.s32.totalorder %s26, %s42
    %p44 = scmp.eq.s32.totalorder %s18, 0
    %p45 = por %p43, %p44
    %s47 = sadd.s32 %s46, 1
    %p50 = scmp.eq.s32.totalorder %s12, 1
    %p51 = scmp.ne.s32.totalorder %s46, %s48
    %p52 = scmp.eq.s32.totalorder %s12, 0
    %p53 = por %p51, %p52
    %p54 = scmp.ne.s32.totalorder %s46, %s48
    %p55 = scmp.eq.s32.totalorder %s17, 1
    %p56 = por %p54, %p55
    %p57 = scmp.ne.s32.totalorder %s48, %s49
    %p58 = scmp.eq.s32.totalorder %s17, 0
    %p59 = por %p57, %p58
    %p60 = scmp.ne.s32.totalorder %s48, %s49
    %p61 = scmp.eq.s32.totalorder %s18, 1
    %p62 = por %p60, %p61
    %p64 = scmp.ne.s32.totalorder %s49, %s63
    %p65 = scmp.eq.s32.totalorder %s18, 0
    %p66 = por %p64, %p65
    %s68 = sadd.s32 %s67, 1
    %p71 = scmp.eq.s32.totalorder %s12, 1
    %p72 = scmp.ne.s32.totalorder %s67, %s69
    %p73 = scmp.eq.s32.totalorder %s12, 0
    %p74 = por %p72, %p73
    %p75 = scmp.ne.s32.totalorder %s67, %s69
    %p76 = scmp.eq.s32.totalorder %s17, 1
    %p77 = por %p75, %p76
    %p78 = scmp.ne.s32.totalorder %s69, %s70
    %p79 = scmp.eq.s32.totalorder %s17, 0
    %p80 = por %p78, %p79
    %p81 = scmp.ne.s32.totalorder %s69, %s70
    %p82 = scmp.eq.s32.totalorder %s18, 1
    %p83 = por %p81, %p82
    %p85 = scmp.ne.s32.totalorder %s70, %s84
    %p86 = scmp.eq.s32.totalorder %s18, 0
    %p87 = por %p85, %p86
    %s88 = ssub.s32 %s12, %s19
    %p89 = scmp.eq.s32.totalorder %s88, 0
    %s91 = sadd.s32 %s90, 1
    %s92 = scalar_select %p89, %s90, %s91
    %p95 = pneg %p89
    %p96 = scmp.eq.s32.totalorder %s12, 1
    %p97 = por %p95, %p96
    %p98 = scmp.ne.s32.totalorder %s90, %s93
    %p99 = scmp.eq.s32.totalorder %s12, 0
    %p100 = por %p98, %p99
    %p101 = scmp.ne.s32.totalorder %s90, %s93
    %p102 = scmp.eq.s32.totalorder %s17, 1
    %p103 = por %p101, %p102
    %p104 = scmp.ne.s32.totalorder %s93, %s94
    %p105 = scmp.eq.s32.totalorder %s17, 0
    %p106 = por %p104, %p105
    %p107 = scmp.ne.s32.totalorder %s93, %s94
    %p108 = scmp.eq.s32.totalorder %s18, 1
    %p109 = por %p107, %p108
    %p111 = scmp.ne.s32.totalorder %s94, %s110
    %p112 = scmp.eq.s32.totalorder %s18, 0
    %p113 = por %p111, %p112
    %s114 = ssub.s32 %s12, %s19
    %p115 = scmp.eq.s32.totalorder %s114, 0
    %s117 = sadd.s32 %s116, 1
    %s118 = scalar_select %p115, %s116, %s117
    %p121 = pneg %p115
    %p122 = scmp.eq.s32.totalorder %s12, 1
    %p123 = por %p121, %p122
    %p124 = scmp.ne.s32.totalorder %s116, %s119
    %p125 = scmp.eq.s32.totalorder %s12, 0
    %p126 = por %p124, %p125
    %p127 = scmp.ne.s32.totalorder %s116, %s119
    %p128 = scmp.eq.s32.totalorder %s17, 1
    %p129 = por %p127, %p128
    %p130 = scmp.ne.s32.totalorder %s119, %s120
    %p131 = scmp.eq.s32.totalorder %s17, 0
    %p132 = por %p130, %p131
    %p133 = scmp.ne.s32.totalorder %s119, %s120
    %p134 = scmp.eq.s32.totalorder %s18, 1
    %p135 = por %p133, %p134
    %p137 = scmp.ne.s32.totalorder %s120, %s136
    %p138 = scmp.eq.s32.totalorder %s18, 0
    %p139 = por %p137, %p138
    %s140 = ssub.s32 %s12, %s19
    %p141 = scmp.eq.s32.totalorder %s140, 0
    %s143 = sadd.s32 %s142, 1
    %s144 = scalar_select %p141, %s142, %s143
    %p147 = pneg %p141
    %p148 = scmp.eq.s32.totalorder %s12, 1
    %p149 = por %p147, %p148
    %p150 = scmp.ne.s32.totalorder %s142, %s145
    %p151 = scmp.eq.s32.totalorder %s12, 0
    %p152 = por %p150, %p151
    %p153 = scmp.ne.s32.totalorder %s142, %s145
    %p154 = scmp.eq.s32.totalorder %s17, 1
    %p155 = por %p153, %p154
    %p156 = scmp.ne.s32.totalorder %s145, %s146
    %p157 = scmp.eq.s32.totalorder %s17, 0
    %p158 = por %p156, %p157
    %p159 = scmp.ne.s32.totalorder %s145, %s146
    %p160 = scmp.eq.s32.totalorder %s18, 1
    %p161 = por %p159, %p160
    %p163 = scmp.ne.s32.totalorder %s146, %s162
    %p164 = scmp.eq.s32.totalorder %s18, 0
    %p165 = por %p163, %p164
    %p166 = scmp.le.s32.totalorder 1, %s12
    %p167 = scmp.lt.s32.totalorder %s12, 3
    %p168 = pnand %p166, %p167
    %p169 = pneg %p168
    // Predicated region
    $region9: #{casa_forward.3} parent=5 // pred_check
      _
    $region10: #{casa_forward.3} parent=5 // pred_check_branch
      %171 = sbr.rel (%p168) target = $region12
    $region11: #{casa_forward.3} parent=5 // pred_region
      %s172 = ssub.s32 %s12, 1
      // Predicated region
      $region13: #{casa_forward.3} parent=11 // pred_check
        %p173 = pneg %p59
      $region14: #{casa_forward.3} parent=11 // pred_check_branch
        %175 = sbr.rel (%p173) target = $region16
      $region15: #{casa_forward.3} parent=11 // pred_region
        _
      $region16: #{casa_forward.3} parent=11 // pred_fallthru
        _
      // Predicated region
      $region17: #{casa_forward.3} parent=11 // pred_check
        %p176 = pneg %p80
      $region18: #{casa_forward.3} parent=11 // pred_check_branch
        %178 = sbr.rel (%p176) target = $region20
      $region19: #{casa_forward.3} parent=11 // pred_region
        _
      $region20: #{casa_forward.3} parent=11 // pred_fallthru
        _
    $region12: #{casa_forward.3} parent=5 // pred_fallthru
      _
    %p179 = scmp.lt.s32.totalorder %s12, 2
    // Predicated region
    $region21: #{casa_forward.3} parent=5 // pred_check
      %p180 = pneg %p179
    $region22: #{casa_forward.3} parent=5 // pred_check_branch
      %182 = sbr.rel (%p180) target = $region24
    $region23: #{casa_forward.3} parent=5 // pred_region
      // Predicated region
      $region25: #{casa_forward.3} parent=23 // pred_check
        %p183 = pneg %p32
      $region26: #{casa_forward.3} parent=23 // pred_check_branch
        %185 = sbr.rel (%p183) target = $region28
      $region27: #{casa_forward.3} parent=23 // pred_region
        %s186 = smul.u32 32, %s12
        %p187 = scmp.lt.s32.totalorder %s186, 63
        %s188 = scalar_select %p187, %s186, 63
        %s189 = smul.addr %s188, 4
        %s190 = scalar_lea.vmem %s0, %s189
        %s191 = smul.u32 32, %s12
      $region28: #{casa_forward.3} parent=23 // pred_fallthru
        _
    $region24: #{casa_forward.3} parent=5 // pred_fallthru
      _
    %p192 = scmp.le.s32.totalorder 1, %s12
    %p193 = scmp.lt.s32.totalorder %s12, 3
    %p194 = pnand %p192, %p193
    %p195 = pneg %p194
    // Predicated region
    $region29: #{casa_forward.3} parent=5 // pred_check
      _
    $region30: #{casa_forward.3} parent=5 // pred_check_branch
      %197 = sbr.rel (%p194) target = $region32
    $region31: #{casa_forward.3} parent=5 // pred_region
      %s198 = ssub.s32 %s12, 1
      %s199 = smul.u32 32, %s17
      %p200 = scmp.lt.s32.totalorder %s199, 63
      %s201 = scalar_select %p200, %s199, 63
      %s202 = smul.addr %s201, 4
      %s203 = scalar_lea.vmem %s0, %s202
      %p204 = pneg %p38
      %p205 = pneg %p35
      %p206 = pneg %p59
      %p207 = pneg %p56
      %p208 = pneg %p80
      %p209 = pneg %p77
      %p210 = pneg %p106
      %p211 = pneg %p103
      %s212 = smul.u32 32, %s17
      %p213 = scmp.lt.s32.totalorder %s212, 63
      %s214 = scalar_select %p213, %s212, 63
      %s215 = smul.addr %s214, 4
      %s216 = scalar_lea.vmem %s3, %s215
      %p217 = pneg %p132
      %p218 = pneg %p129
      %s219 = smul.u32 32, %s17
      %p220 = scmp.lt.s32.totalorder %s219, 63
      %s221 = scalar_select %p220, %s219, 63
      %s222 = smul.addr %s221, 4
      %s223 = scalar_lea.vmem %s4, %s222
      %p224 = pneg %p158
      %p225 = pneg %p155
      %s226 = smul.u32 32, %s17
      %p227 = scmp.lt.s32.totalorder %s226, 63
      %s228 = scalar_select %p227, %s226, 63
      %s229 = smul.addr %s228, 4
      %s230 = scalar_lea.vmem %s5, %s229
      %s231 = smul.u32 32, %s17
      %p232 = scmp.lt.s32.totalorder %s231, 63
      %s233 = scalar_select %p232, %s231, 63
      %s234 = smul.addr %s233, 4
      %s235 = scalar_lea.vmem %s0, %s234
      %s236 = smul.u32 32, %s17
      %s237 = smul.u32 32, %s17
      %p238 = scmp.lt.s32.totalorder %s237, 63
      %s239 = scalar_select %p238, %s237, 63
      %s240 = smul.addr %s239, 4
      %s241 = scalar_lea.vmem %s3, %s240
      %s242 = smul.u32 32, %s17
      %s243 = smul.u32 32, %s17
      %p244 = scmp.lt.s32.totalorder %s243, 63
      %s245 = scalar_select %p244, %s243, 63
      %s246 = smul.addr %s245, 4
      %s247 = scalar_lea.vmem %s4, %s246
      %s248 = smul.u32 32, %s17
      %s249 = smul.u32 32, %s17
      %p250 = scmp.lt.s32.totalorder %s249, 63
      %s251 = scalar_select %p250, %s249, 63
      %s252 = smul.addr %s251, 4
      %s253 = scalar_lea.vmem %s5, %s252
      %s254 = smul.u32 32, %s17
      %v256 = vld [vmem:[%s235] sm:$0xf]
      %v257 = vld [vmem:[%s235 + $0x4] sm:$0xf]
      %v258 = vld [vmem:[%s235 + $0x8] sm:$0xf]
      %v259 = vld [vmem:[%s235 + $0xc] sm:$0xf]
      %v260 = vld [vmem:[%s235 + $0x10] sm:$0xf]
      %v261 = vld [vmem:[%s235 + $0x14] sm:$0xf]
      %v262 = vld [vmem:[%s235 + $0x18] sm:$0xf]
      %v263 = vld [vmem:[%s235 + $0x1c] sm:$0xf]
      %v264 = vld [vmem:[%s235 + $0x20] sm:$0xf]
      %v265 = vld [vmem:[%s235 + $0x24] sm:$0xf]
      %v266 = vld [vmem:[%s235 + $0x28] sm:$0xf]
      %v267 = vld [vmem:[%s235 + $0x2c] sm:$0xf]
      %v268 = vld [vmem:[%s235 + $0x30] sm:$0xf]
      %v269 = vld [vmem:[%s235 + $0x34] sm:$0xf]
      %v270 = vld [vmem:[%s235 + $0x38] sm:$0xf]
      %v271 = vld [vmem:[%s235 + $0x3c] sm:$0xf]
      %v272 = vld [vmem:[%s235 + $0x40] sm:$0xf]
      %v273 = vld [vmem:[%s235 + $0x44] sm:$0xf]
      %v274 = vld [vmem:[%s235 + $0x48] sm:$0xf]
      %v275 = vld [vmem:[%s235 + $0x4c] sm:$0xf]
      %v276 = vld [vmem:[%s235 + $0x50] sm:$0xf]
      %v277 = vld [vmem:[%s235 + $0x54] sm:$0xf]
      %v278 = vld [vmem:[%s235 + $0x58] sm:$0xf]
      %v279 = vld [vmem:[%s235 + $0x5c] sm:$0xf]
      %v280 = vld [vmem:[%s235 + $0x60] sm:$0xf]
      %v281 = vld [vmem:[%s235 + $0x64] sm:$0xf]
      %v282 = vld [vmem:[%s235 + $0x68] sm:$0xf]
      %v283 = vld [vmem:[%s235 + $0x6c] sm:$0xf]
      %v284 = vld [vmem:[%s235 + $0x70] sm:$0xf]
      %v285 = vld [vmem:[%s235 + $0x74] sm:$0xf]
      %v286 = vld [vmem:[%s235 + $0x78] sm:$0xf]
      %v287 = vld [vmem:[%s235 + $0x7c] sm:$0xf]
      %v288 = vld [vmem:[%s1] sm:$0xf]
      %v289 = vld [vmem:[%s2] sm:$0x1]
      %v291 = vperm.slane %v289, 0
      %v325 = vunpack.c.l.b16 %v256
      %v326 = vunpack.c.l.b16 %v257
      %v327 = vunpack.c.l.b16 %v258
      %v328 = vunpack.c.l.b16 %v259
      %v329 = vunpack.c.l.b16 %v260
      %v330 = vunpack.c.l.b16 %v261
      %v331 = vunpack.c.l.b16 %v262
      %v332 = vunpack.c.l.b16 %v263
      %v333 = vunpack.c.l.b16 %v264
      %v334 = vunpack.c.l.b16 %v265
      %v335 = vunpack.c.l.b16 %v266
      %v336 = vunpack.c.l.b16 %v267
      %v337 = vunpack.c.l.b16 %v268
      %v338 = vunpack.c.l.b16 %v269
      %v339 = vunpack.c.l.b16 %v270
      %v340 = vunpack.c.l.b16 %v271
      %v341 = vunpack.c.l.b16 %v272
      %v342 = vunpack.c.l.b16 %v273
      %v343 = vunpack.c.l.b16 %v274
      %v344 = vunpack.c.l.b16 %v275
      %v345 = vunpack.c.l.b16 %v276
      %v346 = vunpack.c.l.b16 %v277
      %v347 = vunpack.c.l.b16 %v278
      %v348 = vunpack.c.l.b16 %v279
      %v349 = vunpack.c.l.b16 %v280
      %v350 = vunpack.c.l.b16 %v281
      %v351 = vunpack.c.l.b16 %v282
      %v352 = vunpack.c.l.b16 %v283
      %v353 = vunpack.c.l.b16 %v284
      %v354 = vunpack.c.l.b16 %v285
      %v355 = vunpack.c.l.b16 %v286
      %v356 = vunpack.c.l.b16 %v287
      %v357 = vpack.c.b16 %v326, %v325
      %v358 = vpack.c.b16 %v328, %v327
      %v359 = vpack.c.b16 %v330, %v329
      %v360 = vpack.c.b16 %v332, %v331
      %v361 = vpack.c.b16 %v334, %v333
      %v362 = vpack.c.b16 %v336, %v335
      %v363 = vpack.c.b16 %v338, %v337
      %v364 = vpack.c.b16 %v340, %v339
      %v365 = vpack.c.b16 %v342, %v341
      %v366 = vpack.c.b16 %v344, %v343
      %v367 = vpack.c.b16 %v346, %v345
      %v368 = vpack.c.b16 %v348, %v347
      %v369 = vpack.c.b16 %v350, %v349
      %v370 = vpack.c.b16 %v352, %v351
      %v371 = vpack.c.b16 %v354, %v353
      %v372 = vpack.c.b16 %v356, %v355
      %vm373 = vcmask 64512
      %v375 = vsel %vm373, %v357, 0
      %v378 = vsel %vm373, %v358, 0
      %v381 = vsel %vm373, %v359, 0
      %v384 = vsel %vm373, %v360, 0
      %v387 = vsel %vm373, %v361, 0
      %v390 = vsel %vm373, %v362, 0
      %v393 = vsel %vm373, %v363, 0
      %v396 = vsel %vm373, %v364, 0
      %v399 = vsel %vm373, %v365, 0
      %v402 = vsel %vm373, %v366, 0
      %v405 = vsel %vm373, %v367, 0
      %v408 = vsel %vm373, %v368, 0
      %v411 = vsel %vm373, %v369, 0
      %v414 = vsel %vm373, %v370, 0
      %v417 = vsel %vm373, %v371, 0
      %v420 = vsel %vm373, %v372, 0
      %vm422 = vcmask 1043456
      %v424 = vsel %vm422, %v288, 0
      %426 = vmatpush.bf16.msra.mxu0 0
      %427 = vmatpush.bf16.msra.mxu0 0
      %428 = vmatpush.bf16.msra.mxu0 0
      %429 = vmatpush.bf16.msra.mxu0 0
      %430 = vmatpush.bf16.msra.mxu0 0
      %431 = vmatpush.bf16.msra.mxu0 0
      %432 = vmatpush.bf16.msra.mxu0 0
      %433 = vmatpush.bf16.msra.mxu0 %v424
      %434 = vmatmul.bf16.gmra.mxu0 %v375
      %v435 = vpop.f32.mrf.mxu0
      %v436 = vadd.f32 %v291, %v435
      %v437 = vpop.f32.mrf.mxu0
      %v438 = vadd.f32 %v291, %v437
      %439 = vmatmul.bf16.gmra.mxu0 %v378
      %v440 = vpop.f32.mrf.mxu0
      %v441 = vadd.f32 %v291, %v440
      %v442 = vpop.f32.mrf.mxu0
      %v443 = vadd.f32 %v291, %v442
      %444 = vmatmul.bf16.gmra.mxu0 %v381
      %v445 = vpop.f32.mrf.mxu0
      %v446 = vadd.f32 %v291, %v445
      %v447 = vpop.f32.mrf.mxu0
      %v448 = vadd.f32 %v291, %v447
      %449 = vmatmul.bf16.gmra.mxu0 %v384
      %v450 = vpop.f32.mrf.mxu0
      %v451 = vadd.f32 %v291, %v450
      %v452 = vpop.f32.mrf.mxu0
      %v453 = vadd.f32 %v291, %v452
      %454 = vmatmul.bf16.gmra.mxu0 %v387
      %v455 = vpop.f32.mrf.mxu0
      %v456 = vadd.f32 %v291, %v455
      %v457 = vpop.f32.mrf.mxu0
      %v458 = vadd.f32 %v291, %v457
      %459 = vmatmul.bf16.gmra.mxu0 %v390
      %v460 = vpop.f32.mrf.mxu0
      %v461 = vadd.f32 %v291, %v460
      %v462 = vpop.f32.mrf.mxu0
      %v463 = vadd.f32 %v291, %v462
      %464 = vmatmul.bf16.gmra.mxu0 %v393
      %v465 = vpop.f32.mrf.mxu0
      %v466 = vadd.f32 %v291, %v465
      %v467 = vpop.f32.mrf.mxu0
      %v468 = vadd.f32 %v291, %v467
      %469 = vmatmul.bf16.gmra.mxu0 %v396
      %v470 = vpop.f32.mrf.mxu0
      %v471 = vadd.f32 %v291, %v470
      %v472 = vpop.f32.mrf.mxu0
      %v473 = vadd.f32 %v291, %v472
      %474 = vmatmul.bf16.gmra.mxu0 %v399
      %v475 = vpop.f32.mrf.mxu0
      %v476 = vadd.f32 %v291, %v475
      %v477 = vpop.f32.mrf.mxu0
      %v478 = vadd.f32 %v291, %v477
      %479 = vmatmul.bf16.gmra.mxu0 %v402
      %v480 = vpop.f32.mrf.mxu0
      %v481 = vadd.f32 %v291, %v480
      %v482 = vpop.f32.mrf.mxu0
      %v483 = vadd.f32 %v291, %v482
      %484 = vmatmul.bf16.gmra.mxu0 %v405
      %v485 = vpop.f32.mrf.mxu0
      %v486 = vadd.f32 %v291, %v485
      %v487 = vpop.f32.mrf.mxu0
      %v488 = vadd.f32 %v291, %v487
      %489 = vmatmul.bf16.gmra.mxu0 %v408
      %v490 = vpop.f32.mrf.mxu0
      %v491 = vadd.f32 %v291, %v490
      %v492 = vpop.f32.mrf.mxu0
      %v493 = vadd.f32 %v291, %v492
      %494 = vmatmul.bf16.gmra.mxu0 %v411
      %v495 = vpop.f32.mrf.mxu0
      %v496 = vadd.f32 %v291, %v495
      %v497 = vpop.f32.mrf.mxu0
      %v498 = vadd.f32 %v291, %v497
      %499 = vmatmul.bf16.gmra.mxu0 %v414
      %v500 = vpop.f32.mrf.mxu0
      %v501 = vadd.f32 %v291, %v500
      %v502 = vpop.f32.mrf.mxu0
      %v503 = vadd.f32 %v291, %v502
      %504 = vmatmul.bf16.gmra.mxu0 %v417
      %v505 = vpop.f32.mrf.mxu0
      %v506 = vadd.f32 %v291, %v505
      %v507 = vpop.f32.mrf.mxu0
      %v508 = vadd.f32 %v291, %v507
      %509 = vmatmul.bf16.gmra.mxu0 %v420
      %v510 = vpop.f32.mrf.mxu0
      %v511 = vadd.f32 %v291, %v510
      %v512 = vpop.f32.mrf.mxu0
      %v513 = vadd.f32 %v291, %v512
      %514 = vdwg.mxu0
      %v515 = vpack.c.bf16 %v436, %v436
      %v516 = vpack.c.bf16 %v438, %v438
      %v517 = vpack.c.bf16 %v441, %v441
      %v518 = vpack.c.bf16 %v443, %v443
      %v519 = vpack.c.bf16 %v446, %v446
      %v520 = vpack.c.bf16 %v448, %v448
      %v521 = vpack.c.bf16 %v451, %v451
      %v522 = vpack.c.bf16 %v453, %v453
      %v523 = vpack.c.bf16 %v456, %v456
      %v524 = vpack.c.bf16 %v458, %v458
      %v525 = vpack.c.bf16 %v461, %v461
      %v526 = vpack.c.bf16 %v463, %v463
      %v527 = vpack.c.bf16 %v466, %v466
      %v528 = vpack.c.bf16 %v468, %v468
      %v529 = vpack.c.bf16 %v471, %v471
      %v530 = vpack.c.bf16 %v473, %v473
      %v531 = vpack.c.bf16 %v476, %v476
      %v532 = vpack.c.bf16 %v478, %v478
      %v533 = vpack.c.bf16 %v481, %v481
      %v534 = vpack.c.bf16 %v483, %v483
      %v535 = vpack.c.bf16 %v486, %v486
      %v536 = vpack.c.bf16 %v488, %v488
      %v537 = vpack.c.bf16 %v491, %v491
      %v538 = vpack.c.bf16 %v493, %v493
      %v539 = vpack.c.bf16 %v496, %v496
      %v540 = vpack.c.bf16 %v498, %v498
      %v541 = vpack.c.bf16 %v501, %v501
      %v542 = vpack.c.bf16 %v503, %v503
      %v543 = vpack.c.bf16 %v506, %v506
      %v544 = vpack.c.bf16 %v508, %v508
      %v545 = vpack.c.bf16 %v511, %v511
      %v546 = vpack.c.bf16 %v513, %v513
      %vm547 = vcmask 60416
      %548 = vst.msk [vmem:[%s241] sm:$0xf] %vm547, %v515
      %549 = vst.msk [vmem:[%s241 + $0x4] sm:$0xf] %vm547, %v516
      %550 = vst.msk [vmem:[%s241 + $0x8] sm:$0xf] %vm547, %v517
      %551 = vst.msk [vmem:[%s241 + $0xc] sm:$0xf] %vm547, %v518
      %552 = vst.msk [vmem:[%s241 + $0x10] sm:$0xf] %vm547, %v519
      %553 = vst.msk [vmem:[%s241 + $0x14] sm:$0xf] %vm547, %v520
      %554 = vst.msk [vmem:[%s241 + $0x18] sm:$0xf] %vm547, %v521
      %555 = vst.msk [vmem:[%s241 + $0x1c] sm:$0xf] %vm547, %v522
      %556 = vst.msk [vmem:[%s241 + $0x20] sm:$0xf] %vm547, %v523
      %557 = vst.msk [vmem:[%s241 + $0x24] sm:$0xf] %vm547, %v524
      %558 = vst.msk [vmem:[%s241 + $0x28] sm:$0xf] %vm547, %v525
      %559 = vst.msk [vmem:[%s241 + $0x2c] sm:$0xf] %vm547, %v526
      %560 = vst.msk [vmem:[%s241 + $0x30] sm:$0xf] %vm547, %v527
      %561 = vst.msk [vmem:[%s241 + $0x34] sm:$0xf] %vm547, %v528
      %562 = vst.msk [vmem:[%s241 + $0x38] sm:$0xf] %vm547, %v529
      %563 = vst.msk [vmem:[%s241 + $0x3c] sm:$0xf] %vm547, %v530
      %564 = vst.msk [vmem:[%s241 + $0x40] sm:$0xf] %vm547, %v531
      %565 = vst.msk [vmem:[%s241 + $0x44] sm:$0xf] %vm547, %v532
      %566 = vst.msk [vmem:[%s241 + $0x48] sm:$0xf] %vm547, %v533
      %567 = vst.msk [vmem:[%s241 + $0x4c] sm:$0xf] %vm547, %v534
      %568 = vst.msk [vmem:[%s241 + $0x50] sm:$0xf] %vm547, %v535
      %569 = vst.msk [vmem:[%s241 + $0x54] sm:$0xf] %vm547, %v536
      %570 = vst.msk [vmem:[%s241 + $0x58] sm:$0xf] %vm547, %v537
      %571 = vst.msk [vmem:[%s241 + $0x5c] sm:$0xf] %vm547, %v538
      %572 = vst.msk [vmem:[%s241 + $0x60] sm:$0xf] %vm547, %v539
      %573 = vst.msk [vmem:[%s241 + $0x64] sm:$0xf] %vm547, %v540
      %574 = vst.msk [vmem:[%s241 + $0x68] sm:$0xf] %vm547, %v541
      %575 = vst.msk [vmem:[%s241 + $0x6c] sm:$0xf] %vm547, %v542
      %576 = vst.msk [vmem:[%s241 + $0x70] sm:$0xf] %vm547, %v543
      %577 = vst.msk [vmem:[%s241 + $0x74] sm:$0xf] %vm547, %v544
      %578 = vst.msk [vmem:[%s241 + $0x78] sm:$0xf] %vm547, %v545
      %579 = vst.msk [vmem:[%s241 + $0x7c] sm:$0xf] %vm547, %v546
      %612 = vrot.lane.b32.xlu0 %v515, 120
      %v613 = vpop.permute.xlu0 %612
      %614 = vrot.lane.b32.xlu0 %v516, 120
      %v615 = vpop.permute.xlu0 %614
      %616 = vrot.lane.b32.xlu0 %v517, 120
      %v617 = vpop.permute.xlu0 %616
      %618 = vrot.lane.b32.xlu0 %v518, 120
      %v619 = vpop.permute.xlu0 %618
      %620 = vrot.lane.b32.xlu0 %v519, 120
      %v621 = vpop.permute.xlu0 %620
      %622 = vrot.lane.b32.xlu0 %v520, 120
      %v623 = vpop.permute.xlu0 %622
      %624 = vrot.lane.b32.xlu0 %v521, 120
      %v625 = vpop.permute.xlu0 %624
      %626 = vrot.lane.b32.xlu0 %v522, 120
      %v627 = vpop.permute.xlu0 %626
      %628 = vrot.lane.b32.xlu0 %v523, 120
      %v629 = vpop.permute.xlu0 %628
      %630 = vrot.lane.b32.xlu0 %v524, 120
      %v631 = vpop.permute.xlu0 %630
      %632 = vrot.lane.b32.xlu0 %v525, 120
      %v633 = vpop.permute.xlu0 %632
      %634 = vrot.lane.b32.xlu0 %v526, 120
      %v635 = vpop.permute.xlu0 %634
      %636 = vrot.lane.b32.xlu0 %v527, 120
      %v637 = vpop.permute.xlu0 %636
      %638 = vrot.lane.b32.xlu0 %v528, 120
      %v639 = vpop.permute.xlu0 %638
      %640 = vrot.lane.b32.xlu0 %v529, 120
      %v641 = vpop.permute.xlu0 %640
      %642 = vrot.lane.b32.xlu0 %v530, 120
      %v643 = vpop.permute.xlu0 %642
      %644 = vrot.lane.b32.xlu0 %v531, 120
      %v645 = vpop.permute.xlu0 %644
      %646 = vrot.lane.b32.xlu0 %v532, 120
      %v647 = vpop.permute.xlu0 %646
      %648 = vrot.lane.b32.xlu0 %v533, 120
      %v649 = vpop.permute.xlu0 %648
      %650 = vrot.lane.b32.xlu0 %v534, 120
      %v651 = vpop.permute.xlu0 %650
      %652 = vrot.lane.b32.xlu0 %v535, 120
      %v653 = vpop.permute.xlu0 %652
      %654 = vrot.lane.b32.xlu0 %v536, 120
      %v655 = vpop.permute.xlu0 %654
      %656 = vrot.lane.b32.xlu0 %v537, 120
      %v657 = vpop.permute.xlu0 %656
      %658 = vrot.lane.b32.xlu0 %v538, 120
      %v659 = vpop.permute.xlu0 %658
      %660 = vrot.lane.b32.xlu0 %v539, 120
      %v661 = vpop.permute.xlu0 %660
      %662 = vrot.lane.b32.xlu0 %v540, 120
      %v663 = vpop.permute.xlu0 %662
      %664 = vrot.lane.b32.xlu0 %v541, 120
      %v665 = vpop.permute.xlu0 %664
      %666 = vrot.lane.b32.xlu0 %v542, 120
      %v667 = vpop.permute.xlu0 %666
      %668 = vrot.lane.b32.xlu0 %v543, 120
      %v669 = vpop.permute.xlu0 %668
      %670 = vrot.lane.b32.xlu0 %v544, 120
      %v671 = vpop.permute.xlu0 %670
      %672 = vrot.lane.b32.xlu0 %v545, 120
      %v673 = vpop.permute.xlu0 %672
      %674 = vrot.lane.b32.xlu0 %v546, 120
      %v675 = vpop.permute.xlu0 %674
      %708 = vst.msk [vmem:[%s247] sm:$0xf] %vm547, %v613
      %709 = vst.msk [vmem:[%s247 + $0x4] sm:$0xf] %vm547, %v615
      %710 = vst.msk [vmem:[%s247 + $0x8] sm:$0xf] %vm547, %v617
      %711 = vst.msk [vmem:[%s247 + $0xc] sm:$0xf] %vm547, %v619
      %712 = vst.msk [vmem:[%s247 + $0x10] sm:$0xf] %vm547, %v621
      %713 = vst.msk [vmem:[%s247 + $0x14] sm:$0xf] %vm547, %v623
      %714 = vst.msk [vmem:[%s247 + $0x18] sm:$0xf] %vm547, %v625
      %715 = vst.msk [vmem:[%s247 + $0x1c] sm:$0xf] %vm547, %v627
      %716 = vst.msk [vmem:[%s247 + $0x20] sm:$0xf] %vm547, %v629
      %717 = vst.msk [vmem:[%s247 + $0x24] sm:$0xf] %vm547, %v631
      %718 = vst.msk [vmem:[%s247 + $0x28] sm:$0xf] %vm547, %v633
      %719 = vst.msk [vmem:[%s247 + $0x2c] sm:$0xf] %vm547, %v635
      %720 = vst.msk [vmem:[%s247 + $0x30] sm:$0xf] %vm547, %v637
      %721 = vst.msk [vmem:[%s247 + $0x34] sm:$0xf] %vm547, %v639
      %722 = vst.msk [vmem:[%s247 + $0x38] sm:$0xf] %vm547, %v641
      %723 = vst.msk [vmem:[%s247 + $0x3c] sm:$0xf] %vm547, %v643
      %724 = vst.msk [vmem:[%s247 + $0x40] sm:$0xf] %vm547, %v645
      %725 = vst.msk [vmem:[%s247 + $0x44] sm:$0xf] %vm547, %v647
      %726 = vst.msk [vmem:[%s247 + $0x48] sm:$0xf] %vm547, %v649
      %727 = vst.msk [vmem:[%s247 + $0x4c] sm:$0xf] %vm547, %v651
      %728 = vst.msk [vmem:[%s247 + $0x50] sm:$0xf] %vm547, %v653
      %729 = vst.msk [vmem:[%s247 + $0x54] sm:$0xf] %vm547, %v655
      %730 = vst.msk [vmem:[%s247 + $0x58] sm:$0xf] %vm547, %v657
      %731 = vst.msk [vmem:[%s247 + $0x5c] sm:$0xf] %vm547, %v659
      %732 = vst.msk [vmem:[%s247 + $0x60] sm:$0xf] %vm547, %v661
      %733 = vst.msk [vmem:[%s247 + $0x64] sm:$0xf] %vm547, %v663
      %734 = vst.msk [vmem:[%s247 + $0x68] sm:$0xf] %vm547, %v665
      %735 = vst.msk [vmem:[%s247 + $0x6c] sm:$0xf] %vm547, %v667
      %736 = vst.msk [vmem:[%s247 + $0x70] sm:$0xf] %vm547, %v669
      %737 = vst.msk [vmem:[%s247 + $0x74] sm:$0xf] %vm547, %v671
      %738 = vst.msk [vmem:[%s247 + $0x78] sm:$0xf] %vm547, %v673
      %739 = vst.msk [vmem:[%s247 + $0x7c] sm:$0xf] %vm547, %v675
      %740 = vrot.lane.b32.xlu0 %v515, 112
      %v741 = vpop.permute.xlu0 %740
      %742 = vrot.lane.b32.xlu0 %v516, 112
      %v743 = vpop.permute.xlu0 %742
      %744 = vrot.lane.b32.xlu0 %v517, 112
      %v745 = vpop.permute.xlu0 %744
      %746 = vrot.lane.b32.xlu0 %v518, 112
      %v747 = vpop.permute.xlu0 %746
      %748 = vrot.lane.b32.xlu0 %v519, 112
      %v749 = vpop.permute.xlu0 %748
      %750 = vrot.lane.b32.xlu0 %v520, 112
      %v751 = vpop.permute.xlu0 %750
      %752 = vrot.lane.b32.xlu0 %v521, 112
      %v753 = vpop.permute.xlu0 %752
      %754 = vrot.lane.b32.xlu0 %v522, 112
      %v755 = vpop.permute.xlu0 %754
      %756 = vrot.lane.b32.xlu0 %v523, 112
      %v757 = vpop.permute.xlu0 %756
      %758 = vrot.lane.b32.xlu0 %v524, 112
      %v759 = vpop.permute.xlu0 %758
      %760 = vrot.lane.b32.xlu0 %v525, 112
      %v761 = vpop.permute.xlu0 %760
      %762 = vrot.lane.b32.xlu0 %v526, 112
      %v763 = vpop.permute.xlu0 %762
      %764 = vrot.lane.b32.xlu0 %v527, 112
      %v765 = vpop.permute.xlu0 %764
      %766 = vrot.lane.b32.xlu0 %v528, 112
      %v767 = vpop.permute.xlu0 %766
      %768 = vrot.lane.b32.xlu0 %v529, 112
      %v769 = vpop.permute.xlu0 %768
      %770 = vrot.lane.b32.xlu0 %v530, 112
      %v771 = vpop.permute.xlu0 %770
      %772 = vrot.lane.b32.xlu0 %v531, 112
      %v773 = vpop.permute.xlu0 %772
      %774 = vrot.lane.b32.xlu0 %v532, 112
      %v775 = vpop.permute.xlu0 %774
      %776 = vrot.lane.b32.xlu0 %v533, 112
      %v777 = vpop.permute.xlu0 %776
      %778 = vrot.lane.b32.xlu0 %v534, 112
      %v779 = vpop.permute.xlu0 %778
      %780 = vrot.lane.b32.xlu0 %v535, 112
      %v781 = vpop.permute.xlu0 %780
      %782 = vrot.lane.b32.xlu0 %v536, 112
      %v783 = vpop.permute.xlu0 %782
      %784 = vrot.lane.b32.xlu0 %v537, 112
      %v785 = vpop.permute.xlu0 %784
      %786 = vrot.lane.b32.xlu0 %v538, 112
      %v787 = vpop.permute.xlu0 %786
      %788 = vrot.lane.b32.xlu0 %v539, 112
      %v789 = vpop.permute.xlu0 %788
      %790 = vrot.lane.b32.xlu0 %v540, 112
      %v791 = vpop.permute.xlu0 %790
      %792 = vrot.lane.b32.xlu0 %v541, 112
      %v793 = vpop.permute.xlu0 %792
      %794 = vrot.lane.b32.xlu0 %v542, 112
      %v795 = vpop.permute.xlu0 %794
      %796 = vrot.lane.b32.xlu0 %v543, 112
      %v797 = vpop.permute.xlu0 %796
      %798 = vrot.lane.b32.xlu0 %v544, 112
      %v799 = vpop.permute.xlu0 %798
      %800 = vrot.lane.b32.xlu0 %v545, 112
      %v801 = vpop.permute.xlu0 %800
      %802 = vrot.lane.b32.xlu0 %v546, 112
      %v803 = vpop.permute.xlu0 %802
      %836 = vst.msk [vmem:[%s253] sm:$0xf] %vm547, %v741
      %837 = vst.msk [vmem:[%s253 + $0x4] sm:$0xf] %vm547, %v743
      %838 = vst.msk [vmem:[%s253 + $0x8] sm:$0xf] %vm547, %v745
      %839 = vst.msk [vmem:[%s253 + $0xc] sm:$0xf] %vm547, %v747
      %840 = vst.msk [vmem:[%s253 + $0x10] sm:$0xf] %vm547, %v749
      %841 = vst.msk [vmem:[%s253 + $0x14] sm:$0xf] %vm547, %v751
      %842 = vst.msk [vmem:[%s253 + $0x18] sm:$0xf] %vm547, %v753
      %843 = vst.msk [vmem:[%s253 + $0x1c] sm:$0xf] %vm547, %v755
      %844 = vst.msk [vmem:[%s253 + $0x20] sm:$0xf] %vm547, %v757
      %845 = vst.msk [vmem:[%s253 + $0x24] sm:$0xf] %vm547, %v759
      %846 = vst.msk [vmem:[%s253 + $0x28] sm:$0xf] %vm547, %v761
      %847 = vst.msk [vmem:[%s253 + $0x2c] sm:$0xf] %vm547, %v763
      %848 = vst.msk [vmem:[%s253 + $0x30] sm:$0xf] %vm547, %v765
      %849 = vst.msk [vmem:[%s253 + $0x34] sm:$0xf] %vm547, %v767
      %850 = vst.msk [vmem:[%s253 + $0x38] sm:$0xf] %vm547, %v769
      %851 = vst.msk [vmem:[%s253 + $0x3c] sm:$0xf] %vm547, %v771
      %852 = vst.msk [vmem:[%s253 + $0x40] sm:$0xf] %vm547, %v773
      %853 = vst.msk [vmem:[%s253 + $0x44] sm:$0xf] %vm547, %v775
      %854 = vst.msk [vmem:[%s253 + $0x48] sm:$0xf] %vm547, %v777
      %855 = vst.msk [vmem:[%s253 + $0x4c] sm:$0xf] %vm547, %v779
      %856 = vst.msk [vmem:[%s253 + $0x50] sm:$0xf] %vm547, %v781
      %857 = vst.msk [vmem:[%s253 + $0x54] sm:$0xf] %vm547, %v783
      %858 = vst.msk [vmem:[%s253 + $0x58] sm:$0xf] %vm547, %v785
      %859 = vst.msk [vmem:[%s253 + $0x5c] sm:$0xf] %vm547, %v787
      %860 = vst.msk [vmem:[%s253 + $0x60] sm:$0xf] %vm547, %v789
      %861 = vst.msk [vmem:[%s253 + $0x64] sm:$0xf] %vm547, %v791
      %862 = vst.msk [vmem:[%s253 + $0x68] sm:$0xf] %vm547, %v793
      %863 = vst.msk [vmem:[%s253 + $0x6c] sm:$0xf] %vm547, %v795
      %864 = vst.msk [vmem:[%s253 + $0x70] sm:$0xf] %vm547, %v797
      %865 = vst.msk [vmem:[%s253 + $0x74] sm:$0xf] %vm547, %v799
      %866 = vst.msk [vmem:[%s253 + $0x78] sm:$0xf] %vm547, %v801
      %867 = vst.msk [vmem:[%s253 + $0x7c] sm:$0xf] %vm547, %v803
      %s868 = smul.u32 32, %s17
      %p869 = scmp.lt.s32.totalorder %s868, 63
      %s870 = scalar_select %p869, %s868, 63
      %s871 = smul.addr %s870, 4
      %s872 = scalar_lea.vmem %s3, %s871
      %s873 = smul.u32 32, %s17
      %p874 = scmp.lt.s32.totalorder %s873, 63
      %s875 = scalar_select %p874, %s873, 63
      %s876 = smul.addr %s875, 4
      %s877 = scalar_lea.vmem %s4, %s876
      %s878 = smul.u32 32, %s17
      %p879 = scmp.lt.s32.totalorder %s878, 63
      %s880 = scalar_select %p879, %s878, 63
      %s881 = smul.addr %s880, 4
      %s882 = scalar_lea.vmem %s5, %s881
      // Predicated region
      $region33: #{casa_forward.3} parent=31 // pred_check
        %p883 = pneg %p103
      $region34: #{casa_forward.3} parent=31 // pred_check_branch
        %885 = sbr.rel (%p883) target = $region36
      $region35: #{casa_forward.3} parent=31 // pred_region
        %s886 = smul.u32 32, %s17
      $region36: #{casa_forward.3} parent=31 // pred_fallthru
        _
      // Predicated region
      $region37: #{casa_forward.3} parent=31 // pred_check
        %p887 = pneg %p129
      $region38: #{casa_forward.3} parent=31 // pred_check_branch
        %889 = sbr.rel (%p887) target = $region40
      $region39: #{casa_forward.3} parent=31 // pred_region
        %s890 = smul.u32 32, %s17
      $region40: #{casa_forward.3} parent=31 // pred_fallthru
        _
      // Predicated region
      $region41: #{casa_forward.3} parent=31 // pred_check
        %p891 = pneg %p155
      $region42: #{casa_forward.3} parent=31 // pred_check_branch
        %893 = sbr.rel (%p891) target = $region44
      $region43: #{casa_forward.3} parent=31 // pred_region
        %s894 = smul.u32 32, %s17
      $region44: #{casa_forward.3} parent=31 // pred_fallthru
        _
    $region32: #{casa_forward.3} parent=5 // pred_fallthru
      _
    %p895 = scmp.le.s32.totalorder 2, %s12
    // Predicated region
    $region45: #{casa_forward.3} parent=5 // pred_check
      %p896 = pneg %p895
    $region46: #{casa_forward.3} parent=5 // pred_check_branch
      %898 = sbr.rel (%p896) target = $region48
    $region47: #{casa_forward.3} parent=5 // pred_region
      %s899 = ssub.s32 %s12, 2
      // Predicated region
      $region49: #{casa_forward.3} parent=47 // pred_check
        %p900 = pneg %p109
      $region50: #{casa_forward.3} parent=47 // pred_check_branch
        %902 = sbr.rel (%p900) target = $region52
      $region51: #{casa_forward.3} parent=47 // pred_region
        %s903 = smul.u32 32, %s18
        %p904 = scmp.lt.s32.totalorder %s903, 63
        %s905 = scalar_select %p904, %s903, 63
        %s906 = smul.addr %s905, 4
        %s907 = scalar_lea.vmem %s3, %s906
      $region52: #{casa_forward.3} parent=47 // pred_fallthru
        _
      // Predicated region
      $region53: #{casa_forward.3} parent=47 // pred_check
        %p908 = pneg %p135
      $region54: #{casa_forward.3} parent=47 // pred_check_branch
        %910 = sbr.rel (%p908) target = $region56
      $region55: #{casa_forward.3} parent=47 // pred_region
        %s911 = smul.u32 32, %s18
        %p912 = scmp.lt.s32.totalorder %s911, 63
        %s913 = scalar_select %p912, %s911, 63
        %s914 = smul.addr %s913, 4
        %s915 = scalar_lea.vmem %s4, %s914
      $region56: #{casa_forward.3} parent=47 // pred_fallthru
        _
      // Predicated region
      $region57: #{casa_forward.3} parent=47 // pred_check
        %p916 = pneg %p161
      $region58: #{casa_forward.3} parent=47 // pred_check_branch
        %918 = sbr.rel (%p916) target = $region60
      $region59: #{casa_forward.3} parent=47 // pred_region
        %s919 = smul.u32 32, %s18
        %p920 = scmp.lt.s32.totalorder %s919, 63
        %s921 = scalar_select %p920, %s919, 63
        %s922 = smul.addr %s921, 4
        %s923 = scalar_lea.vmem %s5, %s922
      $region60: #{casa_forward.3} parent=47 // pred_fallthru
        _
    $region48: #{casa_forward.3} parent=5 // pred_fallthru
      _
  $region6: #{casa_forward.3} parent=0 // loop_footer
    %s16 = sadd.s32 1, %s12
  $region7: #{casa_forward.3} parent=0 // loop_footer_branch
    %11 = sbr.rel target = $region3
  $region8: #{casa_forward.3} parent=0 // loop_exit
    _

// kernel: casa_forward.5
$region0: #{casa_forward.5}
  #allocation0 [shape = 'u32[]', space=smem, size = 0x4, offset = 0x4, fixed_abs, tag = 'smem constant byte address 0x4 - core index']
  #allocation1 [shape = 'u32[72,128]{1,0:T(1,128)}', space=vmem, size = 0x9000, scoped, tag = 'internal scratch']
  #allocation2 [shape = 'bf16[128,8]{1,0:T(8,128)(2,1)}', space=vmem, size = 0x8000, scoped, tag = 'scratch operand']
  #allocation3 [shape = 'bf16[128,8]{1,0:T(8,128)(2,1)}', space=vmem, size = 0x8000, scoped, tag = 'scratch operand']
  #allocation4 [shape = 'bf16[64,128]{1,0:T(8,128)(2,1)}', space=vmem, size = 0x4000, scoped, tag = 'scratch operand']
  %s0 = inlined_call_operand.vmem [shape: bf16[8,64,8], index: 0, kind: input, shape index: {}]
  %s1 = inlined_call_operand.vmem [shape: bf16[8,64,8], index: 1, kind: input, shape index: {}]
  %s2 = inlined_call_operand.vmem [shape: bf16[8,64,8], index: 2, kind: input, shape index: {}]
  %s3 = inlined_call_operand.vmem [shape: bf16[8,64,8], index: 3, kind: input, shape index: {}]
  %s4 = inlined_call_operand.vmem [shape: f32[8,64,8], index: 4, kind: output, shape index: {}]
  %s5 = sld [smem:[#allocation0]]
  $region49: #{casa_forward.5} parent=0
    _
  %s7 = ssub.s32 1, %s5
  %s8 = scalar_select 0, %s7, %s5
  loop: start=0, step=1, limit=4
  $region2: #{casa_forward.5} parent=0 // loop_pre_header
    _
  $region3: #{casa_forward.5} parent=0 // loop_header
    %s10 = sphi 0, %s14
    %p11 = scmp.ge.s32.totalorder %s10, 4
    %s20 = sphi 0, %s22
    %s23 = sphi 0, %s20
    %s24 = sphi 0, %s23
    %s40 = sphi 0, %s24
    %s46 = sphi 0, %s48
    %s49 = sphi 0, %s46
    %s50 = sphi 0, %s49
    %s66 = sphi 0, %s50
    %s72 = sphi 0, %s74
    %s75 = sphi 0, %s72
    %s76 = sphi 0, %s75
    %s92 = sphi 0, %s76
    %s98 = sphi 0, %s100
    %s101 = sphi 0, %s98
    %s102 = sphi 0, %s101
    %s118 = sphi 0, %s102
    %s124 = sphi 0, %s126
    %s127 = sphi 0, %s124
    %s128 = sphi 0, %s127
    %s144 = sphi 0, %s128
  $region4: #{casa_forward.5} parent=0 // loop_header_branch
    %13 = sbr.rel (%p11) target = $region8
  $region5: #{casa_forward.5} parent=0 // loop_body
    %s15 = ssub.s32 %s10, 1
    %s16 = ssub.s32 %s10, 2
    %s17 = sadd.s32 %s10, 1
    %s18 = ssub.s32 %s10, %s17
    %p19 = scmp.eq.s32.totalorder %s18, 0
    %s21 = sadd.s32 %s20, 1
    %s22 = scalar_select %p19, %s20, %s21
    %p25 = pneg %p19
    %p26 = scmp.eq.s32.totalorder %s10, 1
    %p27 = por %p25, %p26
    %p28 = scmp.ne.s32.totalorder %s20, %s23
    %p29 = scmp.eq.s32.totalorder %s10, 0
    %p30 = por %p28, %p29
    %p31 = scmp.ne.s32.totalorder %s20, %s23
    %p32 = scmp.eq.s32.totalorder %s15, 1
    %p33 = por %p31, %p32
    %p34 = scmp.ne.s32.totalorder %s23, %s24
    %p35 = scmp.eq.s32.totalorder %s15, 0
    %p36 = por %p34, %p35
    %p37 = scmp.ne.s32.totalorder %s23, %s24
    %p38 = scmp.eq.s32.totalorder %s16, 1
    %p39 = por %p37, %p38
    %p41 = scmp.ne.s32.totalorder %s24, %s40
    %p42 = scmp.eq.s32.totalorder %s16, 0
    %p43 = por %p41, %p42
    %s44 = ssub.s32 %s10, %s17
    %p45 = scmp.eq.s32.totalorder %s44, 0
    %s47 = sadd.s32 %s46, 1
    %s48 = scalar_select %p45, %s46, %s47
    %p51 = pneg %p45
    %p52 = scmp.eq.s32.totalorder %s10, 1
    %p53 = por %p51, %p52
    %p54 = scmp.ne.s32.totalorder %s46, %s49
    %p55 = scmp.eq.s32.totalorder %s10, 0
    %p56 = por %p54, %p55
    %p57 = scmp.ne.s32.totalorder %s46, %s49
    %p58 = scmp.eq.s32.totalorder %s15, 1
    %p59 = por %p57, %p58
    %p60 = scmp.ne.s32.totalorder %s49, %s50
    %p61 = scmp.eq.s32.totalorder %s15, 0
    %p62 = por %p60, %p61
    %p63 = scmp.ne.s32.totalorder %s49, %s50
    %p64 = scmp.eq.s32.totalorder %s16, 1
    %p65 = por %p63, %p64
    %p67 = scmp.ne.s32.totalorder %s50, %s66
    %p68 = scmp.eq.s32.totalorder %s16, 0
    %p69 = por %p67, %p68
    %s70 = ssub.s32 %s10, %s17
    %p71 = scmp.eq.s32.totalorder %s70, 0
    %s73 = sadd.s32 %s72, 1
    %s74 = scalar_select %p71, %s72, %s73
    %p77 = pneg %p71
    %p78 = scmp.eq.s32.totalorder %s10, 1
    %p79 = por %p77, %p78
    %p80 = scmp.ne.s32.totalorder %s72, %s75
    %p81 = scmp.eq.s32.totalorder %s10, 0
    %p82 = por %p80, %p81
    %p83 = scmp.ne.s32.totalorder %s72, %s75
    %p84 = scmp.eq.s32.totalorder %s15, 1
    %p85 = por %p83, %p84
    %p86 = scmp.ne.s32.totalorder %s75, %s76
    %p87 = scmp.eq.s32.totalorder %s15, 0
    %p88 = por %p86, %p87
    %p89 = scmp.ne.s32.totalorder %s75, %s76
    %p90 = scmp.eq.s32.totalorder %s16, 1
    %p91 = por %p89, %p90
    %p93 = scmp.ne.s32.totalorder %s76, %s92
    %p94 = scmp.eq.s32.totalorder %s16, 0
    %p95 = por %p93, %p94
    %s96 = ssub.s32 %s10, %s17
    %p97 = scmp.eq.s32.totalorder %s96, 0
    %s99 = sadd.s32 %s98, 1
    %s100 = scalar_select %p97, %s98, %s99
    %p103 = pneg %p97
    %p104 = scmp.eq.s32.totalorder %s10, 1
    %p105 = por %p103, %p104
    %p106 = scmp.ne.s32.totalorder %s98, %s101
    %p107 = scmp.eq.s32.totalorder %s10, 0
    %p108 = por %p106, %p107
    %p109 = scmp.ne.s32.totalorder %s98, %s101
    %p110 = scmp.eq.s32.totalorder %s15, 1
    %p111 = por %p109, %p110
    %p112 = scmp.ne.s32.totalorder %s101, %s102
    %p113 = scmp.eq.s32.totalorder %s15, 0
    %p114 = por %p112, %p113
    %p115 = scmp.ne.s32.totalorder %s101, %s102
    %p116 = scmp.eq.s32.totalorder %s16, 1
    %p117 = por %p115, %p116
    %p119 = scmp.ne.s32.totalorder %s102, %s118
    %p120 = scmp.eq.s32.totalorder %s16, 0
    %p121 = por %p119, %p120
    %s122 = ssub.s32 %s10, %s17
    %p123 = scmp.eq.s32.totalorder %s122, 0
    %s125 = sadd.s32 %s124, 1
    %s126 = scalar_select %p123, %s124, %s125
    %p129 = pneg %p123
    %p130 = scmp.eq.s32.totalorder %s10, 1
    %p131 = por %p129, %p130
    %p132 = scmp.ne.s32.totalorder %s124, %s127
    %p133 = scmp.eq.s32.totalorder %s10, 0
    %p134 = por %p132, %p133
    %p135 = scmp.ne.s32.totalorder %s124, %s127
    %p136 = scmp.eq.s32.totalorder %s15, 1
    %p137 = por %p135, %p136
    %p138 = scmp.ne.s32.totalorder %s127, %s128
    %p139 = scmp.eq.s32.totalorder %s15, 0
    %p140 = por %p138, %p139
    %p141 = scmp.ne.s32.totalorder %s127, %s128
    %p142 = scmp.eq.s32.totalorder %s16, 1
    %p143 = por %p141, %p142
    %p145 = scmp.ne.s32.totalorder %s128, %s144
    %p146 = scmp.eq.s32.totalorder %s16, 0
    %p147 = por %p145, %p146
    %p148 = scmp.le.s32.totalorder 1, %s10
    %p149 = scmp.lt.s32.totalorder %s10, 3
    %p150 = pnand %p148, %p149
    %p151 = pneg %p150
    // Predicated region
    $region9: #{casa_forward.5} parent=5 // pred_check
      _
    $region10: #{casa_forward.5} parent=5 // pred_check_branch
      %153 = sbr.rel (%p150) target = $region12
    $region11: #{casa_forward.5} parent=5 // pred_region
      %s154 = ssub.s32 %s10, 1
    $region12: #{casa_forward.5} parent=5 // pred_fallthru
      _
    %p155 = scmp.lt.s32.totalorder %s10, 2
    // Predicated region
    $region13: #{casa_forward.5} parent=5 // pred_check
      %p156 = pneg %p155
    $region14: #{casa_forward.5} parent=5 // pred_check_branch
      %158 = sbr.rel (%p156) target = $region16
    $region15: #{casa_forward.5} parent=5 // pred_region
      // Predicated region
      $region17: #{casa_forward.5} parent=15 // pred_check
        %p159 = pneg %p30
      $region18: #{casa_forward.5} parent=15 // pred_check_branch
        %161 = sbr.rel (%p159) target = $region20
      $region19: #{casa_forward.5} parent=15 // pred_region
        %s162 = smul.u32 4, %s10
        %p163 = scmp.lt.s32.totalorder %s162, 7
        %s164 = scalar_select %p163, %s162, 7
        %s165 = smul.addr %s164, 8
        %s166 = smul.addr %s165, 4
        %s167 = scalar_lea.vmem %s0, %s166
        %s168 = smul.u32 4, %s10
      $region20: #{casa_forward.5} parent=15 // pred_fallthru
        _
      // Predicated region
      $region21: #{casa_forward.5} parent=15 // pred_check
        %p169 = pneg %p56
      $region22: #{casa_forward.5} parent=15 // pred_check_branch
        %171 = sbr.rel (%p169) target = $region24
      $region23: #{casa_forward.5} parent=15 // pred_region
        %s172 = smul.u32 4, %s10
        %p173 = scmp.lt.s32.totalorder %s172, 7
        %s174 = scalar_select %p173, %s172, 7
        %s175 = smul.addr %s174, 8
        %s176 = smul.addr %s175, 4
        %s177 = scalar_lea.vmem %s1, %s176
        %s178 = smul.u32 4, %s10
      $region24: #{casa_forward.5} parent=15 // pred_fallthru
        _
      // Predicated region
      $region25: #{casa_forward.5} parent=15 // pred_check
        %p179 = pneg %p82
      $region26: #{casa_forward.5} parent=15 // pred_check_branch
        %181 = sbr.rel (%p179) target = $region28
      $region27: #{casa_forward.5} parent=15 // pred_region
        %s182 = smul.u32 4, %s10
        %p183 = scmp.lt.s32.totalorder %s182, 7
        %s184 = scalar_select %p183, %s182, 7
        %s185 = smul.addr %s184, 8
        %s186 = smul.addr %s185, 4
        %s187 = scalar_lea.vmem %s2, %s186
        %s188 = smul.u32 4, %s10
      $region28: #{casa_forward.5} parent=15 // pred_fallthru
        _
      // Predicated region
      $region29: #{casa_forward.5} parent=15 // pred_check
        %p189 = pneg %p108
      $region30: #{casa_forward.5} parent=15 // pred_check_branch
        %191 = sbr.rel (%p189) target = $region32
      $region31: #{casa_forward.5} parent=15 // pred_region
        %s192 = smul.u32 4, %s10
        %p193 = scmp.lt.s32.totalorder %s192, 7
        %s194 = scalar_select %p193, %s192, 7
        %s195 = smul.addr %s194, 8
        %s196 = smul.addr %s195, 4
        %s197 = scalar_lea.vmem %s3, %s196
        %s198 = smul.u32 4, %s10
      $region32: #{casa_forward.5} parent=15 // pred_fallthru
        _
    $region16: #{casa_forward.5} parent=5 // pred_fallthru
      _
    %p199 = scmp.le.s32.totalorder 1, %s10
    %p200 = scmp.lt.s32.totalorder %s10, 3
    %p201 = pnand %p199, %p200
    %p202 = pneg %p201
    // Predicated region
    $region33: #{casa_forward.5} parent=5 // pred_check
      _
    $region34: #{casa_forward.5} parent=5 // pred_check_branch
      %204 = sbr.rel (%p201) target = $region36
    $region35: #{casa_forward.5} parent=5 // pred_region
      %s205 = ssub.s32 %s10, 1
      %s206 = smul.u32 4, %s15
      %p207 = scmp.lt.s32.totalorder %s206, 7
      %s208 = scalar_select %p207, %s206, 7
      %s209 = smul.addr %s208, 8
      %s210 = smul.addr %s209, 4
      %s211 = scalar_lea.vmem %s0, %s210
      %p212 = pneg %p36
      %p213 = pneg %p33
      %s214 = smul.u32 4, %s15
      %p215 = scmp.lt.s32.totalorder %s214, 7
      %s216 = scalar_select %p215, %s214, 7
      %s217 = smul.addr %s216, 8
      %s218 = smul.addr %s217, 4
      %s219 = scalar_lea.vmem %s1, %s218
      %p220 = pneg %p62
      %p221 = pneg %p59
      %s222 = smul.u32 4, %s15
      %p223 = scmp.lt.s32.totalorder %s222, 7
      %s224 = scalar_select %p223, %s222, 7
      %s225 = smul.addr %s224, 8
      %s226 = smul.addr %s225, 4
      %s227 = scalar_lea.vmem %s2, %s226
      %p228 = pneg %p88
      %p229 = pneg %p85
      %s230 = smul.u32 4, %s15
      %p231 = scmp.lt.s32.totalorder %s230, 7
      %s232 = scalar_select %p231, %s230, 7
      %s233 = smul.addr %s232, 8
      %s234 = smul.addr %s233, 4
      %s235 = scalar_lea.vmem %s3, %s234
      %p236 = pneg %p114
      %p237 = pneg %p111
      %p238 = pneg %p140
      %p239 = pneg %p137
      %s240 = smul.u32 4, %s15
      %p241 = scmp.lt.s32.totalorder %s240, 7
      %s242 = scalar_select %p241, %s240, 7
      %s243 = smul.addr %s242, 8
      %s244 = smul.addr %s243, 8
      %s245 = scalar_lea.vmem %s4, %s244
      %s246 = smul.u32 4, %s15
      %p247 = scmp.lt.s32.totalorder %s246, 7
      %s248 = scalar_select %p247, %s246, 7
      %s249 = smul.addr %s248, 8
      %s250 = smul.addr %s249, 4
      %s251 = scalar_lea.vmem %s0, %s250
      %s252 = smul.u32 4, %s15
      %s253 = smul.u32 4, %s15
      %p254 = scmp.lt.s32.totalorder %s253, 7
      %s255 = scalar_select %p254, %s253, 7
      %s256 = smul.addr %s255, 8
      %s257 = smul.addr %s256, 4
      %s258 = scalar_lea.vmem %s1, %s257
      %s259 = smul.u32 4, %s15
      %s260 = smul.u32 4, %s15
      %p261 = scmp.lt.s32.totalorder %s260, 7
      %s262 = scalar_select %p261, %s260, 7
      %s263 = smul.addr %s262, 8
      %s264 = smul.addr %s263, 4
      %s265 = scalar_lea.vmem %s2, %s264
      %s266 = smul.u32 4, %s15
      %s267 = smul.u32 4, %s15
      %p268 = scmp.lt.s32.totalorder %s267, 7
      %s269 = scalar_select %p268, %s267, 7
      %s270 = smul.addr %s269, 8
      %s271 = smul.addr %s270, 4
      %s272 = scalar_lea.vmem %s3, %s271
      %s273 = smul.u32 4, %s15
      %s274 = smul.u32 4, %s15
      %p275 = scmp.lt.s32.totalorder %s274, 7
      %s276 = scalar_select %p275, %s274, 7
      %s277 = smul.addr %s276, 8
      %s278 = smul.addr %s277, 8
      %s279 = scalar_lea.vmem %s4, %s278
      %s280 = smul.u32 4, %s15
      %vm282 = vcmask 60416
      %283 = vst.msk [vmem:[#allocation2] sm:$0xf] %vm282, 0
      %284 = vst.msk [vmem:[#allocation2 + $0x4] sm:$0xf] %vm282, 0
      %285 = vst.msk [vmem:[#allocation2 + $0x8] sm:$0xf] %vm282, 0
      %286 = vst.msk [vmem:[#allocation2 + $0xc] sm:$0xf] %vm282, 0
      %287 = vst.msk [vmem:[#allocation2 + $0x10] sm:$0xf] %vm282, 0
      %288 = vst.msk [vmem:[#allocation2 + $0x14] sm:$0xf] %vm282, 0
      %289 = vst.msk [vmem:[#allocation2 + $0x18] sm:$0xf] %vm282, 0
      %290 = vst.msk [vmem:[#allocation2 + $0x1c] sm:$0xf] %vm282, 0
      %291 = vst.msk [vmem:[#allocation2 + $0x20] sm:$0xf] %vm282, 0
      %292 = vst.msk [vmem:[#allocation2 + $0x24] sm:$0xf] %vm282, 0
      %293 = vst.msk [vmem:[#allocation2 + $0x28] sm:$0xf] %vm282, 0
      %294 = vst.msk [vmem:[#allocation2 + $0x2c] sm:$0xf] %vm282, 0
      %295 = vst.msk [vmem:[#allocation2 + $0x30] sm:$0xf] %vm282, 0
      %296 = vst.msk [vmem:[#allocation2 + $0x34] sm:$0xf] %vm282, 0
      %297 = vst.msk [vmem:[#allocation2 + $0x38] sm:$0xf] %vm282, 0
      %298 = vst.msk [vmem:[#allocation2 + $0x3c] sm:$0xf] %vm282, 0
      %299 = vst.msk [vmem:[#allocation3] sm:$0xf] %vm282, 0
      %300 = vst.msk [vmem:[#allocation3 + $0x4] sm:$0xf] %vm282, 0
      %301 = vst.msk [vmem:[#allocation3 + $0x8] sm:$0xf] %vm282, 0
      %302 = vst.msk [vmem:[#allocation3 + $0xc] sm:$0xf] %vm282, 0
      %303 = vst.msk [vmem:[#allocation3 + $0x10] sm:$0xf] %vm282, 0
      %304 = vst.msk [vmem:[#allocation3 + $0x14] sm:$0xf] %vm282, 0
      %305 = vst.msk [vmem:[#allocation3 + $0x18] sm:$0xf] %vm282, 0
      %306 = vst.msk [vmem:[#allocation3 + $0x1c] sm:$0xf] %vm282, 0
      %307 = vst.msk [vmem:[#allocation3 + $0x20] sm:$0xf] %vm282, 0
      %308 = vst.msk [vmem:[#allocation3 + $0x24] sm:$0xf] %vm282, 0
      %309 = vst.msk [vmem:[#allocation3 + $0x28] sm:$0xf] %vm282, 0
      %310 = vst.msk [vmem:[#allocation3 + $0x2c] sm:$0xf] %vm282, 0
      %311 = vst.msk [vmem:[#allocation3 + $0x30] sm:$0xf] %vm282, 0
      %312 = vst.msk [vmem:[#allocation3 + $0x34] sm:$0xf] %vm282, 0
      %313 = vst.msk [vmem:[#allocation3 + $0x38] sm:$0xf] %vm282, 0
      %314 = vst.msk [vmem:[#allocation3 + $0x3c] sm:$0xf] %vm282, 0
      %v315 = vld [vmem:[%s258] sm:$0xf]
      %v316 = vld [vmem:[%s258 + $0x4] sm:$0xf]
      %v317 = vld [vmem:[%s258 + $0x8] sm:$0xf]
      %v318 = vld [vmem:[%s258 + $0xc] sm:$0xf]
      %v319 = vld [vmem:[%s258 + $0x10] sm:$0xf]
      %v320 = vld [vmem:[%s258 + $0x14] sm:$0xf]
      %v321 = vld [vmem:[%s258 + $0x18] sm:$0xf]
      %v322 = vld [vmem:[%s258 + $0x1c] sm:$0xf]
      %v323 = vld [vmem:[%s265] sm:$0xf]
      %v324 = vld [vmem:[%s265 + $0x4] sm:$0xf]
      %v325 = vld [vmem:[%s265 + $0x8] sm:$0xf]
      %v326 = vld [vmem:[%s265 + $0xc] sm:$0xf]
      %v327 = vld [vmem:[%s265 + $0x10] sm:$0xf]
      %v328 = vld [vmem:[%s265 + $0x14] sm:$0xf]
      %v329 = vld [vmem:[%s265 + $0x18] sm:$0xf]
      %v330 = vld [vmem:[%s265 + $0x1c] sm:$0xf]
      %vm331 = vcmask 27648
      %332 = vst.msk [vmem:[#allocation2] sm:$0xf] %vm331, %v315
      %333 = vst.msk [vmem:[#allocation2 + $0x4] sm:$0xf] %vm331, %v316
      %334 = vst.msk [vmem:[#allocation2 + $0x8] sm:$0xf] %vm331, %v317
      %335 = vst.msk [vmem:[#allocation2 + $0xc] sm:$0xf] %vm331, %v318
      %336 = vst.msk [vmem:[#allocation2 + $0x10] sm:$0xf] %vm331, %v319
      %337 = vst.msk [vmem:[#allocation2 + $0x14] sm:$0xf] %vm331, %v320
      %338 = vst.msk [vmem:[#allocation2 + $0x18] sm:$0xf] %vm331, %v321
      %339 = vst.msk [vmem:[#allocation2 + $0x1c] sm:$0xf] %vm331, %v322
      %340 = vst.msk [vmem:[#allocation3] sm:$0xf] %vm331, %v323
      %341 = vst.msk [vmem:[#allocation3 + $0x4] sm:$0xf] %vm331, %v324
      %342 = vst.msk [vmem:[#allocation3 + $0x8] sm:$0xf] %vm331, %v325
      %343 = vst.msk [vmem:[#allocation3 + $0xc] sm:$0xf] %vm331, %v326
      %344 = vst.msk [vmem:[#allocation3 + $0x10] sm:$0xf] %vm331, %v327
      %345 = vst.msk [vmem:[#allocation3 + $0x14] sm:$0xf] %vm331, %v328
      %346 = vst.msk [vmem:[#allocation3 + $0x18] sm:$0xf] %vm331, %v329
      %347 = vst.msk [vmem:[#allocation3 + $0x1c] sm:$0xf] %vm331, %v330
      %vm348 = vcmask 60448
      %349 = vst.msk [vmem:[#allocation2 + $0x20] sm:$0xf] %vm348, %v315
      %350 = vst.msk [vmem:[#allocation2 + $0x24] sm:$0xf] %vm348, %v316
      %351 = vst.msk [vmem:[#allocation2 + $0x28] sm:$0xf] %vm348, %v317
      %352 = vst.msk [vmem:[#allocation2 + $0x2c] sm:$0xf] %vm348, %v318
      %353 = vst.msk [vmem:[#allocation2 + $0x30] sm:$0xf] %vm348, %v319
      %354 = vst.msk [vmem:[#allocation2 + $0x34] sm:$0xf] %vm348, %v320
      %355 = vst.msk [vmem:[#allocation2 + $0x38] sm:$0xf] %vm348, %v321
      %356 = vst.msk [vmem:[#allocation2 + $0x3c] sm:$0xf] %vm348, %v322
      %357 = vst.msk [vmem:[#allocation3 + $0x20] sm:$0xf] %vm348, %v323
      %358 = vst.msk [vmem:[#allocation3 + $0x24] sm:$0xf] %vm348, %v324
      %359 = vst.msk [vmem:[#allocation3 + $0x28] sm:$0xf] %vm348, %v325
      %360 = vst.msk [vmem:[#allocation3 + $0x2c] sm:$0xf] %vm348, %v326
      %361 = vst.msk [vmem:[#allocation3 + $0x30] sm:$0xf] %vm348, %v327
      %362 = vst.msk [vmem:[#allocation3 + $0x34] sm:$0xf] %vm348, %v328
      %363 = vst.msk [vmem:[#allocation3 + $0x38] sm:$0xf] %vm348, %v329
      %364 = vst.msk [vmem:[#allocation3 + $0x3c] sm:$0xf] %vm348, %v330
      %v365 = vld [vmem:[%s251] sm:$0xf]
      %v366 = vld [vmem:[%s251 + $0x4] sm:$0xf]
      %v367 = vld [vmem:[%s251 + $0x8] sm:$0xf]
      %v368 = vld [vmem:[%s251 + $0xc] sm:$0xf]
      %v369 = vld [vmem:[%s251 + $0x10] sm:$0xf]
      %v370 = vld [vmem:[%s251 + $0x14] sm:$0xf]
      %v371 = vld [vmem:[%s251 + $0x18] sm:$0xf]
      %v372 = vld [vmem:[%s251 + $0x1c] sm:$0xf]
      %v373 = vld [vmem:[#allocation2] sm:$0xf]
      %v374 = vld [vmem:[#allocation2 + $0x4] sm:$0xf]
      %v375 = vld [vmem:[#allocation2 + $0x8] sm:$0xf]
      %v376 = vld [vmem:[#allocation2 + $0xc] sm:$0xf]
      %v377 = vld [vmem:[#allocation2 + $0x10] sm:$0xf]
      %v378 = vld [vmem:[#allocation2 + $0x14] sm:$0xf]
      %v379 = vld [vmem:[#allocation2 + $0x18] sm:$0xf]
      %v380 = vld [vmem:[#allocation2 + $0x1c] sm:$0xf]
      %v381 = vld [vmem:[#allocation2 + $0x20] sm:$0xf]
      %v382 = vld [vmem:[#allocation2 + $0x24] sm:$0xf]
      %v383 = vld [vmem:[#allocation2 + $0x28] sm:$0xf]
      %v384 = vld [vmem:[#allocation2 + $0x2c] sm:$0xf]
      %v385 = vld [vmem:[#allocation2 + $0x30] sm:$0xf]
      %v386 = vld [vmem:[#allocation2 + $0x34] sm:$0xf]
      %v387 = vld [vmem:[#allocation2 + $0x38] sm:$0xf]
      %v388 = vld [vmem:[#allocation2 + $0x3c] sm:$0xf]
      %v397 = vunpack.c.l.b16 %v365
      %v398 = vunpack.c.l.b16 %v366
      %v399 = vunpack.c.l.b16 %v367
      %v400 = vunpack.c.l.b16 %v368
      %v401 = vunpack.c.l.b16 %v369
      %v402 = vunpack.c.l.b16 %v370
      %v403 = vunpack.c.l.b16 %v371
      %v404 = vunpack.c.l.b16 %v372
      %v405 = vpack.c.b16 %v398, %v397
      %v406 = vpack.c.b16 %v400, %v399
      %v407 = vpack.c.b16 %v402, %v401
      %v408 = vpack.c.b16 %v404, %v403
      %v425 = vunpack.c.l.b16 %v373
      %v426 = vunpack.c.l.b16 %v374
      %v427 = vunpack.c.l.b16 %v375
      %v428 = vunpack.c.l.b16 %v376
      %v429 = vunpack.c.l.b16 %v377
      %v430 = vunpack.c.l.b16 %v378
      %v431 = vunpack.c.l.b16 %v379
      %v432 = vunpack.c.l.b16 %v380
      %v433 = vunpack.c.l.b16 %v381
      %v434 = vunpack.c.l.b16 %v382
      %v435 = vunpack.c.l.b16 %v383
      %v436 = vunpack.c.l.b16 %v384
      %v437 = vunpack.c.l.b16 %v385
      %v438 = vunpack.c.l.b16 %v386
      %v439 = vunpack.c.l.b16 %v387
      %v440 = vunpack.c.l.b16 %v388
      %v441 = vpack.c.b16 %v426, %v425
      %v442 = vpack.c.b16 %v428, %v427
      %v443 = vpack.c.b16 %v430, %v429
      %v444 = vpack.c.b16 %v432, %v431
      %v445 = vpack.c.b16 %v434, %v433
      %v446 = vpack.c.b16 %v436, %v435
      %v447 = vpack.c.b16 %v438, %v437
      %v448 = vpack.c.b16 %v440, %v439
      %vm449 = vcmask 64512
      %v451 = vsel %vm449, %v405, 0
      %v454 = vsel %vm449, %v406, 0
      %v457 = vsel %vm449, %v407, 0
      %v460 = vsel %vm449, %v408, 0
      %v463 = vsel %vm449, %v441, 0
      %v466 = vsel %vm449, %v442, 0
      %v469 = vsel %vm449, %v443, 0
      %v472 = vsel %vm449, %v444, 0
      %v475 = vsel %vm449, %v445, 0
      %v478 = vsel %vm449, %v446, 0
      %v481 = vsel %vm449, %v447, 0
      %v484 = vsel %vm449, %v448, 0
      %486 = vmatpush.bf16.xpose.msra.mxu0 %v484
      %487 = vmatpush.bf16.xpose.msra.mxu0 %v481
      %488 = vmatpush.bf16.xpose.msra.mxu0 %v478
      %489 = vmatpush.bf16.xpose.msra.mxu0 %v475
      %490 = vmatpush.bf16.xpose.msra.mxu0 %v472
      %491 = vmatpush.bf16.xpose.msra.mxu0 %v469
      %492 = vmatpush.bf16.xpose.msra.mxu0 %v466
      %493 = vmatpush.bf16.xpose.msra.mxu0 %v463
      %494 = vmatmul.bf16.gmra.mxu0 %v451
      %v495 = vpop.f32.mrf.mxu0
      %v496 = vadd.f32 0.0, %v495
      %v497 = vpop.f32.mrf.mxu0
      %v498 = vadd.f32 0.0, %v497
      %499 = vmatmul.bf16.gmra.mxu0 %v454
      %v500 = vpop.f32.mrf.mxu0
      %v501 = vadd.f32 0.0, %v500
      %v502 = vpop.f32.mrf.mxu0
      %v503 = vadd.f32 0.0, %v502
      %504 = vmatmul.bf16.gmra.mxu0 %v457
      %v505 = vpop.f32.mrf.mxu0
      %v506 = vadd.f32 0.0, %v505
      %v507 = vpop.f32.mrf.mxu0
      %v508 = vadd.f32 0.0, %v507
      %509 = vmatmul.bf16.gmra.mxu0 %v460
      %v510 = vpop.f32.mrf.mxu0
      %v511 = vadd.f32 0.0, %v510
      %v512 = vpop.f32.mrf.mxu0
      %v513 = vadd.f32 0.0, %v512
      %514 = vdwg.mxu0
      %v515 = vmul.f32 %v496, 0.5
      %v516 = vmul.f32 %v498, 0.5
      %v517 = vmul.f32 %v501, 0.5
      %v518 = vmul.f32 %v503, 0.5
      %v519 = vmul.f32 %v506, 0.5
      %v520 = vmul.f32 %v508, 0.5
      %v521 = vmul.f32 %v511, 0.5
      %v522 = vmul.f32 %v513, 0.5
      %vm523 = vcmask 523264
      %v524 = vsel %vm523, %v515, -inf
      %525 = vmax.xlane.f32.xlu0 %v524
      %v526 = vpop.xlane.xlu0 %525
      %v527 = vsel %vm523, %v516, -inf
      %528 = vmax.xlane.f32.xlu0 %v527
      %v529 = vpop.xlane.xlu0 %528
      %v530 = vsel %vm523, %v517, -inf
      %531 = vmax.xlane.f32.xlu0 %v530
      %v532 = vpop.xlane.xlu0 %531
      %v533 = vsel %vm523, %v518, -inf
      %534 = vmax.xlane.f32.xlu0 %v533
      %v535 = vpop.xlane.xlu0 %534
      %v536 = vsel %vm523, %v519, -inf
      %537 = vmax.xlane.f32.xlu0 %v536
      %v538 = vpop.xlane.xlu0 %537
      %v539 = vsel %vm523, %v520, -inf
      %540 = vmax.xlane.f32.xlu0 %v539
      %v541 = vpop.xlane.xlu0 %540
      %v542 = vsel %vm523, %v521, -inf
      %543 = vmax.xlane.f32.xlu0 %v542
      %v544 = vpop.xlane.xlu0 %543
      %v545 = vsel %vm523, %v522, -inf
      %546 = vmax.xlane.f32.xlu0 %v545
      %v547 = vpop.xlane.xlu0 %546
      %v548 = vsub.f32 %v515, %v526
      %v549 = vsub.f32 %v516, %v529
      %v550 = vsub.f32 %v517, %v532
      %v551 = vsub.f32 %v518, %v535
      %v552 = vsub.f32 %v519, %v538
      %v553 = vsub.f32 %v520, %v541
      %v554 = vsub.f32 %v521, %v544
      %v555 = vsub.f32 %v522, %v547
      %v556 = vmul.f32 %v548, 1.442695
      %v557 = vpow.pop %v556
      %v558 = vmul.f32 %v549, 1.442695
      %v559 = vpow.pop %v558
      %v560 = vmul.f32 %v550, 1.442695
      %v561 = vpow.pop %v560
      %v562 = vmul.f32 %v551, 1.442695
      %v563 = vpow.pop %v562
      %v564 = vmul.f32 %v552, 1.442695
      %v565 = vpow.pop %v564
      %v566 = vmul.f32 %v553, 1.442695
      %v567 = vpow.pop %v566
      %v568 = vmul.f32 %v554, 1.442695
      %v569 = vpow.pop %v568
      %v570 = vmul.f32 %v555, 1.442695
      %v571 = vpow.pop %v570
      %v572 = vsel %vm523, %v557, 0.0
      %573 = vadd.xlane.f32.xlu0 %v572
      %v574 = vpop.xlane.xlu0 %573
      %v575 = vsel %vm523, %v559, 0.0
      %576 = vadd.xlane.f32.xlu0 %v575
      %v577 = vpop.xlane.xlu0 %576
      %v578 = vsel %vm523, %v561, 0.0
      %579 = vadd.xlane.f32.xlu0 %v578
      %v580 = vpop.xlane.xlu0 %579
      %v581 = vsel %vm523, %v563, 0.0
      %582 = vadd.xlane.f32.xlu0 %v581
      %v583 = vpop.xlane.xlu0 %582
      %v584 = vsel %vm523, %v565, 0.0
      %585 = vadd.xlane.f32.xlu0 %v584
      %v586 = vpop.xlane.xlu0 %585
      %v587 = vsel %vm523, %v567, 0.0
      %588 = vadd.xlane.f32.xlu0 %v587
      %v589 = vpop.xlane.xlu0 %588
      %v590 = vsel %vm523, %v569, 0.0
      %591 = vadd.xlane.f32.xlu0 %v590
      %v592 = vpop.xlane.xlu0 %591
      %v593 = vsel %vm523, %v571, 0.0
      %594 = vadd.xlane.f32.xlu0 %v593
      %v595 = vpop.xlane.xlu0 %594
      %v596 = vrcp.pop %v574
      %v597 = vrcp.pop %v577
      %v598 = vrcp.pop %v580
      %v599 = vrcp.pop %v583
      %v600 = vrcp.pop %v586
      %v601 = vrcp.pop %v589
      %v602 = vrcp.pop %v592
      %v603 = vrcp.pop %v595
      %v604 = vmul.f32 %v557, %v596
      %v605 = vmul.f32 %v559, %v597
      %v606 = vmul.f32 %v561, %v598
      %v607 = vmul.f32 %v563, %v599
      %v608 = vmul.f32 %v565, %v600
      %v609 = vmul.f32 %v567, %v601
      %v610 = vmul.f32 %v569, %v602
      %v611 = vmul.f32 %v571, %v603
      %v612 = vpack.c.bf16 %v604, %v604
      %v613 = vpack.c.bf16 %v605, %v605
      %v614 = vpack.c.bf16 %v606, %v606
      %v615 = vpack.c.bf16 %v607, %v607
      %v616 = vpack.c.bf16 %v608, %v608
      %v617 = vpack.c.bf16 %v609, %v609
      %v618 = vpack.c.bf16 %v610, %v610
      %v619 = vpack.c.bf16 %v611, %v611
      %vm620 = vcmask 519168
      %621 = vst.msk [vmem:[#allocation4] sm:$0xf] %vm620, %v612
      %622 = vst.msk [vmem:[#allocation4 + $0x4] sm:$0xf] %vm620, %v613
      %623 = vst.msk [vmem:[#allocation4 + $0x8] sm:$0xf] %vm620, %v614
      %624 = vst.msk [vmem:[#allocation4 + $0xc] sm:$0xf] %vm620, %v615
      %625 = vst.msk [vmem:[#allocation4 + $0x10] sm:$0xf] %vm620, %v616
      %626 = vst.msk [vmem:[#allocation4 + $0x14] sm:$0xf] %vm620, %v617
      %627 = vst.msk [vmem:[#allocation4 + $0x18] sm:$0xf] %vm620, %v618
      %628 = vst.msk [vmem:[#allocation4 + $0x1c] sm:$0xf] %vm620, %v619
      %vm629 = vcmask 1048064
      %v630 = vsel %vm629, %v515, -inf
      %631 = vmax.xlane.f32.xlu0 %v630
      %v632 = vpop.xlane.xlu0 %631
      %v633 = vsel %vm629, %v516, -inf
      %634 = vmax.xlane.f32.xlu0 %v633
      %v635 = vpop.xlane.xlu0 %634
      %v636 = vsel %vm629, %v517, -inf
      %637 = vmax.xlane.f32.xlu0 %v636
      %v638 = vpop.xlane.xlu0 %637
      %v639 = vsel %vm629, %v518, -inf
      %640 = vmax.xlane.f32.xlu0 %v639
      %v641 = vpop.xlane.xlu0 %640
      %v642 = vsel %vm629, %v519, -inf
      %643 = vmax.xlane.f32.xlu0 %v642
      %v644 = vpop.xlane.xlu0 %643
      %v645 = vsel %vm629, %v520, -inf
      %646 = vmax.xlane.f32.xlu0 %v645
      %v647 = vpop.xlane.xlu0 %646
      %v648 = vsel %vm629, %v521, -inf
      %649 = vmax.xlane.f32.xlu0 %v648
      %v650 = vpop.xlane.xlu0 %649
      %v651 = vsel %vm629, %v522, -inf
      %652 = vmax.xlane.f32.xlu0 %v651
      %v653 = vpop.xlane.xlu0 %652
      %v654 = vsub.f32 %v515, %v632
      %v655 = vsub.f32 %v516, %v635
      %v656 = vsub.f32 %v517, %v638
      %v657 = vsub.f32 %v518, %v641
      %v658 = vsub.f32 %v519, %v644
      %v659 = vsub.f32 %v520, %v647
      %v660 = vsub.f32 %v521, %v650
      %v661 = vsub.f32 %v522, %v653
      %v662 = vmul.f32 %v654, 1.442695
      %v663 = vpow.pop %v662
      %v664 = vmul.f32 %v655, 1.442695
      %v665 = vpow.pop %v664
      %v666 = vmul.f32 %v656, 1.442695
      %v667 = vpow.pop %v666
      %v668 = vmul.f32 %v657, 1.442695
      %v669 = vpow.pop %v668
      %v670 = vmul.f32 %v658, 1.442695
      %v671 = vpow.pop %v670
      %v672 = vmul.f32 %v659, 1.442695
      %v673 = vpow.pop %v672
      %v674 = vmul.f32 %v660, 1.442695
      %v675 = vpow.pop %v674
      %v676 = vmul.f32 %v661, 1.442695
      %v677 = vpow.pop %v676
      %686 = vrot.lane.b32.xlu0 %v663, 64
      %v687 = vpop.permute.xlu0 %686
      %688 = vrot.lane.b32.xlu0 %v665, 64
      %v689 = vpop.permute.xlu0 %688
      %690 = vrot.lane.b32.xlu0 %v667, 64
      %v691 = vpop.permute.xlu0 %690
      %692 = vrot.lane.b32.xlu0 %v669, 64
      %v693 = vpop.permute.xlu0 %692
      %694 = vrot.lane.b32.xlu0 %v671, 64
      %v695 = vpop.permute.xlu0 %694
      %696 = vrot.lane.b32.xlu0 %v673, 64
      %v697 = vpop.permute.xlu0 %696
      %698 = vrot.lane.b32.xlu0 %v675, 64
      %v699 = vpop.permute.xlu0 %698
      %700 = vrot.lane.b32.xlu0 %v677, 64
      %v701 = vpop.permute.xlu0 %700
      %v710 = vsel %vm523, %v687, 0.0
      %711 = vadd.xlane.f32.xlu0 %v710
      %v712 = vpop.xlane.xlu0 %711
      %v713 = vsel %vm523, %v689, 0.0
      %714 = vadd.xlane.f32.xlu0 %v713
      %v715 = vpop.xlane.xlu0 %714
      %v716 = vsel %vm523, %v691, 0.0
      %717 = vadd.xlane.f32.xlu0 %v716
      %v718 = vpop.xlane.xlu0 %717
      %v719 = vsel %vm523, %v693, 0.0
      %720 = vadd.xlane.f32.xlu0 %v719
      %v721 = vpop.xlane.xlu0 %720
      %v722 = vsel %vm523, %v695, 0.0
      %723 = vadd.xlane.f32.xlu0 %v722
      %v724 = vpop.xlane.xlu0 %723
      %v725 = vsel %vm523, %v697, 0.0
      %726 = vadd.xlane.f32.xlu0 %v725
      %v727 = vpop.xlane.xlu0 %726
      %v728 = vsel %vm523, %v699, 0.0
      %729 = vadd.xlane.f32.xlu0 %v728
      %v730 = vpop.xlane.xlu0 %729
      %v731 = vsel %vm523, %v701, 0.0
      %732 = vadd.xlane.f32.xlu0 %v731
      %v733 = vpop.xlane.xlu0 %732
      %v734 = vrcp.pop %v712
      %v735 = vrcp.pop %v715
      %v736 = vrcp.pop %v718
      %v737 = vrcp.pop %v721
      %v738 = vrcp.pop %v724
      %v739 = vrcp.pop %v727
      %v740 = vrcp.pop %v730
      %v741 = vrcp.pop %v733
      %v742 = vmul.f32 %v663, %v734
      %v743 = vmul.f32 %v665, %v735
      %v744 = vmul.f32 %v667, %v736
      %v745 = vmul.f32 %v669, %v737
      %v746 = vmul.f32 %v671, %v738
      %v747 = vmul.f32 %v673, %v739
      %v748 = vmul.f32 %v675, %v740
      %v749 = vmul.f32 %v677, %v741
      %v750 = vpack.c.bf16 %v742, %v742
      %v751 = vpack.c.bf16 %v743, %v743
      %v752 = vpack.c.bf16 %v744, %v744
      %v753 = vpack.c.bf16 %v745, %v745
      %v754 = vpack.c.bf16 %v746, %v746
      %v755 = vpack.c.bf16 %v747, %v747
      %v756 = vpack.c.bf16 %v748, %v748
      %v757 = vpack.c.bf16 %v749, %v749
      %vm758 = vcmask 1043968
      %759 = vst.msk [vmem:[#allocation4] sm:$0xf] %vm758, %v750
      %760 = vst.msk [vmem:[#allocation4 + $0x4] sm:$0xf] %vm758, %v751
      %761 = vst.msk [vmem:[#allocation4 + $0x8] sm:$0xf] %vm758, %v752
      %762 = vst.msk [vmem:[#allocation4 + $0xc] sm:$0xf] %vm758, %v753
      %763 = vst.msk [vmem:[#allocation4 + $0x10] sm:$0xf] %vm758, %v754
      %764 = vst.msk [vmem:[#allocation4 + $0x14] sm:$0xf] %vm758, %v755
      %765 = vst.msk [vmem:[#allocation4 + $0x18] sm:$0xf] %vm758, %v756
      %766 = vst.msk [vmem:[#allocation4 + $0x1c] sm:$0xf] %vm758, %v757
      %v767 = vld [vmem:[#allocation4] sm:$0xf]
      %v768 = vld [vmem:[#allocation4 + $0x4] sm:$0xf]
      %v769 = vld [vmem:[#allocation4 + $0x8] sm:$0xf]
      %v770 = vld [vmem:[#allocation4 + $0xc] sm:$0xf]
      %v771 = vld [vmem:[#allocation4 + $0x10] sm:$0xf]
      %v772 = vld [vmem:[#allocation4 + $0x14] sm:$0xf]
      %v773 = vld [vmem:[#allocation4 + $0x18] sm:$0xf]
      %v774 = vld [vmem:[#allocation4 + $0x1c] sm:$0xf]
      %v775 = vld [vmem:[#allocation3] sm:$0xf]
      %v776 = vld [vmem:[#allocation3 + $0x4] sm:$0xf]
      %v777 = vld [vmem:[#allocation3 + $0x8] sm:$0xf]
      %v778 = vld [vmem:[#allocation3 + $0xc] sm:$0xf]
      %v779 = vld [vmem:[#allocation3 + $0x10] sm:$0xf]
      %v780 = vld [vmem:[#allocation3 + $0x14] sm:$0xf]
      %v781 = vld [vmem:[#allocation3 + $0x18] sm:$0xf]
      %v782 = vld [vmem:[#allocation3 + $0x1c] sm:$0xf]
      %v783 = vld [vmem:[#allocation3 + $0x20] sm:$0xf]
      %v784 = vld [vmem:[#allocation3 + $0x24] sm:$0xf]
      %v785 = vld [vmem:[#allocation3 + $0x28] sm:$0xf]
      %v786 = vld [vmem:[#allocation3 + $0x2c] sm:$0xf]
      %v787 = vld [vmem:[#allocation3 + $0x30] sm:$0xf]
      %v788 = vld [vmem:[#allocation3 + $0x34] sm:$0xf]
      %v789 = vld [vmem:[#allocation3 + $0x38] sm:$0xf]
      %v790 = vld [vmem:[#allocation3 + $0x3c] sm:$0xf]
      %v791 = vld [vmem:[%s272] sm:$0xf]
      %v792 = vld [vmem:[%s272 + $0x4] sm:$0xf]
      %v793 = vld [vmem:[%s272 + $0x8] sm:$0xf]
      %v794 = vld [vmem:[%s272 + $0xc] sm:$0xf]
      %v795 = vld [vmem:[%s272 + $0x10] sm:$0xf]
      %v796 = vld [vmem:[%s272 + $0x14] sm:$0xf]
      %v797 = vld [vmem:[%s272 + $0x18] sm:$0xf]
      %v798 = vld [vmem:[%s272 + $0x1c] sm:$0xf]
      %v799 = vunpack.c.l.bf16 %v791
      %v800 = vunpack.c.l.bf16 %v792
      %v801 = vunpack.c.l.bf16 %v793
      %v802 = vunpack.c.l.bf16 %v794
      %v803 = vunpack.c.l.bf16 %v795
      %v804 = vunpack.c.l.bf16 %v796
      %v805 = vunpack.c.l.bf16 %v797
      %v806 = vunpack.c.l.bf16 %v798
      %v815 = vunpack.c.l.b16 %v767
      %v816 = vunpack.c.l.b16 %v768
      %v817 = vunpack.c.l.b16 %v769
      %v818 = vunpack.c.l.b16 %v770
      %v819 = vunpack.c.l.b16 %v771
      %v820 = vunpack.c.l.b16 %v772
      %v821 = vunpack.c.l.b16 %v773
      %v822 = vunpack.c.l.b16 %v774
      %v823 = vpack.c.b16 %v816, %v815
      %v824 = vpack.c.b16 %v818, %v817
      %v825 = vpack.c.b16 %v820, %v819
      %v826 = vpack.c.b16 %v822, %v821
      %v847 = vunpack.c.l.b16 %v775
      %v848 = vunpack.c.l.b16 %v776
      %v849 = vunpack.c.l.b16 %v777
      %v850 = vunpack.c.l.b16 %v778
      %v851 = vunpack.c.l.b16 %v779
      %v852 = vunpack.c.l.b16 %v780
      %v853 = vunpack.c.l.b16 %v781
      %v854 = vunpack.c.l.b16 %v782
      %v855 = vunpack.c.l.b16 %v783
      %v856 = vunpack.c.l.b16 %v784
      %v857 = vunpack.c.l.b16 %v785
      %v858 = vunpack.c.l.b16 %v786
      %v859 = vunpack.c.l.b16 %v787
      %v860 = vunpack.c.l.b16 %v788
      %v861 = vunpack.c.l.b16 %v789
      %v862 = vunpack.c.l.b16 %v790
      %v863 = vpack.c.b16 %v848, %v847
      %v864 = vpack.c.b16 %v850, %v849
      %v865 = vpack.c.b16 %v852, %v851
      %v866 = vpack.c.b16 %v854, %v853
      %v867 = vpack.c.b16 %v856, %v855
      %v868 = vpack.c.b16 %v858, %v857
      %v869 = vpack.c.b16 %v860, %v859
      %v870 = vpack.c.b16 %v862, %v861
      %879 = vmatpush.bf16.msra.mxu0 %v870
      %880 = vmatpush.bf16.msra.mxu0 %v869
      %881 = vmatpush.bf16.msra.mxu0 %v868
      %882 = vmatpush.bf16.msra.mxu0 %v867
      %883 = vmatpush.bf16.msra.mxu0 %v866
      %884 = vmatpush.bf16.msra.mxu0 %v865
      %885 = vmatpush.bf16.msra.mxu0 %v864
      %886 = vmatpush.bf16.msra.mxu0 %v863
      %887 = vmatmul.bf16.gmra.mxu0 %v823
      %v888 = vpop.f32.mrf.mxu0
      %v889 = vadd.f32 %v799, %v888
      %v890 = vpop.f32.mrf.mxu0
      %v891 = vadd.f32 %v800, %v890
      %892 = vmatmul.bf16.gmra.mxu0 %v824
      %v893 = vpop.f32.mrf.mxu0
      %v894 = vadd.f32 %v801, %v893
      %v895 = vpop.f32.mrf.mxu0
      %v896 = vadd.f32 %v802, %v895
      %897 = vmatmul.bf16.gmra.mxu0 %v825
      %v898 = vpop.f32.mrf.mxu0
      %v899 = vadd.f32 %v803, %v898
      %v900 = vpop.f32.mrf.mxu0
      %v901 = vadd.f32 %v804, %v900
      %902 = vmatmul.bf16.gmra.mxu0 %v826
      %v903 = vpop.f32.mrf.mxu0
      %v904 = vadd.f32 %v805, %v903
      %v905 = vpop.f32.mrf.mxu0
      %v906 = vadd.f32 %v806, %v905
      %907 = vdwg.mxu0
      %908 = vst.msk [vmem:[%s279] sm:$0xff] %vm449, %v889
      %909 = vst.msk [vmem:[%s279 + $0x8] sm:$0xff] %vm449, %v891
      %910 = vst.msk [vmem:[%s279 + $0x10] sm:$0xff] %vm449, %v894
      %911 = vst.msk [vmem:[%s279 + $0x18] sm:$0xff] %vm449, %v896
      %912 = vst.msk [vmem:[%s279 + $0x20] sm:$0xff] %vm449, %v899
      %913 = vst.msk [vmem:[%s279 + $0x28] sm:$0xff] %vm449, %v901
      %914 = vst.msk [vmem:[%s279 + $0x30] sm:$0xff] %vm449, %v904
      %915 = vst.msk [vmem:[%s279 + $0x38] sm:$0xff] %vm449, %v906
      %s916 = scalar_lea.vmem %s258, 32
      %v917 = vld [vmem:[%s916] sm:$0xf]
      %v918 = vld [vmem:[%s916 + $0x4] sm:$0xf]
      %v919 = vld [vmem:[%s916 + $0x8] sm:$0xf]
      %v920 = vld [vmem:[%s916 + $0xc] sm:$0xf]
      %v921 = vld [vmem:[%s916 + $0x10] sm:$0xf]
      %v922 = vld [vmem:[%s916 + $0x14] sm:$0xf]
      %v923 = vld [vmem:[%s916 + $0x18] sm:$0xf]
      %v924 = vld [vmem:[%s916 + $0x1c] sm:$0xf]
      %s925 = scalar_lea.vmem %s265, 32
      %v926 = vld [vmem:[%s925] sm:$0xf]
      %v927 = vld [vmem:[%s925 + $0x4] sm:$0xf]
      %v928 = vld [vmem:[%s925 + $0x8] sm:$0xf]
      %v929 = vld [vmem:[%s925 + $0xc] sm:$0xf]
      %v930 = vld [vmem:[%s925 + $0x10] sm:$0xf]
      %v931 = vld [vmem:[%s925 + $0x14] sm:$0xf]
      %v932 = vld [vmem:[%s925 + $0x18] sm:$0xf]
      %v933 = vld [vmem:[%s925 + $0x1c] sm:$0xf]
      %934 = vst.msk [vmem:[#allocation2] sm:$0xf] %vm331, %v917
      %935 = vst.msk [vmem:[#allocation2 + $0x4] sm:$0xf] %vm331, %v918
      %936 = vst.msk [vmem:[#allocation2 + $0x8] sm:$0xf] %vm331, %v919
      %937 = vst.msk [vmem:[#allocation2 + $0xc] sm:$0xf] %vm331, %v920
      %938 = vst.msk [vmem:[#allocation2 + $0x10] sm:$0xf] %vm331, %v921
      %939 = vst.msk [vmem:[#allocation2 + $0x14] sm:$0xf] %vm331, %v922
      %940 = vst.msk [vmem:[#allocation2 + $0x18] sm:$0xf] %vm331, %v923
      %941 = vst.msk [vmem:[#allocation2 + $0x1c] sm:$0xf] %vm331, %v924
      %942 = vst.msk [vmem:[#allocation3] sm:$0xf] %vm331, %v926
      %943 = vst.msk [vmem:[#allocation3 + $0x4] sm:$0xf] %vm331, %v927
      %944 = vst.msk [vmem:[#allocation3 + $0x8] sm:$0xf] %vm331, %v928
      %945 = vst.msk [vmem:[#allocation3 + $0xc] sm:$0xf] %vm331, %v929
      %946 = vst.msk [vmem:[#allocation3 + $0x10] sm:$0xf] %vm331, %v930
      %947 = vst.msk [vmem:[#allocation3 + $0x14] sm:$0xf] %vm331, %v931
      %948 = vst.msk [vmem:[#allocation3 + $0x18] sm:$0xf] %vm331, %v932
      %949 = vst.msk [vmem:[#allocation3 + $0x1c] sm:$0xf] %vm331, %v933
      %950 = vst.msk [vmem:[#allocation2 + $0x20] sm:$0xf] %vm348, %v917
      %951 = vst.msk [vmem:[#allocation2 + $0x24] sm:$0xf] %vm348, %v918
      %952 = vst.msk [vmem:[#allocation2 + $0x28] sm:$0xf] %vm348, %v919
      %953 = vst.msk [vmem:[#allocation2 + $0x2c] sm:$0xf] %vm348, %v920
      %954 = vst.msk [vmem:[#allocation2 + $0x30] sm:$0xf] %vm348, %v921
      %955 = vst.msk [vmem:[#allocation2 + $0x34] sm:$0xf] %vm348, %v922
      %956 = vst.msk [vmem:[#allocation2 + $0x38] sm:$0xf] %vm348, %v923
      %957 = vst.msk [vmem:[#allocation2 + $0x3c] sm:$0xf] %vm348, %v924
      %958 = vst.msk [vmem:[#allocation3 + $0x20] sm:$0xf] %vm348, %v926
      %959 = vst.msk [vmem:[#allocation3 + $0x24] sm:$0xf] %vm348, %v927
      %960 = vst.msk [vmem:[#allocation3 + $0x28] sm:$0xf] %vm348, %v928
      %961 = vst.msk [vmem:[#allocation3 + $0x2c] sm:$0xf] %vm348, %v929
      %962 = vst.msk [vmem:[#allocation3 + $0x30] sm:$0xf] %vm348, %v930
      %963 = vst.msk [vmem:[#allocation3 + $0x34] sm:$0xf] %vm348, %v931
      %964 = vst.msk [vmem:[#allocation3 + $0x38] sm:$0xf] %vm348, %v932
      %965 = vst.msk [vmem:[#allocation3 + $0x3c] sm:$0xf] %vm348, %v933
      %s966 = scalar_lea.vmem %s251, 32
      %v967 = vld [vmem:[%s966] sm:$0xf]
      %v968 = vld [vmem:[%s966 + $0x4] sm:$0xf]
      %v969 = vld [vmem:[%s966 + $0x8] sm:$0xf]
      %v970 = vld [vmem:[%s966 + $0xc] sm:$0xf]
      %v971 = vld [vmem:[%s966 + $0x10] sm:$0xf]
      %v972 = vld [vmem:[%s966 + $0x14] sm:$0xf]
      %v973 = vld [vmem:[%s966 + $0x18] sm:$0xf]
      %v974 = vld [vmem:[%s966 + $0x1c] sm:$0xf]
      %v975 = vld [vmem:[#allocation2] sm:$0xf]
      %v976 = vld [vmem:[#allocation2 + $0x4] sm:$0xf]
      %v977 = vld [vmem:[#allocation2 + $0x8] sm:$0xf]
      %v978 = vld [vmem:[#allocation2 + $0xc] sm:$0xf]
      %v979 = vld [vmem:[#allocation2 + $0x10] sm:$0xf]
      %v980 = vld [vmem:[#allocation2 + $0x14] sm:$0xf]
      %v981 = vld [vmem:[#allocation2 + $0x18] sm:$0xf]
      %v982 = vld [vmem:[#allocation2 + $0x1c] sm:$0xf]
      %v983 = vld [vmem:[#allocation2 + $0x20] sm:$0xf]
      %v984 = vld [vmem:[#allocation2 + $0x24] sm:$0xf]
      %v985 = vld [vmem:[#allocation2 + $0x28] sm:$0xf]
      %v986 = vld [vmem:[#allocation2 + $0x2c] sm:$0xf]
      %v987 = vld [vmem:[#allocation2 + $0x30] sm:$0xf]
      %v988 = vld [vmem:[#allocation2 + $0x34] sm:$0xf]
      %v989 = vld [vmem:[#allocation2 + $0x38] sm:$0xf]
      %v990 = vld [vmem:[#allocation2 + $0x3c] sm:$0xf]
      %v999 = vunpack.c.l.b16 %v967
      %v1000 = vunpack.c.l.b16 %v968
      %v1001 = vunpack.c.l.b16 %v969
      %v1002 = vunpack.c.l.b16 %v970
      %v1003 = vunpack.c.l.b16 %v971
      %v1004 = vunpack.c.l.b16 %v972
      %v1005 = vunpack.c.l.b16 %v973
      %v1006 = vunpack.c.l.b16 %v974
      %v1007 = vpack.c.b16 %v1000, %v999
      %v1008 = vpack.c.b16 %v1002, %v1001
      %v1009 = vpack.c.b16 %v1004, %v1003
      %v1010 = vpack.c.b16 %v1006, %v1005
      %v1027 = vunpack.c.l.b16 %v975
      %v1028 = vunpack.c.l.b16 %v976
      %v1029 = vunpack.c.l.b16 %v977
      %v1030 = vunpack.c.l.b16 %v978
      %v1031 = vunpack.c.l.b16 %v979
      %v1032 = vunpack.c.l.b16 %v980
      %v1033 = vunpack.c.l.b16 %v981
      %v1034 = vunpack.c.l.b16 %v982
      %v1035 = vunpack.c.l.b16 %v983
      %v1036 = vunpack.c.l.b16 %v984
      %v1037 = vunpack.c.l.b16 %v985
      %v1038 = vunpack.c.l.b16 %v986
      %v1039 = vunpack.c.l.b16 %v987
      %v1040 = vunpack.c.l.b16 %v988
      %v1041 = vunpack.c.l.b16 %v989
      %v1042 = vunpack.c.l.b16 %v990
      %v1043 = vpack.c.b16 %v1028, %v1027
      %v1044 = vpack.c.b16 %v1030, %v1029
      %v1045 = vpack.c.b16 %v1032, %v1031
      %v1046 = vpack.c.b16 %v1034, %v1033
      %v1047 = vpack.c.b16 %v1036, %v1035
      %v1048 = vpack.c.b16 %v1038, %v1037
      %v1049 = vpack.c.b16 %v1040, %v1039
      %v1050 = vpack.c.b16 %v1042, %v1041
      %v1052 = vsel %vm449, %v1007, 0
      %v1055 = vsel %vm449, %v1008, 0
      %v1058 = vsel %vm449, %v1009, 0
      %v1061 = vsel %vm449, %v1010, 0
      %v1064 = vsel %vm449, %v1043, 0
      %v1067 = vsel %vm449, %v1044, 0
      %v1070 = vsel %vm449, %v1045, 0
      %v1073 = vsel %vm449, %v1046, 0
      %v1076 = vsel %vm449, %v1047, 0
      %v1079 = vsel %vm449, %v1048, 0
      %v1082 = vsel %vm449, %v1049, 0
      %v1085 = vsel %vm449, %v1050, 0
      %1087 = vmatpush.bf16.xpose.msra.mxu0 %v1085
      %1088 = vmatpush.bf16.xpose.msra.mxu0 %v1082
      %1089 = vmatpush.bf16.xpose.msra.mxu0 %v1079
      %1090 = vmatpush.bf16.xpose.msra.mxu0 %v1076
      %1091 = vmatpush.bf16.xpose.msra.mxu0 %v1073
      %1092 = vmatpush.bf16.xpose.msra.mxu0 %v1070
      %1093 = vmatpush.bf16.xpose.msra.mxu0 %v1067
      %1094 = vmatpush.bf16.xpose.msra.mxu0 %v1064
      %1095 = vmatmul.bf16.gmra.mxu0 %v1052
      %v1096 = vpop.f32.mrf.mxu0
      %v1097 = vadd.f32 0.0, %v1096
      %v1098 = vpop.f32.mrf.mxu0
      %v1099 = vadd.f32 0.0, %v1098
      %1100 = vmatmul.bf16.gmra.mxu0 %v1055
      %v1101 = vpop.f32.mrf.mxu0
      %v1102 = vadd.f32 0.0, %v1101
      %v1103 = vpop.f32.mrf.mxu0
      %v1104 = vadd.f32 0.0, %v1103
      %1105 = vmatmul.bf16.gmra.mxu0 %v1058
      %v1106 = vpop.f32.mrf.mxu0
      %v1107 = vadd.f32 0.0, %v1106
      %v1108 = vpop.f32.mrf.mxu0
      %v1109 = vadd.f32 0.0, %v1108
      %1110 = vmatmul.bf16.gmra.mxu0 %v1061
      %v1111 = vpop.f32.mrf.mxu0
      %v1112 = vadd.f32 0.0, %v1111
      %v1113 = vpop.f32.mrf.mxu0
      %v1114 = vadd.f32 0.0, %v1113
      %1115 = vdwg.mxu0
      %v1116 = vmul.f32 %v1097, 0.5
      %v1117 = vmul.f32 %v1099, 0.5
      %v1118 = vmul.f32 %v1102, 0.5
      %v1119 = vmul.f32 %v1104, 0.5
      %v1120 = vmul.f32 %v1107, 0.5
      %v1121 = vmul.f32 %v1109, 0.5
      %v1122 = vmul.f32 %v1112, 0.5
      %v1123 = vmul.f32 %v1114, 0.5
      %v1124 = vsel %vm523, %v1116, -inf
      %1125 = vmax.xlane.f32.xlu0 %v1124
      %v1126 = vpop.xlane.xlu0 %1125
      %v1127 = vsel %vm523, %v1117, -inf
      %1128 = vmax.xlane.f32.xlu0 %v1127
      %v1129 = vpop.xlane.xlu0 %1128
      %v1130 = vsel %vm523, %v1118, -inf
      %1131 = vmax.xlane.f32.xlu0 %v1130
      %v1132 = vpop.xlane.xlu0 %1131
      %v1133 = vsel %vm523, %v1119, -inf
      %1134 = vmax.xlane.f32.xlu0 %v1133
      %v1135 = vpop.xlane.xlu0 %1134
      %v1136 = vsel %vm523, %v1120, -inf
      %1137 = vmax.xlane.f32.xlu0 %v1136
      %v1138 = vpop.xlane.xlu0 %1137
      %v1139 = vsel %vm523, %v1121, -inf
      %1140 = vmax.xlane.f32.xlu0 %v1139
      %v1141 = vpop.xlane.xlu0 %1140
      %v1142 = vsel %vm523, %v1122, -inf
      %1143 = vmax.xlane.f32.xlu0 %v1142
      %v1144 = vpop.xlane.xlu0 %1143
      %v1145 = vsel %vm523, %v1123, -inf
      %1146 = vmax.xlane.f32.xlu0 %v1145
      %v1147 = vpop.xlane.xlu0 %1146
      %v1148 = vsub.f32 %v1116, %v1126
      %v1149 = vsub.f32 %v1117, %v1129
      %v1150 = vsub.f32 %v1118, %v1132
      %v1151 = vsub.f32 %v1119, %v1135
      %v1152 = vsub.f32 %v1120, %v1138
      %v1153 = vsub.f32 %v1121, %v1141
      %v1154 = vsub.f32 %v1122, %v1144
      %v1155 = vsub.f32 %v1123, %v1147
      %v1156 = vmul.f32 %v1148, 1.442695
      %v1157 = vpow.pop %v1156
      %v1158 = vmul.f32 %v1149, 1.442695
      %v1159 = vpow.pop %v1158
      %v1160 = vmul.f32 %v1150, 1.442695
      %v1161 = vpow.pop %v1160
      %v1162 = vmul.f32 %v1151, 1.442695
      %v1163 = vpow.pop %v1162
      %v1164 = vmul.f32 %v1152, 1.442695
      %v1165 = vpow.pop %v1164
      %v1166 = vmul.f32 %v1153, 1.442695
      %v1167 = vpow.pop %v1166
      %v1168 = vmul.f32 %v1154, 1.442695
      %v1169 = vpow.pop %v1168
      %v1170 = vmul.f32 %v1155, 1.442695
      %v1171 = vpow.pop %v1170
      %v1172 = vsel %vm523, %v1157, 0.0
      %1173 = vadd.xlane.f32.xlu0 %v1172
      %v1174 = vpop.xlane.xlu0 %1173
      %v1175 = vsel %vm523, %v1159, 0.0
      %1176 = vadd.xlane.f32.xlu0 %v1175
      %v1177 = vpop.xlane.xlu0 %1176
      %v1178 = vsel %vm523, %v1161, 0.0
      %1179 = vadd.xlane.f32.xlu0 %v1178
      %v1180 = vpop.xlane.xlu0 %1179
      %v1181 = vsel %vm523, %v1163, 0.0
      %1182 = vadd.xlane.f32.xlu0 %v1181
      %v1183 = vpop.xlane.xlu0 %1182
      %v1184 = vsel %vm523, %v1165, 0.0
      %1185 = vadd.xlane.f32.xlu0 %v1184
      %v1186 = vpop.xlane.xlu0 %1185
      %v1187 = vsel %vm523, %v1167, 0.0
      %1188 = vadd.xlane.f32.xlu0 %v1187
      %v1189 = vpop.xlane.xlu0 %1188
      %v1190 = vsel %vm523, %v1169, 0.0
      %1191 = vadd.xlane.f32.xlu0 %v1190
      %v1192 = vpop.xlane.xlu0 %1191
      %v1193 = vsel %vm523, %v1171, 0.0
      %1194 = vadd.xlane.f32.xlu0 %v1193
      %v1195 = vpop.xlane.xlu0 %1194
      %v1196 = vrcp.pop %v1174
      %v1197 = vrcp.pop %v1177
      %v1198 = vrcp.pop %v1180
      %v1199 = vrcp.pop %v1183
      %v1200 = vrcp.pop %v1186
      %v1201 = vrcp.pop %v1189
      %v1202 = vrcp.pop %v1192
      %v1203 = vrcp.pop %v1195
      %v1204 = vmul.f32 %v1157, %v1196
      %v1205 = vmul.f32 %v1159, %v1197
      %v1206 = vmul.f32 %v1161, %v1198
      %v1207 = vmul.f32 %v1163, %v1199
      %v1208 = vmul.f32 %v1165, %v1200
      %v1209 = vmul.f32 %v1167, %v1201
      %v1210 = vmul.f32 %v1169, %v1202
      %v1211 = vmul.f32 %v1171, %v1203
      %v1212 = vpack.c.bf16 %v1204, %v1204
      %v1213 = vpack.c.bf16 %v1205, %v1205
      %v1214 = vpack.c.bf16 %v1206, %v1206
      %v1215 = vpack.c.bf16 %v1207, %v1207
      %v1216 = vpack.c.bf16 %v1208, %v1208
      %v1217 = vpack.c.bf16 %v1209, %v1209
      %v1218 = vpack.c.bf16 %v1210, %v1210
      %v1219 = vpack.c.bf16 %v1211, %v1211
      %1220 = vst.msk [vmem:[#allocation4] sm:$0xf] %vm620, %v1212
      %1221 = vst.msk [vmem:[#allocation4 + $0x4] sm:$0xf] %vm620, %v1213
      %1222 = vst.msk [vmem:[#allocation4 + $0x8] sm:$0xf] %vm620, %v1214
      %1223 = vst.msk [vmem:[#allocation4 + $0xc] sm:$0xf] %vm620, %v1215
      %1224 = vst.msk [vmem:[#allocation4 + $0x10] sm:$0xf] %vm620, %v1216
      %1225 = vst.msk [vmem:[#allocation4 + $0x14] sm:$0xf] %vm620, %v1217
      %1226 = vst.msk [vmem:[#allocation4 + $0x18] sm:$0xf] %vm620, %v1218
      %1227 = vst.msk [vmem:[#allocation4 + $0x1c] sm:$0xf] %vm620, %v1219
      %v1228 = vsel %vm629, %v1116, -inf
      %1229 = vmax.xlane.f32.xlu0 %v1228
      %v1230 = vpop.xlane.xlu0 %1229
      %v1231 = vsel %vm629, %v1117, -inf
      %1232 = vmax.xlane.f32.xlu0 %v1231
      %v1233 = vpop.xlane.xlu0 %1232
      %v1234 = vsel %vm629, %v1118, -inf
      %1235 = vmax.xlane.f32.xlu0 %v1234
      %v1236 = vpop.xlane.xlu0 %1235
      %v1237 = vsel %vm629, %v1119, -inf
      %1238 = vmax.xlane.f32.xlu0 %v1237
      %v1239 = vpop.xlane.xlu0 %1238
      %v1240 = vsel %vm629, %v1120, -inf
      %1241 = vmax.xlane.f32.xlu0 %v1240
      %v1242 = vpop.xlane.xlu0 %1241
      %v1243 = vsel %vm629, %v1121, -inf
      %1244 = vmax.xlane.f32.xlu0 %v1243
      %v1245 = vpop.xlane.xlu0 %1244
      %v1246 = vsel %vm629, %v1122, -inf
      %1247 = vmax.xlane.f32.xlu0 %v1246
      %v1248 = vpop.xlane.xlu0 %1247
      %v1249 = vsel %vm629, %v1123, -inf
      %1250 = vmax.xlane.f32.xlu0 %v1249
      %v1251 = vpop.xlane.xlu0 %1250
      %v1252 = vsub.f32 %v1116, %v1230
      %v1253 = vsub.f32 %v1117, %v1233
      %v1254 = vsub.f32 %v1118, %v1236
      %v1255 = vsub.f32 %v1119, %v1239
      %v1256 = vsub.f32 %v1120, %v1242
      %v1257 = vsub.f32 %v1121, %v1245
      %v1258 = vsub.f32 %v1122, %v1248
      %v1259 = vsub.f32 %v1123, %v1251
      %v1260 = vmul.f32 %v1252, 1.442695
      %v1261 = vpow.pop %v1260
      %v1262 = vmul.f32 %v1253, 1.442695
      %v1263 = vpow.pop %v1262
      %v1264 = vmul.f32 %v1254, 1.442695
      %v1265 = vpow.pop %v1264
      %v1266 = vmul.f32 %v1255, 1.442695
      %v1267 = vpow.pop %v1266
      %v1268 = vmul.f32 %v1256, 1.442695
      %v1269 = vpow.pop %v1268
      %v1270 = vmul.f32 %v1257, 1.442695
      %v1271 = vpow.pop %v1270
      %v1272 = vmul.f32 %v1258, 1.442695
      %v1273 = vpow.pop %v1272
      %v1274 = vmul.f32 %v1259, 1.442695
      %v1275 = vpow.pop %v1274
      %1284 = vrot.lane.b32.xlu0 %v1261, 64
      %v1285 = vpop.permute.xlu0 %1284
      %1286 = vrot.lane.b32.xlu0 %v1263, 64
      %v1287 = vpop.permute.xlu0 %1286
      %1288 = vrot.lane.b32.xlu0 %v1265, 64
      %v1289 = vpop.permute.xlu0 %1288
      %1290 = vrot.lane.b32.xlu0 %v1267, 64
      %v1291 = vpop.permute.xlu0 %1290
      %1292 = vrot.lane.b32.xlu0 %v1269, 64
      %v1293 = vpop.permute.xlu0 %1292
      %1294 = vrot.lane.b32.xlu0 %v1271, 64
      %v1295 = vpop.permute.xlu0 %1294
      %1296 = vrot.lane.b32.xlu0 %v1273, 64
      %v1297 = vpop.permute.xlu0 %1296
      %1298 = vrot.lane.b32.xlu0 %v1275, 64
      %v1299 = vpop.permute.xlu0 %1298
      %v1308 = vsel %vm523, %v1285, 0.0
      %1309 = vadd.xlane.f32.xlu0 %v1308
      %v1310 = vpop.xlane.xlu0 %1309
      %v1311 = vsel %vm523, %v1287, 0.0
      %1312 = vadd.xlane.f32.xlu0 %v1311
      %v1313 = vpop.xlane.xlu0 %1312
      %v1314 = vsel %vm523, %v1289, 0.0
      %1315 = vadd.xlane.f32.xlu0 %v1314
      %v1316 = vpop.xlane.xlu0 %1315
      %v1317 = vsel %vm523, %v1291, 0.0
      %1318 = vadd.xlane.f32.xlu0 %v1317
      %v1319 = vpop.xlane.xlu0 %1318
      %v1320 = vsel %vm523, %v1293, 0.0
      %1321 = vadd.xlane.f32.xlu0 %v1320
      %v1322 = vpop.xlane.xlu0 %1321
      %v1323 = vsel %vm523, %v1295, 0.0
      %1324 = vadd.xlane.f32.xlu0 %v1323
      %v1325 = vpop.xlane.xlu0 %1324
      %v1326 = vsel %vm523, %v1297, 0.0
      %1327 = vadd.xlane.f32.xlu0 %v1326
      %v1328 = vpop.xlane.xlu0 %1327
      %v1329 = vsel %vm523, %v1299, 0.0
      %1330 = vadd.xlane.f32.xlu0 %v1329
      %v1331 = vpop.xlane.xlu0 %1330
      %v1332 = vrcp.pop %v1310
      %v1333 = vrcp.pop %v1313
      %v1334 = vrcp.pop %v1316
      %v1335 = vrcp.pop %v1319
      %v1336 = vrcp.pop %v1322
      %v1337 = vrcp.pop %v1325
      %v1338 = vrcp.pop %v1328
      %v1339 = vrcp.pop %v1331
      %v1340 = vmul.f32 %v1261, %v1332
      %v1341 = vmul.f32 %v1263, %v1333
      %v1342 = vmul.f32 %v1265, %v1334
      %v1343 = vmul.f32 %v1267, %v1335
      %v1344 = vmul.f32 %v1269, %v1336
      %v1345 = vmul.f32 %v1271, %v1337
      %v1346 = vmul.f32 %v1273, %v1338
      %v1347 = vmul.f32 %v1275, %v1339
      %v1348 = vpack.c.bf16 %v1340, %v1340
      %v1349 = vpack.c.bf16 %v1341, %v1341
      %v1350 = vpack.c.bf16 %v1342, %v1342
      %v1351 = vpack.c.bf16 %v1343, %v1343
      %v1352 = vpack.c.bf16 %v1344, %v1344
      %v1353 = vpack.c.bf16 %v1345, %v1345
      %v1354 = vpack.c.bf16 %v1346, %v1346
      %v1355 = vpack.c.bf16 %v1347, %v1347
      %1356 = vst.msk [vmem:[#allocation4] sm:$0xf] %vm758, %v1348
      %1357 = vst.msk [vmem:[#allocation4 + $0x4] sm:$0xf] %vm758, %v1349
      %1358 = vst.msk [vmem:[#allocation4 + $0x8] sm:$0xf] %vm758, %v1350
      %1359 = vst.msk [vmem:[#allocation4 + $0xc] sm:$0xf] %vm758, %v1351
      %1360 = vst.msk [vmem:[#allocation4 + $0x10] sm:$0xf] %vm758, %v1352
      %1361 = vst.msk [vmem:[#allocation4 + $0x14] sm:$0xf] %vm758, %v1353
      %1362 = vst.msk [vmem:[#allocation4 + $0x18] sm:$0xf] %vm758, %v1354
      %1363 = vst.msk [vmem:[#allocation4 + $0x1c] sm:$0xf] %vm758, %v1355
      %v1364 = vld [vmem:[#allocation4] sm:$0xf]
      %v1365 = vld [vmem:[#allocation4 + $0x4] sm:$0xf]
      %v1366 = vld [vmem:[#allocation4 + $0x8] sm:$0xf]
      %v1367 = vld [vmem:[#allocation4 + $0xc] sm:$0xf]
      %v1368 = vld [vmem:[#allocation4 + $0x10] sm:$0xf]
      %v1369 = vld [vmem:[#allocation4 + $0x14] sm:$0xf]
      %v1370 = vld [vmem:[#allocation4 + $0x18] sm:$0xf]
      %v1371 = vld [vmem:[#allocation4 + $0x1c] sm:$0xf]
      %v1372 = vld [vmem:[#allocation3] sm:$0xf]
      %v1373 = vld [vmem:[#allocation3 + $0x4] sm:$0xf]
      %v1374 = vld [vmem:[#allocation3 + $0x8] sm:$0xf]
      %v1375 = vld [vmem:[#allocation3 + $0xc] sm:$0xf]
      %v1376 = vld [vmem:[#allocation3 + $0x10] sm:$0xf]
      %v1377 = vld [vmem:[#allocation3 + $0x14] sm:$0xf]
      %v1378 = vld [vmem:[#allocation3 + $0x18] sm:$0xf]
      %v1379 = vld [vmem:[#allocation3 + $0x1c] sm:$0xf]
      %v1380 = vld [vmem:[#allocation3 + $0x20] sm:$0xf]
      %v1381 = vld [vmem:[#allocation3 + $0x24] sm:$0xf]
      %v1382 = vld [vmem:[#allocation3 + $0x28] sm:$0xf]
      %v1383 = vld [vmem:[#allocation3 + $0x2c] sm:$0xf]
      %v1384 = vld [vmem:[#allocation3 + $0x30] sm:$0xf]
      %v1385 = vld [vmem:[#allocation3 + $0x34] sm:$0xf]
      %v1386 = vld [vmem:[#allocation3 + $0x38] sm:$0xf]
      %v1387 = vld [vmem:[#allocation3 + $0x3c] sm:$0xf]
      %s1388 = scalar_lea.vmem %s272, 32
      %v1389 = vld [vmem:[%s1388] sm:$0xf]
      %v1390 = vld [vmem:[%s1388 + $0x4] sm:$0xf]
      %v1391 = vld [vmem:[%s1388 + $0x8] sm:$0xf]
      %v1392 = vld [vmem:[%s1388 + $0xc] sm:$0xf]
      %v1393 = vld [vmem:[%s1388 + $0x10] sm:$0xf]
      %v1394 = vld [vmem:[%s1388 + $0x14] sm:$0xf]
      %v1395 = vld [vmem:[%s1388 + $0x18] sm:$0xf]
      %v1396 = vld [vmem:[%s1388 + $0x1c] sm:$0xf]
      %v1397 = vunpack.c.l.bf16 %v1389
      %v1398 = vunpack.c.l.bf16 %v1390
      %v1399 = vunpack.c.l.bf16 %v1391
      %v1400 = vunpack.c.l.bf16 %v1392
      %v1401 = vunpack.c.l.bf16 %v1393
      %v1402 = vunpack.c.l.bf16 %v1394
      %v1403 = vunpack.c.l.bf16 %v1395
      %v1404 = vunpack.c.l.bf16 %v1396
      %v1413 = vunpack.c.l.b16 %v1364
      %v1414 = vunpack.c.l.b16 %v1365
      %v1415 = vunpack.c.l.b16 %v1366
      %v1416 = vunpack.c.l.b16 %v1367
      %v1417 = vunpack.c.l.b16 %v1368
      %v1418 = vunpack.c.l.b16 %v1369
      %v1419 = vunpack.c.l.b16 %v1370
      %v1420 = vunpack.c.l.b16 %v1371
      %v1421 = vpack.c.b16 %v1414, %v1413
      %v1422 = vpack.c.b16 %v1416, %v1415
      %v1423 = vpack.c.b16 %v1418, %v1417
      %v1424 = vpack.c.b16 %v1420, %v1419
      %v1445 = vunpack.c.l.b16 %v1372
      %v1446 = vunpack.c.l.b16 %v1373
      %v1447 = vunpack.c.l.b16 %v1374
      %v1448 = vunpack.c.l.b16 %v1375
      %v1449 = vunpack.c.l.b16 %v1376
      %v1450 = vunpack.c.l.b16 %v1377
      %v1451 = vunpack.c.l.b16 %v1378
      %v1452 = vunpack.c.l.b16 %v1379
      %v1453 = vunpack.c.l.b16 %v1380
      %v1454 = vunpack.c.l.b16 %v1381
      %v1455 = vunpack.c.l.b16 %v1382
      %v1456 = vunpack.c.l.b16 %v1383
      %v1457 = vunpack.c.l.b16 %v1384
      %v1458 = vunpack.c.l.b16 %v1385
      %v1459 = vunpack.c.l.b16 %v1386
      %v1460 = vunpack.c.l.b16 %v1387
      %v1461 = vpack.c.b16 %v1446, %v1445
      %v1462 = vpack.c.b16 %v1448, %v1447
      %v1463 = vpack.c.b16 %v1450, %v1449
      %v1464 = vpack.c.b16 %v1452, %v1451
      %v1465 = vpack.c.b16 %v1454, %v1453
      %v1466 = vpack.c.b16 %v1456, %v1455
      %v1467 = vpack.c.b16 %v1458, %v1457
      %v1468 = vpack.c.b16 %v1460, %v1459
      %1477 = vmatpush.bf16.msra.mxu0 %v1468
      %1478 = vmatpush.bf16.msra.mxu0 %v1467
      %1479 = vmatpush.bf16.msra.mxu0 %v1466
      %1480 = vmatpush.bf16.msra.mxu0 %v1465
      %1481 = vmatpush.bf16.msra.mxu0 %v1464
      %1482 = vmatpush.bf16.msra.mxu0 %v1463
      %1483 = vmatpush.bf16.msra.mxu0 %v1462
      %1484 = vmatpush.bf16.msra.mxu0 %v1461
      %1485 = vmatmul.bf16.gmra.mxu0 %v1421
      %v1486 = vpop.f32.mrf.mxu0
      %v1487 = vadd.f32 %v1397, %v1486
      %v1488 = vpop.f32.mrf.mxu0
      %v1489 = vadd.f32 %v1398, %v1488
      %1490 = vmatmul.bf16.gmra.mxu0 %v1422
      %v1491 = vpop.f32.mrf.mxu0
      %v1492 = vadd.f32 %v1399, %v1491
      %v1493 = vpop.f32.mrf.mxu0
      %v1494 = vadd.f32 %v1400, %v1493
      %1495 = vmatmul.bf16.gmra.mxu0 %v1423
      %v1496 = vpop.f32.mrf.mxu0
      %v1497 = vadd.f32 %v1401, %v1496
      %v1498 = vpop.f32.mrf.mxu0
      %v1499 = vadd.f32 %v1402, %v1498
      %1500 = vmatmul.bf16.gmra.mxu0 %v1424
      %v1501 = vpop.f32.mrf.mxu0
      %v1502 = vadd.f32 %v1403, %v1501
      %v1503 = vpop.f32.mrf.mxu0
      %v1504 = vadd.f32 %v1404, %v1503
      %1505 = vdwg.mxu0
      %s1506 = scalar_lea.vmem %s279, 64
      %1507 = vst.msk [vmem:[%s1506] sm:$0xff] %vm449, %v1487
      %1508 = vst.msk [vmem:[%s1506 + $0x8] sm:$0xff] %vm449, %v1489
      %1509 = vst.msk [vmem:[%s1506 + $0x10] sm:$0xff] %vm449, %v1492
      %1510 = vst.msk [vmem:[%s1506 + $0x18] sm:$0xff] %vm449, %v1494
      %1511 = vst.msk [vmem:[%s1506 + $0x20] sm:$0xff] %vm449, %v1497
      %1512 = vst.msk [vmem:[%s1506 + $0x28] sm:$0xff] %vm449, %v1499
      %1513 = vst.msk [vmem:[%s1506 + $0x30] sm:$0xff] %vm449, %v1502
      %1514 = vst.msk [vmem:[%s1506 + $0x38] sm:$0xff] %vm449, %v1504
      %s1515 = scalar_lea.vmem %s258, 64
      %v1516 = vld [vmem:[%s1515] sm:$0xf]
      %v1517 = vld [vmem:[%s1515 + $0x4] sm:$0xf]
      %v1518 = vld [vmem:[%s1515 + $0x8] sm:$0xf]
      %v1519 = vld [vmem:[%s1515 + $0xc] sm:$0xf]
      %v1520 = vld [vmem:[%s1515 + $0x10] sm:$0xf]
      %v1521 = vld [vmem:[%s1515 + $0x14] sm:$0xf]
      %v1522 = vld [vmem:[%s1515 + $0x18] sm:$0xf]
      %v1523 = vld [vmem:[%s1515 + $0x1c] sm:$0xf]
      %s1524 = scalar_lea.vmem %s265, 64
      %v1525 = vld [vmem:[%s1524] sm:$0xf]
      %v1526 = vld [vmem:[%s1524 + $0x4] sm:$0xf]
      %v1527 = vld [vmem:[%s1524 + $0x8] sm:$0xf]
      %v1528 = vld [vmem:[%s1524 + $0xc] sm:$0xf]
      %v1529 = vld [vmem:[%s1524 + $0x10] sm:$0xf]
      %v1530 = vld [vmem:[%s1524 + $0x14] sm:$0xf]
      %v1531 = vld [vmem:[%s1524 + $0x18] sm:$0xf]
      %v1532 = vld [vmem:[%s1524 + $0x1c] sm:$0xf]
      %1533 = vst.msk [vmem:[#allocation2] sm:$0xf] %vm331, %v1516
      %1534 = vst.msk [vmem:[#allocation2 + $0x4] sm:$0xf] %vm331, %v1517
      %1535 = vst.msk [vmem:[#allocation2 + $0x8] sm:$0xf] %vm331, %v1518
      %1536 = vst.msk [vmem:[#allocation2 + $0xc] sm:$0xf] %vm331, %v1519
      %1537 = vst.msk [vmem:[#allocation2 + $0x10] sm:$0xf] %vm331, %v1520
      %1538 = vst.msk [vmem:[#allocation2 + $0x14] sm:$0xf] %vm331, %v1521
      %1539 = vst.msk [vmem:[#allocation2 + $0x18] sm:$0xf] %vm331, %v1522
      %1540 = vst.msk [vmem:[#allocation2 + $0x1c] sm:$0xf] %vm331, %v1523
      %1541 = vst.msk [vmem:[#allocation3] sm:$0xf] %vm331, %v1525
      %1542 = vst.msk [vmem:[#allocation3 + $0x4] sm:$0xf] %vm331, %v1526
      %1543 = vst.msk [vmem:[#allocation3 + $0x8] sm:$0xf] %vm331, %v1527
      %1544 = vst.msk [vmem:[#allocation3 + $0xc] sm:$0xf] %vm331, %v1528
      %1545 = vst.msk [vmem:[#allocation3 + $0x10] sm:$0xf] %vm331, %v1529
      %1546 = vst.msk [vmem:[#allocation3 + $0x14] sm:$0xf] %vm331, %v1530
      %1547 = vst.msk [vmem:[#allocation3 + $0x18] sm:$0xf] %vm331, %v1531
      %1548 = vst.msk [vmem:[#allocation3 + $0x1c] sm:$0xf] %vm331, %v1532
      %1549 = vst.msk [vmem:[#allocation2 + $0x20] sm:$0xf] %vm348, %v1516
      %1550 = vst.msk [vmem:[#allocation2 + $0x24] sm:$0xf] %vm348, %v1517
      %1551 = vst.msk [vmem:[#allocation2 + $0x28] sm:$0xf] %vm348, %v1518
      %1552 = vst.msk [vmem:[#allocation2 + $0x2c] sm:$0xf] %vm348, %v1519
      %1553 = vst.msk [vmem:[#allocation2 + $0x30] sm:$0xf] %vm348, %v1520
      %1554 = vst.msk [vmem:[#allocation2 + $0x34] sm:$0xf] %vm348, %v1521
      %1555 = vst.msk [vmem:[#allocation2 + $0x38] sm:$0xf] %vm348, %v1522
      %1556 = vst.msk [vmem:[#allocation2 + $0x3c] sm:$0xf] %vm348, %v1523
      %1557 = vst.msk [vmem:[#allocation3 + $0x20] sm:$0xf] %vm348, %v1525
      %1558 = vst.msk [vmem:[#allocation3 + $0x24] sm:$0xf] %vm348, %v1526
      %1559 = vst.msk [vmem:[#allocation3 + $0x28] sm:$0xf] %vm348, %v1527
      %1560 = vst.msk [vmem:[#allocation3 + $0x2c] sm:$0xf] %vm348, %v1528
      %1561 = vst.msk [vmem:[#allocation3 + $0x30] sm:$0xf] %vm348, %v1529
      %1562 = vst.msk [vmem:[#allocation3 + $0x34] sm:$0xf] %vm348, %v1530
      %1563 = vst.msk [vmem:[#allocation3 + $0x38] sm:$0xf] %vm348, %v1531
      %1564 = vst.msk [vmem:[#allocation3 + $0x3c] sm:$0xf] %vm348, %v1532
      %s1565 = scalar_lea.vmem %s251, 64
      %v1566 = vld [vmem:[%s1565] sm:$0xf]
      %v1567 = vld [vmem:[%s1565 + $0x4] sm:$0xf]
      %v1568 = vld [vmem:[%s1565 + $0x8] sm:$0xf]
      %v1569 = vld [vmem:[%s1565 + $0xc] sm:$0xf]
      %v1570 = vld [vmem:[%s1565 + $0x10] sm:$0xf]
      %v1571 = vld [vmem:[%s1565 + $0x14] sm:$0xf]
      %v1572 = vld [vmem:[%s1565 + $0x18] sm:$0xf]
      %v1573 = vld [vmem:[%s1565 + $0x1c] sm:$0xf]
      %v1574 = vld [vmem:[#allocation2] sm:$0xf]
      %v1575 = vld [vmem:[#allocation2 + $0x4] sm:$0xf]
      %v1576 = vld [vmem:[#allocation2 + $0x8] sm:$0xf]
      %v1577 = vld [vmem:[#allocation2 + $0xc] sm:$0xf]
      %v1578 = vld [vmem:[#allocation2 + $0x10] sm:$0xf]
      %v1579 = vld [vmem:[#allocation2 + $0x14] sm:$0xf]
      %v1580 = vld [vmem:[#allocation2 + $0x18] sm:$0xf]
      %v1581 = vld [vmem:[#allocation2 + $0x1c] sm:$0xf]
      %v1582 = vld [vmem:[#allocation2 + $0x20] sm:$0xf]
      %v1583 = vld [vmem:[#allocation2 + $0x24] sm:$0xf]
      %v1584 = vld [vmem:[#allocation2 + $0x28] sm:$0xf]
      %v1585 = vld [vmem:[#allocation2 + $0x2c] sm:$0xf]
      %v1586 = vld [vmem:[#allocation2 + $0x30] sm:$0xf]
      %v1587 = vld [vmem:[#allocation2 + $0x34] sm:$0xf]
      %v1588 = vld [vmem:[#allocation2 + $0x38] sm:$0xf]
      %v1589 = vld [vmem:[#allocation2 + $0x3c] sm:$0xf]
      %v1598 = vunpack.c.l.b16 %v1566
      %v1599 = vunpack.c.l.b16 %v1567
      %v1600 = vunpack.c.l.b16 %v1568
      %v1601 = vunpack.c.l.b16 %v1569
      %v1602 = vunpack.c.l.b16 %v1570
      %v1603 = vunpack.c.l.b16 %v1571
      %v1604 = vunpack.c.l.b16 %v1572
      %v1605 = vunpack.c.l.b16 %v1573
      %v1606 = vpack.c.b16 %v1599, %v1598
      %v1607 = vpack.c.b16 %v1601, %v1600
      %v1608 = vpack.c.b16 %v1603, %v1602
      %v1609 = vpack.c.b16 %v1605, %v1604
      %v1626 = vunpack.c.l.b16 %v1574
      %v1627 = vunpack.c.l.b16 %v1575
      %v1628 = vunpack.c.l.b16 %v1576
      %v1629 = vunpack.c.l.b16 %v1577
      %v1630 = vunpack.c.l.b16 %v1578
      %v1631 = vunpack.c.l.b16 %v1579
      %v1632 = vunpack.c.l.b16 %v1580
      %v1633 = vunpack.c.l.b16 %v1581
      %v1634 = vunpack.c.l.b16 %v1582
      %v1635 = vunpack.c.l.b16 %v1583
      %v1636 = vunpack.c.l.b16 %v1584
      %v1637 = vunpack.c.l.b16 %v1585
      %v1638 = vunpack.c.l.b16 %v1586
      %v1639 = vunpack.c.l.b16 %v1587
      %v1640 = vunpack.c.l.b16 %v1588
      %v1641 = vunpack.c.l.b16 %v1589
      %v1642 = vpack.c.b16 %v1627, %v1626
      %v1643 = vpack.c.b16 %v1629, %v1628
      %v1644 = vpack.c.b16 %v1631, %v1630
      %v1645 = vpack.c.b16 %v1633, %v1632
      %v1646 = vpack.c.b16 %v1635, %v1634
      %v1647 = vpack.c.b16 %v1637, %v1636
      %v1648 = vpack.c.b16 %v1639, %v1638
      %v1649 = vpack.c.b16 %v1641, %v1640
      %v1651 = vsel %vm449, %v1606, 0
      %v1654 = vsel %vm449, %v1607, 0
      %v1657 = vsel %vm449, %v1608, 0
      %v1660 = vsel %vm449, %v1609, 0
      %v1663 = vsel %vm449, %v1642, 0
      %v1666 = vsel %vm449, %v1643, 0
      %v1669 = vsel %vm449, %v1644, 0
      %v1672 = vsel %vm449, %v1645, 0
      %v1675 = vsel %vm449, %v1646, 0
      %v1678 = vsel %vm449, %v1647, 0
      %v1681 = vsel %vm449, %v1648, 0
      %v1684 = vsel %vm449, %v1649, 0
      %1686 = vmatpush.bf16.xpose.msra.mxu0 %v1684
      %1687 = vmatpush.bf16.xpose.msra.mxu0 %v1681
      %1688 = vmatpush.bf16.xpose.msra.mxu0 %v1678
      %1689 = vmatpush.bf16.xpose.msra.mxu0 %v1675
      %1690 = vmatpush.bf16.xpose.msra.mxu0 %v1672
      %1691 = vmatpush.bf16.xpose.msra.mxu0 %v1669
      %1692 = vmatpush.bf16.xpose.msra.mxu0 %v1666
      %1693 = vmatpush.bf16.xpose.msra.mxu0 %v1663
      %1694 = vmatmul.bf16.gmra.mxu0 %v1651
      %v1695 = vpop.f32.mrf.mxu0
      %v1696 = vadd.f32 0.0, %v1695
      %v1697 = vpop.f32.mrf.mxu0
      %v1698 = vadd.f32 0.0, %v1697
      %1699 = vmatmul.bf16.gmra.mxu0 %v1654
      %v1700 = vpop.f32.mrf.mxu0
      %v1701 = vadd.f32 0.0, %v1700
      %v1702 = vpop.f32.mrf.mxu0
      %v1703 = vadd.f32 0.0, %v1702
      %1704 = vmatmul.bf16.gmra.mxu0 %v1657
      %v1705 = vpop.f32.mrf.mxu0
      %v1706 = vadd.f32 0.0, %v1705
      %v1707 = vpop.f32.mrf.mxu0
      %v1708 = vadd.f32 0.0, %v1707
      %1709 = vmatmul.bf16.gmra.mxu0 %v1660
      %v1710 = vpop.f32.mrf.mxu0
      %v1711 = vadd.f32 0.0, %v1710
      %v1712 = vpop.f32.mrf.mxu0
      %v1713 = vadd.f32 0.0, %v1712
      %1714 = vdwg.mxu0
      %v1715 = vmul.f32 %v1696, 0.5
      %v1716 = vmul.f32 %v1698, 0.5
      %v1717 = vmul.f32 %v1701, 0.5
      %v1718 = vmul.f32 %v1703, 0.5
      %v1719 = vmul.f32 %v1706, 0.5
      %v1720 = vmul.f32 %v1708, 0.5
      %v1721 = vmul.f32 %v1711, 0.5
      %v1722 = vmul.f32 %v1713, 0.5
      %v1723 = vsel %vm523, %v1715, -inf
      %1724 = vmax.xlane.f32.xlu0 %v1723
      %v1725 = vpop.xlane.xlu0 %1724
      %v1726 = vsel %vm523, %v1716, -inf
      %1727 = vmax.xlane.f32.xlu0 %v1726
      %v1728 = vpop.xlane.xlu0 %1727
      %v1729 = vsel %vm523, %v1717, -inf
      %1730 = vmax.xlane.f32.xlu0 %v1729
      %v1731 = vpop.xlane.xlu0 %1730
      %v1732 = vsel %vm523, %v1718, -inf
      %1733 = vmax.xlane.f32.xlu0 %v1732
      %v1734 = vpop.xlane.xlu0 %1733
      %v1735 = vsel %vm523, %v1719, -inf
      %1736 = vmax.xlane.f32.xlu0 %v1735
      %v1737 = vpop.xlane.xlu0 %1736
      %v1738 = vsel %vm523, %v1720, -inf
      %1739 = vmax.xlane.f32.xlu0 %v1738
      %v1740 = vpop.xlane.xlu0 %1739
      %v1741 = vsel %vm523, %v1721, -inf
      %1742 = vmax.xlane.f32.xlu0 %v1741
      %v1743 = vpop.xlane.xlu0 %1742
      %v1744 = vsel %vm523, %v1722, -inf
      %1745 = vmax.xlane.f32.xlu0 %v1744
      %v1746 = vpop.xlane.xlu0 %1745
      %v1747 = vsub.f32 %v1715, %v1725
      %v1748 = vsub.f32 %v1716, %v1728
      %v1749 = vsub.f32 %v1717, %v1731
      %v1750 = vsub.f32 %v1718, %v1734
      %v1751 = vsub.f32 %v1719, %v1737
      %v1752 = vsub.f32 %v1720, %v1740
      %v1753 = vsub.f32 %v1721, %v1743
      %v1754 = vsub.f32 %v1722, %v1746
      %v1755 = vmul.f32 %v1747, 1.442695
      %v1756 = vpow.pop %v1755
      %v1757 = vmul.f32 %v1748, 1.442695
      %v1758 = vpow.pop %v1757
      %v1759 = vmul.f32 %v1749, 1.442695
      %v1760 = vpow.pop %v1759
      %v1761 = vmul.f32 %v1750, 1.442695
      %v1762 = vpow.pop %v1761
      %v1763 = vmul.f32 %v1751, 1.442695
      %v1764 = vpow.pop %v1763
      %v1765 = vmul.f32 %v1752, 1.442695
      %v1766 = vpow.pop %v1765
      %v1767 = vmul.f32 %v1753, 1.442695
      %v1768 = vpow.pop %v1767
      %v1769 = vmul.f32 %v1754, 1.442695
      %v1770 = vpow.pop %v1769
      %v1771 = vsel %vm523, %v1756, 0.0
      %1772 = vadd.xlane.f32.xlu0 %v1771
      %v1773 = vpop.xlane.xlu0 %1772
      %v1774 = vsel %vm523, %v1758, 0.0
      %1775 = vadd.xlane.f32.xlu0 %v1774
      %v1776 = vpop.xlane.xlu0 %1775
      %v1777 = vsel %vm523, %v1760, 0.0
      %1778 = vadd.xlane.f32.xlu0 %v1777
      %v1779 = vpop.xlane.xlu0 %1778
      %v1780 = vsel %vm523, %v1762, 0.0
      %1781 = vadd.xlane.f32.xlu0 %v1780
      %v1782 = vpop.xlane.xlu0 %1781
      %v1783 = vsel %vm523, %v1764, 0.0
      %1784 = vadd.xlane.f32.xlu0 %v1783
      %v1785 = vpop.xlane.xlu0 %1784
      %v1786 = vsel %vm523, %v1766, 0.0
      %1787 = vadd.xlane.f32.xlu0 %v1786
      %v1788 = vpop.xlane.xlu0 %1787
      %v1789 = vsel %vm523, %v1768, 0.0
      %1790 = vadd.xlane.f32.xlu0 %v1789
      %v1791 = vpop.xlane.xlu0 %1790
      %v1792 = vsel %vm523, %v1770, 0.0
      %1793 = vadd.xlane.f32.xlu0 %v1792
      %v1794 = vpop.xlane.xlu0 %1793
      %v1795 = vrcp.pop %v1773
      %v1796 = vrcp.pop %v1776
      %v1797 = vrcp.pop %v1779
      %v1798 = vrcp.pop %v1782
      %v1799 = vrcp.pop %v1785
      %v1800 = vrcp.pop %v1788
      %v1801 = vrcp.pop %v1791
      %v1802 = vrcp.pop %v1794
      %v1803 = vmul.f32 %v1756, %v1795
      %v1804 = vmul.f32 %v1758, %v1796
      %v1805 = vmul.f32 %v1760, %v1797
      %v1806 = vmul.f32 %v1762, %v1798
      %v1807 = vmul.f32 %v1764, %v1799
      %v1808 = vmul.f32 %v1766, %v1800
      %v1809 = vmul.f32 %v1768, %v1801
      %v1810 = vmul.f32 %v1770, %v1802
      %v1811 = vpack.c.bf16 %v1803, %v1803
      %v1812 = vpack.c.bf16 %v1804, %v1804
      %v1813 = vpack.c.bf16 %v1805, %v1805
      %v1814 = vpack.c.bf16 %v1806, %v1806
      %v1815 = vpack.c.bf16 %v1807, %v1807
      %v1816 = vpack.c.bf16 %v1808, %v1808
      %v1817 = vpack.c.bf16 %v1809, %v1809
      %v1818 = vpack.c.bf16 %v1810, %v1810
      %1819 = vst.msk [vmem:[#allocation4] sm:$0xf] %vm620, %v1811
      %1820 = vst.msk [vmem:[#allocation4 + $0x4] sm:$0xf] %vm620, %v1812
      %1821 = vst.msk [vmem:[#allocation4 + $0x8] sm:$0xf] %vm620, %v1813
      %1822 = vst.msk [vmem:[#allocation4 + $0xc] sm:$0xf] %vm620, %v1814
      %1823 = vst.msk [vmem:[#allocation4 + $0x10] sm:$0xf] %vm620, %v1815
      %1824 = vst.msk [vmem:[#allocation4 + $0x14] sm:$0xf] %vm620, %v1816
      %1825 = vst.msk [vmem:[#allocation4 + $0x18] sm:$0xf] %vm620, %v1817
      %1826 = vst.msk [vmem:[#allocation4 + $0x1c] sm:$0xf] %vm620, %v1818
      %v1827 = vsel %vm629, %v1715, -inf
      %1828 = vmax.xlane.f32.xlu0 %v1827
      %v1829 = vpop.xlane.xlu0 %1828
      %v1830 = vsel %vm629, %v1716, -inf
      %1831 = vmax.xlane.f32.xlu0 %v1830
      %v1832 = vpop.xlane.xlu0 %1831
      %v1833 = vsel %vm629, %v1717, -inf
      %1834 = vmax.xlane.f32.xlu0 %v1833
      %v1835 = vpop.xlane.xlu0 %1834
      %v1836 = vsel %vm629, %v1718, -inf
      %1837 = vmax.xlane.f32.xlu0 %v1836
      %v1838 = vpop.xlane.xlu0 %1837
      %v1839 = vsel %vm629, %v1719, -inf
      %1840 = vmax.xlane.f32.xlu0 %v1839
      %v1841 = vpop.xlane.xlu0 %1840
      %v1842 = vsel %vm629, %v1720, -inf
      %1843 = vmax.xlane.f32.xlu0 %v1842
      %v1844 = vpop.xlane.xlu0 %1843
      %v1845 = vsel %vm629, %v1721, -inf
      %1846 = vmax.xlane.f32.xlu0 %v1845
      %v1847 = vpop.xlane.xlu0 %1846
      %v1848 = vsel %vm629, %v1722, -inf
      %1849 = vmax.xlane.f32.xlu0 %v1848
      %v1850 = vpop.xlane.xlu0 %1849
      %v1851 = vsub.f32 %v1715, %v1829
      %v1852 = vsub.f32 %v1716, %v1832
      %v1853 = vsub.f32 %v1717, %v1835
      %v1854 = vsub.f32 %v1718, %v1838
      %v1855 = vsub.f32 %v1719, %v1841
      %v1856 = vsub.f32 %v1720, %v1844
      %v1857 = vsub.f32 %v1721, %v1847
      %v1858 = vsub.f32 %v1722, %v1850
      %v1859 = vmul.f32 %v1851, 1.442695
      %v1860 = vpow.pop %v1859
      %v1861 = vmul.f32 %v1852, 1.442695
      %v1862 = vpow.pop %v1861
      %v1863 = vmul.f32 %v1853, 1.442695
      %v1864 = vpow.pop %v1863
      %v1865 = vmul.f32 %v1854, 1.442695
      %v1866 = vpow.pop %v1865
      %v1867 = vmul.f32 %v1855, 1.442695
      %v1868 = vpow.pop %v1867
      %v1869 = vmul.f32 %v1856, 1.442695
      %v1870 = vpow.pop %v1869
      %v1871 = vmul.f32 %v1857, 1.442695
      %v1872 = vpow.pop %v1871
      %v1873 = vmul.f32 %v1858, 1.442695
      %v1874 = vpow.pop %v1873
      %1883 = vrot.lane.b32.xlu0 %v1860, 64
      %v1884 = vpop.permute.xlu0 %1883
      %1885 = vrot.lane.b32.xlu0 %v1862, 64
      %v1886 = vpop.permute.xlu0 %1885
      %1887 = vrot.lane.b32.xlu0 %v1864, 64
      %v1888 = vpop.permute.xlu0 %1887
      %1889 = vrot.lane.b32.xlu0 %v1866, 64
      %v1890 = vpop.permute.xlu0 %1889
      %1891 = vrot.lane.b32.xlu0 %v1868, 64
      %v1892 = vpop.permute.xlu0 %1891
      %1893 = vrot.lane.b32.xlu0 %v1870, 64
      %v1894 = vpop.permute.xlu0 %1893
      %1895 = vrot.lane.b32.xlu0 %v1872, 64
      %v1896 = vpop.permute.xlu0 %1895
      %1897 = vrot.lane.b32.xlu0 %v1874, 64
      %v1898 = vpop.permute.xlu0 %1897
      %v1907 = vsel %vm523, %v1884, 0.0
      %1908 = vadd.xlane.f32.xlu0 %v1907
      %v1909 = vpop.xlane.xlu0 %1908
      %v1910 = vsel %vm523, %v1886, 0.0
      %1911 = vadd.xlane.f32.xlu0 %v1910
      %v1912 = vpop.xlane.xlu0 %1911
      %v1913 = vsel %vm523, %v1888, 0.0
      %1914 = vadd.xlane.f32.xlu0 %v1913
      %v1915 = vpop.xlane.xlu0 %1914
      %v1916 = vsel %vm523, %v1890, 0.0
      %1917 = vadd.xlane.f32.xlu0 %v1916
      %v1918 = vpop.xlane.xlu0 %1917
      %v1919 = vsel %vm523, %v1892, 0.0
      %1920 = vadd.xlane.f32.xlu0 %v1919
      %v1921 = vpop.xlane.xlu0 %1920
      %v1922 = vsel %vm523, %v1894, 0.0
      %1923 = vadd.xlane.f32.xlu0 %v1922
      %v1924 = vpop.xlane.xlu0 %1923
      %v1925 = vsel %vm523, %v1896, 0.0
      %1926 = vadd.xlane.f32.xlu0 %v1925
      %v1927 = vpop.xlane.xlu0 %1926
      %v1928 = vsel %vm523, %v1898, 0.0
      %1929 = vadd.xlane.f32.xlu0 %v1928
      %v1930 = vpop.xlane.xlu0 %1929
      %v1931 = vrcp.pop %v1909
      %v1932 = vrcp.pop %v1912
      %v1933 = vrcp.pop %v1915
      %v1934 = vrcp.pop %v1918
      %v1935 = vrcp.pop %v1921
      %v1936 = vrcp.pop %v1924
      %v1937 = vrcp.pop %v1927
      %v1938 = vrcp.pop %v1930
      %v1939 = vmul.f32 %v1860, %v1931
      %v1940 = vmul.f32 %v1862, %v1932
      %v1941 = vmul.f32 %v1864, %v1933
      %v1942 = vmul.f32 %v1866, %v1934
      %v1943 = vmul.f32 %v1868, %v1935
      %v1944 = vmul.f32 %v1870, %v1936
      %v1945 = vmul.f32 %v1872, %v1937
      %v1946 = vmul.f32 %v1874, %v1938
      %v1947 = vpack.c.bf16 %v1939, %v1939
      %v1948 = vpack.c.bf16 %v1940, %v1940
      %v1949 = vpack.c.bf16 %v1941, %v1941
      %v1950 = vpack.c.bf16 %v1942, %v1942
      %v1951 = vpack.c.bf16 %v1943, %v1943
      %v1952 = vpack.c.bf16 %v1944, %v1944
      %v1953 = vpack.c.bf16 %v1945, %v1945
      %v1954 = vpack.c.bf16 %v1946, %v1946
      %1955 = vst.msk [vmem:[#allocation4] sm:$0xf] %vm758, %v1947
      %1956 = vst.msk [vmem:[#allocation4 + $0x4] sm:$0xf] %vm758, %v1948
      %1957 = vst.msk [vmem:[#allocation4 + $0x8] sm:$0xf] %vm758, %v1949
      %1958 = vst.msk [vmem:[#allocation4 + $0xc] sm:$0xf] %vm758, %v1950
      %1959 = vst.msk [vmem:[#allocation4 + $0x10] sm:$0xf] %vm758, %v1951
      %1960 = vst.msk [vmem:[#allocation4 + $0x14] sm:$0xf] %vm758, %v1952
      %1961 = vst.msk [vmem:[#allocation4 + $0x18] sm:$0xf] %vm758, %v1953
      %1962 = vst.msk [vmem:[#allocation4 + $0x1c] sm:$0xf] %vm758, %v1954
      %v1963 = vld [vmem:[#allocation4] sm:$0xf]
      %v1964 = vld [vmem:[#allocation4 + $0x4] sm:$0xf]
      %v1965 = vld [vmem:[#allocation4 + $0x8] sm:$0xf]
      %v1966 = vld [vmem:[#allocation4 + $0xc] sm:$0xf]
      %v1967 = vld [vmem:[#allocation4 + $0x10] sm:$0xf]
      %v1968 = vld [vmem:[#allocation4 + $0x14] sm:$0xf]
      %v1969 = vld [vmem:[#allocation4 + $0x18] sm:$0xf]
      %v1970 = vld [vmem:[#allocation4 + $0x1c] sm:$0xf]
      %v1971 = vld [vmem:[#allocation3] sm:$0xf]
      %v1972 = vld [vmem:[#allocation3 + $0x4] sm:$0xf]
      %v1973 = vld [vmem:[#allocation3 + $0x8] sm:$0xf]
      %v1974 = vld [vmem:[#allocation3 + $0xc] sm:$0xf]
      %v1975 = vld [vmem:[#allocation3 + $0x10] sm:$0xf]
      %v1976 = vld [vmem:[#allocation3 + $0x14] sm:$0xf]
      %v1977 = vld [vmem:[#allocation3 + $0x18] sm:$0xf]
      %v1978 = vld [vmem:[#allocation3 + $0x1c] sm:$0xf]
      %v1979 = vld [vmem:[#allocation3 + $0x20] sm:$0xf]
      %v1980 = vld [vmem:[#allocation3 + $0x24] sm:$0xf]
      %v1981 = vld [vmem:[#allocation3 + $0x28] sm:$0xf]
      %v1982 = vld [vmem:[#allocation3 + $0x2c] sm:$0xf]
      %v1983 = vld [vmem:[#allocation3 + $0x30] sm:$0xf]
      %v1984 = vld [vmem:[#allocation3 + $0x34] sm:$0xf]
      %v1985 = vld [vmem:[#allocation3 + $0x38] sm:$0xf]
      %v1986 = vld [vmem:[#allocation3 + $0x3c] sm:$0xf]
      %s1987 = scalar_lea.vmem %s272, 64
      %v1988 = vld [vmem:[%s1987] sm:$0xf]
      %v1989 = vld [vmem:[%s1987 + $0x4] sm:$0xf]
      %v1990 = vld [vmem:[%s1987 + $0x8] sm:$0xf]
      %v1991 = vld [vmem:[%s1987 + $0xc] sm:$0xf]
      %v1992 = vld [vmem:[%s1987 + $0x10] sm:$0xf]
      %v1993 = vld [vmem:[%s1987 + $0x14] sm:$0xf]
      %v1994 = vld [vmem:[%s1987 + $0x18] sm:$0xf]
      %v1995 = vld [vmem:[%s1987 + $0x1c] sm:$0xf]
      %v1996 = vunpack.c.l.bf16 %v1988
      %v1997 = vunpack.c.l.bf16 %v1989
      %v1998 = vunpack.c.l.bf16 %v1990
      %v1999 = vunpack.c.l.bf16 %v1991
      %v2000 = vunpack.c.l.bf16 %v1992
      %v2001 = vunpack.c.l.bf16 %v1993
      %v2002 = vunpack.c.l.bf16 %v1994
      %v2003 = vunpack.c.l.bf16 %v1995
      %v2012 = vunpack.c.l.b16 %v1963
      %v2013 = vunpack.c.l.b16 %v1964
      %v2014 = vunpack.c.l.b16 %v1965
      %v2015 = vunpack.c.l.b16 %v1966
      %v2016 = vunpack.c.l.b16 %v1967
      %v2017 = vunpack.c.l.b16 %v1968
      %v2018 = vunpack.c.l.b16 %v1969
      %v2019 = vunpack.c.l.b16 %v1970
      %v2020 = vpack.c.b16 %v2013, %v2012
      %v2021 = vpack.c.b16 %v2015, %v2014
      %v2022 = vpack.c.b16 %v2017, %v2016
      %v2023 = vpack.c.b16 %v2019, %v2018
      %v2044 = vunpack.c.l.b16 %v1971
      %v2045 = vunpack.c.l.b16 %v1972
      %v2046 = vunpack.c.l.b16 %v1973
      %v2047 = vunpack.c.l.b16 %v1974
      %v2048 = vunpack.c.l.b16 %v1975
      %v2049 = vunpack.c.l.b16 %v1976
      %v2050 = vunpack.c.l.b16 %v1977
      %v2051 = vunpack.c.l.b16 %v1978
      %v2052 = vunpack.c.l.b16 %v1979
      %v2053 = vunpack.c.l.b16 %v1980
      %v2054 = vunpack.c.l.b16 %v1981
      %v2055 = vunpack.c.l.b16 %v1982
      %v2056 = vunpack.c.l.b16 %v1983
      %v2057 = vunpack.c.l.b16 %v1984
      %v2058 = vunpack.c.l.b16 %v1985
      %v2059 = vunpack.c.l.b16 %v1986
      %v2060 = vpack.c.b16 %v2045, %v2044
      %v2061 = vpack.c.b16 %v2047, %v2046
      %v2062 = vpack.c.b16 %v2049, %v2048
      %v2063 = vpack.c.b16 %v2051, %v2050
      %v2064 = vpack.c.b16 %v2053, %v2052
      %v2065 = vpack.c.b16 %v2055, %v2054
      %v2066 = vpack.c.b16 %v2057, %v2056
      %v2067 = vpack.c.b16 %v2059, %v2058
      %2076 = vmatpush.bf16.msra.mxu0 %v2067
      %2077 = vmatpush.bf16.msra.mxu0 %v2066
      %2078 = vmatpush.bf16.msra.mxu0 %v2065
      %2079 = vmatpush.bf16.msra.mxu0 %v2064
      %2080 = vmatpush.bf16.msra.mxu0 %v2063
      %2081 = vmatpush.bf16.msra.mxu0 %v2062
      %2082 = vmatpush.bf16.msra.mxu0 %v2061
      %2083 = vmatpush.bf16.msra.mxu0 %v2060
      %2084 = vmatmul.bf16.gmra.mxu0 %v2020
      %v2085 = vpop.f32.mrf.mxu0
      %v2086 = vadd.f32 %v1996, %v2085
      %v2087 = vpop.f32.mrf.mxu0
      %v2088 = vadd.f32 %v1997, %v2087
      %2089 = vmatmul.bf16.gmra.mxu0 %v2021
      %v2090 = vpop.f32.mrf.mxu0
      %v2091 = vadd.f32 %v1998, %v2090
      %v2092 = vpop.f32.mrf.mxu0
      %v2093 = vadd.f32 %v1999, %v2092
      %2094 = vmatmul.bf16.gmra.mxu0 %v2022
      %v2095 = vpop.f32.mrf.mxu0
      %v2096 = vadd.f32 %v2000, %v2095
      %v2097 = vpop.f32.mrf.mxu0
      %v2098 = vadd.f32 %v2001, %v2097
      %2099 = vmatmul.bf16.gmra.mxu0 %v2023
      %v2100 = vpop.f32.mrf.mxu0
      %v2101 = vadd.f32 %v2002, %v2100
      %v2102 = vpop.f32.mrf.mxu0
      %v2103 = vadd.f32 %v2003, %v2102
      %2104 = vdwg.mxu0
      %s2105 = scalar_lea.vmem %s279, 128
      %2106 = vst.msk [vmem:[%s2105] sm:$0xff] %vm449, %v2086
      %2107 = vst.msk [vmem:[%s2105 + $0x8] sm:$0xff] %vm449, %v2088
      %2108 = vst.msk [vmem:[%s2105 + $0x10] sm:$0xff] %vm449, %v2091
      %2109 = vst.msk [vmem:[%s2105 + $0x18] sm:$0xff] %vm449, %v2093
      %2110 = vst.msk [vmem:[%s2105 + $0x20] sm:$0xff] %vm449, %v2096
      %2111 = vst.msk [vmem:[%s2105 + $0x28] sm:$0xff] %vm449, %v2098
      %2112 = vst.msk [vmem:[%s2105 + $0x30] sm:$0xff] %vm449, %v2101
      %2113 = vst.msk [vmem:[%s2105 + $0x38] sm:$0xff] %vm449, %v2103
      %s2114 = scalar_lea.vmem %s258, 96
      %v2115 = vld [vmem:[%s2114] sm:$0xf]
      %v2116 = vld [vmem:[%s2114 + $0x4] sm:$0xf]
      %v2117 = vld [vmem:[%s2114 + $0x8] sm:$0xf]
      %v2118 = vld [vmem:[%s2114 + $0xc] sm:$0xf]
      %v2119 = vld [vmem:[%s2114 + $0x10] sm:$0xf]
      %v2120 = vld [vmem:[%s2114 + $0x14] sm:$0xf]
      %v2121 = vld [vmem:[%s2114 + $0x18] sm:$0xf]
      %v2122 = vld [vmem:[%s2114 + $0x1c] sm:$0xf]
      %s2123 = scalar_lea.vmem %s265, 96
      %v2124 = vld [vmem:[%s2123] sm:$0xf]
      %v2125 = vld [vmem:[%s2123 + $0x4] sm:$0xf]
      %v2126 = vld [vmem:[%s2123 + $0x8] sm:$0xf]
      %v2127 = vld [vmem:[%s2123 + $0xc] sm:$0xf]
      %v2128 = vld [vmem:[%s2123 + $0x10] sm:$0xf]
      %v2129 = vld [vmem:[%s2123 + $0x14] sm:$0xf]
      %v2130 = vld [vmem:[%s2123 + $0x18] sm:$0xf]
      %v2131 = vld [vmem:[%s2123 + $0x1c] sm:$0xf]
      %2132 = vst.msk [vmem:[#allocation2] sm:$0xf] %vm331, %v2115
      %2133 = vst.msk [vmem:[#allocation2 + $0x4] sm:$0xf] %vm331, %v2116
      %2134 = vst.msk [vmem:[#allocation2 + $0x8] sm:$0xf] %vm331, %v2117
      %2135 = vst.msk [vmem:[#allocation2 + $0xc] sm:$0xf] %vm331, %v2118
      %2136 = vst.msk [vmem:[#allocation2 + $0x10] sm:$0xf] %vm331, %v2119
      %2137 = vst.msk [vmem:[#allocation2 + $0x14] sm:$0xf] %vm331, %v2120
      %2138 = vst.msk [vmem:[#allocation2 + $0x18] sm:$0xf] %vm331, %v2121
      %2139 = vst.msk [vmem:[#allocation2 + $0x1c] sm:$0xf] %vm331, %v2122
      %2140 = vst.msk [vmem:[#allocation3] sm:$0xf] %vm331, %v2124
      %2141 = vst.msk [vmem:[#allocation3 + $0x4] sm:$0xf] %vm331, %v2125
      %2142 = vst.msk [vmem:[#allocation3 + $0x8] sm:$0xf] %vm331, %v2126
      %2143 = vst.msk [vmem:[#allocation3 + $0xc] sm:$0xf] %vm331, %v2127
      %2144 = vst.msk [vmem:[#allocation3 + $0x10] sm:$0xf] %vm331, %v2128
      %2145 = vst.msk [vmem:[#allocation3 + $0x14] sm:$0xf] %vm331, %v2129
      %2146 = vst.msk [vmem:[#allocation3 + $0x18] sm:$0xf] %vm331, %v2130
      %2147 = vst.msk [vmem:[#allocation3 + $0x1c] sm:$0xf] %vm331, %v2131
      %2148 = vst.msk [vmem:[#allocation2 + $0x20] sm:$0xf] %vm348, %v2115
      %2149 = vst.msk [vmem:[#allocation2 + $0x24] sm:$0xf] %vm348, %v2116
      %2150 = vst.msk [vmem:[#allocation2 + $0x28] sm:$0xf] %vm348, %v2117
      %2151 = vst.msk [vmem:[#allocation2 + $0x2c] sm:$0xf] %vm348, %v2118
      %2152 = vst.msk [vmem:[#allocation2 + $0x30] sm:$0xf] %vm348, %v2119
      %2153 = vst.msk [vmem:[#allocation2 + $0x34] sm:$0xf] %vm348, %v2120
      %2154 = vst.msk [vmem:[#allocation2 + $0x38] sm:$0xf] %vm348, %v2121
      %2155 = vst.msk [vmem:[#allocation2 + $0x3c] sm:$0xf] %vm348, %v2122
      %2156 = vst.msk [vmem:[#allocation3 + $0x20] sm:$0xf] %vm348, %v2124
      %2157 = vst.msk [vmem:[#allocation3 + $0x24] sm:$0xf] %vm348, %v2125
      %2158 = vst.msk [vmem:[#allocation3 + $0x28] sm:$0xf] %vm348, %v2126
      %2159 = vst.msk [vmem:[#allocation3 + $0x2c] sm:$0xf] %vm348, %v2127
      %2160 = vst.msk [vmem:[#allocation3 + $0x30] sm:$0xf] %vm348, %v2128
      %2161 = vst.msk [vmem:[#allocation3 + $0x34] sm:$0xf] %vm348, %v2129
      %2162 = vst.msk [vmem:[#allocation3 + $0x38] sm:$0xf] %vm348, %v2130
      %2163 = vst.msk [vmem:[#allocation3 + $0x3c] sm:$0xf] %vm348, %v2131
      %s2164 = scalar_lea.vmem %s251, 96
      %v2165 = vld [vmem:[%s2164] sm:$0xf]
      %v2166 = vld [vmem:[%s2164 + $0x4] sm:$0xf]
      %v2167 = vld [vmem:[%s2164 + $0x8] sm:$0xf]
      %v2168 = vld [vmem:[%s2164 + $0xc] sm:$0xf]
      %v2169 = vld [vmem:[%s2164 + $0x10] sm:$0xf]
      %v2170 = vld [vmem:[%s2164 + $0x14] sm:$0xf]
      %v2171 = vld [vmem:[%s2164 + $0x18] sm:$0xf]
      %v2172 = vld [vmem:[%s2164 + $0x1c] sm:$0xf]
      %v2173 = vld [vmem:[#allocation2] sm:$0xf]
      %v2174 = vld [vmem:[#allocation2 + $0x4] sm:$0xf]
      %v2175 = vld [vmem:[#allocation2 + $0x8] sm:$0xf]
      %v2176 = vld [vmem:[#allocation2 + $0xc] sm:$0xf]
      %v2177 = vld [vmem:[#allocation2 + $0x10] sm:$0xf]
      %v2178 = vld [vmem:[#allocation2 + $0x14] sm:$0xf]
      %v2179 = vld [vmem:[#allocation2 + $0x18] sm:$0xf]
      %v2180 = vld [vmem:[#allocation2 + $0x1c] sm:$0xf]
      %v2181 = vld [vmem:[#allocation2 + $0x20] sm:$0xf]
      %v2182 = vld [vmem:[#allocation2 + $0x24] sm:$0xf]
      %v2183 = vld [vmem:[#allocation2 + $0x28] sm:$0xf]
      %v2184 = vld [vmem:[#allocation2 + $0x2c] sm:$0xf]
      %v2185 = vld [vmem:[#allocation2 + $0x30] sm:$0xf]
      %v2186 = vld [vmem:[#allocation2 + $0x34] sm:$0xf]
      %v2187 = vld [vmem:[#allocation2 + $0x38] sm:$0xf]
      %v2188 = vld [vmem:[#allocation2 + $0x3c] sm:$0xf]
      %v2197 = vunpack.c.l.b16 %v2165
      %v2198 = vunpack.c.l.b16 %v2166
      %v2199 = vunpack.c.l.b16 %v2167
      %v2200 = vunpack.c.l.b16 %v2168
      %v2201 = vunpack.c.l.b16 %v2169
      %v2202 = vunpack.c.l.b16 %v2170
      %v2203 = vunpack.c.l.b16 %v2171
      %v2204 = vunpack.c.l.b16 %v2172
      %v2205 = vpack.c.b16 %v2198, %v2197
      %v2206 = vpack.c.b16 %v2200, %v2199
      %v2207 = vpack.c.b16 %v2202, %v2201
      %v2208 = vpack.c.b16 %v2204, %v2203
      %v2225 = vunpack.c.l.b16 %v2173
      %v2226 = vunpack.c.l.b16 %v2174
      %v2227 = vunpack.c.l.b16 %v2175
      %v2228 = vunpack.c.l.b16 %v2176
      %v2229 = vunpack.c.l.b16 %v2177
      %v2230 = vunpack.c.l.b16 %v2178
      %v2231 = vunpack.c.l.b16 %v2179
      %v2232 = vunpack.c.l.b16 %v2180
      %v2233 = vunpack.c.l.b16 %v2181
      %v2234 = vunpack.c.l.b16 %v2182
      %v2235 = vunpack.c.l.b16 %v2183
      %v2236 = vunpack.c.l.b16 %v2184
      %v2237 = vunpack.c.l.b16 %v2185
      %v2238 = vunpack.c.l.b16 %v2186
      %v2239 = vunpack.c.l.b16 %v2187
      %v2240 = vunpack.c.l.b16 %v2188
      %v2241 = vpack.c.b16 %v2226, %v2225
      %v2242 = vpack.c.b16 %v2228, %v2227
      %v2243 = vpack.c.b16 %v2230, %v2229
      %v2244 = vpack.c.b16 %v2232, %v2231
      %v2245 = vpack.c.b16 %v2234, %v2233
      %v2246 = vpack.c.b16 %v2236, %v2235
      %v2247 = vpack.c.b16 %v2238, %v2237
      %v2248 = vpack.c.b16 %v2240, %v2239
      %v2250 = vsel %vm449, %v2205, 0
      %v2253 = vsel %vm449, %v2206, 0
      %v2256 = vsel %vm449, %v2207, 0
      %v2259 = vsel %vm449, %v2208, 0
      %v2262 = vsel %vm449, %v2241, 0
      %v2265 = vsel %vm449, %v2242, 0
      %v2268 = vsel %vm449, %v2243, 0
      %v2271 = vsel %vm449, %v2244, 0
      %v2274 = vsel %vm449, %v2245, 0
      %v2277 = vsel %vm449, %v2246, 0
      %v2280 = vsel %vm449, %v2247, 0
      %v2283 = vsel %vm449, %v2248, 0
      %2285 = vmatpush.bf16.xpose.msra.mxu0 %v2283
      %2286 = vmatpush.bf16.xpose.msra.mxu0 %v2280
      %2287 = vmatpush.bf16.xpose.msra.mxu0 %v2277
      %2288 = vmatpush.bf16.xpose.msra.mxu0 %v2274
      %2289 = vmatpush.bf16.xpose.msra.mxu0 %v2271
      %2290 = vmatpush.bf16.xpose.msra.mxu0 %v2268
      %2291 = vmatpush.bf16.xpose.msra.mxu0 %v2265
      %2292 = vmatpush.bf16.xpose.msra.mxu0 %v2262
      %2293 = vmatmul.bf16.gmra.mxu0 %v2250
      %v2294 = vpop.f32.mrf.mxu0
      %v2295 = vadd.f32 0.0, %v2294
      %v2296 = vpop.f32.mrf.mxu0
      %v2297 = vadd.f32 0.0, %v2296
      %2298 = vmatmul.bf16.gmra.mxu0 %v2253
      %v2299 = vpop.f32.mrf.mxu0
      %v2300 = vadd.f32 0.0, %v2299
      %v2301 = vpop.f32.mrf.mxu0
      %v2302 = vadd.f32 0.0, %v2301
      %2303 = vmatmul.bf16.gmra.mxu0 %v2256
      %v2304 = vpop.f32.mrf.mxu0
      %v2305 = vadd.f32 0.0, %v2304
      %v2306 = vpop.f32.mrf.mxu0
      %v2307 = vadd.f32 0.0, %v2306
      %2308 = vmatmul.bf16.gmra.mxu0 %v2259
      %v2309 = vpop.f32.mrf.mxu0
      %v2310 = vadd.f32 0.0, %v2309
      %v2311 = vpop.f32.mrf.mxu0
      %v2312 = vadd.f32 0.0, %v2311
      %2313 = vdwg.mxu0
      %v2314 = vmul.f32 %v2295, 0.5
      %v2315 = vmul.f32 %v2297, 0.5
      %v2316 = vmul.f32 %v2300, 0.5
      %v2317 = vmul.f32 %v2302, 0.5
      %v2318 = vmul.f32 %v2305, 0.5
      %v2319 = vmul.f32 %v2307, 0.5
      %v2320 = vmul.f32 %v2310, 0.5
      %v2321 = vmul.f32 %v2312, 0.5
      %v2322 = vsel %vm523, %v2314, -inf
      %2323 = vmax.xlane.f32.xlu0 %v2322
      %v2324 = vpop.xlane.xlu0 %2323
      %v2325 = vsel %vm523, %v2315, -inf
      %2326 = vmax.xlane.f32.xlu0 %v2325
      %v2327 = vpop.xlane.xlu0 %2326
      %v2328 = vsel %vm523, %v2316, -inf
      %2329 = vmax.xlane.f32.xlu0 %v2328
      %v2330 = vpop.xlane.xlu0 %2329
      %v2331 = vsel %vm523, %v2317, -inf
      %2332 = vmax.xlane.f32.xlu0 %v2331
      %v2333 = vpop.xlane.xlu0 %2332
      %v2334 = vsel %vm523, %v2318, -inf
      %2335 = vmax.xlane.f32.xlu0 %v2334
      %v2336 = vpop.xlane.xlu0 %2335
      %v2337 = vsel %vm523, %v2319, -inf
      %2338 = vmax.xlane.f32.xlu0 %v2337
      %v2339 = vpop.xlane.xlu0 %2338
      %v2340 = vsel %vm523, %v2320, -inf
      %2341 = vmax.xlane.f32.xlu0 %v2340
      %v2342 = vpop.xlane.xlu0 %2341
      %v2343 = vsel %vm523, %v2321, -inf
      %2344 = vmax.xlane.f32.xlu0 %v2343
      %v2345 = vpop.xlane.xlu0 %2344
      %v2346 = vsub.f32 %v2314, %v2324
      %v2347 = vsub.f32 %v2315, %v2327
      %v2348 = vsub.f32 %v2316, %v2330
      %v2349 = vsub.f32 %v2317, %v2333
      %v2350 = vsub.f32 %v2318, %v2336
      %v2351 = vsub.f32 %v2319, %v2339
      %v2352 = vsub.f32 %v2320, %v2342
      %v2353 = vsub.f32 %v2321, %v2345
      %v2354 = vmul.f32 %v2346, 1.442695
      %v2355 = vpow.pop %v2354
      %v2356 = vmul.f32 %v2347, 1.442695
      %v2357 = vpow.pop %v2356
      %v2358 = vmul.f32 %v2348, 1.442695
      %v2359 = vpow.pop %v2358
      %v2360 = vmul.f32 %v2349, 1.442695
      %v2361 = vpow.pop %v2360
      %v2362 = vmul.f32 %v2350, 1.442695
      %v2363 = vpow.pop %v2362
      %v2364 = vmul.f32 %v2351, 1.442695
      %v2365 = vpow.pop %v2364
      %v2366 = vmul.f32 %v2352, 1.442695
      %v2367 = vpow.pop %v2366
      %v2368 = vmul.f32 %v2353, 1.442695
      %v2369 = vpow.pop %v2368
      %v2370 = vsel %vm523, %v2355, 0.0
      %2371 = vadd.xlane.f32.xlu0 %v2370
      %v2372 = vpop.xlane.xlu0 %2371
      %v2373 = vsel %vm523, %v2357, 0.0
      %2374 = vadd.xlane.f32.xlu0 %v2373
      %v2375 = vpop.xlane.xlu0 %2374
      %v2376 = vsel %vm523, %v2359, 0.0
      %2377 = vadd.xlane.f32.xlu0 %v2376
      %v2378 = vpop.xlane.xlu0 %2377
      %v2379 = vsel %vm523, %v2361, 0.0
      %2380 = vadd.xlane.f32.xlu0 %v2379
      %v2381 = vpop.xlane.xlu0 %2380
      %v2382 = vsel %vm523, %v2363, 0.0
      %2383 = vadd.xlane.f32.xlu0 %v2382
      %v2384 = vpop.xlane.xlu0 %2383
      %v2385 = vsel %vm523, %v2365, 0.0
      %2386 = vadd.xlane.f32.xlu0 %v2385
      %v2387 = vpop.xlane.xlu0 %2386
      %v2388 = vsel %vm523, %v2367, 0.0
      %2389 = vadd.xlane.f32.xlu0 %v2388
      %v2390 = vpop.xlane.xlu0 %2389
      %v2391 = vsel %vm523, %v2369, 0.0
      %2392 = vadd.xlane.f32.xlu0 %v2391
      %v2393 = vpop.xlane.xlu0 %2392
      %v2394 = vrcp.pop %v2372
      %v2395 = vrcp.pop %v2375
      %v2396 = vrcp.pop %v2378
      %v2397 = vrcp.pop %v2381
      %v2398 = vrcp.pop %v2384
      %v2399 = vrcp.pop %v2387
      %v2400 = vrcp.pop %v2390
      %v2401 = vrcp.pop %v2393
      %v2402 = vmul.f32 %v2355, %v2394
      %v2403 = vmul.f32 %v2357, %v2395
      %v2404 = vmul.f32 %v2359, %v2396
      %v2405 = vmul.f32 %v2361, %v2397
      %v2406 = vmul.f32 %v2363, %v2398
      %v2407 = vmul.f32 %v2365, %v2399
      %v2408 = vmul.f32 %v2367, %v2400
      %v2409 = vmul.f32 %v2369, %v2401
      %v2410 = vpack.c.bf16 %v2402, %v2402
      %v2411 = vpack.c.bf16 %v2403, %v2403
      %v2412 = vpack.c.bf16 %v2404, %v2404
      %v2413 = vpack.c.bf16 %v2405, %v2405
      %v2414 = vpack.c.bf16 %v2406, %v2406
      %v2415 = vpack.c.bf16 %v2407, %v2407
      %v2416 = vpack.c.bf16 %v2408, %v2408
      %v2417 = vpack.c.bf16 %v2409, %v2409
      %2418 = vst.msk [vmem:[#allocation4] sm:$0xf] %vm620, %v2410
      %2419 = vst.msk [vmem:[#allocation4 + $0x4] sm:$0xf] %vm620, %v2411
      %2420 = vst.msk [vmem:[#allocation4 + $0x8] sm:$0xf] %vm620, %v2412
      %2421 = vst.msk [vmem:[#allocation4 + $0xc] sm:$0xf] %vm620, %v2413
      %2422 = vst.msk [vmem:[#allocation4 + $0x10] sm:$0xf] %vm620, %v2414
      %2423 = vst.msk [vmem:[#allocation4 + $0x14] sm:$0xf] %vm620, %v2415
      %2424 = vst.msk [vmem:[#allocation4 + $0x18] sm:$0xf] %vm620, %v2416
      %2425 = vst.msk [vmem:[#allocation4 + $0x1c] sm:$0xf] %vm620, %v2417
      %v2426 = vsel %vm629, %v2314, -inf
      %2427 = vmax.xlane.f32.xlu0 %v2426
      %v2428 = vpop.xlane.xlu0 %2427
      %v2429 = vsel %vm629, %v2315, -inf
      %2430 = vmax.xlane.f32.xlu0 %v2429
      %v2431 = vpop.xlane.xlu0 %2430
      %v2432 = vsel %vm629, %v2316, -inf
      %2433 = vmax.xlane.f32.xlu0 %v2432
      %v2434 = vpop.xlane.xlu0 %2433
      %v2435 = vsel %vm629, %v2317, -inf
      %2436 = vmax.xlane.f32.xlu0 %v2435
      %v2437 = vpop.xlane.xlu0 %2436
      %v2438 = vsel %vm629, %v2318, -inf
      %2439 = vmax.xlane.f32.xlu0 %v2438
      %v2440 = vpop.xlane.xlu0 %2439
      %v2441 = vsel %vm629, %v2319, -inf
      %2442 = vmax.xlane.f32.xlu0 %v2441
      %v2443 = vpop.xlane.xlu0 %2442
      %v2444 = vsel %vm629, %v2320, -inf
      %2445 = vmax.xlane.f32.xlu0 %v2444
      %v2446 = vpop.xlane.xlu0 %2445
      %v2447 = vsel %vm629, %v2321, -inf
      %2448 = vmax.xlane.f32.xlu0 %v2447
      %v2449 = vpop.xlane.xlu0 %2448
      %v2450 = vsub.f32 %v2314, %v2428
      %v2451 = vsub.f32 %v2315, %v2431
      %v2452 = vsub.f32 %v2316, %v2434
      %v2453 = vsub.f32 %v2317, %v2437
      %v2454 = vsub.f32 %v2318, %v2440
      %v2455 = vsub.f32 %v2319, %v2443
      %v2456 = vsub.f32 %v2320, %v2446
      %v2457 = vsub.f32 %v2321, %v2449
      %v2458 = vmul.f32 %v2450, 1.442695
      %v2459 = vpow.pop %v2458
      %v2460 = vmul.f32 %v2451, 1.442695
      %v2461 = vpow.pop %v2460
      %v2462 = vmul.f32 %v2452, 1.442695
      %v2463 = vpow.pop %v2462
      %v2464 = vmul.f32 %v2453, 1.442695
      %v2465 = vpow.pop %v2464
      %v2466 = vmul.f32 %v2454, 1.442695
      %v2467 = vpow.pop %v2466
      %v2468 = vmul.f32 %v2455, 1.442695
      %v2469 = vpow.pop %v2468
      %v2470 = vmul.f32 %v2456, 1.442695
      %v2471 = vpow.pop %v2470
      %v2472 = vmul.f32 %v2457, 1.442695
      %v2473 = vpow.pop %v2472
      %2482 = vrot.lane.b32.xlu0 %v2459, 64
      %v2483 = vpop.permute.xlu0 %2482
      %2484 = vrot.lane.b32.xlu0 %v2461, 64
      %v2485 = vpop.permute.xlu0 %2484
      %2486 = vrot.lane.b32.xlu0 %v2463, 64
      %v2487 = vpop.permute.xlu0 %2486
      %2488 = vrot.lane.b32.xlu0 %v2465, 64
      %v2489 = vpop.permute.xlu0 %2488
      %2490 = vrot.lane.b32.xlu0 %v2467, 64
      %v2491 = vpop.permute.xlu0 %2490
      %2492 = vrot.lane.b32.xlu0 %v2469, 64
      %v2493 = vpop.permute.xlu0 %2492
      %2494 = vrot.lane.b32.xlu0 %v2471, 64
      %v2495 = vpop.permute.xlu0 %2494
      %2496 = vrot.lane.b32.xlu0 %v2473, 64
      %v2497 = vpop.permute.xlu0 %2496
      %v2506 = vsel %vm523, %v2483, 0.0
      %2507 = vadd.xlane.f32.xlu0 %v2506
      %v2508 = vpop.xlane.xlu0 %2507
      %v2509 = vsel %vm523, %v2485, 0.0
      %2510 = vadd.xlane.f32.xlu0 %v2509
      %v2511 = vpop.xlane.xlu0 %2510
      %v2512 = vsel %vm523, %v2487, 0.0
      %2513 = vadd.xlane.f32.xlu0 %v2512
      %v2514 = vpop.xlane.xlu0 %2513
      %v2515 = vsel %vm523, %v2489, 0.0
      %2516 = vadd.xlane.f32.xlu0 %v2515
      %v2517 = vpop.xlane.xlu0 %2516
      %v2518 = vsel %vm523, %v2491, 0.0
      %2519 = vadd.xlane.f32.xlu0 %v2518
      %v2520 = vpop.xlane.xlu0 %2519
      %v2521 = vsel %vm523, %v2493, 0.0
      %2522 = vadd.xlane.f32.xlu0 %v2521
      %v2523 = vpop.xlane.xlu0 %2522
      %v2524 = vsel %vm523, %v2495, 0.0
      %2525 = vadd.xlane.f32.xlu0 %v2524
      %v2526 = vpop.xlane.xlu0 %2525
      %v2527 = vsel %vm523, %v2497, 0.0
      %2528 = vadd.xlane.f32.xlu0 %v2527
      %v2529 = vpop.xlane.xlu0 %2528
      %v2530 = vrcp.pop %v2508
      %v2531 = vrcp.pop %v2511
      %v2532 = vrcp.pop %v2514
      %v2533 = vrcp.pop %v2517
      %v2534 = vrcp.pop %v2520
      %v2535 = vrcp.pop %v2523
      %v2536 = vrcp.pop %v2526
      %v2537 = vrcp.pop %v2529
      %v2538 = vmul.f32 %v2459, %v2530
      %v2539 = vmul.f32 %v2461, %v2531
      %v2540 = vmul.f32 %v2463, %v2532
      %v2541 = vmul.f32 %v2465, %v2533
      %v2542 = vmul.f32 %v2467, %v2534
      %v2543 = vmul.f32 %v2469, %v2535
      %v2544 = vmul.f32 %v2471, %v2536
      %v2545 = vmul.f32 %v2473, %v2537
      %v2546 = vpack.c.bf16 %v2538, %v2538
      %v2547 = vpack.c.bf16 %v2539, %v2539
      %v2548 = vpack.c.bf16 %v2540, %v2540
      %v2549 = vpack.c.bf16 %v2541, %v2541
      %v2550 = vpack.c.bf16 %v2542, %v2542
      %v2551 = vpack.c.bf16 %v2543, %v2543
      %v2552 = vpack.c.bf16 %v2544, %v2544
      %v2553 = vpack.c.bf16 %v2545, %v2545
      %2554 = vst.msk [vmem:[#allocation4] sm:$0xf] %vm758, %v2546
      %2555 = vst.msk [vmem:[#allocation4 + $0x4] sm:$0xf] %vm758, %v2547
      %2556 = vst.msk [vmem:[#allocation4 + $0x8] sm:$0xf] %vm758, %v2548
      %2557 = vst.msk [vmem:[#allocation4 + $0xc] sm:$0xf] %vm758, %v2549
      %2558 = vst.msk [vmem:[#allocation4 + $0x10] sm:$0xf] %vm758, %v2550
      %2559 = vst.msk [vmem:[#allocation4 + $0x14] sm:$0xf] %vm758, %v2551
      %2560 = vst.msk [vmem:[#allocation4 + $0x18] sm:$0xf] %vm758, %v2552
      %2561 = vst.msk [vmem:[#allocation4 + $0x1c] sm:$0xf] %vm758, %v2553
      %v2562 = vld [vmem:[#allocation4] sm:$0xf]
      %v2563 = vld [vmem:[#allocation4 + $0x4] sm:$0xf]
      %v2564 = vld [vmem:[#allocation4 + $0x8] sm:$0xf]
      %v2565 = vld [vmem:[#allocation4 + $0xc] sm:$0xf]
      %v2566 = vld [vmem:[#allocation4 + $0x10] sm:$0xf]
      %v2567 = vld [vmem:[#allocation4 + $0x14] sm:$0xf]
      %v2568 = vld [vmem:[#allocation4 + $0x18] sm:$0xf]
      %v2569 = vld [vmem:[#allocation4 + $0x1c] sm:$0xf]
      %v2570 = vld [vmem:[#allocation3] sm:$0xf]
      %v2571 = vld [vmem:[#allocation3 + $0x4] sm:$0xf]
      %v2572 = vld [vmem:[#allocation3 + $0x8] sm:$0xf]
      %v2573 = vld [vmem:[#allocation3 + $0xc] sm:$0xf]
      %v2574 = vld [vmem:[#allocation3 + $0x10] sm:$0xf]
      %v2575 = vld [vmem:[#allocation3 + $0x14] sm:$0xf]
      %v2576 = vld [vmem:[#allocation3 + $0x18] sm:$0xf]
      %v2577 = vld [vmem:[#allocation3 + $0x1c] sm:$0xf]
      %v2578 = vld [vmem:[#allocation3 + $0x20] sm:$0xf]
      %v2579 = vld [vmem:[#allocation3 + $0x24] sm:$0xf]
      %v2580 = vld [vmem:[#allocation3 + $0x28] sm:$0xf]
      %v2581 = vld [vmem:[#allocation3 + $0x2c] sm:$0xf]
      %v2582 = vld [vmem:[#allocation3 + $0x30] sm:$0xf]
      %v2583 = vld [vmem:[#allocation3 + $0x34] sm:$0xf]
      %v2584 = vld [vmem:[#allocation3 + $0x38] sm:$0xf]
      %v2585 = vld [vmem:[#allocation3 + $0x3c] sm:$0xf]
      %s2586 = scalar_lea.vmem %s272, 96
      %v2587 = vld [vmem:[%s2586] sm:$0xf]
      %v2588 = vld [vmem:[%s2586 + $0x4] sm:$0xf]
      %v2589 = vld [vmem:[%s2586 + $0x8] sm:$0xf]
      %v2590 = vld [vmem:[%s2586 + $0xc] sm:$0xf]
      %v2591 = vld [vmem:[%s2586 + $0x10] sm:$0xf]
      %v2592 = vld [vmem:[%s2586 + $0x14] sm:$0xf]
      %v2593 = vld [vmem:[%s2586 + $0x18] sm:$0xf]
      %v2594 = vld [vmem:[%s2586 + $0x1c] sm:$0xf]
      %v2595 = vunpack.c.l.bf16 %v2587
      %v2596 = vunpack.c.l.bf16 %v2588
      %v2597 = vunpack.c.l.bf16 %v2589
      %v2598 = vunpack.c.l.bf16 %v2590
      %v2599 = vunpack.c.l.bf16 %v2591
      %v2600 = vunpack.c.l.bf16 %v2592
      %v2601 = vunpack.c.l.bf16 %v2593
      %v2602 = vunpack.c.l.bf16 %v2594
      %v2611 = vunpack.c.l.b16 %v2562
      %v2612 = vunpack.c.l.b16 %v2563
      %v2613 = vunpack.c.l.b16 %v2564
      %v2614 = vunpack.c.l.b16 %v2565
      %v2615 = vunpack.c.l.b16 %v2566
      %v2616 = vunpack.c.l.b16 %v2567
      %v2617 = vunpack.c.l.b16 %v2568
      %v2618 = vunpack.c.l.b16 %v2569
      %v2619 = vpack.c.b16 %v2612, %v2611
      %v2620 = vpack.c.b16 %v2614, %v2613
      %v2621 = vpack.c.b16 %v2616, %v2615
      %v2622 = vpack.c.b16 %v2618, %v2617
      %v2643 = vunpack.c.l.b16 %v2570
      %v2644 = vunpack.c.l.b16 %v2571
      %v2645 = vunpack.c.l.b16 %v2572
      %v2646 = vunpack.c.l.b16 %v2573
      %v2647 = vunpack.c.l.b16 %v2574
      %v2648 = vunpack.c.l.b16 %v2575
      %v2649 = vunpack.c.l.b16 %v2576
      %v2650 = vunpack.c.l.b16 %v2577
      %v2651 = vunpack.c.l.b16 %v2578
      %v2652 = vunpack.c.l.b16 %v2579
      %v2653 = vunpack.c.l.b16 %v2580
      %v2654 = vunpack.c.l.b16 %v2581
      %v2655 = vunpack.c.l.b16 %v2582
      %v2656 = vunpack.c.l.b16 %v2583
      %v2657 = vunpack.c.l.b16 %v2584
      %v2658 = vunpack.c.l.b16 %v2585
      %v2659 = vpack.c.b16 %v2644, %v2643
      %v2660 = vpack.c.b16 %v2646, %v2645
      %v2661 = vpack.c.b16 %v2648, %v2647
      %v2662 = vpack.c.b16 %v2650, %v2649
      %v2663 = vpack.c.b16 %v2652, %v2651
      %v2664 = vpack.c.b16 %v2654, %v2653
      %v2665 = vpack.c.b16 %v2656, %v2655
      %v2666 = vpack.c.b16 %v2658, %v2657
      %2675 = vmatpush.bf16.msra.mxu0 %v2666
      %2676 = vmatpush.bf16.msra.mxu0 %v2665
      %2677 = vmatpush.bf16.msra.mxu0 %v2664
      %2678 = vmatpush.bf16.msra.mxu0 %v2663
      %2679 = vmatpush.bf16.msra.mxu0 %v2662
      %2680 = vmatpush.bf16.msra.mxu0 %v2661
      %2681 = vmatpush.bf16.msra.mxu0 %v2660
      %2682 = vmatpush.bf16.msra.mxu0 %v2659
      %2683 = vmatmul.bf16.gmra.mxu0 %v2619
      %v2684 = vpop.f32.mrf.mxu0
      %v2685 = vadd.f32 %v2595, %v2684
      %v2686 = vpop.f32.mrf.mxu0
      %v2687 = vadd.f32 %v2596, %v2686
      %2688 = vmatmul.bf16.gmra.mxu0 %v2620
      %v2689 = vpop.f32.mrf.mxu0
      %v2690 = vadd.f32 %v2597, %v2689
      %v2691 = vpop.f32.mrf.mxu0
      %v2692 = vadd.f32 %v2598, %v2691
      %2693 = vmatmul.bf16.gmra.mxu0 %v2621
      %v2694 = vpop.f32.mrf.mxu0
      %v2695 = vadd.f32 %v2599, %v2694
      %v2696 = vpop.f32.mrf.mxu0
      %v2697 = vadd.f32 %v2600, %v2696
      %2698 = vmatmul.bf16.gmra.mxu0 %v2622
      %v2699 = vpop.f32.mrf.mxu0
      %v2700 = vadd.f32 %v2601, %v2699
      %v2701 = vpop.f32.mrf.mxu0
      %v2702 = vadd.f32 %v2602, %v2701
      %2703 = vdwg.mxu0
      %s2704 = scalar_lea.vmem %s279, 192
      %2705 = vst.msk [vmem:[%s2704] sm:$0xff] %vm449, %v2685
      %2706 = vst.msk [vmem:[%s2704 + $0x8] sm:$0xff] %vm449, %v2687
      %2707 = vst.msk [vmem:[%s2704 + $0x10] sm:$0xff] %vm449, %v2690
      %2708 = vst.msk [vmem:[%s2704 + $0x18] sm:$0xff] %vm449, %v2692
      %2709 = vst.msk [vmem:[%s2704 + $0x20] sm:$0xff] %vm449, %v2695
      %2710 = vst.msk [vmem:[%s2704 + $0x28] sm:$0xff] %vm449, %v2697
      %2711 = vst.msk [vmem:[%s2704 + $0x30] sm:$0xff] %vm449, %v2700
      %2712 = vst.msk [vmem:[%s2704 + $0x38] sm:$0xff] %vm449, %v2702
      %s2713 = smul.u32 4, %s15
      %p2714 = scmp.lt.s32.totalorder %s2713, 7
      %s2715 = scalar_select %p2714, %s2713, 7
      %s2716 = smul.addr %s2715, 8
      %s2717 = smul.addr %s2716, 8
      %s2718 = scalar_lea.vmem %s4, %s2717
      // Predicated region
      $region37: #{casa_forward.5} parent=35 // pred_check
        %p2719 = pneg %p137
      $region38: #{casa_forward.5} parent=35 // pred_check_branch
        %2721 = sbr.rel (%p2719) target = $region40
      $region39: #{casa_forward.5} parent=35 // pred_region
        %s2722 = smul.u32 4, %s15
      $region40: #{casa_forward.5} parent=35 // pred_fallthru
        _
    $region36: #{casa_forward.5} parent=5 // pred_fallthru
      _
    %p2723 = scmp.le.s32.totalorder 2, %s10
    // Predicated region
    $region41: #{casa_forward.5} parent=5 // pred_check
      %p2724 = pneg %p2723
    $region42: #{casa_forward.5} parent=5 // pred_check_branch
      %2726 = sbr.rel (%p2724) target = $region44
    $region43: #{casa_forward.5} parent=5 // pred_region
      %s2727 = ssub.s32 %s10, 2
      // Predicated region
      $region45: #{casa_forward.5} parent=43 // pred_check
        %p2728 = pneg %p143
      $region46: #{casa_forward.5} parent=43 // pred_check_branch
        %2730 = sbr.rel (%p2728) target = $region48
      $region47: #{casa_forward.5} parent=43 // pred_region
        %s2731 = smul.u32 4, %s16
        %p2732 = scmp.lt.s32.totalorder %s2731, 7
        %s2733 = scalar_select %p2732, %s2731, 7
        %s2734 = smul.addr %s2733, 8
        %s2735 = smul.addr %s2734, 8
        %s2736 = scalar_lea.vmem %s4, %s2735
      $region48: #{casa_forward.5} parent=43 // pred_fallthru
        _
    $region44: #{casa_forward.5} parent=5 // pred_fallthru
      _
  $region6: #{casa_forward.5} parent=0 // loop_footer
    %s14 = sadd.s32 1, %s10
  $region7: #{casa_forward.5} parent=0 // loop_footer_branch
    %9 = sbr.rel target = $region3
  $region8: #{casa_forward.5} parent=0 // loop_exit
    _

// kernel: casa_forward.4
$region0: #{casa_forward.4}
  #allocation0 [shape = 'u32[]', space=smem, size = 0x4, offset = 0x4, fixed_abs, tag = 'smem constant byte address 0x4 - core index']
  #allocation1 [shape = 'u32[72,128]{1,0:T(1,128)}', space=vmem, size = 0x9000, scoped, tag = 'internal scratch']
  #allocation2 [shape = 'f32[20,160]{1,0:T(8,128)}', space=vmem, size = 0x6000, scoped, tag = 'scratch operand']
  %s0 = inlined_call_operand.vmem [shape: bf16[2,16,128], index: 0, kind: input, shape index: {}, may-alias: {0,1,2}]
  %s1 = inlined_call_operand.vmem [shape: bf16[2,16,128], index: 1, kind: input, shape index: {}, may-alias: {0,1,2}]
  %s2 = inlined_call_operand.vmem [shape: bf16[2,16,128], index: 2, kind: input, shape index: {}, may-alias: {0,1,2}]
  %s3 = inlined_call_operand.vmem [shape: bf16[2,16,128], index: 3, kind: input, shape index: {}, may-alias: {3,4,5}]
  %s4 = inlined_call_operand.vmem [shape: bf16[2,16,128], index: 4, kind: input, shape index: {}, may-alias: {3,4,5}]
  %s5 = inlined_call_operand.vmem [shape: bf16[2,16,128], index: 5, kind: input, shape index: {}, may-alias: {3,4,5}]
  %s6 = inlined_call_operand.vmem [shape: bf16[2,16,128], index: 6, kind: input, shape index: {}, may-alias: {6,7,8}]
  %s7 = inlined_call_operand.vmem [shape: bf16[2,16,128], index: 7, kind: input, shape index: {}, may-alias: {6,7,8}]
  %s8 = inlined_call_operand.vmem [shape: bf16[2,16,128], index: 8, kind: input, shape index: {}, may-alias: {6,7,8}]
  %s9 = inlined_call_operand.vmem [shape: f32[5,5,128], index: 9, kind: input, shape index: {}]
  %s10 = inlined_call_operand.vmem [shape: f32[5,5,128], index: 10, kind: input, shape index: {}]
  %s11 = inlined_call_operand.vmem [shape: f32[5,5,128], index: 11, kind: input, shape index: {}]
  %s12 = inlined_call_operand.vmem [shape: f32[1,128], index: 12, kind: input, shape index: {}]
  %s13 = inlined_call_operand.vmem [shape: f32[1,128], index: 13, kind: input, shape index: {}]
  %s14 = inlined_call_operand.vmem [shape: f32[1,128], index: 14, kind: input, shape index: {}]
  %s15 = inlined_call_operand.vmem [shape: bf16[2,16,128], index: 15, kind: output, shape index: {0}]
  %s16 = inlined_call_operand.vmem [shape: bf16[2,16,128], index: 16, kind: output, shape index: {1}]
  %s17 = inlined_call_operand.vmem [shape: bf16[2,16,128], index: 17, kind: output, shape index: {2}]
  %18 = xla_tuple %s15, %s16, %s17
  %s19 = sld [smem:[#allocation0]]
  $region109: #{casa_forward.4} parent=0
    _
  %s21 = ssub.s32 1, %s19
  %s22 = scalar_select 0, %s21, %s19
  loop: start=0, step=1, limit=4
  $region2: #{casa_forward.4} parent=0 // loop_pre_header
    _
  $region3: #{casa_forward.4} parent=0 // loop_header
    %s24 = sphi 0, %s28
    %p25 = scmp.ge.s32.totalorder %s24, 4
    %s31 = sphi 0, %s43
    %s32 = sphi 0, %s39
    %s33 = sphi 0, %s31
    %s34 = sphi 0, %s32
    %s35 = sphi 0, %s33
    %s36 = sphi 0, %s34
    %s48 = sphi 0, %s50
    %s51 = sphi 0, %s48
    %s52 = sphi 0, %s51
    %s68 = sphi 0, %s52
    %s82 = sphi 0, %s84
    %s85 = sphi 0, %s82
    %s86 = sphi 0, %s85
    %s102 = sphi 0, %s86
    %s116 = sphi 0, %s118
    %s119 = sphi 0, %s116
    %s120 = sphi 0, %s119
    %s136 = sphi 0, %s120
    %s144 = sphi 0, %s146
    %s147 = sphi 0, %s144
    %s148 = sphi 0, %s147
    %s164 = sphi 0, %s148
    %s178 = sphi 0, %s180
    %s181 = sphi 0, %s178
    %s182 = sphi 0, %s181
    %s198 = sphi 0, %s182
    %s212 = sphi 0, %s214
    %s215 = sphi 0, %s212
    %s216 = sphi 0, %s215
    %s232 = sphi 0, %s216
    %s240 = sphi 0, %s242
    %s243 = sphi 0, %s240
    %s244 = sphi 0, %s243
    %s260 = sphi 0, %s244
    %s274 = sphi 0, %s276
    %s277 = sphi 0, %s274
    %s278 = sphi 0, %s277
    %s294 = sphi 0, %s278
    %s308 = sphi 0, %s310
    %s311 = sphi 0, %s308
    %s312 = sphi 0, %s311
    %s328 = sphi 0, %s312
    %s332 = sphi 0, %s332
    %s334 = sphi 0, %s332
    %s335 = sphi 0, %s334
    %s349 = sphi 0, %s335
    %s353 = sphi 0, %s353
    %s355 = sphi 0, %s353
    %s356 = sphi 0, %s355
    %s370 = sphi 0, %s356
    %s374 = sphi 0, %s374
    %s376 = sphi 0, %s374
    %s377 = sphi 0, %s376
    %s391 = sphi 0, %s377
    %s395 = sphi 0, %s395
    %s397 = sphi 0, %s395
    %s398 = sphi 0, %s397
    %s412 = sphi 0, %s398
    %s416 = sphi 0, %s416
    %s418 = sphi 0, %s416
    %s419 = sphi 0, %s418
    %s433 = sphi 0, %s419
    %s437 = sphi 0, %s437
    %s439 = sphi 0, %s437
    %s440 = sphi 0, %s439
    %s454 = sphi 0, %s440
    %s462 = sphi 0, %s464
    %s465 = sphi 0, %s462
    %s466 = sphi 0, %s465
    %s482 = sphi 0, %s466
    %s490 = sphi 0, %s492
    %s493 = sphi 0, %s490
    %s494 = sphi 0, %s493
    %s510 = sphi 0, %s494
    %s518 = sphi 0, %s520
    %s521 = sphi 0, %s518
    %s522 = sphi 0, %s521
    %s538 = sphi 0, %s522
  $region4: #{casa_forward.4} parent=0 // loop_header_branch
    %27 = sbr.rel (%p25) target = $region8
  $region5: #{casa_forward.4} parent=0 // loop_body
    %s29 = ssub.s32 %s24, 1
    %s30 = ssub.s32 %s24, 2
    %s37 = sadd.s32 1, %s32
    %p38 = scmp.ge.s32.totalorder %s37, 1
    %s39 = scalar_select %p38, 0, %s37
    %s40 = sadd.s32 1, %s31
    %s41 = scalar_select %p38, %s40, %s31
    %p42 = scmp.ge.s32.totalorder %s41, 2
    %s43 = scalar_select %p42, 0, %s41
    %s44 = ssub.s32 %s31, %s43
    %s45 = ssub.s32 %s32, %s39
    %s46 = sor.u32 %s44, %s45
    %p47 = scmp.eq.s32.totalorder %s46, 0
    %s49 = sadd.s32 %s48, 1
    %s50 = scalar_select %p47, %s48, %s49
    %p53 = pneg %p47
    %p54 = scmp.eq.s32.totalorder %s24, 1
    %p55 = por %p53, %p54
    %p56 = scmp.ne.s32.totalorder %s48, %s51
    %p57 = scmp.eq.s32.totalorder %s24, 0
    %p58 = por %p56, %p57
    %p59 = scmp.ne.s32.totalorder %s48, %s51
    %p60 = scmp.eq.s32.totalorder %s29, 1
    %p61 = por %p59, %p60
    %p62 = scmp.ne.s32.totalorder %s51, %s52
    %p63 = scmp.eq.s32.totalorder %s29, 0
    %p64 = por %p62, %p63
    %p65 = scmp.ne.s32.totalorder %s51, %s52
    %p66 = scmp.eq.s32.totalorder %s30, 1
    %p67 = por %p65, %p66
    %p69 = scmp.ne.s32.totalorder %s52, %s68
    %p70 = scmp.eq.s32.totalorder %s30, 0
    %p71 = por %p69, %p70
    %s72 = ssub.s32 %s32, 1
    %p73 = scmp.gt.s32.totalorder %s72, 0
    %s74 = scalar_select %p73, %s72, 0
    %s75 = ssub.s32 %s39, 1
    %p76 = scmp.gt.s32.totalorder %s75, 0
    %s77 = scalar_select %p76, %s75, 0
    %s78 = ssub.s32 %s31, %s43
    %s79 = ssub.s32 %s74, %s77
    %s80 = sor.u32 %s78, %s79
    %p81 = scmp.eq.s32.totalorder %s80, 0
    %s83 = sadd.s32 %s82, 1
    %s84 = scalar_select %p81, %s82, %s83
    %p87 = pneg %p81
    %p88 = scmp.eq.s32.totalorder %s24, 1
    %p89 = por %p87, %p88
    %p90 = scmp.ne.s32.totalorder %s82, %s85
    %p91 = scmp.eq.s32.totalorder %s24, 0
    %p92 = por %p90, %p91
    %p93 = scmp.ne.s32.totalorder %s82, %s85
    %p94 = scmp.eq.s32.totalorder %s29, 1
    %p95 = por %p93, %p94
    %p96 = scmp.ne.s32.totalorder %s85, %s86
    %p97 = scmp.eq.s32.totalorder %s29, 0
    %p98 = por %p96, %p97
    %p99 = scmp.ne.s32.totalorder %s85, %s86
    %p100 = scmp.eq.s32.totalorder %s30, 1
    %p101 = por %p99, %p100
    %p103 = scmp.ne.s32.totalorder %s86, %s102
    %p104 = scmp.eq.s32.totalorder %s30, 0
    %p105 = por %p103, %p104
    %s106 = sadd.s32 %s32, 1
    %p107 = scmp.lt.s32.totalorder %s106, 0
    %s108 = scalar_select %p107, %s106, 0
    %s109 = sadd.s32 %s39, 1
    %p110 = scmp.lt.s32.totalorder %s109, 0
    %s111 = scalar_select %p110, %s109, 0
    %s112 = ssub.s32 %s31, %s43
    %s113 = ssub.s32 %s108, %s111
    %s114 = sor.u32 %s112, %s113
    %p115 = scmp.eq.s32.totalorder %s114, 0
    %s117 = sadd.s32 %s116, 1
    %s118 = scalar_select %p115, %s116, %s117
    %p121 = pneg %p115
    %p122 = scmp.eq.s32.totalorder %s24, 1
    %p123 = por %p121, %p122
    %p124 = scmp.ne.s32.totalorder %s116, %s119
    %p125 = scmp.eq.s32.totalorder %s24, 0
    %p126 = por %p124, %p125
    %p127 = scmp.ne.s32.totalorder %s116, %s119
    %p128 = scmp.eq.s32.totalorder %s29, 1
    %p129 = por %p127, %p128
    %p130 = scmp.ne.s32.totalorder %s119, %s120
    %p131 = scmp.eq.s32.totalorder %s29, 0
    %p132 = por %p130, %p131
    %p133 = scmp.ne.s32.totalorder %s119, %s120
    %p134 = scmp.eq.s32.totalorder %s30, 1
    %p135 = por %p133, %p134
    %p137 = scmp.ne.s32.totalorder %s120, %s136
    %p138 = scmp.eq.s32.totalorder %s30, 0
    %p139 = por %p137, %p138
    %s140 = ssub.s32 %s31, %s43
    %s141 = ssub.s32 %s32, %s39
    %s142 = sor.u32 %s140, %s141
    %p143 = scmp.eq.s32.totalorder %s142, 0
    %s145 = sadd.s32 %s144, 1
    %s146 = scalar_select %p143, %s144, %s145
    %p149 = pneg %p143
    %p150 = scmp.eq.s32.totalorder %s24, 1
    %p151 = por %p149, %p150
    %p152 = scmp.ne.s32.totalorder %s144, %s147
    %p153 = scmp.eq.s32.totalorder %s24, 0
    %p154 = por %p152, %p153
    %p155 = scmp.ne.s32.totalorder %s144, %s147
    %p156 = scmp.eq.s32.totalorder %s29, 1
    %p157 = por %p155, %p156
    %p158 = scmp.ne.s32.totalorder %s147, %s148
    %p159 = scmp.eq.s32.totalorder %s29, 0
    %p160 = por %p158, %p159
    %p161 = scmp.ne.s32.totalorder %s147, %s148
    %p162 = scmp.eq.s32.totalorder %s30, 1
    %p163 = por %p161, %p162
    %p165 = scmp.ne.s32.totalorder %s148, %s164
    %p166 = scmp.eq.s32.totalorder %s30, 0
    %p167 = por %p165, %p166
    %s168 = ssub.s32 %s32, 1
    %p169 = scmp.gt.s32.totalorder %s168, 0
    %s170 = scalar_select %p169, %s168, 0
    %s171 = ssub.s32 %s39, 1
    %p172 = scmp.gt.s32.totalorder %s171, 0
    %s173 = scalar_select %p172, %s171, 0
    %s174 = ssub.s32 %s31, %s43
    %s175 = ssub.s32 %s170, %s173
    %s176 = sor.u32 %s174, %s175
    %p177 = scmp.eq.s32.totalorder %s176, 0
    %s179 = sadd.s32 %s178, 1
    %s180 = scalar_select %p177, %s178, %s179
    %p183 = pneg %p177
    %p184 = scmp.eq.s32.totalorder %s24, 1
    %p185 = por %p183, %p184
    %p186 = scmp.ne.s32.totalorder %s178, %s181
    %p187 = scmp.eq.s32.totalorder %s24, 0
    %p188 = por %p186, %p187
    %p189 = scmp.ne.s32.totalorder %s178, %s181
    %p190 = scmp.eq.s32.totalorder %s29, 1
    %p191 = por %p189, %p190
    %p192 = scmp.ne.s32.totalorder %s181, %s182
    %p193 = scmp.eq.s32.totalorder %s29, 0
    %p194 = por %p192, %p193
    %p195 = scmp.ne.s32.totalorder %s181, %s182
    %p196 = scmp.eq.s32.totalorder %s30, 1
    %p197 = por %p195, %p196
    %p199 = scmp.ne.s32.totalorder %s182, %s198
    %p200 = scmp.eq.s32.totalorder %s30, 0
    %p201 = por %p199, %p200
    %s202 = sadd.s32 %s32, 1
    %p203 = scmp.lt.s32.totalorder %s202, 0
    %s204 = scalar_select %p203, %s202, 0
    %s205 = sadd.s32 %s39, 1
    %p206 = scmp.lt.s32.totalorder %s205, 0
    %s207 = scalar_select %p206, %s205, 0
    %s208 = ssub.s32 %s31, %s43
    %s209 = ssub.s32 %s204, %s207
    %s210 = sor.u32 %s208, %s209
    %p211 = scmp.eq.s32.totalorder %s210, 0
    %s213 = sadd.s32 %s212, 1
    %s214 = scalar_select %p211, %s212, %s213
    %p217 = pneg %p211
    %p218 = scmp.eq.s32.totalorder %s24, 1
    %p219 = por %p217, %p218
    %p220 = scmp.ne.s32.totalorder %s212, %s215
    %p221 = scmp.eq.s32.totalorder %s24, 0
    %p222 = por %p220, %p221
    %p223 = scmp.ne.s32.totalorder %s212, %s215
    %p224 = scmp.eq.s32.totalorder %s29, 1
    %p225 = por %p223, %p224
    %p226 = scmp.ne.s32.totalorder %s215, %s216
    %p227 = scmp.eq.s32.totalorder %s29, 0
    %p228 = por %p226, %p227
    %p229 = scmp.ne.s32.totalorder %s215, %s216
    %p230 = scmp.eq.s32.totalorder %s30, 1
    %p231 = por %p229, %p230
    %p233 = scmp.ne.s32.totalorder %s216, %s232
    %p234 = scmp.eq.s32.totalorder %s30, 0
    %p235 = por %p233, %p234
    %s236 = ssub.s32 %s31, %s43
    %s237 = ssub.s32 %s32, %s39
    %s238 = sor.u32 %s236, %s237
    %p239 = scmp.eq.s32.totalorder %s238, 0
    %s241 = sadd.s32 %s240, 1
    %s242 = scalar_select %p239, %s240, %s241
    %p245 = pneg %p239
    %p246 = scmp.eq.s32.totalorder %s24, 1
    %p247 = por %p245, %p246
    %p248 = scmp.ne.s32.totalorder %s240, %s243
    %p249 = scmp.eq.s32.totalorder %s24, 0
    %p250 = por %p248, %p249
    %p251 = scmp.ne.s32.totalorder %s240, %s243
    %p252 = scmp.eq.s32.totalorder %s29, 1
    %p253 = por %p251, %p252
    %p254 = scmp.ne.s32.totalorder %s243, %s244
    %p255 = scmp.eq.s32.totalorder %s29, 0
    %p256 = por %p254, %p255
    %p257 = scmp.ne.s32.totalorder %s243, %s244
    %p258 = scmp.eq.s32.totalorder %s30, 1
    %p259 = por %p257, %p258
    %p261 = scmp.ne.s32.totalorder %s244, %s260
    %p262 = scmp.eq.s32.totalorder %s30, 0
    %p263 = por %p261, %p262
    %s264 = ssub.s32 %s32, 1
    %p265 = scmp.gt.s32.totalorder %s264, 0
    %s266 = scalar_select %p265, %s264, 0
    %s267 = ssub.s32 %s39, 1
    %p268 = scmp.gt.s32.totalorder %s267, 0
    %s269 = scalar_select %p268, %s267, 0
    %s270 = ssub.s32 %s31, %s43
    %s271 = ssub.s32 %s266, %s269
    %s272 = sor.u32 %s270, %s271
    %p273 = scmp.eq.s32.totalorder %s272, 0
    %s275 = sadd.s32 %s274, 1
    %s276 = scalar_select %p273, %s274, %s275
    %p279 = pneg %p273
    %p280 = scmp.eq.s32.totalorder %s24, 1
    %p281 = por %p279, %p280
    %p282 = scmp.ne.s32.totalorder %s274, %s277
    %p283 = scmp.eq.s32.totalorder %s24, 0
    %p284 = por %p282, %p283
    %p285 = scmp.ne.s32.totalorder %s274, %s277
    %p286 = scmp.eq.s32.totalorder %s29, 1
    %p287 = por %p285, %p286
    %p288 = scmp.ne.s32.totalorder %s277, %s278
    %p289 = scmp.eq.s32.totalorder %s29, 0
    %p290 = por %p288, %p289
    %p291 = scmp.ne.s32.totalorder %s277, %s278
    %p292 = scmp.eq.s32.totalorder %s30, 1
    %p293 = por %p291, %p292
    %p295 = scmp.ne.s32.totalorder %s278, %s294
    %p296 = scmp.eq.s32.totalorder %s30, 0
    %p297 = por %p295, %p296
    %s298 = sadd.s32 %s32, 1
    %p299 = scmp.lt.s32.totalorder %s298, 0
    %s300 = scalar_select %p299, %s298, 0
    %s301 = sadd.s32 %s39, 1
    %p302 = scmp.lt.s32.totalorder %s301, 0
    %s303 = scalar_select %p302, %s301, 0
    %s304 = ssub.s32 %s31, %s43
    %s305 = ssub.s32 %s300, %s303
    %s306 = sor.u32 %s304, %s305
    %p307 = scmp.eq.s32.totalorder %s306, 0
    %s309 = sadd.s32 %s308, 1
    %s310 = scalar_select %p307, %s308, %s309
    %p313 = pneg %p307
    %p314 = scmp.eq.s32.totalorder %s24, 1
    %p315 = por %p313, %p314
    %p316 = scmp.ne.s32.totalorder %s308, %s311
    %p317 = scmp.eq.s32.totalorder %s24, 0
    %p318 = por %p316, %p317
    %p319 = scmp.ne.s32.totalorder %s308, %s311
    %p320 = scmp.eq.s32.totalorder %s29, 1
    %p321 = por %p319, %p320
    %p322 = scmp.ne.s32.totalorder %s311, %s312
    %p323 = scmp.eq.s32.totalorder %s29, 0
    %p324 = por %p322, %p323
    %p325 = scmp.ne.s32.totalorder %s311, %s312
    %p326 = scmp.eq.s32.totalorder %s30, 1
    %p327 = por %p325, %p326
    %p329 = scmp.ne.s32.totalorder %s312, %s328
    %p330 = scmp.eq.s32.totalorder %s30, 0
    %p331 = por %p329, %p330
    %s333 = sadd.s32 %s332, 1
    %p336 = scmp.eq.s32.totalorder %s24, 1
    %p337 = scmp.ne.s32.totalorder %s332, %s334
    %p338 = scmp.eq.s32.totalorder %s24, 0
    %p339 = por %p337, %p338
    %p340 = scmp.ne.s32.totalorder %s332, %s334
    %p341 = scmp.eq.s32.totalorder %s29, 1
    %p342 = por %p340, %p341
    %p343 = scmp.ne.s32.totalorder %s334, %s335
    %p344 = scmp.eq.s32.totalorder %s29, 0
    %p345 = por %p343, %p344
    %p346 = scmp.ne.s32.totalorder %s334, %s335
    %p347 = scmp.eq.s32.totalorder %s30, 1
    %p348 = por %p346, %p347
    %p350 = scmp.ne.s32.totalorder %s335, %s349
    %p351 = scmp.eq.s32.totalorder %s30, 0
    %p352 = por %p350, %p351
    %s354 = sadd.s32 %s353, 1
    %p357 = scmp.eq.s32.totalorder %s24, 1
    %p358 = scmp.ne.s32.totalorder %s353, %s355
    %p359 = scmp.eq.s32.totalorder %s24, 0
    %p360 = por %p358, %p359
    %p361 = scmp.ne.s32.totalorder %s353, %s355
    %p362 = scmp.eq.s32.totalorder %s29, 1
    %p363 = por %p361, %p362
    %p364 = scmp.ne.s32.totalorder %s355, %s356
    %p365 = scmp.eq.s32.totalorder %s29, 0
    %p366 = por %p364, %p365
    %p367 = scmp.ne.s32.totalorder %s355, %s356
    %p368 = scmp.eq.s32.totalorder %s30, 1
    %p369 = por %p367, %p368
    %p371 = scmp.ne.s32.totalorder %s356, %s370
    %p372 = scmp.eq.s32.totalorder %s30, 0
    %p373 = por %p371, %p372
    %s375 = sadd.s32 %s374, 1
    %p378 = scmp.eq.s32.totalorder %s24, 1
    %p379 = scmp.ne.s32.totalorder %s374, %s376
    %p380 = scmp.eq.s32.totalorder %s24, 0
    %p381 = por %p379, %p380
    %p382 = scmp.ne.s32.totalorder %s374, %s376
    %p383 = scmp.eq.s32.totalorder %s29, 1
    %p384 = por %p382, %p383
    %p385 = scmp.ne.s32.totalorder %s376, %s377
    %p386 = scmp.eq.s32.totalorder %s29, 0
    %p387 = por %p385, %p386
    %p388 = scmp.ne.s32.totalorder %s376, %s377
    %p389 = scmp.eq.s32.totalorder %s30, 1
    %p390 = por %p388, %p389
    %p392 = scmp.ne.s32.totalorder %s377, %s391
    %p393 = scmp.eq.s32.totalorder %s30, 0
    %p394 = por %p392, %p393
    %s396 = sadd.s32 %s395, 1
    %p399 = scmp.eq.s32.totalorder %s24, 1
    %p400 = scmp.ne.s32.totalorder %s395, %s397
    %p401 = scmp.eq.s32.totalorder %s24, 0
    %p402 = por %p400, %p401
    %p403 = scmp.ne.s32.totalorder %s395, %s397
    %p404 = scmp.eq.s32.totalorder %s29, 1
    %p405 = por %p403, %p404
    %p406 = scmp.ne.s32.totalorder %s397, %s398
    %p407 = scmp.eq.s32.totalorder %s29, 0
    %p408 = por %p406, %p407
    %p409 = scmp.ne.s32.totalorder %s397, %s398
    %p410 = scmp.eq.s32.totalorder %s30, 1
    %p411 = por %p409, %p410
    %p413 = scmp.ne.s32.totalorder %s398, %s412
    %p414 = scmp.eq.s32.totalorder %s30, 0
    %p415 = por %p413, %p414
    %s417 = sadd.s32 %s416, 1
    %p420 = scmp.eq.s32.totalorder %s24, 1
    %p421 = scmp.ne.s32.totalorder %s416, %s418
    %p422 = scmp.eq.s32.totalorder %s24, 0
    %p423 = por %p421, %p422
    %p424 = scmp.ne.s32.totalorder %s416, %s418
    %p425 = scmp.eq.s32.totalorder %s29, 1
    %p426 = por %p424, %p425
    %p427 = scmp.ne.s32.totalorder %s418, %s419
    %p428 = scmp.eq.s32.totalorder %s29, 0
    %p429 = por %p427, %p428
    %p430 = scmp.ne.s32.totalorder %s418, %s419
    %p431 = scmp.eq.s32.totalorder %s30, 1
    %p432 = por %p430, %p431
    %p434 = scmp.ne.s32.totalorder %s419, %s433
    %p435 = scmp.eq.s32.totalorder %s30, 0
    %p436 = por %p434, %p435
    %s438 = sadd.s32 %s437, 1
    %p441 = scmp.eq.s32.totalorder %s24, 1
    %p442 = scmp.ne.s32.totalorder %s437, %s439
    %p443 = scmp.eq.s32.totalorder %s24, 0
    %p444 = por %p442, %p443
    %p445 = scmp.ne.s32.totalorder %s437, %s439
    %p446 = scmp.eq.s32.totalorder %s29, 1
    %p447 = por %p445, %p446
    %p448 = scmp.ne.s32.totalorder %s439, %s440
    %p449 = scmp.eq.s32.totalorder %s29, 0
    %p450 = por %p448, %p449
    %p451 = scmp.ne.s32.totalorder %s439, %s440
    %p452 = scmp.eq.s32.totalorder %s30, 1
    %p453 = por %p451, %p452
    %p455 = scmp.ne.s32.totalorder %s440, %s454
    %p456 = scmp.eq.s32.totalorder %s30, 0
    %p457 = por %p455, %p456
    %s458 = ssub.s32 %s31, %s43
    %s459 = ssub.s32 %s32, %s39
    %s460 = sor.u32 %s458, %s459
    %p461 = scmp.eq.s32.totalorder %s460, 0
    %s463 = sadd.s32 %s462, 1
    %s464 = scalar_select %p461, %s462, %s463
    %p467 = pneg %p461
    %p468 = scmp.eq.s32.totalorder %s24, 1
    %p469 = por %p467, %p468
    %p470 = scmp.ne.s32.totalorder %s462, %s465
    %p471 = scmp.eq.s32.totalorder %s24, 0
    %p472 = por %p470, %p471
    %p473 = scmp.ne.s32.totalorder %s462, %s465
    %p474 = scmp.eq.s32.totalorder %s29, 1
    %p475 = por %p473, %p474
    %p476 = scmp.ne.s32.totalorder %s465, %s466
    %p477 = scmp.eq.s32.totalorder %s29, 0
    %p478 = por %p476, %p477
    %p479 = scmp.ne.s32.totalorder %s465, %s466
    %p480 = scmp.eq.s32.totalorder %s30, 1
    %p481 = por %p479, %p480
    %p483 = scmp.ne.s32.totalorder %s466, %s482
    %p484 = scmp.eq.s32.totalorder %s30, 0
    %p485 = por %p483, %p484
    %s486 = ssub.s32 %s31, %s43
    %s487 = ssub.s32 %s32, %s39
    %s488 = sor.u32 %s486, %s487
    %p489 = scmp.eq.s32.totalorder %s488, 0
    %s491 = sadd.s32 %s490, 1
    %s492 = scalar_select %p489, %s490, %s491
    %p495 = pneg %p489
    %p496 = scmp.eq.s32.totalorder %s24, 1
    %p497 = por %p495, %p496
    %p498 = scmp.ne.s32.totalorder %s490, %s493
    %p499 = scmp.eq.s32.totalorder %s24, 0
    %p500 = por %p498, %p499
    %p501 = scmp.ne.s32.totalorder %s490, %s493
    %p502 = scmp.eq.s32.totalorder %s29, 1
    %p503 = por %p501, %p502
    %p504 = scmp.ne.s32.totalorder %s493, %s494
    %p505 = scmp.eq.s32.totalorder %s29, 0
    %p506 = por %p504, %p505
    %p507 = scmp.ne.s32.totalorder %s493, %s494
    %p508 = scmp.eq.s32.totalorder %s30, 1
    %p509 = por %p507, %p508
    %p511 = scmp.ne.s32.totalorder %s494, %s510
    %p512 = scmp.eq.s32.totalorder %s30, 0
    %p513 = por %p511, %p512
    %s514 = ssub.s32 %s31, %s43
    %s515 = ssub.s32 %s32, %s39
    %s516 = sor.u32 %s514, %s515
    %p517 = scmp.eq.s32.totalorder %s516, 0
    %s519 = sadd.s32 %s518, 1
    %s520 = scalar_select %p517, %s518, %s519
    %p523 = pneg %p517
    %p524 = scmp.eq.s32.totalorder %s24, 1
    %p525 = por %p523, %p524
    %p526 = scmp.ne.s32.totalorder %s518, %s521
    %p527 = scmp.eq.s32.totalorder %s24, 0
    %p528 = por %p526, %p527
    %p529 = scmp.ne.s32.totalorder %s518, %s521
    %p530 = scmp.eq.s32.totalorder %s29, 1
    %p531 = por %p529, %p530
    %p532 = scmp.ne.s32.totalorder %s521, %s522
    %p533 = scmp.eq.s32.totalorder %s29, 0
    %p534 = por %p532, %p533
    %p535 = scmp.ne.s32.totalorder %s521, %s522
    %p536 = scmp.eq.s32.totalorder %s30, 1
    %p537 = por %p535, %p536
    %p539 = scmp.ne.s32.totalorder %s522, %s538
    %p540 = scmp.eq.s32.totalorder %s30, 0
    %p541 = por %p539, %p540
    %p542 = scmp.le.s32.totalorder 1, %s24
    %p543 = scmp.lt.s32.totalorder %s24, 3
    %p544 = pnand %p542, %p543
    %p545 = pneg %p544
    // Predicated region
    $region9: #{casa_forward.4} parent=5 // pred_check
      _
    $region10: #{casa_forward.4} parent=5 // pred_check_branch
      %547 = sbr.rel (%p544) target = $region12
    $region11: #{casa_forward.4} parent=5 // pred_region
      %s548 = ssub.s32 %s24, 1
      // Predicated region
      $region13: #{casa_forward.4} parent=11 // pred_check
        %p549 = pneg %p345
      $region14: #{casa_forward.4} parent=11 // pred_check_branch
        %551 = sbr.rel (%p549) target = $region16
      $region15: #{casa_forward.4} parent=11 // pred_region
        _
      $region16: #{casa_forward.4} parent=11 // pred_fallthru
        _
      // Predicated region
      $region17: #{casa_forward.4} parent=11 // pred_check
        %p552 = pneg %p366
      $region18: #{casa_forward.4} parent=11 // pred_check_branch
        %554 = sbr.rel (%p552) target = $region20
      $region19: #{casa_forward.4} parent=11 // pred_region
        _
      $region20: #{casa_forward.4} parent=11 // pred_fallthru
        _
      // Predicated region
      $region21: #{casa_forward.4} parent=11 // pred_check
        %p555 = pneg %p387
      $region22: #{casa_forward.4} parent=11 // pred_check_branch
        %557 = sbr.rel (%p555) target = $region24
      $region23: #{casa_forward.4} parent=11 // pred_region
        _
      $region24: #{casa_forward.4} parent=11 // pred_fallthru
        _
      // Predicated region
      $region25: #{casa_forward.4} parent=11 // pred_check
        %p558 = pneg %p408
      $region26: #{casa_forward.4} parent=11 // pred_check_branch
        %560 = sbr.rel (%p558) target = $region28
      $region27: #{casa_forward.4} parent=11 // pred_region
        _
      $region28: #{casa_forward.4} parent=11 // pred_fallthru
        _
      // Predicated region
      $region29: #{casa_forward.4} parent=11 // pred_check
        %p561 = pneg %p429
      $region30: #{casa_forward.4} parent=11 // pred_check_branch
        %563 = sbr.rel (%p561) target = $region32
      $region31: #{casa_forward.4} parent=11 // pred_region
        _
      $region32: #{casa_forward.4} parent=11 // pred_fallthru
        _
      // Predicated region
      $region33: #{casa_forward.4} parent=11 // pred_check
        %p564 = pneg %p450
      $region34: #{casa_forward.4} parent=11 // pred_check_branch
        %566 = sbr.rel (%p564) target = $region36
      $region35: #{casa_forward.4} parent=11 // pred_region
        _
      $region36: #{casa_forward.4} parent=11 // pred_fallthru
        _
    $region12: #{casa_forward.4} parent=5 // pred_fallthru
      _
    %p567 = scmp.lt.s32.totalorder %s24, 2
    // Predicated region
    $region37: #{casa_forward.4} parent=5 // pred_check
      %p568 = pneg %p567
    $region38: #{casa_forward.4} parent=5 // pred_check_branch
      %570 = sbr.rel (%p568) target = $region40
    $region39: #{casa_forward.4} parent=5 // pred_region
      // Predicated region
      $region41: #{casa_forward.4} parent=39 // pred_check
        %p571 = pneg %p58
      $region42: #{casa_forward.4} parent=39 // pred_check_branch
        %573 = sbr.rel (%p571) target = $region44
      $region43: #{casa_forward.4} parent=39 // pred_region
        %s574 = smul.u32 2, %s32
        %p575 = scmp.lt.s32.totalorder %s31, 1
        %s576 = scalar_select %p575, %s31, 1
        %p577 = scmp.lt.s32.totalorder %s574, 1
        %s578 = scalar_select %p577, %s574, 1
        %s579 = smul.addr %s576, 2
        %s580 = sadd.s32 %s578, %s579
        %s581 = smul.addr %s580, 4
        %s582 = scalar_lea.vmem %s0, %s581
        %s583 = smul.u32 2, %s32
      $region44: #{casa_forward.4} parent=39 // pred_fallthru
        _
      // Predicated region
      $region45: #{casa_forward.4} parent=39 // pred_check
        %p584 = pneg %p92
      $region46: #{casa_forward.4} parent=39 // pred_check_branch
        %586 = sbr.rel (%p584) target = $region48
      $region47: #{casa_forward.4} parent=39 // pred_region
        %s587 = ssub.s32 %s32, 1
        %p588 = scmp.gt.s32.totalorder %s587, 0
        %s589 = scalar_select %p588, %s587, 0
        %s590 = smul.u32 2, %s589
        %p591 = scmp.lt.s32.totalorder %s31, 1
        %s592 = scalar_select %p591, %s31, 1
        %p593 = scmp.lt.s32.totalorder %s590, 1
        %s594 = scalar_select %p593, %s590, 1
        %s595 = smul.addr %s592, 2
        %s596 = sadd.s32 %s594, %s595
        %s597 = smul.addr %s596, 4
        %s598 = scalar_lea.vmem %s1, %s597
        %s599 = ssub.s32 %s32, 1
        %p600 = scmp.gt.s32.totalorder %s599, 0
        %s601 = scalar_select %p600, %s599, 0
        %s602 = smul.u32 2, %s601
      $region48: #{casa_forward.4} parent=39 // pred_fallthru
        _
      // Predicated region
      $region49: #{casa_forward.4} parent=39 // pred_check
        %p603 = pneg %p126
      $region50: #{casa_forward.4} parent=39 // pred_check_branch
        %605 = sbr.rel (%p603) target = $region52
      $region51: #{casa_forward.4} parent=39 // pred_region
        %s606 = sadd.s32 %s32, 1
        %p607 = scmp.lt.s32.totalorder %s606, 0
        %s608 = scalar_select %p607, %s606, 0
        %s609 = smul.u32 2, %s608
        %p610 = scmp.lt.s32.totalorder %s31, 1
        %s611 = scalar_select %p610, %s31, 1
        %p612 = scmp.lt.s32.totalorder %s609, 1
        %s613 = scalar_select %p612, %s609, 1
        %s614 = smul.addr %s611, 2
        %s615 = sadd.s32 %s613, %s614
        %s616 = smul.addr %s615, 4
        %s617 = scalar_lea.vmem %s2, %s616
        %s618 = sadd.s32 %s32, 1
        %p619 = scmp.lt.s32.totalorder %s618, 0
        %s620 = scalar_select %p619, %s618, 0
        %s621 = smul.u32 2, %s620
      $region52: #{casa_forward.4} parent=39 // pred_fallthru
        _
      // Predicated region
      $region53: #{casa_forward.4} parent=39 // pred_check
        %p622 = pneg %p154
      $region54: #{casa_forward.4} parent=39 // pred_check_branch
        %624 = sbr.rel (%p622) target = $region56
      $region55: #{casa_forward.4} parent=39 // pred_region
        %s625 = smul.u32 2, %s32
        %p626 = scmp.lt.s32.totalorder %s31, 1
        %s627 = scalar_select %p626, %s31, 1
        %p628 = scmp.lt.s32.totalorder %s625, 1
        %s629 = scalar_select %p628, %s625, 1
        %s630 = smul.addr %s627, 2
        %s631 = sadd.s32 %s629, %s630
        %s632 = smul.addr %s631, 4
        %s633 = scalar_lea.vmem %s3, %s632
        %s634 = smul.u32 2, %s32
      $region56: #{casa_forward.4} parent=39 // pred_fallthru
        _
      // Predicated region
      $region57: #{casa_forward.4} parent=39 // pred_check
        %p635 = pneg %p188
      $region58: #{casa_forward.4} parent=39 // pred_check_branch
        %637 = sbr.rel (%p635) target = $region60
      $region59: #{casa_forward.4} parent=39 // pred_region
        %s638 = ssub.s32 %s32, 1
        %p639 = scmp.gt.s32.totalorder %s638, 0
        %s640 = scalar_select %p639, %s638, 0
        %s641 = smul.u32 2, %s640
        %p642 = scmp.lt.s32.totalorder %s31, 1
        %s643 = scalar_select %p642, %s31, 1
        %p644 = scmp.lt.s32.totalorder %s641, 1
        %s645 = scalar_select %p644, %s641, 1
        %s646 = smul.addr %s643, 2
        %s647 = sadd.s32 %s645, %s646
        %s648 = smul.addr %s647, 4
        %s649 = scalar_lea.vmem %s4, %s648
        %s650 = ssub.s32 %s32, 1
        %p651 = scmp.gt.s32.totalorder %s650, 0
        %s652 = scalar_select %p651, %s650, 0
        %s653 = smul.u32 2, %s652
      $region60: #{casa_forward.4} parent=39 // pred_fallthru
        _
      // Predicated region
      $region61: #{casa_forward.4} parent=39 // pred_check
        %p654 = pneg %p222
      $region62: #{casa_forward.4} parent=39 // pred_check_branch
        %656 = sbr.rel (%p654) target = $region64
      $region63: #{casa_forward.4} parent=39 // pred_region
        %s657 = sadd.s32 %s32, 1
        %p658 = scmp.lt.s32.totalorder %s657, 0
        %s659 = scalar_select %p658, %s657, 0
        %s660 = smul.u32 2, %s659
        %p661 = scmp.lt.s32.totalorder %s31, 1
        %s662 = scalar_select %p661, %s31, 1
        %p663 = scmp.lt.s32.totalorder %s660, 1
        %s664 = scalar_select %p663, %s660, 1
        %s665 = smul.addr %s662, 2
        %s666 = sadd.s32 %s664, %s665
        %s667 = smul.addr %s666, 4
        %s668 = scalar_lea.vmem %s5, %s667
        %s669 = sadd.s32 %s32, 1
        %p670 = scmp.lt.s32.totalorder %s669, 0
        %s671 = scalar_select %p670, %s669, 0
        %s672 = smul.u32 2, %s671
      $region64: #{casa_forward.4} parent=39 // pred_fallthru
        _
      // Predicated region
      $region65: #{casa_forward.4} parent=39 // pred_check
        %p673 = pneg %p250
      $region66: #{casa_forward.4} parent=39 // pred_check_branch
        %675 = sbr.rel (%p673) target = $region68
      $region67: #{casa_forward.4} parent=39 // pred_region
        %s676 = smul.u32 2, %s32
        %p677 = scmp.lt.s32.totalorder %s31, 1
        %s678 = scalar_select %p677, %s31, 1
        %p679 = scmp.lt.s32.totalorder %s676, 1
        %s680 = scalar_select %p679, %s676, 1
        %s681 = smul.addr %s678, 2
        %s682 = sadd.s32 %s680, %s681
        %s683 = smul.addr %s682, 4
        %s684 = scalar_lea.vmem %s6, %s683
        %s685 = smul.u32 2, %s32
      $region68: #{casa_forward.4} parent=39 // pred_fallthru
        _
      // Predicated region
      $region69: #{casa_forward.4} parent=39 // pred_check
        %p686 = pneg %p284
      $region70: #{casa_forward.4} parent=39 // pred_check_branch
        %688 = sbr.rel (%p686) target = $region72
      $region71: #{casa_forward.4} parent=39 // pred_region
        %s689 = ssub.s32 %s32, 1
        %p690 = scmp.gt.s32.totalorder %s689, 0
        %s691 = scalar_select %p690, %s689, 0
        %s692 = smul.u32 2, %s691
        %p693 = scmp.lt.s32.totalorder %s31, 1
        %s694 = scalar_select %p693, %s31, 1
        %p695 = scmp.lt.s32.totalorder %s692, 1
        %s696 = scalar_select %p695, %s692, 1
        %s697 = smul.addr %s694, 2
        %s698 = sadd.s32 %s696, %s697
        %s699 = smul.addr %s698, 4
        %s700 = scalar_lea.vmem %s7, %s699
        %s701 = ssub.s32 %s32, 1
        %p702 = scmp.gt.s32.totalorder %s701, 0
        %s703 = scalar_select %p702, %s701, 0
        %s704 = smul.u32 2, %s703
      $region72: #{casa_forward.4} parent=39 // pred_fallthru
        _
      // Predicated region
      $region73: #{casa_forward.4} parent=39 // pred_check
        %p705 = pneg %p318
      $region74: #{casa_forward.4} parent=39 // pred_check_branch
        %707 = sbr.rel (%p705) target = $region76
      $region75: #{casa_forward.4} parent=39 // pred_region
        %s708 = sadd.s32 %s32, 1
        %p709 = scmp.lt.s32.totalorder %s708, 0
        %s710 = scalar_select %p709, %s708, 0
        %s711 = smul.u32 2, %s710
        %p712 = scmp.lt.s32.totalorder %s31, 1
        %s713 = scalar_select %p712, %s31, 1
        %p714 = scmp.lt.s32.totalorder %s711, 1
        %s715 = scalar_select %p714, %s711, 1
        %s716 = smul.addr %s713, 2
        %s717 = sadd.s32 %s715, %s716
        %s718 = smul.addr %s717, 4
        %s719 = scalar_lea.vmem %s8, %s718
        %s720 = sadd.s32 %s32, 1
        %p721 = scmp.lt.s32.totalorder %s720, 0
        %s722 = scalar_select %p721, %s720, 0
        %s723 = smul.u32 2, %s722
      $region76: #{casa_forward.4} parent=39 // pred_fallthru
        _
    $region40: #{casa_forward.4} parent=5 // pred_fallthru
      _
    %p724 = scmp.le.s32.totalorder 1, %s24
    %p725 = scmp.lt.s32.totalorder %s24, 3
    %p726 = pnand %p724, %p725
    %p727 = pneg %p726
    // Predicated region
    $region77: #{casa_forward.4} parent=5 // pred_check
      _
    $region78: #{casa_forward.4} parent=5 // pred_check_branch
      %729 = sbr.rel (%p726) target = $region80
    $region79: #{casa_forward.4} parent=5 // pred_region
      %s730 = ssub.s32 %s24, 1
      %s731 = smul.u32 2, %s34
      %p732 = scmp.lt.s32.totalorder %s33, 1
      %s733 = scalar_select %p732, %s33, 1
      %p734 = scmp.lt.s32.totalorder %s731, 1
      %s735 = scalar_select %p734, %s731, 1
      %s736 = smul.addr %s733, 2
      %s737 = sadd.s32 %s735, %s736
      %s738 = smul.addr %s737, 4
      %s739 = scalar_lea.vmem %s0, %s738
      %p740 = pneg %p64
      %p741 = pneg %p61
      %s742 = ssub.s32 %s34, 1
      %p743 = scmp.gt.s32.totalorder %s742, 0
      %s744 = scalar_select %p743, %s742, 0
      %s745 = smul.u32 2, %s744
      %p746 = scmp.lt.s32.totalorder %s33, 1
      %s747 = scalar_select %p746, %s33, 1
      %p748 = scmp.lt.s32.totalorder %s745, 1
      %s749 = scalar_select %p748, %s745, 1
      %s750 = smul.addr %s747, 2
      %s751 = sadd.s32 %s749, %s750
      %s752 = smul.addr %s751, 4
      %s753 = scalar_lea.vmem %s1, %s752
      %p754 = pneg %p98
      %p755 = pneg %p95
      %s756 = sadd.s32 %s34, 1
      %p757 = scmp.lt.s32.totalorder %s756, 0
      %s758 = scalar_select %p757, %s756, 0
      %s759 = smul.u32 2, %s758
      %p760 = scmp.lt.s32.totalorder %s33, 1
      %s761 = scalar_select %p760, %s33, 1
      %p762 = scmp.lt.s32.totalorder %s759, 1
      %s763 = scalar_select %p762, %s759, 1
      %s764 = smul.addr %s761, 2
      %s765 = sadd.s32 %s763, %s764
      %s766 = smul.addr %s765, 4
      %s767 = scalar_lea.vmem %s2, %s766
      %p768 = pneg %p132
      %p769 = pneg %p129
      %s770 = smul.u32 2, %s34
      %p771 = scmp.lt.s32.totalorder %s33, 1
      %s772 = scalar_select %p771, %s33, 1
      %p773 = scmp.lt.s32.totalorder %s770, 1
      %s774 = scalar_select %p773, %s770, 1
      %s775 = smul.addr %s772, 2
      %s776 = sadd.s32 %s774, %s775
      %s777 = smul.addr %s776, 4
      %s778 = scalar_lea.vmem %s3, %s777
      %p779 = pneg %p160
      %p780 = pneg %p157
      %s781 = ssub.s32 %s34, 1
      %p782 = scmp.gt.s32.totalorder %s781, 0
      %s783 = scalar_select %p782, %s781, 0
      %s784 = smul.u32 2, %s783
      %p785 = scmp.lt.s32.totalorder %s33, 1
      %s786 = scalar_select %p785, %s33, 1
      %p787 = scmp.lt.s32.totalorder %s784, 1
      %s788 = scalar_select %p787, %s784, 1
      %s789 = smul.addr %s786, 2
      %s790 = sadd.s32 %s788, %s789
      %s791 = smul.addr %s790, 4
      %s792 = scalar_lea.vmem %s4, %s791
      %p793 = pneg %p194
      %p794 = pneg %p191
      %s795 = sadd.s32 %s34, 1
      %p796 = scmp.lt.s32.totalorder %s795, 0
      %s797 = scalar_select %p796, %s795, 0
      %s798 = smul.u32 2, %s797
      %p799 = scmp.lt.s32.totalorder %s33, 1
      %s800 = scalar_select %p799, %s33, 1
      %p801 = scmp.lt.s32.totalorder %s798, 1
      %s802 = scalar_select %p801, %s798, 1
      %s803 = smul.addr %s800, 2
      %s804 = sadd.s32 %s802, %s803
      %s805 = smul.addr %s804, 4
      %s806 = scalar_lea.vmem %s5, %s805
      %p807 = pneg %p228
      %p808 = pneg %p225
      %s809 = smul.u32 2, %s34
      %p810 = scmp.lt.s32.totalorder %s33, 1
      %s811 = scalar_select %p810, %s33, 1
      %p812 = scmp.lt.s32.totalorder %s809, 1
      %s813 = scalar_select %p812, %s809, 1
      %s814 = smul.addr %s811, 2
      %s815 = sadd.s32 %s813, %s814
      %s816 = smul.addr %s815, 4
      %s817 = scalar_lea.vmem %s6, %s816
      %p818 = pneg %p256
      %p819 = pneg %p253
      %s820 = ssub.s32 %s34, 1
      %p821 = scmp.gt.s32.totalorder %s820, 0
      %s822 = scalar_select %p821, %s820, 0
      %s823 = smul.u32 2, %s822
      %p824 = scmp.lt.s32.totalorder %s33, 1
      %s825 = scalar_select %p824, %s33, 1
      %p826 = scmp.lt.s32.totalorder %s823, 1
      %s827 = scalar_select %p826, %s823, 1
      %s828 = smul.addr %s825, 2
      %s829 = sadd.s32 %s827, %s828
      %s830 = smul.addr %s829, 4
      %s831 = scalar_lea.vmem %s7, %s830
      %p832 = pneg %p290
      %p833 = pneg %p287
      %s834 = sadd.s32 %s34, 1
      %p835 = scmp.lt.s32.totalorder %s834, 0
      %s836 = scalar_select %p835, %s834, 0
      %s837 = smul.u32 2, %s836
      %p838 = scmp.lt.s32.totalorder %s33, 1
      %s839 = scalar_select %p838, %s33, 1
      %p840 = scmp.lt.s32.totalorder %s837, 1
      %s841 = scalar_select %p840, %s837, 1
      %s842 = smul.addr %s839, 2
      %s843 = sadd.s32 %s841, %s842
      %s844 = smul.addr %s843, 4
      %s845 = scalar_lea.vmem %s8, %s844
      %p846 = pneg %p324
      %p847 = pneg %p321
      %p848 = pneg %p345
      %p849 = pneg %p342
      %p850 = pneg %p366
      %p851 = pneg %p363
      %p852 = pneg %p387
      %p853 = pneg %p384
      %p854 = pneg %p408
      %p855 = pneg %p405
      %p856 = pneg %p429
      %p857 = pneg %p426
      %p858 = pneg %p450
      %p859 = pneg %p447
      %p860 = pneg %p478
      %p861 = pneg %p475
      %s862 = smul.u32 2, %s34
      %p863 = scmp.lt.s32.totalorder %s33, 1
      %s864 = scalar_select %p863, %s33, 1
      %p865 = scmp.lt.s32.totalorder %s862, 1
      %s866 = scalar_select %p865, %s862, 1
      %s867 = smul.addr %s864, 2
      %s868 = sadd.s32 %s866, %s867
      %s869 = smul.addr %s868, 4
      %s870 = scalar_lea.vmem %s15, %s869
      %p871 = pneg %p506
      %p872 = pneg %p503
      %s873 = smul.u32 2, %s34
      %p874 = scmp.lt.s32.totalorder %s33, 1
      %s875 = scalar_select %p874, %s33, 1
      %p876 = scmp.lt.s32.totalorder %s873, 1
      %s877 = scalar_select %p876, %s873, 1
      %s878 = smul.addr %s875, 2
      %s879 = sadd.s32 %s877, %s878
      %s880 = smul.addr %s879, 4
      %s881 = scalar_lea.vmem %s16, %s880
      %p882 = pneg %p534
      %p883 = pneg %p531
      %s884 = smul.u32 2, %s34
      %p885 = scmp.lt.s32.totalorder %s33, 1
      %s886 = scalar_select %p885, %s33, 1
      %p887 = scmp.lt.s32.totalorder %s884, 1
      %s888 = scalar_select %p887, %s884, 1
      %s889 = smul.addr %s886, 2
      %s890 = sadd.s32 %s888, %s889
      %s891 = smul.addr %s890, 4
      %s892 = scalar_lea.vmem %s17, %s891
      %s893 = smul.u32 2, %s34
      %p894 = scmp.lt.s32.totalorder %s33, 1
      %s895 = scalar_select %p894, %s33, 1
      %p896 = scmp.lt.s32.totalorder %s893, 1
      %s897 = scalar_select %p896, %s893, 1
      %s898 = smul.addr %s895, 2
      %s899 = sadd.s32 %s897, %s898
      %s900 = smul.addr %s899, 4
      %s901 = scalar_lea.vmem %s0, %s900
      %s902 = smul.u32 2, %s34
      %s903 = ssub.s32 %s34, 1
      %p904 = scmp.gt.s32.totalorder %s903, 0
      %s905 = scalar_select %p904, %s903, 0
      %s906 = smul.u32 2, %s905
      %p907 = scmp.lt.s32.totalorder %s33, 1
      %s908 = scalar_select %p907, %s33, 1
      %p909 = scmp.lt.s32.totalorder %s906, 1
      %s910 = scalar_select %p909, %s906, 1
      %s911 = smul.addr %s908, 2
      %s912 = sadd.s32 %s910, %s911
      %s913 = smul.addr %s912, 4
      %s914 = scalar_lea.vmem %s1, %s913
      %s915 = ssub.s32 %s34, 1
      %p916 = scmp.gt.s32.totalorder %s915, 0
      %s917 = scalar_select %p916, %s915, 0
      %s918 = smul.u32 2, %s917
      %s919 = sadd.s32 %s34, 1
      %p920 = scmp.lt.s32.totalorder %s919, 0
      %s921 = scalar_select %p920, %s919, 0
      %s922 = smul.u32 2, %s921
      %p923 = scmp.lt.s32.totalorder %s33, 1
      %s924 = scalar_select %p923, %s33, 1
      %p925 = scmp.lt.s32.totalorder %s922, 1
      %s926 = scalar_select %p925, %s922, 1
      %s927 = smul.addr %s924, 2
      %s928 = sadd.s32 %s926, %s927
      %s929 = smul.addr %s928, 4
      %s930 = scalar_lea.vmem %s2, %s929
      %s931 = sadd.s32 %s34, 1
      %p932 = scmp.lt.s32.totalorder %s931, 0
      %s933 = scalar_select %p932, %s931, 0
      %s934 = smul.u32 2, %s933
      %s935 = smul.u32 2, %s34
      %p936 = scmp.lt.s32.totalorder %s33, 1
      %s937 = scalar_select %p936, %s33, 1
      %p938 = scmp.lt.s32.totalorder %s935, 1
      %s939 = scalar_select %p938, %s935, 1
      %s940 = smul.addr %s937, 2
      %s941 = sadd.s32 %s939, %s940
      %s942 = smul.addr %s941, 4
      %s943 = scalar_lea.vmem %s3, %s942
      %s944 = smul.u32 2, %s34
      %s945 = ssub.s32 %s34, 1
      %p946 = scmp.gt.s32.totalorder %s945, 0
      %s947 = scalar_select %p946, %s945, 0
      %s948 = smul.u32 2, %s947
      %p949 = scmp.lt.s32.totalorder %s33, 1
      %s950 = scalar_select %p949, %s33, 1
      %p951 = scmp.lt.s32.totalorder %s948, 1
      %s952 = scalar_select %p951, %s948, 1
      %s953 = smul.addr %s950, 2
      %s954 = sadd.s32 %s952, %s953
      %s955 = smul.addr %s954, 4
      %s956 = scalar_lea.vmem %s4, %s955
      %s957 = ssub.s32 %s34, 1
      %p958 = scmp.gt.s32.totalorder %s957, 0
      %s959 = scalar_select %p958, %s957, 0
      %s960 = smul.u32 2, %s959
      %s961 = sadd.s32 %s34, 1
      %p962 = scmp.lt.s32.totalorder %s961, 0
      %s963 = scalar_select %p962, %s961, 0
      %s964 = smul.u32 2, %s963
      %p965 = scmp.lt.s32.totalorder %s33, 1
      %s966 = scalar_select %p965, %s33, 1
      %p967 = scmp.lt.s32.totalorder %s964, 1
      %s968 = scalar_select %p967, %s964, 1
      %s969 = smul.addr %s966, 2
      %s970 = sadd.s32 %s968, %s969
      %s971 = smul.addr %s970, 4
      %s972 = scalar_lea.vmem %s5, %s971
      %s973 = sadd.s32 %s34, 1
      %p974 = scmp.lt.s32.totalorder %s973, 0
      %s975 = scalar_select %p974, %s973, 0
      %s976 = smul.u32 2, %s975
      %s977 = smul.u32 2, %s34
      %p978 = scmp.lt.s32.totalorder %s33, 1
      %s979 = scalar_select %p978, %s33, 1
      %p980 = scmp.lt.s32.totalorder %s977, 1
      %s981 = scalar_select %p980, %s977, 1
      %s982 = smul.addr %s979, 2
      %s983 = sadd.s32 %s981, %s982
      %s984 = smul.addr %s983, 4
      %s985 = scalar_lea.vmem %s6, %s984
      %s986 = smul.u32 2, %s34
      %s987 = ssub.s32 %s34, 1
      %p988 = scmp.gt.s32.totalorder %s987, 0
      %s989 = scalar_select %p988, %s987, 0
      %s990 = smul.u32 2, %s989
      %p991 = scmp.lt.s32.totalorder %s33, 1
      %s992 = scalar_select %p991, %s33, 1
      %p993 = scmp.lt.s32.totalorder %s990, 1
      %s994 = scalar_select %p993, %s990, 1
      %s995 = smul.addr %s992, 2
      %s996 = sadd.s32 %s994, %s995
      %s997 = smul.addr %s996, 4
      %s998 = scalar_lea.vmem %s7, %s997
      %s999 = ssub.s32 %s34, 1
      %p1000 = scmp.gt.s32.totalorder %s999, 0
      %s1001 = scalar_select %p1000, %s999, 0
      %s1002 = smul.u32 2, %s1001
      %s1003 = sadd.s32 %s34, 1
      %p1004 = scmp.lt.s32.totalorder %s1003, 0
      %s1005 = scalar_select %p1004, %s1003, 0
      %s1006 = smul.u32 2, %s1005
      %p1007 = scmp.lt.s32.totalorder %s33, 1
      %s1008 = scalar_select %p1007, %s33, 1
      %p1009 = scmp.lt.s32.totalorder %s1006, 1
      %s1010 = scalar_select %p1009, %s1006, 1
      %s1011 = smul.addr %s1008, 2
      %s1012 = sadd.s32 %s1010, %s1011
      %s1013 = smul.addr %s1012, 4
      %s1014 = scalar_lea.vmem %s8, %s1013
      %s1015 = sadd.s32 %s34, 1
      %p1016 = scmp.lt.s32.totalorder %s1015, 0
      %s1017 = scalar_select %p1016, %s1015, 0
      %s1018 = smul.u32 2, %s1017
      %s1019 = smul.u32 2, %s34
      %p1020 = scmp.lt.s32.totalorder %s33, 1
      %s1021 = scalar_select %p1020, %s33, 1
      %p1022 = scmp.lt.s32.totalorder %s1019, 1
      %s1023 = scalar_select %p1022, %s1019, 1
      %s1024 = smul.addr %s1021, 2
      %s1025 = sadd.s32 %s1023, %s1024
      %s1026 = smul.addr %s1025, 4
      %s1027 = scalar_lea.vmem %s15, %s1026
      %s1028 = smul.u32 2, %s34
      %s1029 = smul.u32 2, %s34
      %p1030 = scmp.lt.s32.totalorder %s33, 1
      %s1031 = scalar_select %p1030, %s33, 1
      %p1032 = scmp.lt.s32.totalorder %s1029, 1
      %s1033 = scalar_select %p1032, %s1029, 1
      %s1034 = smul.addr %s1031, 2
      %s1035 = sadd.s32 %s1033, %s1034
      %s1036 = smul.addr %s1035, 4
      %s1037 = scalar_lea.vmem %s16, %s1036
      %s1038 = smul.u32 2, %s34
      %s1039 = smul.u32 2, %s34
      %p1040 = scmp.lt.s32.totalorder %s33, 1
      %s1041 = scalar_select %p1040, %s33, 1
      %p1042 = scmp.lt.s32.totalorder %s1039, 1
      %s1043 = scalar_select %p1042, %s1039, 1
      %s1044 = smul.addr %s1041, 2
      %s1045 = sadd.s32 %s1043, %s1044
      %s1046 = smul.addr %s1045, 4
      %s1047 = scalar_lea.vmem %s17, %s1046
      %s1048 = smul.u32 2, %s34
      %vm1049 = vcmask 130048
      %1050 = vst.msk [vmem:[#allocation2] sm:$0xff] %vm1049, 0.0
      %1051 = vst.msk [vmem:[#allocation2 + $0x10] sm:$0xff] %vm1049, 0.0
      %vm1052 = vcmask 125952
      %1053 = vst.msk [vmem:[#allocation2 + $0x20] sm:$0xf] %vm1052, 0.0
      %vm1054 = vcmask 261248
      %1055 = vst.msk [vmem:[#allocation2 + $0x8] sm:$0xff] %vm1054, 0.0
      %1056 = vst.msk [vmem:[#allocation2 + $0x18] sm:$0xff] %vm1054, 0.0
      %vm1057 = vcmask 257152
      %1058 = vst.msk [vmem:[#allocation2 + $0x28] sm:$0xf] %vm1057, 0.0
      %v1059 = vld [vmem:[%s985] sm:$0xf]
      %v1060 = vld [vmem:[%s985 + $0x4] sm:$0xf]
      %v1061 = vunpack.c.l.bf16 %v1059
      %v1062 = vunpack.c.l.bf16 %v1060
      %vm1065 = vcmask 1041408
      %v1066 = vrot.slane %v1061, 6
      %v1067 = vrot.slane %v1062, 6
      %v1068 = vsel %vm1065, %v1066, %v1067
      %1069 = vrot.lane.b32.xlu0 %v1066, 16
      %v1070 = vpop.permute.xlu0 %1069
      %1071 = vrot.lane.b32.xlu0 %v1068, 16
      %v1072 = vpop.permute.xlu0 %1071
      %1073 = vrot.lane.b32.xlu0 %v1067, 16
      %v1074 = vpop.permute.xlu0 %1073
      %vm1078 = vcmask 1047682
      %1079 = vst.msk [vmem:[#allocation2] sm:$0xfc] %vm1078, %v1070
      %vm1080 = vcmask 130050
      %1081 = vst.msk [vmem:[#allocation2 + $0x8] sm:$0xfc] %vm1080, %v1070
      %vm1082 = vcmask 1047680
      %1083 = vst.msk [vmem:[#allocation2 + $0x10] sm:$0xff] %vm1082, %v1072
      %1084 = vst.msk [vmem:[#allocation2 + $0x18] sm:$0xff] %vm1049, %v1072
      %vm1085 = vcmask 1041536
      %1086 = vst.msk [vmem:[#allocation2 + $0x20] sm:$0x3] %vm1085, %v1074
      %vm1087 = vcmask 123904
      %1088 = vst.msk [vmem:[#allocation2 + $0x28] sm:$0x3] %vm1087, %v1074
      %p1089 = scmp.gt.s32.totalorder %s34, 0
      %v1090 = vld [vmem:[%s998 + $0x4] sm:$0x8]
      %v1091 = vunpack.c.l.bf16 %v1090
      %s1092 = scalar_select %p1089, 1, 0
      %v1093 = vstv %s1092
      %vm1094 = vcmp.eq.s32.totalorder %v1093, 1
      %v1095 = vsel %vm1094, %v1091, 0.0
      %v1097 = vrot.slane %v1095, 6
      %1098 = vrot.lane.b32.xlu0 %v1097, 16
      %v1099 = vpop.permute.xlu0 %1098
      %1101 = vst.msk [vmem:[#allocation2] sm:$0x3] %vm1085, %v1099
      %1102 = vst.msk [vmem:[#allocation2 + $0x8] sm:$0x3] %vm1087, %v1099
      %p1103 = scmp.lt.s32.totalorder %s34, 0
      %v1104 = vld [vmem:[%s1014] sm:$0x1]
      %v1105 = vunpack.c.l.bf16 %v1104
      %s1106 = scalar_select %p1103, 1, 0
      %v1107 = vstv %s1106
      %vm1108 = vcmp.eq.s32.totalorder %v1107, 1
      %v1109 = vsel %vm1108, %v1105, 0.0
      %v1111 = vrot.slane %v1109, 6
      %1112 = vrot.lane.b32.xlu0 %v1111, 16
      %v1113 = vpop.permute.xlu0 %1112
      %vm1115 = vcmask 1043586
      %1116 = vst.msk [vmem:[#allocation2 + $0x20] sm:$0xc] %vm1115, %v1113
      %vm1117 = vcmask 125954
      %1118 = vst.msk [vmem:[#allocation2 + $0x28] sm:$0xc] %vm1117, %v1113
      %v1119 = vld [vmem:[%s14] sm:$0x1]
      %v1121 = vperm.slane %v1119, 0
      %v1123 = vadd.f32 %v1121, 0.0
      %v1124 = vld [vmem:[%s11] sm:$0x1]
      %v1125 = vld [vmem:[#allocation2] sm:$0xff]
      %v1126 = vld [vmem:[#allocation2 + $0x10] sm:$0xff]
      %v1127 = vperm.slane %v1124, 0
      %v1128 = vmul.f32 %v1125, %v1127
      %v1129 = vmul.f32 %v1126, %v1127
      %v1130 = vadd.f32 %v1123, %v1128
      %v1131 = vadd.f32 %v1123, %v1129
      %v1132 = vld [vmem:[%s11 + $0x1] sm:$0x1]
      %v1133 = vld [vmem:[#allocation2 + $0x8] sm:$0xff]
      %v1134 = vld [vmem:[#allocation2 + $0x18] sm:$0xff]
      %v1135 = vperm.slane %v1132, 0
      %1137 = vrot.lane.b32.xlu0 %v1135, 8
      %v1138 = vpop.permute.xlu0 %1137
      %v1140 = vmul.f32 %v1125, %v1138
      %v1141 = vmul.f32 %v1133, %v1138
      %v1142 = vmul.f32 %v1126, %v1138
      %v1143 = vmul.f32 %v1134, %v1138
      %1148 = vrot.lane.b32.xlu0 %v1140, 120
      %v1149 = vpop.permute.xlu0 %1148
      %1150 = vrot.lane.b32.xlu0 %v1141, 120
      %v1151 = vpop.permute.xlu0 %1150
      %1152 = vrot.lane.b32.xlu0 %v1142, 120
      %v1153 = vpop.permute.xlu0 %1152
      %1154 = vrot.lane.b32.xlu0 %v1143, 120
      %v1155 = vpop.permute.xlu0 %1154
      %vm1156 = vcmask 982016
      %v1157 = vsel %vm1156, %v1149, %v1151
      %v1158 = vsel %vm1156, %v1153, %v1155
      %v1161 = vadd.f32 %v1130, %v1157
      %v1162 = vadd.f32 %v1131, %v1158
      %v1163 = vld [vmem:[%s11 + $0x2] sm:$0x1]
      %v1164 = vperm.slane %v1163, 0
      %1166 = vrot.lane.b32.xlu0 %v1164, 16
      %v1167 = vpop.permute.xlu0 %1166
      %v1169 = vmul.f32 %v1125, %v1167
      %v1170 = vmul.f32 %v1133, %v1167
      %v1171 = vmul.f32 %v1126, %v1167
      %v1172 = vmul.f32 %v1134, %v1167
      %1177 = vrot.lane.b32.xlu0 %v1169, 112
      %v1178 = vpop.permute.xlu0 %1177
      %1179 = vrot.lane.b32.xlu0 %v1170, 112
      %v1180 = vpop.permute.xlu0 %1179
      %1181 = vrot.lane.b32.xlu0 %v1171, 112
      %v1182 = vpop.permute.xlu0 %1181
      %1183 = vrot.lane.b32.xlu0 %v1172, 112
      %v1184 = vpop.permute.xlu0 %1183
      %vm1185 = vcmask 916480
      %v1186 = vsel %vm1185, %v1178, %v1180
      %v1187 = vsel %vm1185, %v1182, %v1184
      %v1190 = vadd.f32 %v1161, %v1186
      %v1191 = vadd.f32 %v1162, %v1187
      %v1192 = vld [vmem:[%s11 + $0x3] sm:$0x1]
      %v1193 = vperm.slane %v1192, 0
      %1195 = vrot.lane.b32.xlu0 %v1193, 24
      %v1196 = vpop.permute.xlu0 %1195
      %v1198 = vmul.f32 %v1125, %v1196
      %v1199 = vmul.f32 %v1133, %v1196
      %v1200 = vmul.f32 %v1126, %v1196
      %v1201 = vmul.f32 %v1134, %v1196
      %1206 = vrot.lane.b32.xlu0 %v1198, 104
      %v1207 = vpop.permute.xlu0 %1206
      %1208 = vrot.lane.b32.xlu0 %v1199, 104
      %v1209 = vpop.permute.xlu0 %1208
      %1210 = vrot.lane.b32.xlu0 %v1200, 104
      %v1211 = vpop.permute.xlu0 %1210
      %1212 = vrot.lane.b32.xlu0 %v1201, 104
      %v1213 = vpop.permute.xlu0 %1212
      %vm1214 = vcmask 850944
      %v1215 = vsel %vm1214, %v1207, %v1209
      %v1216 = vsel %vm1214, %v1211, %v1213
      %v1219 = vadd.f32 %v1190, %v1215
      %v1220 = vadd.f32 %v1191, %v1216
      %v1221 = vld [vmem:[%s11 + $0x4] sm:$0x1]
      %v1222 = vperm.slane %v1221, 0
      %1224 = vrot.lane.b32.xlu0 %v1222, 32
      %v1225 = vpop.permute.xlu0 %1224
      %v1227 = vmul.f32 %v1125, %v1225
      %v1228 = vmul.f32 %v1133, %v1225
      %v1229 = vmul.f32 %v1126, %v1225
      %v1230 = vmul.f32 %v1134, %v1225
      %1235 = vrot.lane.b32.xlu0 %v1227, 96
      %v1236 = vpop.permute.xlu0 %1235
      %1237 = vrot.lane.b32.xlu0 %v1228, 96
      %v1238 = vpop.permute.xlu0 %1237
      %1239 = vrot.lane.b32.xlu0 %v1229, 96
      %v1240 = vpop.permute.xlu0 %1239
      %1241 = vrot.lane.b32.xlu0 %v1230, 96
      %v1242 = vpop.permute.xlu0 %1241
      %vm1243 = vcmask 785408
      %v1244 = vsel %vm1243, %v1236, %v1238
      %v1245 = vsel %vm1243, %v1240, %v1242
      %v1248 = vadd.f32 %v1219, %v1244
      %v1249 = vadd.f32 %v1220, %v1245
      %s1250 = scalar_lea.vmem %s11, 8
      %v1251 = vld [vmem:[%s1250] sm:$0x1]
      %v1252 = vld [vmem:[#allocation2] sm:$0xfe]
      %v1253 = vld [vmem:[#allocation2 + $0x20] sm:$0x1]
      %v1254 = vperm.slane %v1251, 0
      %v1255 = vmul.f32 %v1252, %v1254
      %v1256 = vmul.f32 %v1126, %v1254
      %v1257 = vmul.f32 %v1253, %v1254
      %vm1261 = vcmask 1046528
      %v1262 = vrot.slane %v1255, 1
      %v1263 = vrot.slane %v1256, 1
      %v1264 = vsel %vm1261, %v1262, %v1263
      %v1265 = vrot.slane %v1257, 1
      %v1266 = vsel %vm1261, %v1263, %v1265
      %v1269 = vadd.f32 %v1248, %v1264
      %v1270 = vadd.f32 %v1249, %v1266
      %v1271 = vld [vmem:[%s1250 + $0x1] sm:$0x1]
      %v1272 = vld [vmem:[#allocation2 + $0x8] sm:$0xfe]
      %v1273 = vld [vmem:[#allocation2 + $0x28] sm:$0x1]
      %v1274 = vperm.slane %v1271, 0
      %1276 = vrot.lane.b32.xlu0 %v1274, 8
      %v1277 = vpop.permute.xlu0 %1276
      %v1279 = vmul.f32 %v1252, %v1277
      %v1280 = vmul.f32 %v1272, %v1277
      %v1281 = vmul.f32 %v1126, %v1277
      %v1282 = vmul.f32 %v1134, %v1277
      %v1283 = vmul.f32 %v1253, %v1277
      %v1284 = vmul.f32 %v1273, %v1277
      %v1291 = vrot.slane %v1279, 1
      %v1292 = vrot.slane %v1281, 1
      %v1293 = vsel %vm1261, %v1291, %v1292
      %v1294 = vrot.slane %v1280, 1
      %v1295 = vrot.slane %v1282, 1
      %v1296 = vsel %vm1261, %v1294, %v1295
      %v1297 = vrot.slane %v1283, 1
      %v1298 = vsel %vm1261, %v1292, %v1297
      %v1299 = vrot.slane %v1284, 1
      %v1300 = vsel %vm1261, %v1295, %v1299
      %1301 = vrot.lane.b32.xlu0 %v1293, 120
      %v1302 = vpop.permute.xlu0 %1301
      %1303 = vrot.lane.b32.xlu0 %v1296, 120
      %v1304 = vpop.permute.xlu0 %1303
      %1305 = vrot.lane.b32.xlu0 %v1298, 120
      %v1306 = vpop.permute.xlu0 %1305
      %1307 = vrot.lane.b32.xlu0 %v1300, 120
      %v1308 = vpop.permute.xlu0 %1307
      %v1309 = vsel %vm1156, %v1302, %v1304
      %v1310 = vsel %vm1156, %v1306, %v1308
      %v1313 = vadd.f32 %v1269, %v1309
      %v1314 = vadd.f32 %v1270, %v1310
      %v1315 = vld [vmem:[%s1250 + $0x2] sm:$0x1]
      %v1316 = vperm.slane %v1315, 0
      %1318 = vrot.lane.b32.xlu0 %v1316, 16
      %v1319 = vpop.permute.xlu0 %1318
      %v1321 = vmul.f32 %v1252, %v1319
      %v1322 = vmul.f32 %v1272, %v1319
      %v1323 = vmul.f32 %v1126, %v1319
      %v1324 = vmul.f32 %v1134, %v1319
      %v1325 = vmul.f32 %v1253, %v1319
      %v1326 = vmul.f32 %v1273, %v1319
      %v1333 = vrot.slane %v1321, 1
      %v1334 = vrot.slane %v1323, 1
      %v1335 = vsel %vm1261, %v1333, %v1334
      %v1336 = vrot.slane %v1322, 1
      %v1337 = vrot.slane %v1324, 1
      %v1338 = vsel %vm1261, %v1336, %v1337
      %v1339 = vrot.slane %v1325, 1
      %v1340 = vsel %vm1261, %v1334, %v1339
      %v1341 = vrot.slane %v1326, 1
      %v1342 = vsel %vm1261, %v1337, %v1341
      %1343 = vrot.lane.b32.xlu0 %v1335, 112
      %v1344 = vpop.permute.xlu0 %1343
      %1345 = vrot.lane.b32.xlu0 %v1338, 112
      %v1346 = vpop.permute.xlu0 %1345
      %1347 = vrot.lane.b32.xlu0 %v1340, 112
      %v1348 = vpop.permute.xlu0 %1347
      %1349 = vrot.lane.b32.xlu0 %v1342, 112
      %v1350 = vpop.permute.xlu0 %1349
      %v1351 = vsel %vm1185, %v1344, %v1346
      %v1352 = vsel %vm1185, %v1348, %v1350
      %v1355 = vadd.f32 %v1313, %v1351
      %v1356 = vadd.f32 %v1314, %v1352
      %v1357 = vld [vmem:[%s1250 + $0x3] sm:$0x1]
      %v1358 = vperm.slane %v1357, 0
      %1360 = vrot.lane.b32.xlu0 %v1358, 24
      %v1361 = vpop.permute.xlu0 %1360
      %v1363 = vmul.f32 %v1252, %v1361
      %v1364 = vmul.f32 %v1272, %v1361
      %v1365 = vmul.f32 %v1126, %v1361
      %v1366 = vmul.f32 %v1134, %v1361
      %v1367 = vmul.f32 %v1253, %v1361
      %v1368 = vmul.f32 %v1273, %v1361
      %v1375 = vrot.slane %v1363, 1
      %v1376 = vrot.slane %v1365, 1
      %v1377 = vsel %vm1261, %v1375, %v1376
      %v1378 = vrot.slane %v1364, 1
      %v1379 = vrot.slane %v1366, 1
      %v1380 = vsel %vm1261, %v1378, %v1379
      %v1381 = vrot.slane %v1367, 1
      %v1382 = vsel %vm1261, %v1376, %v1381
      %v1383 = vrot.slane %v1368, 1
      %v1384 = vsel %vm1261, %v1379, %v1383
      %1385 = vrot.lane.b32.xlu0 %v1377, 104
      %v1386 = vpop.permute.xlu0 %1385
      %1387 = vrot.lane.b32.xlu0 %v1380, 104
      %v1388 = vpop.permute.xlu0 %1387
      %1389 = vrot.lane.b32.xlu0 %v1382, 104
      %v1390 = vpop.permute.xlu0 %1389
      %1391 = vrot.lane.b32.xlu0 %v1384, 104
      %v1392 = vpop.permute.xlu0 %1391
      %v1393 = vsel %vm1214, %v1386, %v1388
      %v1394 = vsel %vm1214, %v1390, %v1392
      %v1397 = vadd.f32 %v1355, %v1393
      %v1398 = vadd.f32 %v1356, %v1394
      %v1399 = vld [vmem:[%s1250 + $0x4] sm:$0x1]
      %v1400 = vperm.slane %v1399, 0
      %1402 = vrot.lane.b32.xlu0 %v1400, 32
      %v1403 = vpop.permute.xlu0 %1402
      %v1405 = vmul.f32 %v1252, %v1403
      %v1406 = vmul.f32 %v1272, %v1403
      %v1407 = vmul.f32 %v1126, %v1403
      %v1408 = vmul.f32 %v1134, %v1403
      %v1409 = vmul.f32 %v1253, %v1403
      %v1410 = vmul.f32 %v1273, %v1403
      %v1417 = vrot.slane %v1405, 1
      %v1418 = vrot.slane %v1407, 1
      %v1419 = vsel %vm1261, %v1417, %v1418
      %v1420 = vrot.slane %v1406, 1
      %v1421 = vrot.slane %v1408, 1
      %v1422 = vsel %vm1261, %v1420, %v1421
      %v1423 = vrot.slane %v1409, 1
      %v1424 = vsel %vm1261, %v1418, %v1423
      %v1425 = vrot.slane %v1410, 1
      %v1426 = vsel %vm1261, %v1421, %v1425
      %1427 = vrot.lane.b32.xlu0 %v1419, 96
      %v1428 = vpop.permute.xlu0 %1427
      %1429 = vrot.lane.b32.xlu0 %v1422, 96
      %v1430 = vpop.permute.xlu0 %1429
      %1431 = vrot.lane.b32.xlu0 %v1424, 96
      %v1432 = vpop.permute.xlu0 %1431
      %1433 = vrot.lane.b32.xlu0 %v1426, 96
      %v1434 = vpop.permute.xlu0 %1433
      %v1435 = vsel %vm1243, %v1428, %v1430
      %v1436 = vsel %vm1243, %v1432, %v1434
      %v1439 = vadd.f32 %v1397, %v1435
      %v1440 = vadd.f32 %v1398, %v1436
      %s1441 = scalar_lea.vmem %s11, 16
      %v1442 = vld [vmem:[%s1441] sm:$0x1]
      %v1443 = vld [vmem:[#allocation2] sm:$0xfc]
      %v1444 = vld [vmem:[#allocation2 + $0x20] sm:$0x3]
      %v1445 = vperm.slane %v1442, 0
      %v1446 = vmul.f32 %v1443, %v1445
      %v1447 = vmul.f32 %v1126, %v1445
      %v1448 = vmul.f32 %v1444, %v1445
      %vm1452 = vcmask 1045504
      %v1453 = vrot.slane %v1446, 2
      %v1454 = vrot.slane %v1447, 2
      %v1455 = vsel %vm1452, %v1453, %v1454
      %v1456 = vrot.slane %v1448, 2
      %v1457 = vsel %vm1452, %v1454, %v1456
      %v1460 = vadd.f32 %v1439, %v1455
      %v1461 = vadd.f32 %v1440, %v1457
      %v1462 = vld [vmem:[%s1441 + $0x1] sm:$0x1]
      %v1463 = vld [vmem:[#allocation2 + $0x8] sm:$0xfc]
      %v1464 = vld [vmem:[#allocation2 + $0x28] sm:$0x3]
      %v1465 = vperm.slane %v1462, 0
      %1467 = vrot.lane.b32.xlu0 %v1465, 8
      %v1468 = vpop.permute.xlu0 %1467
      %v1470 = vmul.f32 %v1443, %v1468
      %v1471 = vmul.f32 %v1463, %v1468
      %v1472 = vmul.f32 %v1126, %v1468
      %v1473 = vmul.f32 %v1134, %v1468
      %v1474 = vmul.f32 %v1444, %v1468
      %v1475 = vmul.f32 %v1464, %v1468
      %v1482 = vrot.slane %v1470, 2
      %v1483 = vrot.slane %v1472, 2
      %v1484 = vsel %vm1452, %v1482, %v1483
      %v1485 = vrot.slane %v1471, 2
      %v1486 = vrot.slane %v1473, 2
      %v1487 = vsel %vm1452, %v1485, %v1486
      %v1488 = vrot.slane %v1474, 2
      %v1489 = vsel %vm1452, %v1483, %v1488
      %v1490 = vrot.slane %v1475, 2
      %v1491 = vsel %vm1452, %v1486, %v1490
      %1492 = vrot.lane.b32.xlu0 %v1484, 120
      %v1493 = vpop.permute.xlu0 %1492
      %1494 = vrot.lane.b32.xlu0 %v1487, 120
      %v1495 = vpop.permute.xlu0 %1494
      %1496 = vrot.lane.b32.xlu0 %v1489, 120
      %v1497 = vpop.permute.xlu0 %1496
      %1498 = vrot.lane.b32.xlu0 %v1491, 120
      %v1499 = vpop.permute.xlu0 %1498
      %v1500 = vsel %vm1156, %v1493, %v1495
      %v1501 = vsel %vm1156, %v1497, %v1499
      %v1504 = vadd.f32 %v1460, %v1500
      %v1505 = vadd.f32 %v1461, %v1501
      %v1506 = vld [vmem:[%s1441 + $0x2] sm:$0x1]
      %v1507 = vperm.slane %v1506, 0
      %1509 = vrot.lane.b32.xlu0 %v1507, 16
      %v1510 = vpop.permute.xlu0 %1509
      %v1512 = vmul.f32 %v1443, %v1510
      %v1513 = vmul.f32 %v1463, %v1510
      %v1514 = vmul.f32 %v1126, %v1510
      %v1515 = vmul.f32 %v1134, %v1510
      %v1516 = vmul.f32 %v1444, %v1510
      %v1517 = vmul.f32 %v1464, %v1510
      %v1524 = vrot.slane %v1512, 2
      %v1525 = vrot.slane %v1514, 2
      %v1526 = vsel %vm1452, %v1524, %v1525
      %v1527 = vrot.slane %v1513, 2
      %v1528 = vrot.slane %v1515, 2
      %v1529 = vsel %vm1452, %v1527, %v1528
      %v1530 = vrot.slane %v1516, 2
      %v1531 = vsel %vm1452, %v1525, %v1530
      %v1532 = vrot.slane %v1517, 2
      %v1533 = vsel %vm1452, %v1528, %v1532
      %1534 = vrot.lane.b32.xlu0 %v1526, 112
      %v1535 = vpop.permute.xlu0 %1534
      %1536 = vrot.lane.b32.xlu0 %v1529, 112
      %v1537 = vpop.permute.xlu0 %1536
      %1538 = vrot.lane.b32.xlu0 %v1531, 112
      %v1539 = vpop.permute.xlu0 %1538
      %1540 = vrot.lane.b32.xlu0 %v1533, 112
      %v1541 = vpop.permute.xlu0 %1540
      %v1542 = vsel %vm1185, %v1535, %v1537
      %v1543 = vsel %vm1185, %v1539, %v1541
      %v1546 = vadd.f32 %v1504, %v1542
      %v1547 = vadd.f32 %v1505, %v1543
      %v1548 = vld [vmem:[%s1441 + $0x3] sm:$0x1]
      %v1549 = vperm.slane %v1548, 0
      %1551 = vrot.lane.b32.xlu0 %v1549, 24
      %v1552 = vpop.permute.xlu0 %1551
      %v1554 = vmul.f32 %v1443, %v1552
      %v1555 = vmul.f32 %v1463, %v1552
      %v1556 = vmul.f32 %v1126, %v1552
      %v1557 = vmul.f32 %v1134, %v1552
      %v1558 = vmul.f32 %v1444, %v1552
      %v1559 = vmul.f32 %v1464, %v1552
      %v1566 = vrot.slane %v1554, 2
      %v1567 = vrot.slane %v1556, 2
      %v1568 = vsel %vm1452, %v1566, %v1567
      %v1569 = vrot.slane %v1555, 2
      %v1570 = vrot.slane %v1557, 2
      %v1571 = vsel %vm1452, %v1569, %v1570
      %v1572 = vrot.slane %v1558, 2
      %v1573 = vsel %vm1452, %v1567, %v1572
      %v1574 = vrot.slane %v1559, 2
      %v1575 = vsel %vm1452, %v1570, %v1574
      %1576 = vrot.lane.b32.xlu0 %v1568, 104
      %v1577 = vpop.permute.xlu0 %1576
      %1578 = vrot.lane.b32.xlu0 %v1571, 104
      %v1579 = vpop.permute.xlu0 %1578
      %1580 = vrot.lane.b32.xlu0 %v1573, 104
      %v1581 = vpop.permute.xlu0 %1580
      %1582 = vrot.lane.b32.xlu0 %v1575, 104
      %v1583 = vpop.permute.xlu0 %1582
      %v1584 = vsel %vm1214, %v1577, %v1579
      %v1585 = vsel %vm1214, %v1581, %v1583
      %v1588 = vadd.f32 %v1546, %v1584
      %v1589 = vadd.f32 %v1547, %v1585
      %v1590 = vld [vmem:[%s1441 + $0x4] sm:$0x1]
      %v1591 = vperm.slane %v1590, 0
      %1593 = vrot.lane.b32.xlu0 %v1591, 32
      %v1594 = vpop.permute.xlu0 %1593
      %v1596 = vmul.f32 %v1443, %v1594
      %v1597 = vmul.f32 %v1463, %v1594
      %v1598 = vmul.f32 %v1126, %v1594
      %v1599 = vmul.f32 %v1134, %v1594
      %v1600 = vmul.f32 %v1444, %v1594
      %v1601 = vmul.f32 %v1464, %v1594
      %v1608 = vrot.slane %v1596, 2
      %v1609 = vrot.slane %v1598, 2
      %v1610 = vsel %vm1452, %v1608, %v1609
      %v1611 = vrot.slane %v1597, 2
      %v1612 = vrot.slane %v1599, 2
      %v1613 = vsel %vm1452, %v1611, %v1612
      %v1614 = vrot.slane %v1600, 2
      %v1615 = vsel %vm1452, %v1609, %v1614
      %v1616 = vrot.slane %v1601, 2
      %v1617 = vsel %vm1452, %v1612, %v1616
      %1618 = vrot.lane.b32.xlu0 %v1610, 96
      %v1619 = vpop.permute.xlu0 %1618
      %1620 = vrot.lane.b32.xlu0 %v1613, 96
      %v1621 = vpop.permute.xlu0 %1620
      %1622 = vrot.lane.b32.xlu0 %v1615, 96
      %v1623 = vpop.permute.xlu0 %1622
      %1624 = vrot.lane.b32.xlu0 %v1617, 96
      %v1625 = vpop.permute.xlu0 %1624
      %v1626 = vsel %vm1243, %v1619, %v1621
      %v1627 = vsel %vm1243, %v1623, %v1625
      %v1630 = vadd.f32 %v1588, %v1626
      %v1631 = vadd.f32 %v1589, %v1627
      %s1632 = scalar_lea.vmem %s11, 24
      %v1633 = vld [vmem:[%s1632] sm:$0x1]
      %v1634 = vld [vmem:[#allocation2] sm:$0xf8]
      %v1635 = vld [vmem:[#allocation2 + $0x20] sm:$0x7]
      %v1636 = vperm.slane %v1633, 0
      %v1637 = vmul.f32 %v1634, %v1636
      %v1638 = vmul.f32 %v1126, %v1636
      %v1639 = vmul.f32 %v1635, %v1636
      %vm1643 = vcmask 1044480
      %v1644 = vrot.slane %v1637, 3
      %v1645 = vrot.slane %v1638, 3
      %v1646 = vsel %vm1643, %v1644, %v1645
      %v1647 = vrot.slane %v1639, 3
      %v1648 = vsel %vm1643, %v1645, %v1647
      %v1651 = vadd.f32 %v1630, %v1646
      %v1652 = vadd.f32 %v1631, %v1648
      %v1653 = vld [vmem:[%s1632 + $0x1] sm:$0x1]
      %v1654 = vld [vmem:[#allocation2 + $0x8] sm:$0xf8]
      %v1655 = vld [vmem:[#allocation2 + $0x28] sm:$0x7]
      %v1656 = vperm.slane %v1653, 0
      %1658 = vrot.lane.b32.xlu0 %v1656, 8
      %v1659 = vpop.permute.xlu0 %1658
      %v1661 = vmul.f32 %v1634, %v1659
      %v1662 = vmul.f32 %v1654, %v1659
      %v1663 = vmul.f32 %v1126, %v1659
      %v1664 = vmul.f32 %v1134, %v1659
      %v1665 = vmul.f32 %v1635, %v1659
      %v1666 = vmul.f32 %v1655, %v1659
      %v1673 = vrot.slane %v1661, 3
      %v1674 = vrot.slane %v1663, 3
      %v1675 = vsel %vm1643, %v1673, %v1674
      %v1676 = vrot.slane %v1662, 3
      %v1677 = vrot.slane %v1664, 3
      %v1678 = vsel %vm1643, %v1676, %v1677
      %v1679 = vrot.slane %v1665, 3
      %v1680 = vsel %vm1643, %v1674, %v1679
      %v1681 = vrot.slane %v1666, 3
      %v1682 = vsel %vm1643, %v1677, %v1681
      %1683 = vrot.lane.b32.xlu0 %v1675, 120
      %v1684 = vpop.permute.xlu0 %1683
      %1685 = vrot.lane.b32.xlu0 %v1678, 120
      %v1686 = vpop.permute.xlu0 %1685
      %1687 = vrot.lane.b32.xlu0 %v1680, 120
      %v1688 = vpop.permute.xlu0 %1687
      %1689 = vrot.lane.b32.xlu0 %v1682, 120
      %v1690 = vpop.permute.xlu0 %1689
      %v1691 = vsel %vm1156, %v1684, %v1686
      %v1692 = vsel %vm1156, %v1688, %v1690
      %v1695 = vadd.f32 %v1651, %v1691
      %v1696 = vadd.f32 %v1652, %v1692
      %v1697 = vld [vmem:[%s1632 + $0x2] sm:$0x1]
      %v1698 = vperm.slane %v1697, 0
      %1700 = vrot.lane.b32.xlu0 %v1698, 16
      %v1701 = vpop.permute.xlu0 %1700
      %v1703 = vmul.f32 %v1634, %v1701
      %v1704 = vmul.f32 %v1654, %v1701
      %v1705 = vmul.f32 %v1126, %v1701
      %v1706 = vmul.f32 %v1134, %v1701
      %v1707 = vmul.f32 %v1635, %v1701
      %v1708 = vmul.f32 %v1655, %v1701
      %v1715 = vrot.slane %v1703, 3
      %v1716 = vrot.slane %v1705, 3
      %v1717 = vsel %vm1643, %v1715, %v1716
      %v1718 = vrot.slane %v1704, 3
      %v1719 = vrot.slane %v1706, 3
      %v1720 = vsel %vm1643, %v1718, %v1719
      %v1721 = vrot.slane %v1707, 3
      %v1722 = vsel %vm1643, %v1716, %v1721
      %v1723 = vrot.slane %v1708, 3
      %v1724 = vsel %vm1643, %v1719, %v1723
      %1725 = vrot.lane.b32.xlu0 %v1717, 112
      %v1726 = vpop.permute.xlu0 %1725
      %1727 = vrot.lane.b32.xlu0 %v1720, 112
      %v1728 = vpop.permute.xlu0 %1727
      %1729 = vrot.lane.b32.xlu0 %v1722, 112
      %v1730 = vpop.permute.xlu0 %1729
      %1731 = vrot.lane.b32.xlu0 %v1724, 112
      %v1732 = vpop.permute.xlu0 %1731
      %v1733 = vsel %vm1185, %v1726, %v1728
      %v1734 = vsel %vm1185, %v1730, %v1732
      %v1737 = vadd.f32 %v1695, %v1733
      %v1738 = vadd.f32 %v1696, %v1734
      %v1739 = vld [vmem:[%s1632 + $0x3] sm:$0x1]
      %v1740 = vperm.slane %v1739, 0
      %1742 = vrot.lane.b32.xlu0 %v1740, 24
      %v1743 = vpop.permute.xlu0 %1742
      %v1745 = vmul.f32 %v1634, %v1743
      %v1746 = vmul.f32 %v1654, %v1743
      %v1747 = vmul.f32 %v1126, %v1743
      %v1748 = vmul.f32 %v1134, %v1743
      %v1749 = vmul.f32 %v1635, %v1743
      %v1750 = vmul.f32 %v1655, %v1743
      %v1757 = vrot.slane %v1745, 3
      %v1758 = vrot.slane %v1747, 3
      %v1759 = vsel %vm1643, %v1757, %v1758
      %v1760 = vrot.slane %v1746, 3
      %v1761 = vrot.slane %v1748, 3
      %v1762 = vsel %vm1643, %v1760, %v1761
      %v1763 = vrot.slane %v1749, 3
      %v1764 = vsel %vm1643, %v1758, %v1763
      %v1765 = vrot.slane %v1750, 3
      %v1766 = vsel %vm1643, %v1761, %v1765
      %1767 = vrot.lane.b32.xlu0 %v1759, 104
      %v1768 = vpop.permute.xlu0 %1767
      %1769 = vrot.lane.b32.xlu0 %v1762, 104
      %v1770 = vpop.permute.xlu0 %1769
      %1771 = vrot.lane.b32.xlu0 %v1764, 104
      %v1772 = vpop.permute.xlu0 %1771
      %1773 = vrot.lane.b32.xlu0 %v1766, 104
      %v1774 = vpop.permute.xlu0 %1773
      %v1775 = vsel %vm1214, %v1768, %v1770
      %v1776 = vsel %vm1214, %v1772, %v1774
      %v1779 = vadd.f32 %v1737, %v1775
      %v1780 = vadd.f32 %v1738, %v1776
      %v1781 = vld [vmem:[%s1632 + $0x4] sm:$0x1]
      %v1782 = vperm.slane %v1781, 0
      %1784 = vrot.lane.b32.xlu0 %v1782, 32
      %v1785 = vpop.permute.xlu0 %1784
      %v1787 = vmul.f32 %v1634, %v1785
      %v1788 = vmul.f32 %v1654, %v1785
      %v1789 = vmul.f32 %v1126, %v1785
      %v1790 = vmul.f32 %v1134, %v1785
      %v1791 = vmul.f32 %v1635, %v1785
      %v1792 = vmul.f32 %v1655, %v1785
      %v1799 = vrot.slane %v1787, 3
      %v1800 = vrot.slane %v1789, 3
      %v1801 = vsel %vm1643, %v1799, %v1800
      %v1802 = vrot.slane %v1788, 3
      %v1803 = vrot.slane %v1790, 3
      %v1804 = vsel %vm1643, %v1802, %v1803
      %v1805 = vrot.slane %v1791, 3
      %v1806 = vsel %vm1643, %v1800, %v1805
      %v1807 = vrot.slane %v1792, 3
      %v1808 = vsel %vm1643, %v1803, %v1807
      %1809 = vrot.lane.b32.xlu0 %v1801, 96
      %v1810 = vpop.permute.xlu0 %1809
      %1811 = vrot.lane.b32.xlu0 %v1804, 96
      %v1812 = vpop.permute.xlu0 %1811
      %1813 = vrot.lane.b32.xlu0 %v1806, 96
      %v1814 = vpop.permute.xlu0 %1813
      %1815 = vrot.lane.b32.xlu0 %v1808, 96
      %v1816 = vpop.permute.xlu0 %1815
      %v1817 = vsel %vm1243, %v1810, %v1812
      %v1818 = vsel %vm1243, %v1814, %v1816
      %v1821 = vadd.f32 %v1779, %v1817
      %v1822 = vadd.f32 %v1780, %v1818
      %s1823 = scalar_lea.vmem %s11, 32
      %v1824 = vld [vmem:[%s1823] sm:$0x1]
      %v1825 = vld [vmem:[#allocation2] sm:$0xf0]
      %v1826 = vld [vmem:[#allocation2 + $0x20] sm:$0xf]
      %v1827 = vperm.slane %v1824, 0
      %v1828 = vmul.f32 %v1825, %v1827
      %v1829 = vmul.f32 %v1126, %v1827
      %v1830 = vmul.f32 %v1826, %v1827
      %vm1834 = vcmask 1043456
      %v1835 = vrot.slane %v1828, 4
      %v1836 = vrot.slane %v1829, 4
      %v1837 = vsel %vm1834, %v1835, %v1836
      %v1838 = vrot.slane %v1830, 4
      %v1839 = vsel %vm1834, %v1836, %v1838
      %v1842 = vadd.f32 %v1821, %v1837
      %v1843 = vadd.f32 %v1822, %v1839
      %v1844 = vld [vmem:[%s1823 + $0x1] sm:$0x1]
      %v1845 = vld [vmem:[#allocation2 + $0x8] sm:$0xf0]
      %v1846 = vld [vmem:[#allocation2 + $0x28] sm:$0xf]
      %v1847 = vperm.slane %v1844, 0
      %1849 = vrot.lane.b32.xlu0 %v1847, 8
      %v1850 = vpop.permute.xlu0 %1849
      %v1852 = vmul.f32 %v1825, %v1850
      %v1853 = vmul.f32 %v1845, %v1850
      %v1854 = vmul.f32 %v1126, %v1850
      %v1855 = vmul.f32 %v1134, %v1850
      %v1856 = vmul.f32 %v1826, %v1850
      %v1857 = vmul.f32 %v1846, %v1850
      %v1864 = vrot.slane %v1852, 4
      %v1865 = vrot.slane %v1854, 4
      %v1866 = vsel %vm1834, %v1864, %v1865
      %v1867 = vrot.slane %v1853, 4
      %v1868 = vrot.slane %v1855, 4
      %v1869 = vsel %vm1834, %v1867, %v1868
      %v1870 = vrot.slane %v1856, 4
      %v1871 = vsel %vm1834, %v1865, %v1870
      %v1872 = vrot.slane %v1857, 4
      %v1873 = vsel %vm1834, %v1868, %v1872
      %1874 = vrot.lane.b32.xlu0 %v1866, 120
      %v1875 = vpop.permute.xlu0 %1874
      %1876 = vrot.lane.b32.xlu0 %v1869, 120
      %v1877 = vpop.permute.xlu0 %1876
      %1878 = vrot.lane.b32.xlu0 %v1871, 120
      %v1879 = vpop.permute.xlu0 %1878
      %1880 = vrot.lane.b32.xlu0 %v1873, 120
      %v1881 = vpop.permute.xlu0 %1880
      %v1882 = vsel %vm1156, %v1875, %v1877
      %v1883 = vsel %vm1156, %v1879, %v1881
      %v1886 = vadd.f32 %v1842, %v1882
      %v1887 = vadd.f32 %v1843, %v1883
      %v1888 = vld [vmem:[%s1823 + $0x2] sm:$0x1]
      %v1889 = vperm.slane %v1888, 0
      %1891 = vrot.lane.b32.xlu0 %v1889, 16
      %v1892 = vpop.permute.xlu0 %1891
      %v1894 = vmul.f32 %v1825, %v1892
      %v1895 = vmul.f32 %v1845, %v1892
      %v1896 = vmul.f32 %v1126, %v1892
      %v1897 = vmul.f32 %v1134, %v1892
      %v1898 = vmul.f32 %v1826, %v1892
      %v1899 = vmul.f32 %v1846, %v1892
      %v1906 = vrot.slane %v1894, 4
      %v1907 = vrot.slane %v1896, 4
      %v1908 = vsel %vm1834, %v1906, %v1907
      %v1909 = vrot.slane %v1895, 4
      %v1910 = vrot.slane %v1897, 4
      %v1911 = vsel %vm1834, %v1909, %v1910
      %v1912 = vrot.slane %v1898, 4
      %v1913 = vsel %vm1834, %v1907, %v1912
      %v1914 = vrot.slane %v1899, 4
      %v1915 = vsel %vm1834, %v1910, %v1914
      %1916 = vrot.lane.b32.xlu0 %v1908, 112
      %v1917 = vpop.permute.xlu0 %1916
      %1918 = vrot.lane.b32.xlu0 %v1911, 112
      %v1919 = vpop.permute.xlu0 %1918
      %1920 = vrot.lane.b32.xlu0 %v1913, 112
      %v1921 = vpop.permute.xlu0 %1920
      %1922 = vrot.lane.b32.xlu0 %v1915, 112
      %v1923 = vpop.permute.xlu0 %1922
      %v1924 = vsel %vm1185, %v1917, %v1919
      %v1925 = vsel %vm1185, %v1921, %v1923
      %v1928 = vadd.f32 %v1886, %v1924
      %v1929 = vadd.f32 %v1887, %v1925
      %v1930 = vld [vmem:[%s1823 + $0x3] sm:$0x1]
      %v1931 = vperm.slane %v1930, 0
      %1933 = vrot.lane.b32.xlu0 %v1931, 24
      %v1934 = vpop.permute.xlu0 %1933
      %v1936 = vmul.f32 %v1825, %v1934
      %v1937 = vmul.f32 %v1845, %v1934
      %v1938 = vmul.f32 %v1126, %v1934
      %v1939 = vmul.f32 %v1134, %v1934
      %v1940 = vmul.f32 %v1826, %v1934
      %v1941 = vmul.f32 %v1846, %v1934
      %v1948 = vrot.slane %v1936, 4
      %v1949 = vrot.slane %v1938, 4
      %v1950 = vsel %vm1834, %v1948, %v1949
      %v1951 = vrot.slane %v1937, 4
      %v1952 = vrot.slane %v1939, 4
      %v1953 = vsel %vm1834, %v1951, %v1952
      %v1954 = vrot.slane %v1940, 4
      %v1955 = vsel %vm1834, %v1949, %v1954
      %v1956 = vrot.slane %v1941, 4
      %v1957 = vsel %vm1834, %v1952, %v1956
      %1958 = vrot.lane.b32.xlu0 %v1950, 104
      %v1959 = vpop.permute.xlu0 %1958
      %1960 = vrot.lane.b32.xlu0 %v1953, 104
      %v1961 = vpop.permute.xlu0 %1960
      %1962 = vrot.lane.b32.xlu0 %v1955, 104
      %v1963 = vpop.permute.xlu0 %1962
      %1964 = vrot.lane.b32.xlu0 %v1957, 104
      %v1965 = vpop.permute.xlu0 %1964
      %v1966 = vsel %vm1214, %v1959, %v1961
      %v1967 = vsel %vm1214, %v1963, %v1965
      %v1970 = vadd.f32 %v1928, %v1966
      %v1971 = vadd.f32 %v1929, %v1967
      %v1972 = vld [vmem:[%s1823 + $0x4] sm:$0x1]
      %v1973 = vperm.slane %v1972, 0
      %1975 = vrot.lane.b32.xlu0 %v1973, 32
      %v1976 = vpop.permute.xlu0 %1975
      %v1978 = vmul.f32 %v1825, %v1976
      %v1979 = vmul.f32 %v1845, %v1976
      %v1980 = vmul.f32 %v1126, %v1976
      %v1981 = vmul.f32 %v1134, %v1976
      %v1982 = vmul.f32 %v1826, %v1976
      %v1983 = vmul.f32 %v1846, %v1976
      %v1990 = vrot.slane %v1978, 4
      %v1991 = vrot.slane %v1980, 4
      %v1992 = vsel %vm1834, %v1990, %v1991
      %v1993 = vrot.slane %v1979, 4
      %v1994 = vrot.slane %v1981, 4
      %v1995 = vsel %vm1834, %v1993, %v1994
      %v1996 = vrot.slane %v1982, 4
      %v1997 = vsel %vm1834, %v1991, %v1996
      %v1998 = vrot.slane %v1983, 4
      %v1999 = vsel %vm1834, %v1994, %v1998
      %2000 = vrot.lane.b32.xlu0 %v1992, 96
      %v2001 = vpop.permute.xlu0 %2000
      %2002 = vrot.lane.b32.xlu0 %v1995, 96
      %v2003 = vpop.permute.xlu0 %2002
      %2004 = vrot.lane.b32.xlu0 %v1997, 96
      %v2005 = vpop.permute.xlu0 %2004
      %2006 = vrot.lane.b32.xlu0 %v1999, 96
      %v2007 = vpop.permute.xlu0 %2006
      %v2008 = vsel %vm1243, %v2001, %v2003
      %v2009 = vsel %vm1243, %v2005, %v2007
      %v2012 = vadd.f32 %v1970, %v2008
      %v2013 = vadd.f32 %v1971, %v2009
      %v2014 = vpack.c.bf16 %v2012, %v2012
      %v2015 = vpack.c.bf16 %v2013, %v2013
      %2016 = vst [vmem:[%s1047] sm:$0xf] %v2014
      %2017 = vst [vmem:[%s1047 + $0x4] sm:$0xf] %v2015
      %v2018 = vld [vmem:[%s901] sm:$0xf]
      %v2019 = vld [vmem:[%s901 + $0x4] sm:$0xf]
      %v2020 = vunpack.c.l.bf16 %v2018
      %v2021 = vunpack.c.l.bf16 %v2019
      %v2024 = vrot.slane %v2020, 6
      %v2025 = vrot.slane %v2021, 6
      %v2026 = vsel %vm1065, %v2024, %v2025
      %2027 = vrot.lane.b32.xlu0 %v2024, 16
      %v2028 = vpop.permute.xlu0 %2027
      %2029 = vrot.lane.b32.xlu0 %v2026, 16
      %v2030 = vpop.permute.xlu0 %2029
      %2031 = vrot.lane.b32.xlu0 %v2025, 16
      %v2032 = vpop.permute.xlu0 %2031
      %2036 = vst.msk [vmem:[#allocation2] sm:$0xfc] %vm1078, %v2028
      %2037 = vst.msk [vmem:[#allocation2 + $0x8] sm:$0xfc] %vm1080, %v2028
      %2038 = vst.msk [vmem:[#allocation2 + $0x10] sm:$0xff] %vm1082, %v2030
      %2039 = vst.msk [vmem:[#allocation2 + $0x18] sm:$0xff] %vm1049, %v2030
      %2040 = vst.msk [vmem:[#allocation2 + $0x20] sm:$0x3] %vm1085, %v2032
      %2041 = vst.msk [vmem:[#allocation2 + $0x28] sm:$0x3] %vm1087, %v2032
      %v2042 = vld [vmem:[%s914 + $0x4] sm:$0x8]
      %v2043 = vunpack.c.l.bf16 %v2042
      %v2044 = vsel %vm1094, %v2043, 0.0
      %v2046 = vrot.slane %v2044, 6
      %2047 = vrot.lane.b32.xlu0 %v2046, 16
      %v2048 = vpop.permute.xlu0 %2047
      %2050 = vst.msk [vmem:[#allocation2] sm:$0x3] %vm1085, %v2048
      %2051 = vst.msk [vmem:[#allocation2 + $0x8] sm:$0x3] %vm1087, %v2048
      %v2052 = vld [vmem:[%s930] sm:$0x1]
      %v2053 = vunpack.c.l.bf16 %v2052
      %v2054 = vsel %vm1108, %v2053, 0.0
      %v2056 = vrot.slane %v2054, 6
      %2057 = vrot.lane.b32.xlu0 %v2056, 16
      %v2058 = vpop.permute.xlu0 %2057
      %2060 = vst.msk [vmem:[#allocation2 + $0x20] sm:$0xc] %vm1115, %v2058
      %2061 = vst.msk [vmem:[#allocation2 + $0x28] sm:$0xc] %vm1117, %v2058
      %v2062 = vld [vmem:[%s12] sm:$0x1]
      %v2064 = vperm.slane %v2062, 0
      %v2066 = vadd.f32 %v2064, 0.0
      %v2067 = vld [vmem:[%s9] sm:$0x1]
      %v2068 = vld [vmem:[#allocation2] sm:$0xff]
      %v2069 = vld [vmem:[#allocation2 + $0x10] sm:$0xff]
      %v2070 = vperm.slane %v2067, 0
      %v2071 = vmul.f32 %v2068, %v2070
      %v2072 = vmul.f32 %v2069, %v2070
      %v2073 = vadd.f32 %v2066, %v2071
      %v2074 = vadd.f32 %v2066, %v2072
      %v2075 = vld [vmem:[%s9 + $0x1] sm:$0x1]
      %v2076 = vld [vmem:[#allocation2 + $0x8] sm:$0xff]
      %v2077 = vld [vmem:[#allocation2 + $0x18] sm:$0xff]
      %v2078 = vperm.slane %v2075, 0
      %2080 = vrot.lane.b32.xlu0 %v2078, 8
      %v2081 = vpop.permute.xlu0 %2080
      %v2083 = vmul.f32 %v2068, %v2081
      %v2084 = vmul.f32 %v2076, %v2081
      %v2085 = vmul.f32 %v2069, %v2081
      %v2086 = vmul.f32 %v2077, %v2081
      %2091 = vrot.lane.b32.xlu0 %v2083, 120
      %v2092 = vpop.permute.xlu0 %2091
      %2093 = vrot.lane.b32.xlu0 %v2084, 120
      %v2094 = vpop.permute.xlu0 %2093
      %2095 = vrot.lane.b32.xlu0 %v2085, 120
      %v2096 = vpop.permute.xlu0 %2095
      %2097 = vrot.lane.b32.xlu0 %v2086, 120
      %v2098 = vpop.permute.xlu0 %2097
      %v2099 = vsel %vm1156, %v2092, %v2094
      %v2100 = vsel %vm1156, %v2096, %v2098
      %v2103 = vadd.f32 %v2073, %v2099
      %v2104 = vadd.f32 %v2074, %v2100
      %v2105 = vld [vmem:[%s9 + $0x2] sm:$0x1]
      %v2106 = vperm.slane %v2105, 0
      %2108 = vrot.lane.b32.xlu0 %v2106, 16
      %v2109 = vpop.permute.xlu0 %2108
      %v2111 = vmul.f32 %v2068, %v2109
      %v2112 = vmul.f32 %v2076, %v2109
      %v2113 = vmul.f32 %v2069, %v2109
      %v2114 = vmul.f32 %v2077, %v2109
      %2119 = vrot.lane.b32.xlu0 %v2111, 112
      %v2120 = vpop.permute.xlu0 %2119
      %2121 = vrot.lane.b32.xlu0 %v2112, 112
      %v2122 = vpop.permute.xlu0 %2121
      %2123 = vrot.lane.b32.xlu0 %v2113, 112
      %v2124 = vpop.permute.xlu0 %2123
      %2125 = vrot.lane.b32.xlu0 %v2114, 112
      %v2126 = vpop.permute.xlu0 %2125
      %v2127 = vsel %vm1185, %v2120, %v2122
      %v2128 = vsel %vm1185, %v2124, %v2126
      %v2131 = vadd.f32 %v2103, %v2127
      %v2132 = vadd.f32 %v2104, %v2128
      %v2133 = vld [vmem:[%s9 + $0x3] sm:$0x1]
      %v2134 = vperm.slane %v2133, 0
      %2136 = vrot.lane.b32.xlu0 %v2134, 24
      %v2137 = vpop.permute.xlu0 %2136
      %v2139 = vmul.f32 %v2068, %v2137
      %v2140 = vmul.f32 %v2076, %v2137
      %v2141 = vmul.f32 %v2069, %v2137
      %v2142 = vmul.f32 %v2077, %v2137
      %2147 = vrot.lane.b32.xlu0 %v2139, 104
      %v2148 = vpop.permute.xlu0 %2147
      %2149 = vrot.lane.b32.xlu0 %v2140, 104
      %v2150 = vpop.permute.xlu0 %2149
      %2151 = vrot.lane.b32.xlu0 %v2141, 104
      %v2152 = vpop.permute.xlu0 %2151
      %2153 = vrot.lane.b32.xlu0 %v2142, 104
      %v2154 = vpop.permute.xlu0 %2153
      %v2155 = vsel %vm1214, %v2148, %v2150
      %v2156 = vsel %vm1214, %v2152, %v2154
      %v2159 = vadd.f32 %v2131, %v2155
      %v2160 = vadd.f32 %v2132, %v2156
      %v2161 = vld [vmem:[%s9 + $0x4] sm:$0x1]
      %v2162 = vperm.slane %v2161, 0
      %2164 = vrot.lane.b32.xlu0 %v2162, 32
      %v2165 = vpop.permute.xlu0 %2164
      %v2167 = vmul.f32 %v2068, %v2165
      %v2168 = vmul.f32 %v2076, %v2165
      %v2169 = vmul.f32 %v2069, %v2165
      %v2170 = vmul.f32 %v2077, %v2165
      %2175 = vrot.lane.b32.xlu0 %v2167, 96
      %v2176 = vpop.permute.xlu0 %2175
      %2177 = vrot.lane.b32.xlu0 %v2168, 96
      %v2178 = vpop.permute.xlu0 %2177
      %2179 = vrot.lane.b32.xlu0 %v2169, 96
      %v2180 = vpop.permute.xlu0 %2179
      %2181 = vrot.lane.b32.xlu0 %v2170, 96
      %v2182 = vpop.permute.xlu0 %2181
      %v2183 = vsel %vm1243, %v2176, %v2178
      %v2184 = vsel %vm1243, %v2180, %v2182
      %v2187 = vadd.f32 %v2159, %v2183
      %v2188 = vadd.f32 %v2160, %v2184
      %s2189 = scalar_lea.vmem %s9, 8
      %v2190 = vld [vmem:[%s2189] sm:$0x1]
      %v2191 = vld [vmem:[#allocation2] sm:$0xfe]
      %v2192 = vld [vmem:[#allocation2 + $0x20] sm:$0x1]
      %v2193 = vperm.slane %v2190, 0
      %v2194 = vmul.f32 %v2191, %v2193
      %v2195 = vmul.f32 %v2069, %v2193
      %v2196 = vmul.f32 %v2192, %v2193
      %v2200 = vrot.slane %v2194, 1
      %v2201 = vrot.slane %v2195, 1
      %v2202 = vsel %vm1261, %v2200, %v2201
      %v2203 = vrot.slane %v2196, 1
      %v2204 = vsel %vm1261, %v2201, %v2203
      %v2207 = vadd.f32 %v2187, %v2202
      %v2208 = vadd.f32 %v2188, %v2204
      %v2209 = vld [vmem:[%s2189 + $0x1] sm:$0x1]
      %v2210 = vld [vmem:[#allocation2 + $0x8] sm:$0xfe]
      %v2211 = vld [vmem:[#allocation2 + $0x28] sm:$0x1]
      %v2212 = vperm.slane %v2209, 0
      %2214 = vrot.lane.b32.xlu0 %v2212, 8
      %v2215 = vpop.permute.xlu0 %2214
      %v2217 = vmul.f32 %v2191, %v2215
      %v2218 = vmul.f32 %v2210, %v2215
      %v2219 = vmul.f32 %v2069, %v2215
      %v2220 = vmul.f32 %v2077, %v2215
      %v2221 = vmul.f32 %v2192, %v2215
      %v2222 = vmul.f32 %v2211, %v2215
      %v2229 = vrot.slane %v2217, 1
      %v2230 = vrot.slane %v2219, 1
      %v2231 = vsel %vm1261, %v2229, %v2230
      %v2232 = vrot.slane %v2218, 1
      %v2233 = vrot.slane %v2220, 1
      %v2234 = vsel %vm1261, %v2232, %v2233
      %v2235 = vrot.slane %v2221, 1
      %v2236 = vsel %vm1261, %v2230, %v2235
      %v2237 = vrot.slane %v2222, 1
      %v2238 = vsel %vm1261, %v2233, %v2237
      %2239 = vrot.lane.b32.xlu0 %v2231, 120
      %v2240 = vpop.permute.xlu0 %2239
      %2241 = vrot.lane.b32.xlu0 %v2234, 120
      %v2242 = vpop.permute.xlu0 %2241
      %2243 = vrot.lane.b32.xlu0 %v2236, 120
      %v2244 = vpop.permute.xlu0 %2243
      %2245 = vrot.lane.b32.xlu0 %v2238, 120
      %v2246 = vpop.permute.xlu0 %2245
      %v2247 = vsel %vm1156, %v2240, %v2242
      %v2248 = vsel %vm1156, %v2244, %v2246
      %v2251 = vadd.f32 %v2207, %v2247
      %v2252 = vadd.f32 %v2208, %v2248
      %v2253 = vld [vmem:[%s2189 + $0x2] sm:$0x1]
      %v2254 = vperm.slane %v2253, 0
      %2256 = vrot.lane.b32.xlu0 %v2254, 16
      %v2257 = vpop.permute.xlu0 %2256
      %v2259 = vmul.f32 %v2191, %v2257
      %v2260 = vmul.f32 %v2210, %v2257
      %v2261 = vmul.f32 %v2069, %v2257
      %v2262 = vmul.f32 %v2077, %v2257
      %v2263 = vmul.f32 %v2192, %v2257
      %v2264 = vmul.f32 %v2211, %v2257
      %v2271 = vrot.slane %v2259, 1
      %v2272 = vrot.slane %v2261, 1
      %v2273 = vsel %vm1261, %v2271, %v2272
      %v2274 = vrot.slane %v2260, 1
      %v2275 = vrot.slane %v2262, 1
      %v2276 = vsel %vm1261, %v2274, %v2275
      %v2277 = vrot.slane %v2263, 1
      %v2278 = vsel %vm1261, %v2272, %v2277
      %v2279 = vrot.slane %v2264, 1
      %v2280 = vsel %vm1261, %v2275, %v2279
      %2281 = vrot.lane.b32.xlu0 %v2273, 112
      %v2282 = vpop.permute.xlu0 %2281
      %2283 = vrot.lane.b32.xlu0 %v2276, 112
      %v2284 = vpop.permute.xlu0 %2283
      %2285 = vrot.lane.b32.xlu0 %v2278, 112
      %v2286 = vpop.permute.xlu0 %2285
      %2287 = vrot.lane.b32.xlu0 %v2280, 112
      %v2288 = vpop.permute.xlu0 %2287
      %v2289 = vsel %vm1185, %v2282, %v2284
      %v2290 = vsel %vm1185, %v2286, %v2288
      %v2293 = vadd.f32 %v2251, %v2289
      %v2294 = vadd.f32 %v2252, %v2290
      %v2295 = vld [vmem:[%s2189 + $0x3] sm:$0x1]
      %v2296 = vperm.slane %v2295, 0
      %2298 = vrot.lane.b32.xlu0 %v2296, 24
      %v2299 = vpop.permute.xlu0 %2298
      %v2301 = vmul.f32 %v2191, %v2299
      %v2302 = vmul.f32 %v2210, %v2299
      %v2303 = vmul.f32 %v2069, %v2299
      %v2304 = vmul.f32 %v2077, %v2299
      %v2305 = vmul.f32 %v2192, %v2299
      %v2306 = vmul.f32 %v2211, %v2299
      %v2313 = vrot.slane %v2301, 1
      %v2314 = vrot.slane %v2303, 1
      %v2315 = vsel %vm1261, %v2313, %v2314
      %v2316 = vrot.slane %v2302, 1
      %v2317 = vrot.slane %v2304, 1
      %v2318 = vsel %vm1261, %v2316, %v2317
      %v2319 = vrot.slane %v2305, 1
      %v2320 = vsel %vm1261, %v2314, %v2319
      %v2321 = vrot.slane %v2306, 1
      %v2322 = vsel %vm1261, %v2317, %v2321
      %2323 = vrot.lane.b32.xlu0 %v2315, 104
      %v2324 = vpop.permute.xlu0 %2323
      %2325 = vrot.lane.b32.xlu0 %v2318, 104
      %v2326 = vpop.permute.xlu0 %2325
      %2327 = vrot.lane.b32.xlu0 %v2320, 104
      %v2328 = vpop.permute.xlu0 %2327
      %2329 = vrot.lane.b32.xlu0 %v2322, 104
      %v2330 = vpop.permute.xlu0 %2329
      %v2331 = vsel %vm1214, %v2324, %v2326
      %v2332 = vsel %vm1214, %v2328, %v2330
      %v2335 = vadd.f32 %v2293, %v2331
      %v2336 = vadd.f32 %v2294, %v2332
      %v2337 = vld [vmem:[%s2189 + $0x4] sm:$0x1]
      %v2338 = vperm.slane %v2337, 0
      %2340 = vrot.lane.b32.xlu0 %v2338, 32
      %v2341 = vpop.permute.xlu0 %2340
      %v2343 = vmul.f32 %v2191, %v2341
      %v2344 = vmul.f32 %v2210, %v2341
      %v2345 = vmul.f32 %v2069, %v2341
      %v2346 = vmul.f32 %v2077, %v2341
      %v2347 = vmul.f32 %v2192, %v2341
      %v2348 = vmul.f32 %v2211, %v2341
      %v2355 = vrot.slane %v2343, 1
      %v2356 = vrot.slane %v2345, 1
      %v2357 = vsel %vm1261, %v2355, %v2356
      %v2358 = vrot.slane %v2344, 1
      %v2359 = vrot.slane %v2346, 1
      %v2360 = vsel %vm1261, %v2358, %v2359
      %v2361 = vrot.slane %v2347, 1
      %v2362 = vsel %vm1261, %v2356, %v2361
      %v2363 = vrot.slane %v2348, 1
      %v2364 = vsel %vm1261, %v2359, %v2363
      %2365 = vrot.lane.b32.xlu0 %v2357, 96
      %v2366 = vpop.permute.xlu0 %2365
      %2367 = vrot.lane.b32.xlu0 %v2360, 96
      %v2368 = vpop.permute.xlu0 %2367
      %2369 = vrot.lane.b32.xlu0 %v2362, 96
      %v2370 = vpop.permute.xlu0 %2369
      %2371 = vrot.lane.b32.xlu0 %v2364, 96
      %v2372 = vpop.permute.xlu0 %2371
      %v2373 = vsel %vm1243, %v2366, %v2368
      %v2374 = vsel %vm1243, %v2370, %v2372
      %v2377 = vadd.f32 %v2335, %v2373
      %v2378 = vadd.f32 %v2336, %v2374
      %s2379 = scalar_lea.vmem %s9, 16
      %v2380 = vld [vmem:[%s2379] sm:$0x1]
      %v2381 = vld [vmem:[#allocation2] sm:$0xfc]
      %v2382 = vld [vmem:[#allocation2 + $0x20] sm:$0x3]
      %v2383 = vperm.slane %v2380, 0
      %v2384 = vmul.f32 %v2381, %v2383
      %v2385 = vmul.f32 %v2069, %v2383
      %v2386 = vmul.f32 %v2382, %v2383
      %v2390 = vrot.slane %v2384, 2
      %v2391 = vrot.slane %v2385, 2
      %v2392 = vsel %vm1452, %v2390, %v2391
      %v2393 = vrot.slane %v2386, 2
      %v2394 = vsel %vm1452, %v2391, %v2393
      %v2397 = vadd.f32 %v2377, %v2392
      %v2398 = vadd.f32 %v2378, %v2394
      %v2399 = vld [vmem:[%s2379 + $0x1] sm:$0x1]
      %v2400 = vld [vmem:[#allocation2 + $0x8] sm:$0xfc]
      %v2401 = vld [vmem:[#allocation2 + $0x28] sm:$0x3]
      %v2402 = vperm.slane %v2399, 0
      %2404 = vrot.lane.b32.xlu0 %v2402, 8
      %v2405 = vpop.permute.xlu0 %2404
      %v2407 = vmul.f32 %v2381, %v2405
      %v2408 = vmul.f32 %v2400, %v2405
      %v2409 = vmul.f32 %v2069, %v2405
      %v2410 = vmul.f32 %v2077, %v2405
      %v2411 = vmul.f32 %v2382, %v2405
      %v2412 = vmul.f32 %v2401, %v2405
      %v2419 = vrot.slane %v2407, 2
      %v2420 = vrot.slane %v2409, 2
      %v2421 = vsel %vm1452, %v2419, %v2420
      %v2422 = vrot.slane %v2408, 2
      %v2423 = vrot.slane %v2410, 2
      %v2424 = vsel %vm1452, %v2422, %v2423
      %v2425 = vrot.slane %v2411, 2
      %v2426 = vsel %vm1452, %v2420, %v2425
      %v2427 = vrot.slane %v2412, 2
      %v2428 = vsel %vm1452, %v2423, %v2427
      %2429 = vrot.lane.b32.xlu0 %v2421, 120
      %v2430 = vpop.permute.xlu0 %2429
      %2431 = vrot.lane.b32.xlu0 %v2424, 120
      %v2432 = vpop.permute.xlu0 %2431
      %2433 = vrot.lane.b32.xlu0 %v2426, 120
      %v2434 = vpop.permute.xlu0 %2433
      %2435 = vrot.lane.b32.xlu0 %v2428, 120
      %v2436 = vpop.permute.xlu0 %2435
      %v2437 = vsel %vm1156, %v2430, %v2432
      %v2438 = vsel %vm1156, %v2434, %v2436
      %v2441 = vadd.f32 %v2397, %v2437
      %v2442 = vadd.f32 %v2398, %v2438
      %v2443 = vld [vmem:[%s2379 + $0x2] sm:$0x1]
      %v2444 = vperm.slane %v2443, 0
      %2446 = vrot.lane.b32.xlu0 %v2444, 16
      %v2447 = vpop.permute.xlu0 %2446
      %v2449 = vmul.f32 %v2381, %v2447
      %v2450 = vmul.f32 %v2400, %v2447
      %v2451 = vmul.f32 %v2069, %v2447
      %v2452 = vmul.f32 %v2077, %v2447
      %v2453 = vmul.f32 %v2382, %v2447
      %v2454 = vmul.f32 %v2401, %v2447
      %v2461 = vrot.slane %v2449, 2
      %v2462 = vrot.slane %v2451, 2
      %v2463 = vsel %vm1452, %v2461, %v2462
      %v2464 = vrot.slane %v2450, 2
      %v2465 = vrot.slane %v2452, 2
      %v2466 = vsel %vm1452, %v2464, %v2465
      %v2467 = vrot.slane %v2453, 2
      %v2468 = vsel %vm1452, %v2462, %v2467
      %v2469 = vrot.slane %v2454, 2
      %v2470 = vsel %vm1452, %v2465, %v2469
      %2471 = vrot.lane.b32.xlu0 %v2463, 112
      %v2472 = vpop.permute.xlu0 %2471
      %2473 = vrot.lane.b32.xlu0 %v2466, 112
      %v2474 = vpop.permute.xlu0 %2473
      %2475 = vrot.lane.b32.xlu0 %v2468, 112
      %v2476 = vpop.permute.xlu0 %2475
      %2477 = vrot.lane.b32.xlu0 %v2470, 112
      %v2478 = vpop.permute.xlu0 %2477
      %v2479 = vsel %vm1185, %v2472, %v2474
      %v2480 = vsel %vm1185, %v2476, %v2478
      %v2483 = vadd.f32 %v2441, %v2479
      %v2484 = vadd.f32 %v2442, %v2480
      %v2485 = vld [vmem:[%s2379 + $0x3] sm:$0x1]
      %v2486 = vperm.slane %v2485, 0
      %2488 = vrot.lane.b32.xlu0 %v2486, 24
      %v2489 = vpop.permute.xlu0 %2488
      %v2491 = vmul.f32 %v2381, %v2489
      %v2492 = vmul.f32 %v2400, %v2489
      %v2493 = vmul.f32 %v2069, %v2489
      %v2494 = vmul.f32 %v2077, %v2489
      %v2495 = vmul.f32 %v2382, %v2489
      %v2496 = vmul.f32 %v2401, %v2489
      %v2503 = vrot.slane %v2491, 2
      %v2504 = vrot.slane %v2493, 2
      %v2505 = vsel %vm1452, %v2503, %v2504
      %v2506 = vrot.slane %v2492, 2
      %v2507 = vrot.slane %v2494, 2
      %v2508 = vsel %vm1452, %v2506, %v2507
      %v2509 = vrot.slane %v2495, 2
      %v2510 = vsel %vm1452, %v2504, %v2509
      %v2511 = vrot.slane %v2496, 2
      %v2512 = vsel %vm1452, %v2507, %v2511
      %2513 = vrot.lane.b32.xlu0 %v2505, 104
      %v2514 = vpop.permute.xlu0 %2513
      %2515 = vrot.lane.b32.xlu0 %v2508, 104
      %v2516 = vpop.permute.xlu0 %2515
      %2517 = vrot.lane.b32.xlu0 %v2510, 104
      %v2518 = vpop.permute.xlu0 %2517
      %2519 = vrot.lane.b32.xlu0 %v2512, 104
      %v2520 = vpop.permute.xlu0 %2519
      %v2521 = vsel %vm1214, %v2514, %v2516
      %v2522 = vsel %vm1214, %v2518, %v2520
      %v2525 = vadd.f32 %v2483, %v2521
      %v2526 = vadd.f32 %v2484, %v2522
      %v2527 = vld [vmem:[%s2379 + $0x4] sm:$0x1]
      %v2528 = vperm.slane %v2527, 0
      %2530 = vrot.lane.b32.xlu0 %v2528, 32
      %v2531 = vpop.permute.xlu0 %2530
      %v2533 = vmul.f32 %v2381, %v2531
      %v2534 = vmul.f32 %v2400, %v2531
      %v2535 = vmul.f32 %v2069, %v2531
      %v2536 = vmul.f32 %v2077, %v2531
      %v2537 = vmul.f32 %v2382, %v2531
      %v2538 = vmul.f32 %v2401, %v2531
      %v2545 = vrot.slane %v2533, 2
      %v2546 = vrot.slane %v2535, 2
      %v2547 = vsel %vm1452, %v2545, %v2546
      %v2548 = vrot.slane %v2534, 2
      %v2549 = vrot.slane %v2536, 2
      %v2550 = vsel %vm1452, %v2548, %v2549
      %v2551 = vrot.slane %v2537, 2
      %v2552 = vsel %vm1452, %v2546, %v2551
      %v2553 = vrot.slane %v2538, 2
      %v2554 = vsel %vm1452, %v2549, %v2553
      %2555 = vrot.lane.b32.xlu0 %v2547, 96
      %v2556 = vpop.permute.xlu0 %2555
      %2557 = vrot.lane.b32.xlu0 %v2550, 96
      %v2558 = vpop.permute.xlu0 %2557
      %2559 = vrot.lane.b32.xlu0 %v2552, 96
      %v2560 = vpop.permute.xlu0 %2559
      %2561 = vrot.lane.b32.xlu0 %v2554, 96
      %v2562 = vpop.permute.xlu0 %2561
      %v2563 = vsel %vm1243, %v2556, %v2558
      %v2564 = vsel %vm1243, %v2560, %v2562
      %v2567 = vadd.f32 %v2525, %v2563
      %v2568 = vadd.f32 %v2526, %v2564
      %s2569 = scalar_lea.vmem %s9, 24
      %v2570 = vld [vmem:[%s2569] sm:$0x1]
      %v2571 = vld [vmem:[#allocation2] sm:$0xf8]
      %v2572 = vld [vmem:[#allocation2 + $0x20] sm:$0x7]
      %v2573 = vperm.slane %v2570, 0
      %v2574 = vmul.f32 %v2571, %v2573
      %v2575 = vmul.f32 %v2069, %v2573
      %v2576 = vmul.f32 %v2572, %v2573
      %v2580 = vrot.slane %v2574, 3
      %v2581 = vrot.slane %v2575, 3
      %v2582 = vsel %vm1643, %v2580, %v2581
      %v2583 = vrot.slane %v2576, 3
      %v2584 = vsel %vm1643, %v2581, %v2583
      %v2587 = vadd.f32 %v2567, %v2582
      %v2588 = vadd.f32 %v2568, %v2584
      %v2589 = vld [vmem:[%s2569 + $0x1] sm:$0x1]
      %v2590 = vld [vmem:[#allocation2 + $0x8] sm:$0xf8]
      %v2591 = vld [vmem:[#allocation2 + $0x28] sm:$0x7]
      %v2592 = vperm.slane %v2589, 0
      %2594 = vrot.lane.b32.xlu0 %v2592, 8
      %v2595 = vpop.permute.xlu0 %2594
      %v2597 = vmul.f32 %v2571, %v2595
      %v2598 = vmul.f32 %v2590, %v2595
      %v2599 = vmul.f32 %v2069, %v2595
      %v2600 = vmul.f32 %v2077, %v2595
      %v2601 = vmul.f32 %v2572, %v2595
      %v2602 = vmul.f32 %v2591, %v2595
      %v2609 = vrot.slane %v2597, 3
      %v2610 = vrot.slane %v2599, 3
      %v2611 = vsel %vm1643, %v2609, %v2610
      %v2612 = vrot.slane %v2598, 3
      %v2613 = vrot.slane %v2600, 3
      %v2614 = vsel %vm1643, %v2612, %v2613
      %v2615 = vrot.slane %v2601, 3
      %v2616 = vsel %vm1643, %v2610, %v2615
      %v2617 = vrot.slane %v2602, 3
      %v2618 = vsel %vm1643, %v2613, %v2617
      %2619 = vrot.lane.b32.xlu0 %v2611, 120
      %v2620 = vpop.permute.xlu0 %2619
      %2621 = vrot.lane.b32.xlu0 %v2614, 120
      %v2622 = vpop.permute.xlu0 %2621
      %2623 = vrot.lane.b32.xlu0 %v2616, 120
      %v2624 = vpop.permute.xlu0 %2623
      %2625 = vrot.lane.b32.xlu0 %v2618, 120
      %v2626 = vpop.permute.xlu0 %2625
      %v2627 = vsel %vm1156, %v2620, %v2622
      %v2628 = vsel %vm1156, %v2624, %v2626
      %v2631 = vadd.f32 %v2587, %v2627
      %v2632 = vadd.f32 %v2588, %v2628
      %v2633 = vld [vmem:[%s2569 + $0x2] sm:$0x1]
      %v2634 = vperm.slane %v2633, 0
      %2636 = vrot.lane.b32.xlu0 %v2634, 16
      %v2637 = vpop.permute.xlu0 %2636
      %v2639 = vmul.f32 %v2571, %v2637
      %v2640 = vmul.f32 %v2590, %v2637
      %v2641 = vmul.f32 %v2069, %v2637
      %v2642 = vmul.f32 %v2077, %v2637
      %v2643 = vmul.f32 %v2572, %v2637
      %v2644 = vmul.f32 %v2591, %v2637
      %v2651 = vrot.slane %v2639, 3
      %v2652 = vrot.slane %v2641, 3
      %v2653 = vsel %vm1643, %v2651, %v2652
      %v2654 = vrot.slane %v2640, 3
      %v2655 = vrot.slane %v2642, 3
      %v2656 = vsel %vm1643, %v2654, %v2655
      %v2657 = vrot.slane %v2643, 3
      %v2658 = vsel %vm1643, %v2652, %v2657
      %v2659 = vrot.slane %v2644, 3
      %v2660 = vsel %vm1643, %v2655, %v2659
      %2661 = vrot.lane.b32.xlu0 %v2653, 112
      %v2662 = vpop.permute.xlu0 %2661
      %2663 = vrot.lane.b32.xlu0 %v2656, 112
      %v2664 = vpop.permute.xlu0 %2663
      %2665 = vrot.lane.b32.xlu0 %v2658, 112
      %v2666 = vpop.permute.xlu0 %2665
      %2667 = vrot.lane.b32.xlu0 %v2660, 112
      %v2668 = vpop.permute.xlu0 %2667
      %v2669 = vsel %vm1185, %v2662, %v2664
      %v2670 = vsel %vm1185, %v2666, %v2668
      %v2673 = vadd.f32 %v2631, %v2669
      %v2674 = vadd.f32 %v2632, %v2670
      %v2675 = vld [vmem:[%s2569 + $0x3] sm:$0x1]
      %v2676 = vperm.slane %v2675, 0
      %2678 = vrot.lane.b32.xlu0 %v2676, 24
      %v2679 = vpop.permute.xlu0 %2678
      %v2681 = vmul.f32 %v2571, %v2679
      %v2682 = vmul.f32 %v2590, %v2679
      %v2683 = vmul.f32 %v2069, %v2679
      %v2684 = vmul.f32 %v2077, %v2679
      %v2685 = vmul.f32 %v2572, %v2679
      %v2686 = vmul.f32 %v2591, %v2679
      %v2693 = vrot.slane %v2681, 3
      %v2694 = vrot.slane %v2683, 3
      %v2695 = vsel %vm1643, %v2693, %v2694
      %v2696 = vrot.slane %v2682, 3
      %v2697 = vrot.slane %v2684, 3
      %v2698 = vsel %vm1643, %v2696, %v2697
      %v2699 = vrot.slane %v2685, 3
      %v2700 = vsel %vm1643, %v2694, %v2699
      %v2701 = vrot.slane %v2686, 3
      %v2702 = vsel %vm1643, %v2697, %v2701
      %2703 = vrot.lane.b32.xlu0 %v2695, 104
      %v2704 = vpop.permute.xlu0 %2703
      %2705 = vrot.lane.b32.xlu0 %v2698, 104
      %v2706 = vpop.permute.xlu0 %2705
      %2707 = vrot.lane.b32.xlu0 %v2700, 104
      %v2708 = vpop.permute.xlu0 %2707
      %2709 = vrot.lane.b32.xlu0 %v2702, 104
      %v2710 = vpop.permute.xlu0 %2709
      %v2711 = vsel %vm1214, %v2704, %v2706
      %v2712 = vsel %vm1214, %v2708, %v2710
      %v2715 = vadd.f32 %v2673, %v2711
      %v2716 = vadd.f32 %v2674, %v2712
      %v2717 = vld [vmem:[%s2569 + $0x4] sm:$0x1]
      %v2718 = vperm.slane %v2717, 0
      %2720 = vrot.lane.b32.xlu0 %v2718, 32
      %v2721 = vpop.permute.xlu0 %2720
      %v2723 = vmul.f32 %v2571, %v2721
      %v2724 = vmul.f32 %v2590, %v2721
      %v2725 = vmul.f32 %v2069, %v2721
      %v2726 = vmul.f32 %v2077, %v2721
      %v2727 = vmul.f32 %v2572, %v2721
      %v2728 = vmul.f32 %v2591, %v2721
      %v2735 = vrot.slane %v2723, 3
      %v2736 = vrot.slane %v2725, 3
      %v2737 = vsel %vm1643, %v2735, %v2736
      %v2738 = vrot.slane %v2724, 3
      %v2739 = vrot.slane %v2726, 3
      %v2740 = vsel %vm1643, %v2738, %v2739
      %v2741 = vrot.slane %v2727, 3
      %v2742 = vsel %vm1643, %v2736, %v2741
      %v2743 = vrot.slane %v2728, 3
      %v2744 = vsel %vm1643, %v2739, %v2743
      %2745 = vrot.lane.b32.xlu0 %v2737, 96
      %v2746 = vpop.permute.xlu0 %2745
      %2747 = vrot.lane.b32.xlu0 %v2740, 96
      %v2748 = vpop.permute.xlu0 %2747
      %2749 = vrot.lane.b32.xlu0 %v2742, 96
      %v2750 = vpop.permute.xlu0 %2749
      %2751 = vrot.lane.b32.xlu0 %v2744, 96
      %v2752 = vpop.permute.xlu0 %2751
      %v2753 = vsel %vm1243, %v2746, %v2748
      %v2754 = vsel %vm1243, %v2750, %v2752
      %v2757 = vadd.f32 %v2715, %v2753
      %v2758 = vadd.f32 %v2716, %v2754
      %s2759 = scalar_lea.vmem %s9, 32
      %v2760 = vld [vmem:[%s2759] sm:$0x1]
      %v2761 = vld [vmem:[#allocation2] sm:$0xf0]
      %v2762 = vld [vmem:[#allocation2 + $0x20] sm:$0xf]
      %v2763 = vperm.slane %v2760, 0
      %v2764 = vmul.f32 %v2761, %v2763
      %v2765 = vmul.f32 %v2069, %v2763
      %v2766 = vmul.f32 %v2762, %v2763
      %v2770 = vrot.slane %v2764, 4
      %v2771 = vrot.slane %v2765, 4
      %v2772 = vsel %vm1834, %v2770, %v2771
      %v2773 = vrot.slane %v2766, 4
      %v2774 = vsel %vm1834, %v2771, %v2773
      %v2777 = vadd.f32 %v2757, %v2772
      %v2778 = vadd.f32 %v2758, %v2774
      %v2779 = vld [vmem:[%s2759 + $0x1] sm:$0x1]
      %v2780 = vld [vmem:[#allocation2 + $0x8] sm:$0xf0]
      %v2781 = vld [vmem:[#allocation2 + $0x28] sm:$0xf]
      %v2782 = vperm.slane %v2779, 0
      %2784 = vrot.lane.b32.xlu0 %v2782, 8
      %v2785 = vpop.permute.xlu0 %2784
      %v2787 = vmul.f32 %v2761, %v2785
      %v2788 = vmul.f32 %v2780, %v2785
      %v2789 = vmul.f32 %v2069, %v2785
      %v2790 = vmul.f32 %v2077, %v2785
      %v2791 = vmul.f32 %v2762, %v2785
      %v2792 = vmul.f32 %v2781, %v2785
      %v2799 = vrot.slane %v2787, 4
      %v2800 = vrot.slane %v2789, 4
      %v2801 = vsel %vm1834, %v2799, %v2800
      %v2802 = vrot.slane %v2788, 4
      %v2803 = vrot.slane %v2790, 4
      %v2804 = vsel %vm1834, %v2802, %v2803
      %v2805 = vrot.slane %v2791, 4
      %v2806 = vsel %vm1834, %v2800, %v2805
      %v2807 = vrot.slane %v2792, 4
      %v2808 = vsel %vm1834, %v2803, %v2807
      %2809 = vrot.lane.b32.xlu0 %v2801, 120
      %v2810 = vpop.permute.xlu0 %2809
      %2811 = vrot.lane.b32.xlu0 %v2804, 120
      %v2812 = vpop.permute.xlu0 %2811
      %2813 = vrot.lane.b32.xlu0 %v2806, 120
      %v2814 = vpop.permute.xlu0 %2813
      %2815 = vrot.lane.b32.xlu0 %v2808, 120
      %v2816 = vpop.permute.xlu0 %2815
      %v2817 = vsel %vm1156, %v2810, %v2812
      %v2818 = vsel %vm1156, %v2814, %v2816
      %v2821 = vadd.f32 %v2777, %v2817
      %v2822 = vadd.f32 %v2778, %v2818
      %v2823 = vld [vmem:[%s2759 + $0x2] sm:$0x1]
      %v2824 = vperm.slane %v2823, 0
      %2826 = vrot.lane.b32.xlu0 %v2824, 16
      %v2827 = vpop.permute.xlu0 %2826
      %v2829 = vmul.f32 %v2761, %v2827
      %v2830 = vmul.f32 %v2780, %v2827
      %v2831 = vmul.f32 %v2069, %v2827
      %v2832 = vmul.f32 %v2077, %v2827
      %v2833 = vmul.f32 %v2762, %v2827
      %v2834 = vmul.f32 %v2781, %v2827
      %v2841 = vrot.slane %v2829, 4
      %v2842 = vrot.slane %v2831, 4
      %v2843 = vsel %vm1834, %v2841, %v2842
      %v2844 = vrot.slane %v2830, 4
      %v2845 = vrot.slane %v2832, 4
      %v2846 = vsel %vm1834, %v2844, %v2845
      %v2847 = vrot.slane %v2833, 4
      %v2848 = vsel %vm1834, %v2842, %v2847
      %v2849 = vrot.slane %v2834, 4
      %v2850 = vsel %vm1834, %v2845, %v2849
      %2851 = vrot.lane.b32.xlu0 %v2843, 112
      %v2852 = vpop.permute.xlu0 %2851
      %2853 = vrot.lane.b32.xlu0 %v2846, 112
      %v2854 = vpop.permute.xlu0 %2853
      %2855 = vrot.lane.b32.xlu0 %v2848, 112
      %v2856 = vpop.permute.xlu0 %2855
      %2857 = vrot.lane.b32.xlu0 %v2850, 112
      %v2858 = vpop.permute.xlu0 %2857
      %v2859 = vsel %vm1185, %v2852, %v2854
      %v2860 = vsel %vm1185, %v2856, %v2858
      %v2863 = vadd.f32 %v2821, %v2859
      %v2864 = vadd.f32 %v2822, %v2860
      %v2865 = vld [vmem:[%s2759 + $0x3] sm:$0x1]
      %v2866 = vperm.slane %v2865, 0
      %2868 = vrot.lane.b32.xlu0 %v2866, 24
      %v2869 = vpop.permute.xlu0 %2868
      %v2871 = vmul.f32 %v2761, %v2869
      %v2872 = vmul.f32 %v2780, %v2869
      %v2873 = vmul.f32 %v2069, %v2869
      %v2874 = vmul.f32 %v2077, %v2869
      %v2875 = vmul.f32 %v2762, %v2869
      %v2876 = vmul.f32 %v2781, %v2869
      %v2883 = vrot.slane %v2871, 4
      %v2884 = vrot.slane %v2873, 4
      %v2885 = vsel %vm1834, %v2883, %v2884
      %v2886 = vrot.slane %v2872, 4
      %v2887 = vrot.slane %v2874, 4
      %v2888 = vsel %vm1834, %v2886, %v2887
      %v2889 = vrot.slane %v2875, 4
      %v2890 = vsel %vm1834, %v2884, %v2889
      %v2891 = vrot.slane %v2876, 4
      %v2892 = vsel %vm1834, %v2887, %v2891
      %2893 = vrot.lane.b32.xlu0 %v2885, 104
      %v2894 = vpop.permute.xlu0 %2893
      %2895 = vrot.lane.b32.xlu0 %v2888, 104
      %v2896 = vpop.permute.xlu0 %2895
      %2897 = vrot.lane.b32.xlu0 %v2890, 104
      %v2898 = vpop.permute.xlu0 %2897
      %2899 = vrot.lane.b32.xlu0 %v2892, 104
      %v2900 = vpop.permute.xlu0 %2899
      %v2901 = vsel %vm1214, %v2894, %v2896
      %v2902 = vsel %vm1214, %v2898, %v2900
      %v2905 = vadd.f32 %v2863, %v2901
      %v2906 = vadd.f32 %v2864, %v2902
      %v2907 = vld [vmem:[%s2759 + $0x4] sm:$0x1]
      %v2908 = vperm.slane %v2907, 0
      %2910 = vrot.lane.b32.xlu0 %v2908, 32
      %v2911 = vpop.permute.xlu0 %2910
      %v2913 = vmul.f32 %v2761, %v2911
      %v2914 = vmul.f32 %v2780, %v2911
      %v2915 = vmul.f32 %v2069, %v2911
      %v2916 = vmul.f32 %v2077, %v2911
      %v2917 = vmul.f32 %v2762, %v2911
      %v2918 = vmul.f32 %v2781, %v2911
      %v2925 = vrot.slane %v2913, 4
      %v2926 = vrot.slane %v2915, 4
      %v2927 = vsel %vm1834, %v2925, %v2926
      %v2928 = vrot.slane %v2914, 4
      %v2929 = vrot.slane %v2916, 4
      %v2930 = vsel %vm1834, %v2928, %v2929
      %v2931 = vrot.slane %v2917, 4
      %v2932 = vsel %vm1834, %v2926, %v2931
      %v2933 = vrot.slane %v2918, 4
      %v2934 = vsel %vm1834, %v2929, %v2933
      %2935 = vrot.lane.b32.xlu0 %v2927, 96
      %v2936 = vpop.permute.xlu0 %2935
      %2937 = vrot.lane.b32.xlu0 %v2930, 96
      %v2938 = vpop.permute.xlu0 %2937
      %2939 = vrot.lane.b32.xlu0 %v2932, 96
      %v2940 = vpop.permute.xlu0 %2939
      %2941 = vrot.lane.b32.xlu0 %v2934, 96
      %v2942 = vpop.permute.xlu0 %2941
      %v2943 = vsel %vm1243, %v2936, %v2938
      %v2944 = vsel %vm1243, %v2940, %v2942
      %v2947 = vadd.f32 %v2905, %v2943
      %v2948 = vadd.f32 %v2906, %v2944
      %v2949 = vld [vmem:[%s1047] sm:$0xf]
      %v2950 = vld [vmem:[%s1047 + $0x4] sm:$0xf]
      %v2951 = vunpack.c.l.bf16 %v2949
      %v2952 = vunpack.c.l.bf16 %v2950
      %v2953 = vadd.f32 %v2947, %v2951
      %v2954 = vadd.f32 %v2948, %v2952
      %v2955 = vpack.c.bf16 %v2953, %v2953
      %v2956 = vpack.c.bf16 %v2954, %v2954
      %2957 = vst [vmem:[%s1027] sm:$0xf] %v2955
      %2958 = vst [vmem:[%s1027 + $0x4] sm:$0xf] %v2956
      %v2959 = vld [vmem:[%s943] sm:$0xf]
      %v2960 = vld [vmem:[%s943 + $0x4] sm:$0xf]
      %v2961 = vunpack.c.l.bf16 %v2959
      %v2962 = vunpack.c.l.bf16 %v2960
      %v2965 = vrot.slane %v2961, 6
      %v2966 = vrot.slane %v2962, 6
      %v2967 = vsel %vm1065, %v2965, %v2966
      %2968 = vrot.lane.b32.xlu0 %v2965, 16
      %v2969 = vpop.permute.xlu0 %2968
      %2970 = vrot.lane.b32.xlu0 %v2967, 16
      %v2971 = vpop.permute.xlu0 %2970
      %2972 = vrot.lane.b32.xlu0 %v2966, 16
      %v2973 = vpop.permute.xlu0 %2972
      %2977 = vst.msk [vmem:[#allocation2] sm:$0xfc] %vm1078, %v2969
      %2978 = vst.msk [vmem:[#allocation2 + $0x8] sm:$0xfc] %vm1080, %v2969
      %2979 = vst.msk [vmem:[#allocation2 + $0x10] sm:$0xff] %vm1082, %v2971
      %2980 = vst.msk [vmem:[#allocation2 + $0x18] sm:$0xff] %vm1049, %v2971
      %2981 = vst.msk [vmem:[#allocation2 + $0x20] sm:$0x3] %vm1085, %v2973
      %2982 = vst.msk [vmem:[#allocation2 + $0x28] sm:$0x3] %vm1087, %v2973
      %v2983 = vld [vmem:[%s956 + $0x4] sm:$0x8]
      %v2984 = vunpack.c.l.bf16 %v2983
      %v2985 = vsel %vm1094, %v2984, 0.0
      %v2987 = vrot.slane %v2985, 6
      %2988 = vrot.lane.b32.xlu0 %v2987, 16
      %v2989 = vpop.permute.xlu0 %2988
      %2991 = vst.msk [vmem:[#allocation2] sm:$0x3] %vm1085, %v2989
      %2992 = vst.msk [vmem:[#allocation2 + $0x8] sm:$0x3] %vm1087, %v2989
      %v2993 = vld [vmem:[%s972] sm:$0x1]
      %v2994 = vunpack.c.l.bf16 %v2993
      %v2995 = vsel %vm1108, %v2994, 0.0
      %v2997 = vrot.slane %v2995, 6
      %2998 = vrot.lane.b32.xlu0 %v2997, 16
      %v2999 = vpop.permute.xlu0 %2998
      %3001 = vst.msk [vmem:[#allocation2 + $0x20] sm:$0xc] %vm1115, %v2999
      %3002 = vst.msk [vmem:[#allocation2 + $0x28] sm:$0xc] %vm1117, %v2999
      %v3003 = vld [vmem:[%s13] sm:$0x1]
      %v3005 = vperm.slane %v3003, 0
      %v3007 = vadd.f32 %v3005, 0.0
      %v3008 = vld [vmem:[%s10] sm:$0x1]
      %v3009 = vld [vmem:[#allocation2] sm:$0xff]
      %v3010 = vld [vmem:[#allocation2 + $0x10] sm:$0xff]
      %v3011 = vperm.slane %v3008, 0
      %v3012 = vmul.f32 %v3009, %v3011
      %v3013 = vmul.f32 %v3010, %v3011
      %v3014 = vadd.f32 %v3007, %v3012
      %v3015 = vadd.f32 %v3007, %v3013
      %v3016 = vld [vmem:[%s10 + $0x1] sm:$0x1]
      %v3017 = vld [vmem:[#allocation2 + $0x8] sm:$0xff]
      %v3018 = vld [vmem:[#allocation2 + $0x18] sm:$0xff]
      %v3019 = vperm.slane %v3016, 0
      %3021 = vrot.lane.b32.xlu0 %v3019, 8
      %v3022 = vpop.permute.xlu0 %3021
      %v3024 = vmul.f32 %v3009, %v3022
      %v3025 = vmul.f32 %v3017, %v3022
      %v3026 = vmul.f32 %v3010, %v3022
      %v3027 = vmul.f32 %v3018, %v3022
      %3032 = vrot.lane.b32.xlu0 %v3024, 120
      %v3033 = vpop.permute.xlu0 %3032
      %3034 = vrot.lane.b32.xlu0 %v3025, 120
      %v3035 = vpop.permute.xlu0 %3034
      %3036 = vrot.lane.b32.xlu0 %v3026, 120
      %v3037 = vpop.permute.xlu0 %3036
      %3038 = vrot.lane.b32.xlu0 %v3027, 120
      %v3039 = vpop.permute.xlu0 %3038
      %v3040 = vsel %vm1156, %v3033, %v3035
      %v3041 = vsel %vm1156, %v3037, %v3039
      %v3044 = vadd.f32 %v3014, %v3040
      %v3045 = vadd.f32 %v3015, %v3041
      %v3046 = vld [vmem:[%s10 + $0x2] sm:$0x1]
      %v3047 = vperm.slane %v3046, 0
      %3049 = vrot.lane.b32.xlu0 %v3047, 16
      %v3050 = vpop.permute.xlu0 %3049
      %v3052 = vmul.f32 %v3009, %v3050
      %v3053 = vmul.f32 %v3017, %v3050
      %v3054 = vmul.f32 %v3010, %v3050
      %v3055 = vmul.f32 %v3018, %v3050
      %3060 = vrot.lane.b32.xlu0 %v3052, 112
      %v3061 = vpop.permute.xlu0 %3060
      %3062 = vrot.lane.b32.xlu0 %v3053, 112
      %v3063 = vpop.permute.xlu0 %3062
      %3064 = vrot.lane.b32.xlu0 %v3054, 112
      %v3065 = vpop.permute.xlu0 %3064
      %3066 = vrot.lane.b32.xlu0 %v3055, 112
      %v3067 = vpop.permute.xlu0 %3066
      %v3068 = vsel %vm1185, %v3061, %v3063
      %v3069 = vsel %vm1185, %v3065, %v3067
      %v3072 = vadd.f32 %v3044, %v3068
      %v3073 = vadd.f32 %v3045, %v3069
      %v3074 = vld [vmem:[%s10 + $0x3] sm:$0x1]
      %v3075 = vperm.slane %v3074, 0
      %3077 = vrot.lane.b32.xlu0 %v3075, 24
      %v3078 = vpop.permute.xlu0 %3077
      %v3080 = vmul.f32 %v3009, %v3078
      %v3081 = vmul.f32 %v3017, %v3078
      %v3082 = vmul.f32 %v3010, %v3078
      %v3083 = vmul.f32 %v3018, %v3078
      %3088 = vrot.lane.b32.xlu0 %v3080, 104
      %v3089 = vpop.permute.xlu0 %3088
      %3090 = vrot.lane.b32.xlu0 %v3081, 104
      %v3091 = vpop.permute.xlu0 %3090
      %3092 = vrot.lane.b32.xlu0 %v3082, 104
      %v3093 = vpop.permute.xlu0 %3092
      %3094 = vrot.lane.b32.xlu0 %v3083, 104
      %v3095 = vpop.permute.xlu0 %3094
      %v3096 = vsel %vm1214, %v3089, %v3091
      %v3097 = vsel %vm1214, %v3093, %v3095
      %v3100 = vadd.f32 %v3072, %v3096
      %v3101 = vadd.f32 %v3073, %v3097
      %v3102 = vld [vmem:[%s10 + $0x4] sm:$0x1]
      %v3103 = vperm.slane %v3102, 0
      %3105 = vrot.lane.b32.xlu0 %v3103, 32
      %v3106 = vpop.permute.xlu0 %3105
      %v3108 = vmul.f32 %v3009, %v3106
      %v3109 = vmul.f32 %v3017, %v3106
      %v3110 = vmul.f32 %v3010, %v3106
      %v3111 = vmul.f32 %v3018, %v3106
      %3116 = vrot.lane.b32.xlu0 %v3108, 96
      %v3117 = vpop.permute.xlu0 %3116
      %3118 = vrot.lane.b32.xlu0 %v3109, 96
      %v3119 = vpop.permute.xlu0 %3118
      %3120 = vrot.lane.b32.xlu0 %v3110, 96
      %v3121 = vpop.permute.xlu0 %3120
      %3122 = vrot.lane.b32.xlu0 %v3111, 96
      %v3123 = vpop.permute.xlu0 %3122
      %v3124 = vsel %vm1243, %v3117, %v3119
      %v3125 = vsel %vm1243, %v3121, %v3123
      %v3128 = vadd.f32 %v3100, %v3124
      %v3129 = vadd.f32 %v3101, %v3125
      %s3130 = scalar_lea.vmem %s10, 8
      %v3131 = vld [vmem:[%s3130] sm:$0x1]
      %v3132 = vld [vmem:[#allocation2] sm:$0xfe]
      %v3133 = vld [vmem:[#allocation2 + $0x20] sm:$0x1]
      %v3134 = vperm.slane %v3131, 0
      %v3135 = vmul.f32 %v3132, %v3134
      %v3136 = vmul.f32 %v3010, %v3134
      %v3137 = vmul.f32 %v3133, %v3134
      %v3141 = vrot.slane %v3135, 1
      %v3142 = vrot.slane %v3136, 1
      %v3143 = vsel %vm1261, %v3141, %v3142
      %v3144 = vrot.slane %v3137, 1
      %v3145 = vsel %vm1261, %v3142, %v3144
      %v3148 = vadd.f32 %v3128, %v3143
      %v3149 = vadd.f32 %v3129, %v3145
      %v3150 = vld [vmem:[%s3130 + $0x1] sm:$0x1]
      %v3151 = vld [vmem:[#allocation2 + $0x8] sm:$0xfe]
      %v3152 = vld [vmem:[#allocation2 + $0x28] sm:$0x1]
      %v3153 = vperm.slane %v3150, 0
      %3155 = vrot.lane.b32.xlu0 %v3153, 8
      %v3156 = vpop.permute.xlu0 %3155
      %v3158 = vmul.f32 %v3132, %v3156
      %v3159 = vmul.f32 %v3151, %v3156
      %v3160 = vmul.f32 %v3010, %v3156
      %v3161 = vmul.f32 %v3018, %v3156
      %v3162 = vmul.f32 %v3133, %v3156
      %v3163 = vmul.f32 %v3152, %v3156
      %v3170 = vrot.slane %v3158, 1
      %v3171 = vrot.slane %v3160, 1
      %v3172 = vsel %vm1261, %v3170, %v3171
      %v3173 = vrot.slane %v3159, 1
      %v3174 = vrot.slane %v3161, 1
      %v3175 = vsel %vm1261, %v3173, %v3174
      %v3176 = vrot.slane %v3162, 1
      %v3177 = vsel %vm1261, %v3171, %v3176
      %v3178 = vrot.slane %v3163, 1
      %v3179 = vsel %vm1261, %v3174, %v3178
      %3180 = vrot.lane.b32.xlu0 %v3172, 120
      %v3181 = vpop.permute.xlu0 %3180
      %3182 = vrot.lane.b32.xlu0 %v3175, 120
      %v3183 = vpop.permute.xlu0 %3182
      %3184 = vrot.lane.b32.xlu0 %v3177, 120
      %v3185 = vpop.permute.xlu0 %3184
      %3186 = vrot.lane.b32.xlu0 %v3179, 120
      %v3187 = vpop.permute.xlu0 %3186
      %v3188 = vsel %vm1156, %v3181, %v3183
      %v3189 = vsel %vm1156, %v3185, %v3187
      %v3192 = vadd.f32 %v3148, %v3188
      %v3193 = vadd.f32 %v3149, %v3189
      %v3194 = vld [vmem:[%s3130 + $0x2] sm:$0x1]
      %v3195 = vperm.slane %v3194, 0
      %3197 = vrot.lane.b32.xlu0 %v3195, 16
      %v3198 = vpop.permute.xlu0 %3197
      %v3200 = vmul.f32 %v3132, %v3198
      %v3201 = vmul.f32 %v3151, %v3198
      %v3202 = vmul.f32 %v3010, %v3198
      %v3203 = vmul.f32 %v3018, %v3198
      %v3204 = vmul.f32 %v3133, %v3198
      %v3205 = vmul.f32 %v3152, %v3198
      %v3212 = vrot.slane %v3200, 1
      %v3213 = vrot.slane %v3202, 1
      %v3214 = vsel %vm1261, %v3212, %v3213
      %v3215 = vrot.slane %v3201, 1
      %v3216 = vrot.slane %v3203, 1
      %v3217 = vsel %vm1261, %v3215, %v3216
      %v3218 = vrot.slane %v3204, 1
      %v3219 = vsel %vm1261, %v3213, %v3218
      %v3220 = vrot.slane %v3205, 1
      %v3221 = vsel %vm1261, %v3216, %v3220
      %3222 = vrot.lane.b32.xlu0 %v3214, 112
      %v3223 = vpop.permute.xlu0 %3222
      %3224 = vrot.lane.b32.xlu0 %v3217, 112
      %v3225 = vpop.permute.xlu0 %3224
      %3226 = vrot.lane.b32.xlu0 %v3219, 112
      %v3227 = vpop.permute.xlu0 %3226
      %3228 = vrot.lane.b32.xlu0 %v3221, 112
      %v3229 = vpop.permute.xlu0 %3228
      %v3230 = vsel %vm1185, %v3223, %v3225
      %v3231 = vsel %vm1185, %v3227, %v3229
      %v3234 = vadd.f32 %v3192, %v3230
      %v3235 = vadd.f32 %v3193, %v3231
      %v3236 = vld [vmem:[%s3130 + $0x3] sm:$0x1]
      %v3237 = vperm.slane %v3236, 0
      %3239 = vrot.lane.b32.xlu0 %v3237, 24
      %v3240 = vpop.permute.xlu0 %3239
      %v3242 = vmul.f32 %v3132, %v3240
      %v3243 = vmul.f32 %v3151, %v3240
      %v3244 = vmul.f32 %v3010, %v3240
      %v3245 = vmul.f32 %v3018, %v3240
      %v3246 = vmul.f32 %v3133, %v3240
      %v3247 = vmul.f32 %v3152, %v3240
      %v3254 = vrot.slane %v3242, 1
      %v3255 = vrot.slane %v3244, 1
      %v3256 = vsel %vm1261, %v3254, %v3255
      %v3257 = vrot.slane %v3243, 1
      %v3258 = vrot.slane %v3245, 1
      %v3259 = vsel %vm1261, %v3257, %v3258
      %v3260 = vrot.slane %v3246, 1
      %v3261 = vsel %vm1261, %v3255, %v3260
      %v3262 = vrot.slane %v3247, 1
      %v3263 = vsel %vm1261, %v3258, %v3262
      %3264 = vrot.lane.b32.xlu0 %v3256, 104
      %v3265 = vpop.permute.xlu0 %3264
      %3266 = vrot.lane.b32.xlu0 %v3259, 104
      %v3267 = vpop.permute.xlu0 %3266
      %3268 = vrot.lane.b32.xlu0 %v3261, 104
      %v3269 = vpop.permute.xlu0 %3268
      %3270 = vrot.lane.b32.xlu0 %v3263, 104
      %v3271 = vpop.permute.xlu0 %3270
      %v3272 = vsel %vm1214, %v3265, %v3267
      %v3273 = vsel %vm1214, %v3269, %v3271
      %v3276 = vadd.f32 %v3234, %v3272
      %v3277 = vadd.f32 %v3235, %v3273
      %v3278 = vld [vmem:[%s3130 + $0x4] sm:$0x1]
      %v3279 = vperm.slane %v3278, 0
      %3281 = vrot.lane.b32.xlu0 %v3279, 32
      %v3282 = vpop.permute.xlu0 %3281
      %v3284 = vmul.f32 %v3132, %v3282
      %v3285 = vmul.f32 %v3151, %v3282
      %v3286 = vmul.f32 %v3010, %v3282
      %v3287 = vmul.f32 %v3018, %v3282
      %v3288 = vmul.f32 %v3133, %v3282
      %v3289 = vmul.f32 %v3152, %v3282
      %v3296 = vrot.slane %v3284, 1
      %v3297 = vrot.slane %v3286, 1
      %v3298 = vsel %vm1261, %v3296, %v3297
      %v3299 = vrot.slane %v3285, 1
      %v3300 = vrot.slane %v3287, 1
      %v3301 = vsel %vm1261, %v3299, %v3300
      %v3302 = vrot.slane %v3288, 1
      %v3303 = vsel %vm1261, %v3297, %v3302
      %v3304 = vrot.slane %v3289, 1
      %v3305 = vsel %vm1261, %v3300, %v3304
      %3306 = vrot.lane.b32.xlu0 %v3298, 96
      %v3307 = vpop.permute.xlu0 %3306
      %3308 = vrot.lane.b32.xlu0 %v3301, 96
      %v3309 = vpop.permute.xlu0 %3308
      %3310 = vrot.lane.b32.xlu0 %v3303, 96
      %v3311 = vpop.permute.xlu0 %3310
      %3312 = vrot.lane.b32.xlu0 %v3305, 96
      %v3313 = vpop.permute.xlu0 %3312
      %v3314 = vsel %vm1243, %v3307, %v3309
      %v3315 = vsel %vm1243, %v3311, %v3313
      %v3318 = vadd.f32 %v3276, %v3314
      %v3319 = vadd.f32 %v3277, %v3315
      %s3320 = scalar_lea.vmem %s10, 16
      %v3321 = vld [vmem:[%s3320] sm:$0x1]
      %v3322 = vld [vmem:[#allocation2] sm:$0xfc]
      %v3323 = vld [vmem:[#allocation2 + $0x20] sm:$0x3]
      %v3324 = vperm.slane %v3321, 0
      %v3325 = vmul.f32 %v3322, %v3324
      %v3326 = vmul.f32 %v3010, %v3324
      %v3327 = vmul.f32 %v3323, %v3324
      %v3331 = vrot.slane %v3325, 2
      %v3332 = vrot.slane %v3326, 2
      %v3333 = vsel %vm1452, %v3331, %v3332
      %v3334 = vrot.slane %v3327, 2
      %v3335 = vsel %vm1452, %v3332, %v3334
      %v3338 = vadd.f32 %v3318, %v3333
      %v3339 = vadd.f32 %v3319, %v3335
      %v3340 = vld [vmem:[%s3320 + $0x1] sm:$0x1]
      %v3341 = vld [vmem:[#allocation2 + $0x8] sm:$0xfc]
      %v3342 = vld [vmem:[#allocation2 + $0x28] sm:$0x3]
      %v3343 = vperm.slane %v3340, 0
      %3345 = vrot.lane.b32.xlu0 %v3343, 8
      %v3346 = vpop.permute.xlu0 %3345
      %v3348 = vmul.f32 %v3322, %v3346
      %v3349 = vmul.f32 %v3341, %v3346
      %v3350 = vmul.f32 %v3010, %v3346
      %v3351 = vmul.f32 %v3018, %v3346
      %v3352 = vmul.f32 %v3323, %v3346
      %v3353 = vmul.f32 %v3342, %v3346
      %v3360 = vrot.slane %v3348, 2
      %v3361 = vrot.slane %v3350, 2
      %v3362 = vsel %vm1452, %v3360, %v3361
      %v3363 = vrot.slane %v3349, 2
      %v3364 = vrot.slane %v3351, 2
      %v3365 = vsel %vm1452, %v3363, %v3364
      %v3366 = vrot.slane %v3352, 2
      %v3367 = vsel %vm1452, %v3361, %v3366
      %v3368 = vrot.slane %v3353, 2
      %v3369 = vsel %vm1452, %v3364, %v3368
      %3370 = vrot.lane.b32.xlu0 %v3362, 120
      %v3371 = vpop.permute.xlu0 %3370
      %3372 = vrot.lane.b32.xlu0 %v3365, 120
      %v3373 = vpop.permute.xlu0 %3372
      %3374 = vrot.lane.b32.xlu0 %v3367, 120
      %v3375 = vpop.permute.xlu0 %3374
      %3376 = vrot.lane.b32.xlu0 %v3369, 120
      %v3377 = vpop.permute.xlu0 %3376
      %v3378 = vsel %vm1156, %v3371, %v3373
      %v3379 = vsel %vm1156, %v3375, %v3377
      %v3382 = vadd.f32 %v3338, %v3378
      %v3383 = vadd.f32 %v3339, %v3379
      %v3384 = vld [vmem:[%s3320 + $0x2] sm:$0x1]
      %v3385 = vperm.slane %v3384, 0
      %3387 = vrot.lane.b32.xlu0 %v3385, 16
      %v3388 = vpop.permute.xlu0 %3387
      %v3390 = vmul.f32 %v3322, %v3388
      %v3391 = vmul.f32 %v3341, %v3388
      %v3392 = vmul.f32 %v3010, %v3388
      %v3393 = vmul.f32 %v3018, %v3388
      %v3394 = vmul.f32 %v3323, %v3388
      %v3395 = vmul.f32 %v3342, %v3388
      %v3402 = vrot.slane %v3390, 2
      %v3403 = vrot.slane %v3392, 2
      %v3404 = vsel %vm1452, %v3402, %v3403
      %v3405 = vrot.slane %v3391, 2
      %v3406 = vrot.slane %v3393, 2
      %v3407 = vsel %vm1452, %v3405, %v3406
      %v3408 = vrot.slane %v3394, 2
      %v3409 = vsel %vm1452, %v3403, %v3408
      %v3410 = vrot.slane %v3395, 2
      %v3411 = vsel %vm1452, %v3406, %v3410
      %3412 = vrot.lane.b32.xlu0 %v3404, 112
      %v3413 = vpop.permute.xlu0 %3412
      %3414 = vrot.lane.b32.xlu0 %v3407, 112
      %v3415 = vpop.permute.xlu0 %3414
      %3416 = vrot.lane.b32.xlu0 %v3409, 112
      %v3417 = vpop.permute.xlu0 %3416
      %3418 = vrot.lane.b32.xlu0 %v3411, 112
      %v3419 = vpop.permute.xlu0 %3418
      %v3420 = vsel %vm1185, %v3413, %v3415
      %v3421 = vsel %vm1185, %v3417, %v3419
      %v3424 = vadd.f32 %v3382, %v3420
      %v3425 = vadd.f32 %v3383, %v3421
      %v3426 = vld [vmem:[%s3320 + $0x3] sm:$0x1]
      %v3427 = vperm.slane %v3426, 0
      %3429 = vrot.lane.b32.xlu0 %v3427, 24
      %v3430 = vpop.permute.xlu0 %3429
      %v3432 = vmul.f32 %v3322, %v3430
      %v3433 = vmul.f32 %v3341, %v3430
      %v3434 = vmul.f32 %v3010, %v3430
      %v3435 = vmul.f32 %v3018, %v3430
      %v3436 = vmul.f32 %v3323, %v3430
      %v3437 = vmul.f32 %v3342, %v3430
      %v3444 = vrot.slane %v3432, 2
      %v3445 = vrot.slane %v3434, 2
      %v3446 = vsel %vm1452, %v3444, %v3445
      %v3447 = vrot.slane %v3433, 2
      %v3448 = vrot.slane %v3435, 2
      %v3449 = vsel %vm1452, %v3447, %v3448
      %v3450 = vrot.slane %v3436, 2
      %v3451 = vsel %vm1452, %v3445, %v3450
      %v3452 = vrot.slane %v3437, 2
      %v3453 = vsel %vm1452, %v3448, %v3452
      %3454 = vrot.lane.b32.xlu0 %v3446, 104
      %v3455 = vpop.permute.xlu0 %3454
      %3456 = vrot.lane.b32.xlu0 %v3449, 104
      %v3457 = vpop.permute.xlu0 %3456
      %3458 = vrot.lane.b32.xlu0 %v3451, 104
      %v3459 = vpop.permute.xlu0 %3458
      %3460 = vrot.lane.b32.xlu0 %v3453, 104
      %v3461 = vpop.permute.xlu0 %3460
      %v3462 = vsel %vm1214, %v3455, %v3457
      %v3463 = vsel %vm1214, %v3459, %v3461
      %v3466 = vadd.f32 %v3424, %v3462
      %v3467 = vadd.f32 %v3425, %v3463
      %v3468 = vld [vmem:[%s3320 + $0x4] sm:$0x1]
      %v3469 = vperm.slane %v3468, 0
      %3471 = vrot.lane.b32.xlu0 %v3469, 32
      %v3472 = vpop.permute.xlu0 %3471
      %v3474 = vmul.f32 %v3322, %v3472
      %v3475 = vmul.f32 %v3341, %v3472
      %v3476 = vmul.f32 %v3010, %v3472
      %v3477 = vmul.f32 %v3018, %v3472
      %v3478 = vmul.f32 %v3323, %v3472
      %v3479 = vmul.f32 %v3342, %v3472
      %v3486 = vrot.slane %v3474, 2
      %v3487 = vrot.slane %v3476, 2
      %v3488 = vsel %vm1452, %v3486, %v3487
      %v3489 = vrot.slane %v3475, 2
      %v3490 = vrot.slane %v3477, 2
      %v3491 = vsel %vm1452, %v3489, %v3490
      %v3492 = vrot.slane %v3478, 2
      %v3493 = vsel %vm1452, %v3487, %v3492
      %v3494 = vrot.slane %v3479, 2
      %v3495 = vsel %vm1452, %v3490, %v3494
      %3496 = vrot.lane.b32.xlu0 %v3488, 96
      %v3497 = vpop.permute.xlu0 %3496
      %3498 = vrot.lane.b32.xlu0 %v3491, 96
      %v3499 = vpop.permute.xlu0 %3498
      %3500 = vrot.lane.b32.xlu0 %v3493, 96
      %v3501 = vpop.permute.xlu0 %3500
      %3502 = vrot.lane.b32.xlu0 %v3495, 96
      %v3503 = vpop.permute.xlu0 %3502
      %v3504 = vsel %vm1243, %v3497, %v3499
      %v3505 = vsel %vm1243, %v3501, %v3503
      %v3508 = vadd.f32 %v3466, %v3504
      %v3509 = vadd.f32 %v3467, %v3505
      %s3510 = scalar_lea.vmem %s10, 24
      %v3511 = vld [vmem:[%s3510] sm:$0x1]
      %v3512 = vld [vmem:[#allocation2] sm:$0xf8]
      %v3513 = vld [vmem:[#allocation2 + $0x20] sm:$0x7]
      %v3514 = vperm.slane %v3511, 0
      %v3515 = vmul.f32 %v3512, %v3514
      %v3516 = vmul.f32 %v3010, %v3514
      %v3517 = vmul.f32 %v3513, %v3514
      %v3521 = vrot.slane %v3515, 3
      %v3522 = vrot.slane %v3516, 3
      %v3523 = vsel %vm1643, %v3521, %v3522
      %v3524 = vrot.slane %v3517, 3
      %v3525 = vsel %vm1643, %v3522, %v3524
      %v3528 = vadd.f32 %v3508, %v3523
      %v3529 = vadd.f32 %v3509, %v3525
      %v3530 = vld [vmem:[%s3510 + $0x1] sm:$0x1]
      %v3531 = vld [vmem:[#allocation2 + $0x8] sm:$0xf8]
      %v3532 = vld [vmem:[#allocation2 + $0x28] sm:$0x7]
      %v3533 = vperm.slane %v3530, 0
      %3535 = vrot.lane.b32.xlu0 %v3533, 8
      %v3536 = vpop.permute.xlu0 %3535
      %v3538 = vmul.f32 %v3512, %v3536
      %v3539 = vmul.f32 %v3531, %v3536
      %v3540 = vmul.f32 %v3010, %v3536
      %v3541 = vmul.f32 %v3018, %v3536
      %v3542 = vmul.f32 %v3513, %v3536
      %v3543 = vmul.f32 %v3532, %v3536
      %v3550 = vrot.slane %v3538, 3
      %v3551 = vrot.slane %v3540, 3
      %v3552 = vsel %vm1643, %v3550, %v3551
      %v3553 = vrot.slane %v3539, 3
      %v3554 = vrot.slane %v3541, 3
      %v3555 = vsel %vm1643, %v3553, %v3554
      %v3556 = vrot.slane %v3542, 3
      %v3557 = vsel %vm1643, %v3551, %v3556
      %v3558 = vrot.slane %v3543, 3
      %v3559 = vsel %vm1643, %v3554, %v3558
      %3560 = vrot.lane.b32.xlu0 %v3552, 120
      %v3561 = vpop.permute.xlu0 %3560
      %3562 = vrot.lane.b32.xlu0 %v3555, 120
      %v3563 = vpop.permute.xlu0 %3562
      %3564 = vrot.lane.b32.xlu0 %v3557, 120
      %v3565 = vpop.permute.xlu0 %3564
      %3566 = vrot.lane.b32.xlu0 %v3559, 120
      %v3567 = vpop.permute.xlu0 %3566
      %v3568 = vsel %vm1156, %v3561, %v3563
      %v3569 = vsel %vm1156, %v3565, %v3567
      %v3572 = vadd.f32 %v3528, %v3568
      %v3573 = vadd.f32 %v3529, %v3569
      %v3574 = vld [vmem:[%s3510 + $0x2] sm:$0x1]
      %v3575 = vperm.slane %v3574, 0
      %3577 = vrot.lane.b32.xlu0 %v3575, 16
      %v3578 = vpop.permute.xlu0 %3577
      %v3580 = vmul.f32 %v3512, %v3578
      %v3581 = vmul.f32 %v3531, %v3578
      %v3582 = vmul.f32 %v3010, %v3578
      %v3583 = vmul.f32 %v3018, %v3578
      %v3584 = vmul.f32 %v3513, %v3578
      %v3585 = vmul.f32 %v3532, %v3578
      %v3592 = vrot.slane %v3580, 3
      %v3593 = vrot.slane %v3582, 3
      %v3594 = vsel %vm1643, %v3592, %v3593
      %v3595 = vrot.slane %v3581, 3
      %v3596 = vrot.slane %v3583, 3
      %v3597 = vsel %vm1643, %v3595, %v3596
      %v3598 = vrot.slane %v3584, 3
      %v3599 = vsel %vm1643, %v3593, %v3598
      %v3600 = vrot.slane %v3585, 3
      %v3601 = vsel %vm1643, %v3596, %v3600
      %3602 = vrot.lane.b32.xlu0 %v3594, 112
      %v3603 = vpop.permute.xlu0 %3602
      %3604 = vrot.lane.b32.xlu0 %v3597, 112
      %v3605 = vpop.permute.xlu0 %3604
      %3606 = vrot.lane.b32.xlu0 %v3599, 112
      %v3607 = vpop.permute.xlu0 %3606
      %3608 = vrot.lane.b32.xlu0 %v3601, 112
      %v3609 = vpop.permute.xlu0 %3608
      %v3610 = vsel %vm1185, %v3603, %v3605
      %v3611 = vsel %vm1185, %v3607, %v3609
      %v3614 = vadd.f32 %v3572, %v3610
      %v3615 = vadd.f32 %v3573, %v3611
      %v3616 = vld [vmem:[%s3510 + $0x3] sm:$0x1]
      %v3617 = vperm.slane %v3616, 0
      %3619 = vrot.lane.b32.xlu0 %v3617, 24
      %v3620 = vpop.permute.xlu0 %3619
      %v3622 = vmul.f32 %v3512, %v3620
      %v3623 = vmul.f32 %v3531, %v3620
      %v3624 = vmul.f32 %v3010, %v3620
      %v3625 = vmul.f32 %v3018, %v3620
      %v3626 = vmul.f32 %v3513, %v3620
      %v3627 = vmul.f32 %v3532, %v3620
      %v3634 = vrot.slane %v3622, 3
      %v3635 = vrot.slane %v3624, 3
      %v3636 = vsel %vm1643, %v3634, %v3635
      %v3637 = vrot.slane %v3623, 3
      %v3638 = vrot.slane %v3625, 3
      %v3639 = vsel %vm1643, %v3637, %v3638
      %v3640 = vrot.slane %v3626, 3
      %v3641 = vsel %vm1643, %v3635, %v3640
      %v3642 = vrot.slane %v3627, 3
      %v3643 = vsel %vm1643, %v3638, %v3642
      %3644 = vrot.lane.b32.xlu0 %v3636, 104
      %v3645 = vpop.permute.xlu0 %3644
      %3646 = vrot.lane.b32.xlu0 %v3639, 104
      %v3647 = vpop.permute.xlu0 %3646
      %3648 = vrot.lane.b32.xlu0 %v3641, 104
      %v3649 = vpop.permute.xlu0 %3648
      %3650 = vrot.lane.b32.xlu0 %v3643, 104
      %v3651 = vpop.permute.xlu0 %3650
      %v3652 = vsel %vm1214, %v3645, %v3647
      %v3653 = vsel %vm1214, %v3649, %v3651
      %v3656 = vadd.f32 %v3614, %v3652
      %v3657 = vadd.f32 %v3615, %v3653
      %v3658 = vld [vmem:[%s3510 + $0x4] sm:$0x1]
      %v3659 = vperm.slane %v3658, 0
      %3661 = vrot.lane.b32.xlu0 %v3659, 32
      %v3662 = vpop.permute.xlu0 %3661
      %v3664 = vmul.f32 %v3512, %v3662
      %v3665 = vmul.f32 %v3531, %v3662
      %v3666 = vmul.f32 %v3010, %v3662
      %v3667 = vmul.f32 %v3018, %v3662
      %v3668 = vmul.f32 %v3513, %v3662
      %v3669 = vmul.f32 %v3532, %v3662
      %v3676 = vrot.slane %v3664, 3
      %v3677 = vrot.slane %v3666, 3
      %v3678 = vsel %vm1643, %v3676, %v3677
      %v3679 = vrot.slane %v3665, 3
      %v3680 = vrot.slane %v3667, 3
      %v3681 = vsel %vm1643, %v3679, %v3680
      %v3682 = vrot.slane %v3668, 3
      %v3683 = vsel %vm1643, %v3677, %v3682
      %v3684 = vrot.slane %v3669, 3
      %v3685 = vsel %vm1643, %v3680, %v3684
      %3686 = vrot.lane.b32.xlu0 %v3678, 96
      %v3687 = vpop.permute.xlu0 %3686
      %3688 = vrot.lane.b32.xlu0 %v3681, 96
      %v3689 = vpop.permute.xlu0 %3688
      %3690 = vrot.lane.b32.xlu0 %v3683, 96
      %v3691 = vpop.permute.xlu0 %3690
      %3692 = vrot.lane.b32.xlu0 %v3685, 96
      %v3693 = vpop.permute.xlu0 %3692
      %v3694 = vsel %vm1243, %v3687, %v3689
      %v3695 = vsel %vm1243, %v3691, %v3693
      %v3698 = vadd.f32 %v3656, %v3694
      %v3699 = vadd.f32 %v3657, %v3695
      %s3700 = scalar_lea.vmem %s10, 32
      %v3701 = vld [vmem:[%s3700] sm:$0x1]
      %v3702 = vld [vmem:[#allocation2] sm:$0xf0]
      %v3703 = vld [vmem:[#allocation2 + $0x20] sm:$0xf]
      %v3704 = vperm.slane %v3701, 0
      %v3705 = vmul.f32 %v3702, %v3704
      %v3706 = vmul.f32 %v3010, %v3704
      %v3707 = vmul.f32 %v3703, %v3704
      %v3711 = vrot.slane %v3705, 4
      %v3712 = vrot.slane %v3706, 4
      %v3713 = vsel %vm1834, %v3711, %v3712
      %v3714 = vrot.slane %v3707, 4
      %v3715 = vsel %vm1834, %v3712, %v3714
      %v3718 = vadd.f32 %v3698, %v3713
      %v3719 = vadd.f32 %v3699, %v3715
      %v3720 = vld [vmem:[%s3700 + $0x1] sm:$0x1]
      %v3721 = vld [vmem:[#allocation2 + $0x8] sm:$0xf0]
      %v3722 = vld [vmem:[#allocation2 + $0x28] sm:$0xf]
      %v3723 = vperm.slane %v3720, 0
      %3725 = vrot.lane.b32.xlu0 %v3723, 8
      %v3726 = vpop.permute.xlu0 %3725
      %v3728 = vmul.f32 %v3702, %v3726
      %v3729 = vmul.f32 %v3721, %v3726
      %v3730 = vmul.f32 %v3010, %v3726
      %v3731 = vmul.f32 %v3018, %v3726
      %v3732 = vmul.f32 %v3703, %v3726
      %v3733 = vmul.f32 %v3722, %v3726
      %v3740 = vrot.slane %v3728, 4
      %v3741 = vrot.slane %v3730, 4
      %v3742 = vsel %vm1834, %v3740, %v3741
      %v3743 = vrot.slane %v3729, 4
      %v3744 = vrot.slane %v3731, 4
      %v3745 = vsel %vm1834, %v3743, %v3744
      %v3746 = vrot.slane %v3732, 4
      %v3747 = vsel %vm1834, %v3741, %v3746
      %v3748 = vrot.slane %v3733, 4
      %v3749 = vsel %vm1834, %v3744, %v3748
      %3750 = vrot.lane.b32.xlu0 %v3742, 120
      %v3751 = vpop.permute.xlu0 %3750
      %3752 = vrot.lane.b32.xlu0 %v3745, 120
      %v3753 = vpop.permute.xlu0 %3752
      %3754 = vrot.lane.b32.xlu0 %v3747, 120
      %v3755 = vpop.permute.xlu0 %3754
      %3756 = vrot.lane.b32.xlu0 %v3749, 120
      %v3757 = vpop.permute.xlu0 %3756
      %v3758 = vsel %vm1156, %v3751, %v3753
      %v3759 = vsel %vm1156, %v3755, %v3757
      %v3762 = vadd.f32 %v3718, %v3758
      %v3763 = vadd.f32 %v3719, %v3759
      %v3764 = vld [vmem:[%s3700 + $0x2] sm:$0x1]
      %v3765 = vperm.slane %v3764, 0
      %3767 = vrot.lane.b32.xlu0 %v3765, 16
      %v3768 = vpop.permute.xlu0 %3767
      %v3770 = vmul.f32 %v3702, %v3768
      %v3771 = vmul.f32 %v3721, %v3768
      %v3772 = vmul.f32 %v3010, %v3768
      %v3773 = vmul.f32 %v3018, %v3768
      %v3774 = vmul.f32 %v3703, %v3768
      %v3775 = vmul.f32 %v3722, %v3768
      %v3782 = vrot.slane %v3770, 4
      %v3783 = vrot.slane %v3772, 4
      %v3784 = vsel %vm1834, %v3782, %v3783
      %v3785 = vrot.slane %v3771, 4
      %v3786 = vrot.slane %v3773, 4
      %v3787 = vsel %vm1834, %v3785, %v3786
      %v3788 = vrot.slane %v3774, 4
      %v3789 = vsel %vm1834, %v3783, %v3788
      %v3790 = vrot.slane %v3775, 4
      %v3791 = vsel %vm1834, %v3786, %v3790
      %3792 = vrot.lane.b32.xlu0 %v3784, 112
      %v3793 = vpop.permute.xlu0 %3792
      %3794 = vrot.lane.b32.xlu0 %v3787, 112
      %v3795 = vpop.permute.xlu0 %3794
      %3796 = vrot.lane.b32.xlu0 %v3789, 112
      %v3797 = vpop.permute.xlu0 %3796
      %3798 = vrot.lane.b32.xlu0 %v3791, 112
      %v3799 = vpop.permute.xlu0 %3798
      %v3800 = vsel %vm1185, %v3793, %v3795
      %v3801 = vsel %vm1185, %v3797, %v3799
      %v3804 = vadd.f32 %v3762, %v3800
      %v3805 = vadd.f32 %v3763, %v3801
      %v3806 = vld [vmem:[%s3700 + $0x3] sm:$0x1]
      %v3807 = vperm.slane %v3806, 0
      %3809 = vrot.lane.b32.xlu0 %v3807, 24
      %v3810 = vpop.permute.xlu0 %3809
      %v3812 = vmul.f32 %v3702, %v3810
      %v3813 = vmul.f32 %v3721, %v3810
      %v3814 = vmul.f32 %v3010, %v3810
      %v3815 = vmul.f32 %v3018, %v3810
      %v3816 = vmul.f32 %v3703, %v3810
      %v3817 = vmul.f32 %v3722, %v3810
      %v3824 = vrot.slane %v3812, 4
      %v3825 = vrot.slane %v3814, 4
      %v3826 = vsel %vm1834, %v3824, %v3825
      %v3827 = vrot.slane %v3813, 4
      %v3828 = vrot.slane %v3815, 4
      %v3829 = vsel %vm1834, %v3827, %v3828
      %v3830 = vrot.slane %v3816, 4
      %v3831 = vsel %vm1834, %v3825, %v3830
      %v3832 = vrot.slane %v3817, 4
      %v3833 = vsel %vm1834, %v3828, %v3832
      %3834 = vrot.lane.b32.xlu0 %v3826, 104
      %v3835 = vpop.permute.xlu0 %3834
      %3836 = vrot.lane.b32.xlu0 %v3829, 104
      %v3837 = vpop.permute.xlu0 %3836
      %3838 = vrot.lane.b32.xlu0 %v3831, 104
      %v3839 = vpop.permute.xlu0 %3838
      %3840 = vrot.lane.b32.xlu0 %v3833, 104
      %v3841 = vpop.permute.xlu0 %3840
      %v3842 = vsel %vm1214, %v3835, %v3837
      %v3843 = vsel %vm1214, %v3839, %v3841
      %v3846 = vadd.f32 %v3804, %v3842
      %v3847 = vadd.f32 %v3805, %v3843
      %v3848 = vld [vmem:[%s3700 + $0x4] sm:$0x1]
      %v3849 = vperm.slane %v3848, 0
      %3851 = vrot.lane.b32.xlu0 %v3849, 32
      %v3852 = vpop.permute.xlu0 %3851
      %v3854 = vmul.f32 %v3702, %v3852
      %v3855 = vmul.f32 %v3721, %v3852
      %v3856 = vmul.f32 %v3010, %v3852
      %v3857 = vmul.f32 %v3018, %v3852
      %v3858 = vmul.f32 %v3703, %v3852
      %v3859 = vmul.f32 %v3722, %v3852
      %v3866 = vrot.slane %v3854, 4
      %v3867 = vrot.slane %v3856, 4
      %v3868 = vsel %vm1834, %v3866, %v3867
      %v3869 = vrot.slane %v3855, 4
      %v3870 = vrot.slane %v3857, 4
      %v3871 = vsel %vm1834, %v3869, %v3870
      %v3872 = vrot.slane %v3858, 4
      %v3873 = vsel %vm1834, %v3867, %v3872
      %v3874 = vrot.slane %v3859, 4
      %v3875 = vsel %vm1834, %v3870, %v3874
      %3876 = vrot.lane.b32.xlu0 %v3868, 96
      %v3877 = vpop.permute.xlu0 %3876
      %3878 = vrot.lane.b32.xlu0 %v3871, 96
      %v3879 = vpop.permute.xlu0 %3878
      %3880 = vrot.lane.b32.xlu0 %v3873, 96
      %v3881 = vpop.permute.xlu0 %3880
      %3882 = vrot.lane.b32.xlu0 %v3875, 96
      %v3883 = vpop.permute.xlu0 %3882
      %v3884 = vsel %vm1243, %v3877, %v3879
      %v3885 = vsel %vm1243, %v3881, %v3883
      %v3888 = vadd.f32 %v3846, %v3884
      %v3889 = vadd.f32 %v3847, %v3885
      %v3890 = vld [vmem:[%s1047] sm:$0xf]
      %v3891 = vld [vmem:[%s1047 + $0x4] sm:$0xf]
      %v3892 = vunpack.c.l.bf16 %v3890
      %v3893 = vunpack.c.l.bf16 %v3891
      %v3894 = vadd.f32 %v3888, %v3892
      %v3895 = vadd.f32 %v3889, %v3893
      %v3896 = vpack.c.bf16 %v3894, %v3894
      %v3897 = vpack.c.bf16 %v3895, %v3895
      %3898 = vst [vmem:[%s1037] sm:$0xf] %v3896
      %3899 = vst [vmem:[%s1037 + $0x4] sm:$0xf] %v3897
      %s3900 = smul.u32 2, %s34
      %p3901 = scmp.lt.s32.totalorder %s33, 1
      %s3902 = scalar_select %p3901, %s33, 1
      %p3903 = scmp.lt.s32.totalorder %s3900, 1
      %s3904 = scalar_select %p3903, %s3900, 1
      %s3905 = smul.addr %s3902, 2
      %s3906 = sadd.s32 %s3904, %s3905
      %s3907 = smul.addr %s3906, 4
      %s3908 = scalar_lea.vmem %s15, %s3907
      %s3909 = smul.u32 2, %s34
      %p3910 = scmp.lt.s32.totalorder %s33, 1
      %s3911 = scalar_select %p3910, %s33, 1
      %p3912 = scmp.lt.s32.totalorder %s3909, 1
      %s3913 = scalar_select %p3912, %s3909, 1
      %s3914 = smul.addr %s3911, 2
      %s3915 = sadd.s32 %s3913, %s3914
      %s3916 = smul.addr %s3915, 4
      %s3917 = scalar_lea.vmem %s16, %s3916
      %s3918 = smul.u32 2, %s34
      %p3919 = scmp.lt.s32.totalorder %s33, 1
      %s3920 = scalar_select %p3919, %s33, 1
      %p3921 = scmp.lt.s32.totalorder %s3918, 1
      %s3922 = scalar_select %p3921, %s3918, 1
      %s3923 = smul.addr %s3920, 2
      %s3924 = sadd.s32 %s3922, %s3923
      %s3925 = smul.addr %s3924, 4
      %s3926 = scalar_lea.vmem %s17, %s3925
      // Predicated region
      $region81: #{casa_forward.4} parent=79 // pred_check
        %p3927 = pneg %p475
      $region82: #{casa_forward.4} parent=79 // pred_check_branch
        %3929 = sbr.rel (%p3927) target = $region84
      $region83: #{casa_forward.4} parent=79 // pred_region
        %s3930 = smul.u32 2, %s34
      $region84: #{casa_forward.4} parent=79 // pred_fallthru
        _
      // Predicated region
      $region85: #{casa_forward.4} parent=79 // pred_check
        %p3931 = pneg %p503
      $region86: #{casa_forward.4} parent=79 // pred_check_branch
        %3933 = sbr.rel (%p3931) target = $region88
      $region87: #{casa_forward.4} parent=79 // pred_region
        %s3934 = smul.u32 2, %s34
      $region88: #{casa_forward.4} parent=79 // pred_fallthru
        _
      // Predicated region
      $region89: #{casa_forward.4} parent=79 // pred_check
        %p3935 = pneg %p531
      $region90: #{casa_forward.4} parent=79 // pred_check_branch
        %3937 = sbr.rel (%p3935) target = $region92
      $region91: #{casa_forward.4} parent=79 // pred_region
        %s3938 = smul.u32 2, %s34
      $region92: #{casa_forward.4} parent=79 // pred_fallthru
        _
    $region80: #{casa_forward.4} parent=5 // pred_fallthru
      _
    %p3939 = scmp.le.s32.totalorder 2, %s24
    // Predicated region
    $region93: #{casa_forward.4} parent=5 // pred_check
      %p3940 = pneg %p3939
    $region94: #{casa_forward.4} parent=5 // pred_check_branch
      %3942 = sbr.rel (%p3940) target = $region96
    $region95: #{casa_forward.4} parent=5 // pred_region
      %s3943 = ssub.s32 %s24, 2
      // Predicated region
      $region97: #{casa_forward.4} parent=95 // pred_check
        %p3944 = pneg %p481
      $region98: #{casa_forward.4} parent=95 // pred_check_branch
        %3946 = sbr.rel (%p3944) target = $region100
      $region99: #{casa_forward.4} parent=95 // pred_region
        %s3947 = smul.u32 2, %s36
        %p3948 = scmp.lt.s32.totalorder %s35, 1
        %s3949 = scalar_select %p3948, %s35, 1
        %p3950 = scmp.lt.s32.totalorder %s3947, 1
        %s3951 = scalar_select %p3950, %s3947, 1
        %s3952 = smul.addr %s3949, 2
        %s3953 = sadd.s32 %s3951, %s3952
        %s3954 = smul.addr %s3953, 4
        %s3955 = scalar_lea.vmem %s15, %s3954
      $region100: #{casa_forward.4} parent=95 // pred_fallthru
        _
      // Predicated region
      $region101: #{casa_forward.4} parent=95 // pred_check
        %p3956 = pneg %p509
      $region102: #{casa_forward.4} parent=95 // pred_check_branch
        %3958 = sbr.rel (%p3956) target = $region104
      $region103: #{casa_forward.4} parent=95 // pred_region
        %s3959 = smul.u32 2, %s36
        %p3960 = scmp.lt.s32.totalorder %s35, 1
        %s3961 = scalar_select %p3960, %s35, 1
        %p3962 = scmp.lt.s32.totalorder %s3959, 1
        %s3963 = scalar_select %p3962, %s3959, 1
        %s3964 = smul.addr %s3961, 2
        %s3965 = sadd.s32 %s3963, %s3964
        %s3966 = smul.addr %s3965, 4
        %s3967 = scalar_lea.vmem %s16, %s3966
      $region104: #{casa_forward.4} parent=95 // pred_fallthru
        _
      // Predicated region
      $region105: #{casa_forward.4} parent=95 // pred_check
        %p3968 = pneg %p537
      $region106: #{casa_forward.4} parent=95 // pred_check_branch
        %3970 = sbr.rel (%p3968) target = $region108
      $region107: #{casa_forward.4} parent=95 // pred_region
        %s3971 = smul.u32 2, %s36
        %p3972 = scmp.lt.s32.totalorder %s35, 1
        %s3973 = scalar_select %p3972, %s35, 1
        %p3974 = scmp.lt.s32.totalorder %s3971, 1
        %s3975 = scalar_select %p3974, %s3971, 1
        %s3976 = smul.addr %s3973, 2
        %s3977 = sadd.s32 %s3975, %s3976
        %s3978 = smul.addr %s3977, 4
        %s3979 = scalar_lea.vmem %s17, %s3978
      $region108: #{casa_forward.4} parent=95 // pred_fallthru
        _
    $region96: #{casa_forward.4} parent=5 // pred_fallthru
      _
  $region6: #{casa_forward.4} parent=0 // loop_footer
    %s28 = sadd.s32 1, %s24
  $region7: #{casa_forward.4} parent=0 // loop_footer_branch
    %23 = sbr.rel target = $region3
  $region8: #{casa_forward.4} parent=0 // loop_exit
    _

</llo_original>
